<compile_context>
chip_gen: v7x
topology: tpu7x:2x2x1
jax: 0.10.0
libtpu: 0.0.40
codegen_flags: <defaults>
</compile_context>

<pallas_src>
import jax
import jax.numpy as jnp
from jax import lax
from jax.experimental import pallas as pl
from jax.experimental.pallas import tpu as pltpu

BN_EPS = 1e-5
ACT_DTYPE = jnp.bfloat16           # activation / conv-weight storage dtype

# Raw operand-block budgets for the single-shot fused kernels (Pallas double
# buffers; default scoped VMEM is ~32 MiB on every generation, so stay well
# under half of it).
_FUSED_CONV_BUDGET = 6 * 2**20
_FUSED_POOL_BUDGET = 2 * 2**20

_VMEM_LIMIT_CACHE = None


def _fallback_vmem_limit():
    """Generation-aware scoped-VMEM budget for the large-tile fallback kernels
    (v7x: 64 MiB physical VMEM, v5e/v6e: 128 MiB); leave >=25% headroom."""
    global _VMEM_LIMIT_CACHE
    if _VMEM_LIMIT_CACHE is None:
        cap = 128 * 2**20
        try:
            cap = int(pltpu.get_tpu_info().vmem_capacity_bytes)
        except Exception:
            pass
        _VMEM_LIMIT_CACHE = int(min(cap * 3 // 4, 100 * 2**20))
    return _VMEM_LIMIT_CACHE


# --------------------------- shared in-kernel math ---------------------------

def _bn_normalize(x, gamma, beta):
    """Training-mode BN of an f32 (rows=channels, cols=samples) block."""
    mean = jnp.mean(x, axis=1, keepdims=True)
    var = jnp.mean(jnp.square(x - mean), axis=1, keepdims=True)   # biased var
    return (x - mean) * lax.rsqrt(var + BN_EPS) * gamma + beta


# ------------------- fused conv GEMM + BN (+res/+ds) + ReLU ------------------

def _conv_bn_kernel(relu, res_mode):
    """GEMM -> BN -> (+identity residual | +BN(downsample 1x1x1 GEMM)) -> ReLU.

    Single shot: the whole (P-block, M) tile lives as an f32 accumulator, so
    BN statistics over the full M axis are exact and computed pre-rounding."""
    def kernel(*refs):
        if res_mode == 'ds':
            (w_ref, a_ref, g_ref, b_ref,
             dsw_ref, xs_ref, dsg_ref, dsb_ref, o_ref) = refs
        elif res_mode == 'add':
            w_ref, a_ref, g_ref, b_ref, res_ref, o_ref = refs
        else:
            w_ref, a_ref, g_ref, b_ref, o_ref = refs

        acc = jnp.dot(w_ref[...], a_ref[...],
                      preferred_element_type=jnp.float32)
        y = _bn_normalize(acc, g_ref[...], b_ref[...])
        if res_mode == 'ds':          # fused type-'B' shortcut: BN(ds_w @ xs)
            sc = jnp.dot(dsw_ref[...], xs_ref[...],
                         preferred_element_type=jnp.float32)
            y = y + _bn_normalize(sc, dsg_ref[...], dsb_ref[...])
        elif res_mode == 'add':       # identity shortcut
            y = y + res_ref[...].astype(jnp.float32)
        if relu:
            y = jnp.maximum(y, 0.0)
        o_ref[...] = y.astype(o_ref.dtype)
    return kernel


# ------------------------------ im2col (wrapper) -----------------------------

def _im2col_t(x, ksize, stride, pad):
    """x: (C, N, D, H, W) -> a: (kvol*C, N*Do*Ho*Wo).  K ordered (kd, kh, kw, C)
    so the slab stack flattens with NO minor-dim transpose."""
    C, N, D, H, W = x.shape
    kd, kh, kw = ksize
    sd, sh, sw = stride
    pd, ph, pw = pad
    if pd or ph or pw:
        x = jnp.pad(x, ((0, 0), (0, 0), (pd, pd), (ph, ph), (pw, pw)))
    Do = (D + 2 * pd - kd) // sd + 1
    Ho = (H + 2 * ph - kh) // sh + 1
    Wo = (W + 2 * pw - kw) // sw + 1
    slabs = []
    for i in range(kd):
        for j in range(kh):
            for k in range(kw):
                slabs.append(
                    x[:, :, i:i + Do * sd:sd, j:j + Ho * sh:sh, k:k + Wo * sw:sw])
    a = jnp.stack(slabs, axis=0)                     # (kvol, C, N, Do, Ho, Wo)
    return a.reshape(kd * kh * kw * C, N * Do * Ho * Wo), (Do, Ho, Wo)


# ------------------------- fallback tiled GEMM kernels ------------------------

def _gemm_kernel_single(w_ref, a_ref, o_ref):
    o_ref[...] = jnp.dot(w_ref[...], a_ref[...],
                         preferred_element_type=jnp.float32).astype(o_ref.dtype)


def _gemm_kernel_acc(w_ref, a_ref, o_ref, acc_ref):
    k = pl.program_id(1)

    @pl.when(k == 0)
    def _():
        acc_ref[...] = jnp.zeros_like(acc_ref)

    acc_ref[...] += jnp.dot(w_ref[...], a_ref[...],
                            preferred_element_type=jnp.float32)

    @pl.when(k == pl.num_programs(1) - 1)
    def _():
        o_ref[...] = acc_ref[...].astype(o_ref.dtype)


def _pick_k_tile(K, tk_max=2048):
    if K <= tk_max:
        return K
    for t in range(tk_max, 0, -1):      # largest divisor of K that fits
        if K % t == 0:
            return t
    return K


def gemm_t(w, a, out_dtype=None, tm=512):
    """Fallback tiled GEMM: out = w @ a.  w: (P, K), a: (K, M) -> (P, M)."""
    P, K = w.shape
    K2, M = a.shape
    assert K == K2
    out_dtype = out_dtype or w.dtype
    a = a.astype(w.dtype)
    TM = tm if M > tm else M
    TK = _pick_k_tile(K)
    vmem = _fallback_vmem_limit()
    if K == TK:       # single K block: no scratch, no init/finalize predication
        return pl.pallas_call(
            _gemm_kernel_single,
            grid=(pl.cdiv(M, TM),),
            in_specs=[pl.BlockSpec((P, K), lambda m: (0, 0)),
                      pl.BlockSpec((K, TM), lambda m: (0, m))],
            out_specs=pl.BlockSpec((P, TM), lambda m: (0, m)),
            out_shape=jax.ShapeDtypeStruct((P, M), out_dtype),
            compiler_params=pltpu.CompilerParams(
                dimension_semantics=("parallel",),
                vmem_limit_bytes=vmem),
        )(w, a)
    return pl.pallas_call(
        _gemm_kernel_acc,
        grid=(pl.cdiv(M, TM), K // TK),
        in_specs=[pl.BlockSpec((P, TK), lambda m, k: (0, k)),
                  pl.BlockSpec((TK, TM), lambda m, k: (k, m))],
        out_specs=pl.BlockSpec((P, TM), lambda m, k: (0, m)),
        out_shape=jax.ShapeDtypeStruct((P, M), out_dtype),
        scratch_shapes=[pltpu.VMEM((P, TM), jnp.float32)],
        compiler_params=pltpu.CompilerParams(
            dimension_semantics=("parallel", "arbitrary"),
            vmem_limit_bytes=vmem),
    )(w, a)


# ------------------------ fallback standalone BatchNorm ----------------------

def _bn_kernel(has_res, relu):
    def kernel(x_ref, g_ref, b_ref, *rest):
        if has_res:
            r_ref, o_ref = rest
        else:
            (o_ref,) = rest
        y = _bn_normalize(x_ref[...].astype(jnp.float32), g_ref[...], b_ref[...])
        if has_res:
            y = y + r_ref[...].astype(jnp.float32)
        if relu:
            y = jnp.maximum(y, 0.0)
        o_ref[...] = y.astype(o_ref.dtype)
    return kernel


def pallas_batchnorm(x, gamma, beta, residual=None, relu=False, out_dtype=None):
    """Fallback training-mode BN on a channels-first (C, M) view (exact stats:
    the channel/sublane axis only is gridded)."""
    C, M = x.shape
    out_dtype = out_dtype or x.dtype
    TC = C
    for c in (32, 16, 8):       # bigger sublane tiles fill packed bf16 vregs
        if C % c == 0:
            TC = c
            break
    # TODO(synk): two-pass (sum/sumsq reduce, then normalize) M-tiled variant
    # for activation sizes whose (TC, M) slab would not fit scoped VMEM.
    in_specs = [pl.BlockSpec((TC, M), lambda i: (i, 0)),
                pl.BlockSpec((TC, 1), lambda i: (i, 0)),
                pl.BlockSpec((TC, 1), lambda i: (i, 0))]
    args = [x, gamma.reshape(C, 1).astype(jnp.float32),
            beta.reshape(C, 1).astype(jnp.float32)]
    if residual is not None:
        in_specs.append(pl.BlockSpec((TC, M), lambda i: (i, 0)))
        args.append(residual)
    return pl.pallas_call(
        _bn_kernel(residual is not None, relu),
        grid=(C // TC,),
        in_specs=in_specs,
        out_specs=pl.BlockSpec((TC, M), lambda i: (i, 0)),
        out_shape=jax.ShapeDtypeStruct((C, M), out_dtype),
        compiler_params=pltpu.CompilerParams(
            dimension_semantics=("parallel",),
            vmem_limit_bytes=_fallback_vmem_limit()),
    )(*args)


# --------------------------------- conv + BN ---------------------------------

def conv_bn(x, w_t, ksize, stride, pad, gamma, beta, relu=True,
            residual=None, ds=None, out_dtype=None):
    """Fused Conv3d (no bias) + BatchNorm3d [+ residual | + fused 1x1x1
    downsample-conv+BN shortcut] [+ ReLU].

    x:    (Cin, N, D, H, W) channels-first activations
    w_t:  (Cout, kd*kh*kw*Cin) weight, K ordered (kd, kh, kw, Cin)
          (== torch weight.permute(0,2,3,4,1).reshape(Cout, -1))
    residual: optional (Cout, M) tensor added after BN (identity shortcut)
    ds:   optional (ds_w (Cout, Cds), xs (Cds, M), ds_gamma, ds_beta):
          type-'B' shortcut BN(ds_w @ xs) computed inside the same kernel.
    """
    Cout = w_t.shape[0]
    Cin, N = x.shape[:2]
    out_dtype = out_dtype or ACT_DTYPE

    if ksize == (1, 1, 1) and pad == (0, 0, 0):      # 1x1x1 conv: no im2col
        sd, sh, sw = stride
        xs0 = x[:, :, ::sd, ::sh, ::sw]
        Do, Ho, Wo = xs0.shape[2:]
        a = xs0.reshape(Cin, -1)
    else:
        a, (Do, Ho, Wo) = _im2col_t(x, ksize, stride, pad)
    a = a.astype(ACT_DTYPE)
    K, M = a.shape
    P = Cout
    g = gamma.reshape(P, 1).astype(jnp.float32)
    b = beta.reshape(P, 1).astype(jnp.float32)
    w = w_t.astype(ACT_DTYPE)

    blk_bytes = (P * K + K * M + P * M) * 2 + P * M * 4
    if ds is not None:
        blk_bytes += (ds[0].size + ds[1].size) * 2
    if residual is not None:
        blk_bytes += residual.size * 2

    if blk_bytes <= _FUSED_CONV_BUDGET:
        # -------- fused single-shot path: GEMM + BN (+res/+ds) + ReLU --------
        TP = P // 2 if P % 16 == 0 else P       # >=2 parallel steps when legal
        if ds is not None:
            ds_w, xs_a, ds_g, ds_b = ds
            Cds = ds_w.shape[1]
            res_mode = 'ds'
            extra_args = [ds_w.astype(ACT_DTYPE), xs_a.astype(ACT_DTYPE),
                          ds_g.reshape(P, 1).astype(jnp.float32),
                          ds_b.reshape(P, 1).astype(jnp.float32)]
            extra_specs = [pl.BlockSpec((TP, Cds), lambda i: (i, 0)),
                           pl.BlockSpec((Cds, M), lambda i: (0, 0)),
                           pl.BlockSpec((TP, 1), lambda i: (i, 0)),
                           pl.BlockSpec((TP, 1), lambda i: (i, 0))]
        elif residual is not None:
            res_mode = 'add'
            extra_args = [residual.astype(ACT_DTYPE)]
            extra_specs = [pl.BlockSpec((TP, M), lambda i: (i, 0))]
        else:
            res_mode = None
            extra_args, extra_specs = [], []
        out = pl.pallas_call(
            _conv_bn_kernel(relu, res_mode),
            grid=(P // TP,),
            in_specs=[pl.BlockSpec((TP, K), lambda i: (i, 0)),
                      pl.BlockSpec((K, M), lambda i: (0, 0)),
                      pl.BlockSpec((TP, 1), lambda i: (i, 0)),
                      pl.BlockSpec((TP, 1), lambda i: (i, 0))] + extra_specs,
            out_specs=pl.BlockSpec((TP, M), lambda i: (i, 0)),
            out_shape=jax.ShapeDtypeStruct((P, M), out_dtype),
            compiler_params=pltpu.CompilerParams(
                dimension_semantics=("parallel",)),
        )(w, a, g, b, *extra_args)
    else:
        # -------- fallback for configs exceeding the fused VMEM budget -------
        out1 = gemm_t(w, a)
        res = None
        if ds is not None:
            ds_w, xs_a, ds_g, ds_b = ds
            r = gemm_t(ds_w.astype(ACT_DTYPE), xs_a.astype(ACT_DTYPE))
            res = pallas_batchnorm(r, ds_g, ds_b)
        elif residual is not None:
            res = residual
        out = pallas_batchnorm(out1, gamma, beta, residual=res, relu=relu,
                               out_dtype=out_dtype)
    return out.reshape(P, N, Do, Ho, Wo)


# --------------------------------- max pooling -------------------------------

def _maxpool_dense_kernel(x_ref, o_ref):
    """Separable k=3, stride-1, replicate-edge window max over the last 3 axes,
    entirely in VMEM.  Subsampling every other position of this dense result
    (wrapper side) is exactly MaxPool3d(kernel=3, stride=2, padding=1)."""
    x = x_ref[...]
    for ax in (1, 2, 3):
        L = x.shape[ax]
        if L > 1:
            first = lax.slice_in_dim(x, 0, 1, axis=ax)
            last = lax.slice_in_dim(x, L - 1, L, axis=ax)
            left = jnp.concatenate(
                [first, lax.slice_in_dim(x, 0, L - 1, axis=ax)], axis=ax)
            right = jnp.concatenate(
                [lax.slice_in_dim(x, 1, L, axis=ax), last], axis=ax)
            x = jnp.maximum(x, jnp.maximum(left, right))
    o_ref[...] = x


def _max3_kernel(a_ref, b_ref, c_ref, o_ref):
    o_ref[...] = jnp.maximum(jnp.maximum(a_ref[...], b_ref[...]), c_ref[...])


def _pool1d_max(x, axis, k=3, stride=2, pad=1):
    """Fallback per-axis pooling (only used when blocks exceed the budget)."""
    L = x.shape[axis]
    Lo = (L + 2 * pad - k) // stride + 1
    pad_cfg = [(0, 0)] * x.ndim
    pad_cfg[axis] = (pad, pad)
    xp = jnp.pad(x, pad_cfg, constant_values=float('-inf'))
    limit = (Lo - 1) * stride + 1
    slabs = [lax.slice_in_dim(xp, j, j + limit, stride=stride, axis=axis)
             for j in range(k)]
    shape = slabs[0].shape
    R = shape[0]
    flats = [s.reshape(R, -1) for s in slabs]
    Lcols = flats[0].shape[1]
    TR = 8 if R % 8 == 0 else R
    out = pl.pallas_call(
        _max3_kernel,
        grid=(R // TR,),
        in_specs=[pl.BlockSpec((TR, Lcols), lambda i: (i, 0))] * 3,
        out_specs=pl.BlockSpec((TR, Lcols), lambda i: (i, 0)),
        out_shape=jax.ShapeDtypeStruct((R, Lcols), x.dtype),
        compiler_params=pltpu.CompilerParams(
            dimension_semantics=("parallel",),
            vmem_limit_bytes=_fallback_vmem_limit()),
    )(*flats)
    return out.reshape(shape)


def _maxpool3d_separable(x):
    for axis in (4, 3, 2):
        x = _pool1d_max(x, axis)
    return x


def maxpool3d(x):
    """MaxPool3d(kernel=3, stride=2, padding=1) on (C, N, D, H, W)."""
    C, N, D, H, W = x.shape
    R = C * N
    TR = R // 2 if (R % 2 == 0 and R >= 2) else R    # 2 parallel steps (v7x)
    if TR * D * H * W * x.dtype.itemsize > _FUSED_POOL_BUDGET:
        return _maxpool3d_separable(x)               # fallback for huge inputs
    x4 = x.reshape(R, D, H, W)
    dense = pl.pallas_call(
        _maxpool_dense_kernel,
        grid=(R // TR,),
        in_specs=[pl.BlockSpec((TR, D, H, W), lambda i: (i, 0, 0, 0))],
        out_specs=pl.BlockSpec((TR, D, H, W), lambda i: (i, 0, 0, 0)),
        out_shape=jax.ShapeDtypeStruct((R, D, H, W), x.dtype),
        compiler_params=pltpu.CompilerParams(
            dimension_semantics=("parallel",)),
    )(x4)
    pooled = dense[:, ::2, ::2, ::2]                 # centers of the s=2 windows
    Do, Ho, Wo = pooled.shape[1:]
    return pooled.reshape(C, N, Do, Ho, Wo)


# --------------------- fused avgpool + classification/BYOL heads -------------

def _head_kernel(x_ref, cw1_ref, cb1_ref, cw2_ref, cb2_ref,
                 bw1_ref, bb1_ref, bg_ref, bb_ref, bw2_ref, bb2_ref,
                 proj_ref, cls_ref):
    # adaptive average pool (1,1,1): per-(channel, sample) mean over spatial
    x = x_ref[...].astype(jnp.float32)               # (C, N, S)
    pooled = jnp.mean(x, axis=-1)                    # (C, N)  f32
    p_bf = pooled.astype(ACT_DTYPE)
    # fc_cls: Linear -> ReLU -> Linear     (transposed: out^T = W @ x^T + b)
    h = jnp.dot(cw1_ref[...], p_bf, preferred_element_type=jnp.float32)
    h = jnp.maximum(h + cb1_ref[...], 0.0)
    cls = jnp.dot(cw2_ref[...], h.astype(ACT_DTYPE),
                  preferred_element_type=jnp.float32) + cb2_ref[...]
    cls_ref[...] = cls
    # fc_byol (MLP): Linear -> BatchNorm1d -> ReLU -> Linear
    z = jnp.dot(bw1_ref[...], p_bf, preferred_element_type=jnp.float32)
    z = _bn_normalize(z + bb1_ref[...], bg_ref[...], bb_ref[...])
    z = jnp.maximum(z, 0.0)
    proj = jnp.dot(bw2_ref[...], z.astype(ACT_DTYPE),
                   preferred_element_type=jnp.float32) + bb2_ref[...]
    proj_ref[...] = proj


def fused_head(h, params):
    """avgpool(1,1,1) + fc_cls + fc_byol in one pallas_call.
    Returns (x_proj (N, 512) f32, x_cls (N, n_classes) f32)."""
    C, N = h.shape[:2]
    S = h.shape[2] * h.shape[3] * h.shape[4]
    x3 = h.reshape(C, N, S)

    def col(v):
        return v.reshape(-1, 1).astype(jnp.float32)

    args = [x3,
            params['cls_w1'], col(params['cls_b1']),
            params['cls_w2'], col(params['cls_b2']),
            params['byol_w1'], col(params['byol_b1']),
            col(params['byol_bn_g']), col(params['byol_bn_b']),
            params['byol_w2'], col(params['byol_b2'])]
    in_specs = [pl.BlockSpec(a.shape, lambda i, nd=a.ndim: (0,) * nd)
                for a in args]
    proj_dim = params['byol_w2'].shape[0]
    n_cls = params['cls_w2'].shape[0]
    proj, cls = pl.pallas_call(
        _head_kernel,
        grid=(1,),
        in_specs=in_specs,
        out_specs=(pl.BlockSpec((proj_dim, N), lambda i: (0, 0)),
                   pl.BlockSpec((n_cls, N), lambda i: (0, 0))),
        out_shape=(jax.ShapeDtypeStruct((proj_dim, N), jnp.float32),
                   jax.ShapeDtypeStruct((n_cls, N), jnp.float32)),
        compiler_params=pltpu.CompilerParams(
            dimension_semantics=("arbitrary",)),
    )(*args)
    return proj.T, cls.T


# ------------------------------- model forward -------------------------------

def basic_block(x, p):
    """3D-ResNet BasicBlock (expansion=1) with everything after each conv GEMM
    fused into that GEMM's epilogue."""
    s = p['stride']
    h1 = conv_bn(x, p['conv1_w'], (3, 3, 3), (s, s, s), (1, 1, 1),
                 p['bn1_g'], p['bn1_b'], relu=True)
    if 'ds_w' in p:    # shortcut type 'B': conv1x1x1(stride=s)+BN, fused in
        xs = x[:, :, ::s, ::s, ::s].reshape(x.shape[0], -1)
        ds = (p['ds_w'], xs, p['ds_g'], p['ds_b'])
        return conv_bn(h1, p['conv2_w'], (3, 3, 3), (1, 1, 1), (1, 1, 1),
                       p['bn2_g'], p['bn2_b'], relu=True, ds=ds)
    res = x.reshape(x.shape[0], -1)                  # identity shortcut
    return conv_bn(h1, p['conv2_w'], (3, 3, 3), (1, 1, 1), (1, 1, 1),
                   p['bn2_g'], p['bn2_b'], relu=True, residual=res)


def resunet_forward(x_ncdhw, params):
    # NCDHW -> channels-first flattened (C, N, D, H, W), bf16 activations.
    x = jnp.transpose(x_ncdhw, (1, 0, 2, 3, 4)).astype(ACT_DTYPE)
    x1 = conv_bn(x, params['conv1_w'], (7, 7, 7), (2, 2, 2), (3, 3, 3),
                 params['bn1_g'], params['bn1_b'], relu=True)
    h = maxpool3d(x1)                                # no_max_pool=False default
    for layer in params['layers']:
        for blk in layer:
            h = basic_block(h, blk)
    x_proj, x_cls = fused_head(h, params)            # avgpool + both heads
    return x_proj, x_cls                             # (N, 512), (N, n_classes)


# ------------------------------- initialization -------------------------------

def init_params(key, block_inplanes=(4, 8, 16, 32), layers=(1, 1, 1, 1),
                n_input_channels=1, n_classes=2):
    kit = iter(jax.random.split(key, 128))

    def conv_w(cin, cout, k):   # kaiming_normal_, mode='fan_out', relu
        kvol = k[0] * k[1] * k[2]
        std = (2.0 / (cout * kvol)) ** 0.5
        w = jax.random.normal(next(kit), (cout, kvol * cin), jnp.float32) * std
        return w.astype(ACT_DTYPE)        # (Cout, kd*kh*kw*Cin), K kvol-major

    def linear_wb(cin, cout):   # PyTorch Linear default init, (out, in) layout
        bound = 1.0 / (cin ** 0.5)
        w = jax.random.uniform(next(kit), (cout, cin), jnp.float32, -bound, bound)
        b = jax.random.uniform(next(kit), (cout,), jnp.float32, -bound, bound)
        return w.astype(ACT_DTYPE), b     # bf16 weights (MXU-native), f32 bias

    params = {}
    in_planes = block_inplanes[0]
    params['conv1_w'] = conv_w(n_input_channels, in_planes, (7, 7, 7))
    params['bn1_g'] = jnp.ones((in_planes,), jnp.float32)
    params['bn1_b'] = jnp.zeros((in_planes,), jnp.float32)

    layer_params = []
    for li, (planes, nblocks) in enumerate(zip(block_inplanes, layers)):
        layer_stride = 1 if li == 0 else 2
        blocks = []
        for bi in range(nblocks):
            s = layer_stride if bi == 0 else 1
            blk = {'stride': s,
                   'conv1_w': conv_w(in_planes, planes, (3, 3, 3)),
                   'bn1_g': jnp.ones((planes,), jnp.float32),
                   'bn1_b': jnp.zeros((planes,), jnp.float32),
                   'conv2_w': conv_w(planes, planes, (3, 3, 3)),
                   'bn2_g': jnp.ones((planes,), jnp.float32),
                   'bn2_b': jnp.zeros((planes,), jnp.float32)}
            if s != 1 or in_planes != planes:   # BasicBlock.expansion == 1
                blk['ds_w'] = conv_w(in_planes, planes, (1, 1, 1))
                blk['ds_g'] = jnp.ones((planes,), jnp.float32)
                blk['ds_b'] = jnp.zeros((planes,), jnp.float32)
            in_planes = planes
            blocks.append(blk)
        layer_params.append(blocks)
    params['layers'] = layer_params

    feat = block_inplanes[3]    # * expansion(=1)
    params['cls_w1'], params['cls_b1'] = linear_wb(feat, feat // 2)
    params['cls_w2'], params['cls_b2'] = linear_wb(feat // 2, n_classes)
    params['byol_w1'], params['byol_b1'] = linear_wb(feat, feat)  # MLP hidden=feat
    params['byol_bn_g'] = jnp.ones((feat,), jnp.float32)
    params['byol_bn_b'] = jnp.zeros((feat,), jnp.float32)
    params['byol_w2'], params['byol_b2'] = linear_wb(feat, 512)
    return params


if __name__ == "__main__":
    key = jax.random.PRNGKey(0)
    pkey, xkey = jax.random.split(key)
    params = init_params(pkey)
    # PyTorch-style NCDHW input: batch=2, channels=1, spatial=16^3
    x = jax.random.normal(xkey, (2, 1, 16, 16, 16), jnp.float32)

    fwd = jax.jit(lambda inp: resunet_forward(inp, params))
    x_proj, x_cls = fwd(x)
    jax.block_until_ready((x_proj, x_cls))

    assert x_proj.shape == (2, 512), x_proj.shape
    assert x_cls.shape == (2, 2), x_cls.shape
    assert jnp.all(jnp.isfinite(x_proj)) and jnp.all(jnp.isfinite(x_cls))
    print("KERNEL_OK")
</pallas_src>

<mosaic_0001>
module attributes {stable_mosaic.version = 11 : i64} {
  func.func @_maxpool_dense_kernel(%arg0: i32, %arg1: memref<4x8x8x8xbf16, #tpu.memory_space<vmem>>, %arg2: memref<4x8x8x8xbf16, #tpu.memory_space<vmem>>) attributes {dimension_semantics = [#tpu.dimension_semantics<parallel>], iteration_bounds = array<i64: 2>, scalar_prefetch = 0 : i64, scratch_operands = 0 : i64, tpu.core_type = #tpu.core_type<tc>, window_params = [{transform_indices = @transform_0, window_bounds = array<i64: 4, 8, 8, 8>}, {transform_indices = @transform_1, window_bounds = array<i64: 4, 8, 8, 8>}]} {
    %c0 = arith.constant 0 : index
    %c0_0 = arith.constant 0 : index
    %c0_1 = arith.constant 0 : index
    %c0_2 = arith.constant 0 : index
    %0 = vector.load %arg1[%c0, %c0_0, %c0_1, %c0_2] : memref<4x8x8x8xbf16, #tpu.memory_space<vmem>>, vector<4x8x8x8xbf16>
    %1 = vector.extract_strided_slice %0 {offsets = [0, 0, 0, 0], sizes = [4, 1, 8, 8], strides = [1, 1, 1, 1]} : vector<4x8x8x8xbf16> to vector<4x1x8x8xbf16>
    %2 = vector.extract_strided_slice %0 {offsets = [0, 7, 0, 0], sizes = [4, 1, 8, 8], strides = [1, 1, 1, 1]} : vector<4x8x8x8xbf16> to vector<4x1x8x8xbf16>
    %3 = vector.extract_strided_slice %0 {offsets = [0, 0, 0, 0], sizes = [4, 7, 8, 8], strides = [1, 1, 1, 1]} : vector<4x8x8x8xbf16> to vector<4x7x8x8xbf16>
    %4 = tpu.concatenate %1, %3 in 1 : vector<4x1x8x8xbf16>, vector<4x7x8x8xbf16> -> vector<4x8x8x8xbf16>
    %5 = vector.extract_strided_slice %0 {offsets = [0, 1, 0, 0], sizes = [4, 7, 8, 8], strides = [1, 1, 1, 1]} : vector<4x8x8x8xbf16> to vector<4x7x8x8xbf16>
    %6 = tpu.concatenate %5, %2 in 1 : vector<4x7x8x8xbf16>, vector<4x1x8x8xbf16> -> vector<4x8x8x8xbf16>
    %7 = arith.maximumf %4, %6 : vector<4x8x8x8xbf16>
    %8 = arith.maximumf %0, %7 : vector<4x8x8x8xbf16>
    %9 = vector.extract_strided_slice %8 {offsets = [0, 0, 0, 0], sizes = [4, 8, 1, 8], strides = [1, 1, 1, 1]} : vector<4x8x8x8xbf16> to vector<4x8x1x8xbf16>
    %10 = vector.extract_strided_slice %8 {offsets = [0, 0, 7, 0], sizes = [4, 8, 1, 8], strides = [1, 1, 1, 1]} : vector<4x8x8x8xbf16> to vector<4x8x1x8xbf16>
    %11 = vector.extract_strided_slice %8 {offsets = [0, 0, 0, 0], sizes = [4, 8, 7, 8], strides = [1, 1, 1, 1]} : vector<4x8x8x8xbf16> to vector<4x8x7x8xbf16>
    %12 = tpu.concatenate %9, %11 in 2 : vector<4x8x1x8xbf16>, vector<4x8x7x8xbf16> -> vector<4x8x8x8xbf16>
    %13 = vector.extract_strided_slice %8 {offsets = [0, 0, 1, 0], sizes = [4, 8, 7, 8], strides = [1, 1, 1, 1]} : vector<4x8x8x8xbf16> to vector<4x8x7x8xbf16>
    %14 = tpu.concatenate %13, %10 in 2 : vector<4x8x7x8xbf16>, vector<4x8x1x8xbf16> -> vector<4x8x8x8xbf16>
    %15 = arith.maximumf %12, %14 : vector<4x8x8x8xbf16>
    %16 = arith.maximumf %8, %15 : vector<4x8x8x8xbf16>
    %17 = vector.extract_strided_slice %16 {offsets = [0, 0, 0, 0], sizes = [4, 8, 8, 1], strides = [1, 1, 1, 1]} : vector<4x8x8x8xbf16> to vector<4x8x8x1xbf16>
    %18 = vector.extract_strided_slice %16 {offsets = [0, 0, 0, 7], sizes = [4, 8, 8, 1], strides = [1, 1, 1, 1]} : vector<4x8x8x8xbf16> to vector<4x8x8x1xbf16>
    %19 = vector.extract_strided_slice %16 {offsets = [0, 0, 0, 0], sizes = [4, 8, 8, 7], strides = [1, 1, 1, 1]} : vector<4x8x8x8xbf16> to vector<4x8x8x7xbf16>
    %20 = tpu.concatenate %17, %19 in 3 : vector<4x8x8x1xbf16>, vector<4x8x8x7xbf16> -> vector<4x8x8x8xbf16>
    %21 = vector.extract_strided_slice %16 {offsets = [0, 0, 0, 1], sizes = [4, 8, 8, 7], strides = [1, 1, 1, 1]} : vector<4x8x8x8xbf16> to vector<4x8x8x7xbf16>
    %22 = tpu.concatenate %21, %18 in 3 : vector<4x8x8x7xbf16>, vector<4x8x8x1xbf16> -> vector<4x8x8x8xbf16>
    %23 = arith.maximumf %20, %22 : vector<4x8x8x8xbf16>
    %24 = arith.maximumf %16, %23 : vector<4x8x8x8xbf16>
    %c0_3 = arith.constant 0 : index
    %c0_4 = arith.constant 0 : index
    %c0_5 = arith.constant 0 : index
    %c0_6 = arith.constant 0 : index
    %25 = vector.load %arg2[%c0_3, %c0_4, %c0_5, %c0_6] : memref<4x8x8x8xbf16, #tpu.memory_space<vmem>>, vector<4x8x8x8xbf16>
    tpu.vector_store %arg2[%c0_3, %c0_4, %c0_5, %c0_6], %24 {strides = array<i32>} : memref<4x8x8x8xbf16, #tpu.memory_space<vmem>>, vector<4x8x8x8xbf16>,
    return
  }
  func.func @transform_0(%arg0: i32) -> (i32, i32, i32, i32) {
    %c0_i32 = arith.constant 0 : i32
    %c0_i32_0 = arith.constant 0 : i32
    %c0_i32_1 = arith.constant 0 : i32
    %c0_i32_2 = arith.constant 0 : i32
    return %arg0, %c0_i32, %c0_i32_0, %c0_i32_1 : i32, i32, i32, i32
  }
  func.func @transform_1(%arg0: i32) -> (i32, i32, i32, i32) {
    %c0_i32 = arith.constant 0 : i32
    %c0_i32_0 = arith.constant 0 : i32
    %c0_i32_1 = arith.constant 0 : i32
    %c0_i32_2 = arith.constant 0 : i32
    return %arg0, %c0_i32, %c0_i32_0, %c0_i32_1 : i32, i32, i32, i32
  }
}

module attributes {stable_mosaic.version = 11 : i64} {
  func.func @kernel(%arg0: i32, %arg1: memref<4x343xbf16, #tpu.memory_space<vmem>>, %arg2: memref<343x1024xbf16, #tpu.memory_space<vmem>>, %arg3: memref<4x1xf32, #tpu.memory_space<vmem>>, %arg4: memref<4x1xf32, #tpu.memory_space<vmem>>, %arg5: memref<4x1024xbf16, #tpu.memory_space<vmem>>) attributes {dimension_semantics = [#tpu.dimension_semantics<parallel>], iteration_bounds = array<i64: 1>, scalar_prefetch = 0 : i64, scratch_operands = 0 : i64, tpu.core_type = #tpu.core_type<tc>, window_params = [{transform_indices = @transform_0, window_bounds = array<i64: 4, 343>}, {pipeline_mode = #tpu.pipeline_mode<synchronous>, transform_indices = @transform_1, window_bounds = array<i64: 343, 1024>}, {transform_indices = @transform_2, window_bounds = array<i64: 4, 1>}, {transform_indices = @transform_3, window_bounds = array<i64: 4, 1>}, {transform_indices = @transform_4, window_bounds = array<i64: 4, 1024>}]} {
    %c0 = arith.constant 0 : index
    %c0_0 = arith.constant 0 : index
    %0 = vector.load %arg1[%c0, %c0_0] : memref<4x343xbf16, #tpu.memory_space<vmem>>, vector<4x343xbf16>
    %c0_1 = arith.constant 0 : index
    %c0_2 = arith.constant 0 : index
    %1 = vector.load %arg2[%c0_1, %c0_2] : memref<343x1024xbf16, #tpu.memory_space<vmem>>, vector<343x1024xbf16>
    %cst = arith.constant dense<0.000000e+00> : vector<4x1024xf32>
    %2 = tpu.matmul %0, %1, %cst {dimension_numbers = #tpu.dot_dimension_numbers<[1], [0], [0], [1], [0, 0, 1, 1], [], []>} : vector<4x343xbf16>, vector<343x1024xbf16>, vector<4x1024xf32> -> vector<4x1024xf32>
    %c0_3 = arith.constant 0 : index
    %c0_4 = arith.constant 0 : index
    %3 = vector.load %arg3[%c0_3, %c0_4] : memref<4x1xf32, #tpu.memory_space<vmem>>, vector<4x1xf32>
    %c0_5 = arith.constant 0 : index
    %c0_6 = arith.constant 0 : index
    %4 = vector.load %arg4[%c0_5, %c0_6] : memref<4x1xf32, #tpu.memory_space<vmem>>, vector<4x1xf32>
    %cst_7 = arith.constant dense<0.000000e+00> : vector<4xf32>
    %5 = vector.multi_reduction <add>, %2, %cst_7 [1] : vector<4x1024xf32> to vector<4xf32>
    %6 = vector.shape_cast %5 : vector<4xf32> to vector<4x1xf32>
    %cst_8 = arith.constant 1.024000e+03 : f32
    %7 = vector.broadcast %cst_8 : f32 to vector<4x1xf32>
    %8 = arith.divf %6, %7 : vector<4x1xf32>
    %9 = vector.broadcast %8 : vector<4x1xf32> to vector<4x1024xf32>
    %10 = arith.subf %2, %9 : vector<4x1024xf32>
    %11 = arith.mulf %10, %10 : vector<4x1024xf32>
    %cst_9 = arith.constant dense<0.000000e+00> : vector<4xf32>
    %12 = vector.multi_reduction <add>, %11, %cst_9 [1] : vector<4x1024xf32> to vector<4xf32>
    %13 = vector.shape_cast %12 : vector<4xf32> to vector<4x1xf32>
    %cst_10 = arith.constant 1.024000e+03 : f32
    %14 = vector.broadcast %cst_10 : f32 to vector<4x1xf32>
    %15 = arith.divf %13, %14 : vector<4x1xf32>
    %16 = vector.broadcast %8 : vector<4x1xf32> to vector<4x1024xf32>
    %17 = arith.subf %2, %16 : vector<4x1024xf32>
    %cst_11 = arith.constant 9.99999974E-6 : f32
    %18 = vector.broadcast %cst_11 : f32 to vector<4x1xf32>
    %19 = arith.addf %15, %18 : vector<4x1xf32>
    %20 = math.rsqrt %19 : vector<4x1xf32>
    %21 = vector.broadcast %20 : vector<4x1xf32> to vector<4x1024xf32>
    %22 = arith.mulf %17, %21 : vector<4x1024xf32>
    %23 = vector.broadcast %3 : vector<4x1xf32> to vector<4x1024xf32>
    %24 = arith.mulf %22, %23 : vector<4x1024xf32>
    %25 = vector.broadcast %4 : vector<4x1xf32> to vector<4x1024xf32>
    %26 = arith.addf %24, %25 : vector<4x1024xf32>
    %cst_12 = arith.constant 0.000000e+00 : f32
    %27 = vector.broadcast %cst_12 : f32 to vector<4x1024xf32>
    %28 = arith.maximumf %26, %27 : vector<4x1024xf32>
    %29 = arith.truncf %28 : vector<4x1024xf32> to vector<4x1024xbf16>
    %c0_13 = arith.constant 0 : index
    %c0_14 = arith.constant 0 : index
    %30 = vector.load %arg5[%c0_13, %c0_14] : memref<4x1024xbf16, #tpu.memory_space<vmem>>, vector<4x1024xbf16>
    tpu.vector_store %arg5[%c0_13, %c0_14], %29 {strides = array<i32>} : memref<4x1024xbf16, #tpu.memory_space<vmem>>, vector<4x1024xbf16>,
    return
  }
  func.func @transform_0(%arg0: i32) -> (i32, i32) {
    %c0_i32 = arith.constant 0 : i32
    %c0_i32_0 = arith.constant 0 : i32
    return %arg0, %c0_i32 : i32, i32
  }
  func.func @transform_1(%arg0: i32) -> (i32, i32) {
    %c0_i32 = arith.constant 0 : i32
    %c0_i32_0 = arith.constant 0 : i32
    %c0_i32_1 = arith.constant 0 : i32
    return %c0_i32, %c0_i32_0 : i32, i32
  }
  func.func @transform_2(%arg0: i32) -> (i32, i32) {
    %c0_i32 = arith.constant 0 : i32
    %c0_i32_0 = arith.constant 0 : i32
    return %arg0, %c0_i32 : i32, i32
  }
  func.func @transform_3(%arg0: i32) -> (i32, i32) {
    %c0_i32 = arith.constant 0 : i32
    %c0_i32_0 = arith.constant 0 : i32
    return %arg0, %c0_i32 : i32, i32
  }
  func.func @transform_4(%arg0: i32) -> (i32, i32) {
    %c0_i32 = arith.constant 0 : i32
    %c0_i32_0 = arith.constant 0 : i32
    return %arg0, %c0_i32 : i32, i32
  }
}

module attributes {stable_mosaic.version = 11 : i64} {
  func.func @kernel(%arg0: i32, %arg1: memref<4x108xbf16, #tpu.memory_space<vmem>>, %arg2: memref<108x128xbf16, #tpu.memory_space<vmem>>, %arg3: memref<4x1xf32, #tpu.memory_space<vmem>>, %arg4: memref<4x1xf32, #tpu.memory_space<vmem>>, %arg5: memref<4x128xbf16, #tpu.memory_space<vmem>>) attributes {dimension_semantics = [#tpu.dimension_semantics<parallel>], iteration_bounds = array<i64: 1>, scalar_prefetch = 0 : i64, scratch_operands = 0 : i64, tpu.core_type = #tpu.core_type<tc>, window_params = [{transform_indices = @transform_0, window_bounds = array<i64: 4, 108>}, {pipeline_mode = #tpu.pipeline_mode<synchronous>, transform_indices = @transform_1, window_bounds = array<i64: 108, 128>}, {transform_indices = @transform_2, window_bounds = array<i64: 4, 1>}, {transform_indices = @transform_3, window_bounds = array<i64: 4, 1>}, {transform_indices = @transform_4, window_bounds = array<i64: 4, 128>}]} {
    %c0 = arith.constant 0 : index
    %c0_0 = arith.constant 0 : index
    %0 = vector.load %arg1[%c0, %c0_0] : memref<4x108xbf16, #tpu.memory_space<vmem>>, vector<4x108xbf16>
    %c0_1 = arith.constant 0 : index
    %c0_2 = arith.constant 0 : index
    %1 = vector.load %arg2[%c0_1, %c0_2] : memref<108x128xbf16, #tpu.memory_space<vmem>>, vector<108x128xbf16>
    %cst = arith.constant dense<0.000000e+00> : vector<4x128xf32>
    %2 = tpu.matmul %0, %1, %cst {dimension_numbers = #tpu.dot_dimension_numbers<[1], [0], [0], [1], [0, 0, 1, 1], [], []>} : vector<4x108xbf16>, vector<108x128xbf16>, vector<4x128xf32> -> vector<4x128xf32>
    %c0_3 = arith.constant 0 : index
    %c0_4 = arith.constant 0 : index
    %3 = vector.load %arg3[%c0_3, %c0_4] : memref<4x1xf32, #tpu.memory_space<vmem>>, vector<4x1xf32>
    %c0_5 = arith.constant 0 : index
    %c0_6 = arith.constant 0 : index
    %4 = vector.load %arg4[%c0_5, %c0_6] : memref<4x1xf32, #tpu.memory_space<vmem>>, vector<4x1xf32>
    %cst_7 = arith.constant dense<0.000000e+00> : vector<4xf32>
    %5 = vector.multi_reduction <add>, %2, %cst_7 [1] : vector<4x128xf32> to vector<4xf32>
    %6 = vector.shape_cast %5 : vector<4xf32> to vector<4x1xf32>
    %cst_8 = arith.constant 1.280000e+02 : f32
    %7 = vector.broadcast %cst_8 : f32 to vector<4x1xf32>
    %8 = arith.divf %6, %7 : vector<4x1xf32>
    %9 = vector.broadcast %8 : vector<4x1xf32> to vector<4x128xf32>
    %10 = arith.subf %2, %9 : vector<4x128xf32>
    %11 = arith.mulf %10, %10 : vector<4x128xf32>
    %cst_9 = arith.constant dense<0.000000e+00> : vector<4xf32>
    %12 = vector.multi_reduction <add>, %11, %cst_9 [1] : vector<4x128xf32> to vector<4xf32>
    %13 = vector.shape_cast %12 : vector<4xf32> to vector<4x1xf32>
    %cst_10 = arith.constant 1.280000e+02 : f32
    %14 = vector.broadcast %cst_10 : f32 to vector<4x1xf32>
    %15 = arith.divf %13, %14 : vector<4x1xf32>
    %16 = vector.broadcast %8 : vector<4x1xf32> to vector<4x128xf32>
    %17 = arith.subf %2, %16 : vector<4x128xf32>
    %cst_11 = arith.constant 9.99999974E-6 : f32
    %18 = vector.broadcast %cst_11 : f32 to vector<4x1xf32>
    %19 = arith.addf %15, %18 : vector<4x1xf32>
    %20 = math.rsqrt %19 : vector<4x1xf32>
    %21 = vector.broadcast %20 : vector<4x1xf32> to vector<4x128xf32>
    %22 = arith.mulf %17, %21 : vector<4x128xf32>
    %23 = vector.broadcast %3 : vector<4x1xf32> to vector<4x128xf32>
    %24 = arith.mulf %22, %23 : vector<4x128xf32>
    %25 = vector.broadcast %4 : vector<4x1xf32> to vector<4x128xf32>
    %26 = arith.addf %24, %25 : vector<4x128xf32>
    %cst_12 = arith.constant 0.000000e+00 : f32
    %27 = vector.broadcast %cst_12 : f32 to vector<4x128xf32>
    %28 = arith.maximumf %26, %27 : vector<4x128xf32>
    %29 = arith.truncf %28 : vector<4x128xf32> to vector<4x128xbf16>
    %c0_13 = arith.constant 0 : index
    %c0_14 = arith.constant 0 : index
    %30 = vector.load %arg5[%c0_13, %c0_14] : memref<4x128xbf16, #tpu.memory_space<vmem>>, vector<4x128xbf16>
    tpu.vector_store %arg5[%c0_13, %c0_14], %29 {strides = array<i32>} : memref<4x128xbf16, #tpu.memory_space<vmem>>, vector<4x128xbf16>,
    return
  }
  func.func @transform_0(%arg0: i32) -> (i32, i32) {
    %c0_i32 = arith.constant 0 : i32
    %c0_i32_0 = arith.constant 0 : i32
    return %arg0, %c0_i32 : i32, i32
  }
  func.func @transform_1(%arg0: i32) -> (i32, i32) {
    %c0_i32 = arith.constant 0 : i32
    %c0_i32_0 = arith.constant 0 : i32
    %c0_i32_1 = arith.constant 0 : i32
    return %c0_i32, %c0_i32_0 : i32, i32
  }
  func.func @transform_2(%arg0: i32) -> (i32, i32) {
    %c0_i32 = arith.constant 0 : i32
    %c0_i32_0 = arith.constant 0 : i32
    return %arg0, %c0_i32 : i32, i32
  }
  func.func @transform_3(%arg0: i32) -> (i32, i32) {
    %c0_i32 = arith.constant 0 : i32
    %c0_i32_0 = arith.constant 0 : i32
    return %arg0, %c0_i32 : i32, i32
  }
  func.func @transform_4(%arg0: i32) -> (i32, i32) {
    %c0_i32 = arith.constant 0 : i32
    %c0_i32_0 = arith.constant 0 : i32
    return %arg0, %c0_i32 : i32, i32
  }
}

module attributes {stable_mosaic.version = 11 : i64} {
  func.func @kernel(%arg0: i32, %arg1: memref<4x108xbf16, #tpu.memory_space<vmem>>, %arg2: memref<108x128xbf16, #tpu.memory_space<vmem>>, %arg3: memref<4x1xf32, #tpu.memory_space<vmem>>, %arg4: memref<4x1xf32, #tpu.memory_space<vmem>>, %arg5: memref<4x128xbf16, #tpu.memory_space<vmem>>, %arg6: memref<4x128xbf16, #tpu.memory_space<vmem>>) attributes {dimension_semantics = [#tpu.dimension_semantics<parallel>], iteration_bounds = array<i64: 1>, scalar_prefetch = 0 : i64, scratch_operands = 0 : i64, tpu.core_type = #tpu.core_type<tc>, window_params = [{transform_indices = @transform_0, window_bounds = array<i64: 4, 108>}, {pipeline_mode = #tpu.pipeline_mode<synchronous>, transform_indices = @transform_1, window_bounds = array<i64: 108, 128>}, {transform_indices = @transform_2, window_bounds = array<i64: 4, 1>}, {transform_indices = @transform_3, window_bounds = array<i64: 4, 1>}, {transform_indices = @transform_4, window_bounds = array<i64: 4, 128>}, {transform_indices = @transform_5, window_bounds = array<i64: 4, 128>}]} {
    %c0 = arith.constant 0 : index
    %c0_0 = arith.constant 0 : index
    %0 = vector.load %arg1[%c0, %c0_0] : memref<4x108xbf16, #tpu.memory_space<vmem>>, vector<4x108xbf16>
    %c0_1 = arith.constant 0 : index
    %c0_2 = arith.constant 0 : index
    %1 = vector.load %arg2[%c0_1, %c0_2] : memref<108x128xbf16, #tpu.memory_space<vmem>>, vector<108x128xbf16>
    %cst = arith.constant dense<0.000000e+00> : vector<4x128xf32>
    %2 = tpu.matmul %0, %1, %cst {dimension_numbers = #tpu.dot_dimension_numbers<[1], [0], [0], [1], [0, 0, 1, 1], [], []>} : vector<4x108xbf16>, vector<108x128xbf16>, vector<4x128xf32> -> vector<4x128xf32>
    %c0_3 = arith.constant 0 : index
    %c0_4 = arith.constant 0 : index
    %3 = vector.load %arg3[%c0_3, %c0_4] : memref<4x1xf32, #tpu.memory_space<vmem>>, vector<4x1xf32>
    %c0_5 = arith.constant 0 : index
    %c0_6 = arith.constant 0 : index
    %4 = vector.load %arg4[%c0_5, %c0_6] : memref<4x1xf32, #tpu.memory_space<vmem>>, vector<4x1xf32>
    %cst_7 = arith.constant dense<0.000000e+00> : vector<4xf32>
    %5 = vector.multi_reduction <add>, %2, %cst_7 [1] : vector<4x128xf32> to vector<4xf32>
    %6 = vector.shape_cast %5 : vector<4xf32> to vector<4x1xf32>
    %cst_8 = arith.constant 1.280000e+02 : f32
    %7 = vector.broadcast %cst_8 : f32 to vector<4x1xf32>
    %8 = arith.divf %6, %7 : vector<4x1xf32>
    %9 = vector.broadcast %8 : vector<4x1xf32> to vector<4x128xf32>
    %10 = arith.subf %2, %9 : vector<4x128xf32>
    %11 = arith.mulf %10, %10 : vector<4x128xf32>
    %cst_9 = arith.constant dense<0.000000e+00> : vector<4xf32>
    %12 = vector.multi_reduction <add>, %11, %cst_9 [1] : vector<4x128xf32> to vector<4xf32>
    %13 = vector.shape_cast %12 : vector<4xf32> to vector<4x1xf32>
    %cst_10 = arith.constant 1.280000e+02 : f32
    %14 = vector.broadcast %cst_10 : f32 to vector<4x1xf32>
    %15 = arith.divf %13, %14 : vector<4x1xf32>
    %16 = vector.broadcast %8 : vector<4x1xf32> to vector<4x128xf32>
    %17 = arith.subf %2, %16 : vector<4x128xf32>
    %cst_11 = arith.constant 9.99999974E-6 : f32
    %18 = vector.broadcast %cst_11 : f32 to vector<4x1xf32>
    %19 = arith.addf %15, %18 : vector<4x1xf32>
    %20 = math.rsqrt %19 : vector<4x1xf32>
    %21 = vector.broadcast %20 : vector<4x1xf32> to vector<4x128xf32>
    %22 = arith.mulf %17, %21 : vector<4x128xf32>
    %23 = vector.broadcast %3 : vector<4x1xf32> to vector<4x128xf32>
    %24 = arith.mulf %22, %23 : vector<4x128xf32>
    %25 = vector.broadcast %4 : vector<4x1xf32> to vector<4x128xf32>
    %26 = arith.addf %24, %25 : vector<4x128xf32>
    %c0_12 = arith.constant 0 : index
    %c0_13 = arith.constant 0 : index
    %27 = vector.load %arg5[%c0_12, %c0_13] : memref<4x128xbf16, #tpu.memory_space<vmem>>, vector<4x128xbf16>
    %28 = arith.extf %27 : vector<4x128xbf16> to vector<4x128xf32>
    %29 = arith.addf %26, %28 : vector<4x128xf32>
    %cst_14 = arith.constant 0.000000e+00 : f32
    %30 = vector.broadcast %cst_14 : f32 to vector<4x128xf32>
    %31 = arith.maximumf %29, %30 : vector<4x128xf32>
    %32 = arith.truncf %31 : vector<4x128xf32> to vector<4x128xbf16>
    %c0_15 = arith.constant 0 : index
    %c0_16 = arith.constant 0 : index
    %33 = vector.load %arg6[%c0_15, %c0_16] : memref<4x128xbf16, #tpu.memory_space<vmem>>, vector<4x128xbf16>
    tpu.vector_store %arg6[%c0_15, %c0_16], %32 {strides = array<i32>} : memref<4x128xbf16, #tpu.memory_space<vmem>>, vector<4x128xbf16>,
    return
  }
  func.func @transform_0(%arg0: i32) -> (i32, i32) {
    %c0_i32 = arith.constant 0 : i32
    %c0_i32_0 = arith.constant 0 : i32
    return %arg0, %c0_i32 : i32, i32
  }
  func.func @transform_1(%arg0: i32) -> (i32, i32) {
    %c0_i32 = arith.constant 0 : i32
    %c0_i32_0 = arith.constant 0 : i32
    %c0_i32_1 = arith.constant 0 : i32
    return %c0_i32, %c0_i32_0 : i32, i32
  }
  func.func @transform_2(%arg0: i32) -> (i32, i32) {
    %c0_i32 = arith.constant 0 : i32
    %c0_i32_0 = arith.constant 0 : i32
    return %arg0, %c0_i32 : i32, i32
  }
  func.func @transform_3(%arg0: i32) -> (i32, i32) {
    %c0_i32 = arith.constant 0 : i32
    %c0_i32_0 = arith.constant 0 : i32
    return %arg0, %c0_i32 : i32, i32
  }
  func.func @transform_4(%arg0: i32) -> (i32, i32) {
    %c0_i32 = arith.constant 0 : i32
    %c0_i32_0 = arith.constant 0 : i32
    return %arg0, %c0_i32 : i32, i32
  }
  func.func @transform_5(%arg0: i32) -> (i32, i32) {
    %c0_i32 = arith.constant 0 : i32
    %c0_i32_0 = arith.constant 0 : i32
    return %arg0, %c0_i32 : i32, i32
  }
}

module attributes {stable_mosaic.version = 11 : i64} {
  func.func @kernel(%arg0: i32, %arg1: memref<8x108xbf16, #tpu.memory_space<vmem>>, %arg2: memref<108x16xbf16, #tpu.memory_space<vmem>>, %arg3: memref<8x1xf32, #tpu.memory_space<vmem>>, %arg4: memref<8x1xf32, #tpu.memory_space<vmem>>, %arg5: memref<8x16xbf16, #tpu.memory_space<vmem>>) attributes {dimension_semantics = [#tpu.dimension_semantics<parallel>], iteration_bounds = array<i64: 1>, scalar_prefetch = 0 : i64, scratch_operands = 0 : i64, tpu.core_type = #tpu.core_type<tc>, window_params = [{transform_indices = @transform_0, window_bounds = array<i64: 8, 108>}, {pipeline_mode = #tpu.pipeline_mode<synchronous>, transform_indices = @transform_1, window_bounds = array<i64: 108, 16>}, {transform_indices = @transform_2, window_bounds = array<i64: 8, 1>}, {transform_indices = @transform_3, window_bounds = array<i64: 8, 1>}, {transform_indices = @transform_4, window_bounds = array<i64: 8, 16>}]} {
    %c0 = arith.constant 0 : index
    %c0_0 = arith.constant 0 : index
    %0 = vector.load %arg1[%c0, %c0_0] : memref<8x108xbf16, #tpu.memory_space<vmem>>, vector<8x108xbf16>
    %c0_1 = arith.constant 0 : index
    %c0_2 = arith.constant 0 : index
    %1 = vector.load %arg2[%c0_1, %c0_2] : memref<108x16xbf16, #tpu.memory_space<vmem>>, vector<108x16xbf16>
    %cst = arith.constant dense<0.000000e+00> : vector<8x16xf32>
    %2 = tpu.matmul %0, %1, %cst {dimension_numbers = #tpu.dot_dimension_numbers<[1], [0], [0], [1], [0, 0, 1, 1], [], []>} : vector<8x108xbf16>, vector<108x16xbf16>, vector<8x16xf32> -> vector<8x16xf32>
    %c0_3 = arith.constant 0 : index
    %c0_4 = arith.constant 0 : index
    %3 = vector.load %arg3[%c0_3, %c0_4] : memref<8x1xf32, #tpu.memory_space<vmem>>, vector<8x1xf32>
    %c0_5 = arith.constant 0 : index
    %c0_6 = arith.constant 0 : index
    %4 = vector.load %arg4[%c0_5, %c0_6] : memref<8x1xf32, #tpu.memory_space<vmem>>, vector<8x1xf32>
    %cst_7 = arith.constant dense<0.000000e+00> : vector<8xf32>
    %5 = vector.multi_reduction <add>, %2, %cst_7 [1] : vector<8x16xf32> to vector<8xf32>
    %6 = vector.shape_cast %5 : vector<8xf32> to vector<8x1xf32>
    %cst_8 = arith.constant 1.600000e+01 : f32
    %7 = vector.broadcast %cst_8 : f32 to vector<8x1xf32>
    %8 = arith.divf %6, %7 : vector<8x1xf32>
    %9 = vector.broadcast %8 : vector<8x1xf32> to vector<8x16xf32>
    %10 = arith.subf %2, %9 : vector<8x16xf32>
    %11 = arith.mulf %10, %10 : vector<8x16xf32>
    %cst_9 = arith.constant dense<0.000000e+00> : vector<8xf32>
    %12 = vector.multi_reduction <add>, %11, %cst_9 [1] : vector<8x16xf32> to vector<8xf32>
    %13 = vector.shape_cast %12 : vector<8xf32> to vector<8x1xf32>
    %cst_10 = arith.constant 1.600000e+01 : f32
    %14 = vector.broadcast %cst_10 : f32 to vector<8x1xf32>
    %15 = arith.divf %13, %14 : vector<8x1xf32>
    %16 = vector.broadcast %8 : vector<8x1xf32> to vector<8x16xf32>
    %17 = arith.subf %2, %16 : vector<8x16xf32>
    %cst_11 = arith.constant 9.99999974E-6 : f32
    %18 = vector.broadcast %cst_11 : f32 to vector<8x1xf32>
    %19 = arith.addf %15, %18 : vector<8x1xf32>
    %20 = math.rsqrt %19 : vector<8x1xf32>
    %21 = vector.broadcast %20 : vector<8x1xf32> to vector<8x16xf32>
    %22 = arith.mulf %17, %21 : vector<8x16xf32>
    %23 = vector.broadcast %3 : vector<8x1xf32> to vector<8x16xf32>
    %24 = arith.mulf %22, %23 : vector<8x16xf32>
    %25 = vector.broadcast %4 : vector<8x1xf32> to vector<8x16xf32>
    %26 = arith.addf %24, %25 : vector<8x16xf32>
    %cst_12 = arith.constant 0.000000e+00 : f32
    %27 = vector.broadcast %cst_12 : f32 to vector<8x16xf32>
    %28 = arith.maximumf %26, %27 : vector<8x16xf32>
    %29 = arith.truncf %28 : vector<8x16xf32> to vector<8x16xbf16>
    %c0_13 = arith.constant 0 : index
    %c0_14 = arith.constant 0 : index
    %30 = vector.load %arg5[%c0_13, %c0_14] : memref<8x16xbf16, #tpu.memory_space<vmem>>, vector<8x16xbf16>
    tpu.vector_store %arg5[%c0_13, %c0_14], %29 {strides = array<i32>} : memref<8x16xbf16, #tpu.memory_space<vmem>>, vector<8x16xbf16>,
    return
  }
  func.func @transform_0(%arg0: i32) -> (i32, i32) {
    %c0_i32 = arith.constant 0 : i32
    %c0_i32_0 = arith.constant 0 : i32
    return %arg0, %c0_i32 : i32, i32
  }
  func.func @transform_1(%arg0: i32) -> (i32, i32) {
    %c0_i32 = arith.constant 0 : i32
    %c0_i32_0 = arith.constant 0 : i32
    %c0_i32_1 = arith.constant 0 : i32
    return %c0_i32, %c0_i32_0 : i32, i32
  }
  func.func @transform_2(%arg0: i32) -> (i32, i32) {
    %c0_i32 = arith.constant 0 : i32
    %c0_i32_0 = arith.constant 0 : i32
    return %arg0, %c0_i32 : i32, i32
  }
  func.func @transform_3(%arg0: i32) -> (i32, i32) {
    %c0_i32 = arith.constant 0 : i32
    %c0_i32_0 = arith.constant 0 : i32
    return %arg0, %c0_i32 : i32, i32
  }
  func.func @transform_4(%arg0: i32) -> (i32, i32) {
    %c0_i32 = arith.constant 0 : i32
    %c0_i32_0 = arith.constant 0 : i32
    return %arg0, %c0_i32 : i32, i32
  }
}

module attributes {stable_mosaic.version = 11 : i64} {
  func.func @kernel(%arg0: i32, %arg1: memref<8x216xbf16, #tpu.memory_space<vmem>>, %arg2: memref<216x16xbf16, #tpu.memory_space<vmem>>, %arg3: memref<8x1xf32, #tpu.memory_space<vmem>>, %arg4: memref<8x1xf32, #tpu.memory_space<vmem>>, %arg5: memref<8x4xbf16, #tpu.memory_space<vmem>>, %arg6: memref<4x16xbf16, #tpu.memory_space<vmem>>, %arg7: memref<8x1xf32, #tpu.memory_space<vmem>>, %arg8: memref<8x1xf32, #tpu.memory_space<vmem>>, %arg9: memref<8x16xbf16, #tpu.memory_space<vmem>>) attributes {dimension_semantics = [#tpu.dimension_semantics<parallel>], iteration_bounds = array<i64: 1>, scalar_prefetch = 0 : i64, scratch_operands = 0 : i64, tpu.core_type = #tpu.core_type<tc>, window_params = [{transform_indices = @transform_0, window_bounds = array<i64: 8, 216>}, {pipeline_mode = #tpu.pipeline_mode<synchronous>, transform_indices = @transform_1, window_bounds = array<i64: 216, 16>}, {transform_indices = @transform_2, window_bounds = array<i64: 8, 1>}, {transform_indices = @transform_3, window_bounds = array<i64: 8, 1>}, {transform_indices = @transform_4, window_bounds = array<i64: 8, 4>}, {pipeline_mode = #tpu.pipeline_mode<synchronous>, transform_indices = @transform_5, window_bounds = array<i64: 4, 16>}, {transform_indices = @transform_6, window_bounds = array<i64: 8, 1>}, {transform_indices = @transform_7, window_bounds = array<i64: 8, 1>}, {transform_indices = @transform_8, window_bounds = array<i64: 8, 16>}]} {
    %c0 = arith.constant 0 : index
    %c0_0 = arith.constant 0 : index
    %0 = vector.load %arg1[%c0, %c0_0] : memref<8x216xbf16, #tpu.memory_space<vmem>>, vector<8x216xbf16>
    %c0_1 = arith.constant 0 : index
    %c0_2 = arith.constant 0 : index
    %1 = vector.load %arg2[%c0_1, %c0_2] : memref<216x16xbf16, #tpu.memory_space<vmem>>, vector<216x16xbf16>
    %cst = arith.constant dense<0.000000e+00> : vector<8x16xf32>
    %2 = tpu.matmul %0, %1, %cst {dimension_numbers = #tpu.dot_dimension_numbers<[1], [0], [0], [1], [0, 0, 1, 1], [], []>} : vector<8x216xbf16>, vector<216x16xbf16>, vector<8x16xf32> -> vector<8x16xf32>
    %c0_3 = arith.constant 0 : index
    %c0_4 = arith.constant 0 : index
    %3 = vector.load %arg3[%c0_3, %c0_4] : memref<8x1xf32, #tpu.memory_space<vmem>>, vector<8x1xf32>
    %c0_5 = arith.constant 0 : index
    %c0_6 = arith.constant 0 : index
    %4 = vector.load %arg4[%c0_5, %c0_6] : memref<8x1xf32, #tpu.memory_space<vmem>>, vector<8x1xf32>
    %cst_7 = arith.constant dense<0.000000e+00> : vector<8xf32>
    %5 = vector.multi_reduction <add>, %2, %cst_7 [1] : vector<8x16xf32> to vector<8xf32>
    %6 = vector.shape_cast %5 : vector<8xf32> to vector<8x1xf32>
    %cst_8 = arith.constant 1.600000e+01 : f32
    %7 = vector.broadcast %cst_8 : f32 to vector<8x1xf32>
    %8 = arith.divf %6, %7 : vector<8x1xf32>
    %9 = vector.broadcast %8 : vector<8x1xf32> to vector<8x16xf32>
    %10 = arith.subf %2, %9 : vector<8x16xf32>
    %11 = arith.mulf %10, %10 : vector<8x16xf32>
    %cst_9 = arith.constant dense<0.000000e+00> : vector<8xf32>
    %12 = vector.multi_reduction <add>, %11, %cst_9 [1] : vector<8x16xf32> to vector<8xf32>
    %13 = vector.shape_cast %12 : vector<8xf32> to vector<8x1xf32>
    %cst_10 = arith.constant 1.600000e+01 : f32
    %14 = vector.broadcast %cst_10 : f32 to vector<8x1xf32>
    %15 = arith.divf %13, %14 : vector<8x1xf32>
    %16 = vector.broadcast %8 : vector<8x1xf32> to vector<8x16xf32>
    %17 = arith.subf %2, %16 : vector<8x16xf32>
    %cst_11 = arith.constant 9.99999974E-6 : f32
    %18 = vector.broadcast %cst_11 : f32 to vector<8x1xf32>
    %19 = arith.addf %15, %18 : vector<8x1xf32>
    %20 = math.rsqrt %19 : vector<8x1xf32>
    %21 = vector.broadcast %20 : vector<8x1xf32> to vector<8x16xf32>
    %22 = arith.mulf %17, %21 : vector<8x16xf32>
    %23 = vector.broadcast %3 : vector<8x1xf32> to vector<8x16xf32>
    %24 = arith.mulf %22, %23 : vector<8x16xf32>
    %25 = vector.broadcast %4 : vector<8x1xf32> to vector<8x16xf32>
    %26 = arith.addf %24, %25 : vector<8x16xf32>
    %c0_12 = arith.constant 0 : index
    %c0_13 = arith.constant 0 : index
    %27 = vector.load %arg5[%c0_12, %c0_13] : memref<8x4xbf16, #tpu.memory_space<vmem>>, vector<8x4xbf16>
    %c0_14 = arith.constant 0 : index
    %c0_15 = arith.constant 0 : index
    %28 = vector.load %arg6[%c0_14, %c0_15] : memref<4x16xbf16, #tpu.memory_space<vmem>>, vector<4x16xbf16>
    %cst_16 = arith.constant dense<0.000000e+00> : vector<8x16xf32>
    %29 = tpu.matmul %27, %28, %cst_16 {dimension_numbers = #tpu.dot_dimension_numbers<[1], [0], [0], [1], [0, 0, 1, 1], [], []>} : vector<8x4xbf16>, vector<4x16xbf16>, vector<8x16xf32> -> vector<8x16xf32>
    %c0_17 = arith.constant 0 : index
    %c0_18 = arith.constant 0 : index
    %30 = vector.load %arg7[%c0_17, %c0_18] : memref<8x1xf32, #tpu.memory_space<vmem>>, vector<8x1xf32>
    %c0_19 = arith.constant 0 : index
    %c0_20 = arith.constant 0 : index
    %31 = vector.load %arg8[%c0_19, %c0_20] : memref<8x1xf32, #tpu.memory_space<vmem>>, vector<8x1xf32>
    %cst_21 = arith.constant dense<0.000000e+00> : vector<8xf32>
    %32 = vector.multi_reduction <add>, %29, %cst_21 [1] : vector<8x16xf32> to vector<8xf32>
    %33 = vector.shape_cast %32 : vector<8xf32> to vector<8x1xf32>
    %cst_22 = arith.constant 1.600000e+01 : f32
    %34 = vector.broadcast %cst_22 : f32 to vector<8x1xf32>
    %35 = arith.divf %33, %34 : vector<8x1xf32>
    %36 = vector.broadcast %35 : vector<8x1xf32> to vector<8x16xf32>
    %37 = arith.subf %29, %36 : vector<8x16xf32>
    %38 = arith.mulf %37, %37 : vector<8x16xf32>
    %cst_23 = arith.constant dense<0.000000e+00> : vector<8xf32>
    %39 = vector.multi_reduction <add>, %38, %cst_23 [1] : vector<8x16xf32> to vector<8xf32>
    %40 = vector.shape_cast %39 : vector<8xf32> to vector<8x1xf32>
    %cst_24 = arith.constant 1.600000e+01 : f32
    %41 = vector.broadcast %cst_24 : f32 to vector<8x1xf32>
    %42 = arith.divf %40, %41 : vector<8x1xf32>
    %43 = vector.broadcast %35 : vector<8x1xf32> to vector<8x16xf32>
    %44 = arith.subf %29, %43 : vector<8x16xf32>
    %cst_25 = arith.constant 9.99999974E-6 : f32
    %45 = vector.broadcast %cst_25 : f32 to vector<8x1xf32>
    %46 = arith.addf %42, %45 : vector<8x1xf32>
    %47 = math.rsqrt %46 : vector<8x1xf32>
    %48 = vector.broadcast %47 : vector<8x1xf32> to vector<8x16xf32>
    %49 = arith.mulf %44, %48 : vector<8x16xf32>
    %50 = vector.broadcast %30 : vector<8x1xf32> to vector<8x16xf32>
    %51 = arith.mulf %49, %50 : vector<8x16xf32>
    %52 = vector.broadcast %31 : vector<8x1xf32> to vector<8x16xf32>
    %53 = arith.addf %51, %52 : vector<8x16xf32>
    %54 = arith.addf %26, %53 : vector<8x16xf32>
    %cst_26 = arith.constant 0.000000e+00 : f32
    %55 = vector.broadcast %cst_26 : f32 to vector<8x16xf32>
    %56 = arith.maximumf %54, %55 : vector<8x16xf32>
    %57 = arith.truncf %56 : vector<8x16xf32> to vector<8x16xbf16>
    %c0_27 = arith.constant 0 : index
    %c0_28 = arith.constant 0 : index
    %58 = vector.load %arg9[%c0_27, %c0_28] : memref<8x16xbf16, #tpu.memory_space<vmem>>, vector<8x16xbf16>
    tpu.vector_store %arg9[%c0_27, %c0_28], %57 {strides = array<i32>} : memref<8x16xbf16, #tpu.memory_space<vmem>>, vector<8x16xbf16>,
    return
  }
  func.func @transform_0(%arg0: i32) -> (i32, i32) {
    %c0_i32 = arith.constant 0 : i32
    %c0_i32_0 = arith.constant 0 : i32
    return %arg0, %c0_i32 : i32, i32
  }
  func.func @transform_1(%arg0: i32) -> (i32, i32) {
    %c0_i32 = arith.constant 0 : i32
    %c0_i32_0 = arith.constant 0 : i32
    %c0_i32_1 = arith.constant 0 : i32
    return %c0_i32, %c0_i32_0 : i32, i32
  }
  func.func @transform_2(%arg0: i32) -> (i32, i32) {
    %c0_i32 = arith.constant 0 : i32
    %c0_i32_0 = arith.constant 0 : i32
    return %arg0, %c0_i32 : i32, i32
  }
  func.func @transform_3(%arg0: i32) -> (i32, i32) {
    %c0_i32 = arith.constant 0 : i32
    %c0_i32_0 = arith.constant 0 : i32
    return %arg0, %c0_i32 : i32, i32
  }
  func.func @transform_4(%arg0: i32) -> (i32, i32) {
    %c0_i32 = arith.constant 0 : i32
    %c0_i32_0 = arith.constant 0 : i32
    return %arg0, %c0_i32 : i32, i32
  }
  func.func @transform_5(%arg0: i32) -> (i32, i32) {
    %c0_i32 = arith.constant 0 : i32
    %c0_i32_0 = arith.constant 0 : i32
    %c0_i32_1 = arith.constant 0 : i32
    return %c0_i32, %c0_i32_0 : i32, i32
  }
  func.func @transform_6(%arg0: i32) -> (i32, i32) {
    %c0_i32 = arith.constant 0 : i32
    %c0_i32_0 = arith.constant 0 : i32
    return %arg0, %c0_i32 : i32, i32
  }
  func.func @transform_7(%arg0: i32) -> (i32, i32) {
    %c0_i32 = arith.constant 0 : i32
    %c0_i32_0 = arith.constant 0 : i32
    return %arg0, %c0_i32 : i32, i32
  }
  func.func @transform_8(%arg0: i32) -> (i32, i32) {
    %c0_i32 = arith.constant 0 : i32
    %c0_i32_0 = arith.constant 0 : i32
    return %arg0, %c0_i32 : i32, i32
  }
}

module attributes {stable_mosaic.version = 11 : i64} {
  func.func @kernel(%arg0: i32, %arg1: memref<8x216xbf16, #tpu.memory_space<vmem>>, %arg2: memref<216x2xbf16, #tpu.memory_space<vmem>>, %arg3: memref<8x1xf32, #tpu.memory_space<vmem>>, %arg4: memref<8x1xf32, #tpu.memory_space<vmem>>, %arg5: memref<8x2xbf16, #tpu.memory_space<vmem>>) attributes {dimension_semantics = [#tpu.dimension_semantics<parallel>], iteration_bounds = array<i64: 2>, scalar_prefetch = 0 : i64, scratch_operands = 0 : i64, tpu.core_type = #tpu.core_type<tc>, window_params = [{transform_indices = @transform_0, window_bounds = array<i64: 8, 216>}, {pipeline_mode = #tpu.pipeline_mode<synchronous>, transform_indices = @transform_1, window_bounds = array<i64: 216, 2>}, {transform_indices = @transform_2, window_bounds = array<i64: 8, 1>}, {transform_indices = @transform_3, window_bounds = array<i64: 8, 1>}, {transform_indices = @transform_4, window_bounds = array<i64: 8, 2>}]} {
    %c0 = arith.constant 0 : index
    %c0_0 = arith.constant 0 : index
    %0 = vector.load %arg1[%c0, %c0_0] : memref<8x216xbf16, #tpu.memory_space<vmem>>, vector<8x216xbf16>
    %c0_1 = arith.constant 0 : index
    %c0_2 = arith.constant 0 : index
    %1 = vector.load %arg2[%c0_1, %c0_2] : memref<216x2xbf16, #tpu.memory_space<vmem>>, vector<216x2xbf16>
    %cst = arith.constant dense<0.000000e+00> : vector<8x2xf32>
    %2 = tpu.matmul %0, %1, %cst {dimension_numbers = #tpu.dot_dimension_numbers<[1], [0], [0], [1], [0, 0, 1, 1], [], []>} : vector<8x216xbf16>, vector<216x2xbf16>, vector<8x2xf32> -> vector<8x2xf32>
    %c0_3 = arith.constant 0 : index
    %c0_4 = arith.constant 0 : index
    %3 = vector.load %arg3[%c0_3, %c0_4] : memref<8x1xf32, #tpu.memory_space<vmem>>, vector<8x1xf32>
    %c0_5 = arith.constant 0 : index
    %c0_6 = arith.constant 0 : index
    %4 = vector.load %arg4[%c0_5, %c0_6] : memref<8x1xf32, #tpu.memory_space<vmem>>, vector<8x1xf32>
    %cst_7 = arith.constant dense<0.000000e+00> : vector<8xf32>
    %5 = vector.multi_reduction <add>, %2, %cst_7 [1] : vector<8x2xf32> to vector<8xf32>
    %6 = vector.shape_cast %5 : vector<8xf32> to vector<8x1xf32>
    %cst_8 = arith.constant 2.000000e+00 : f32
    %7 = vector.broadcast %cst_8 : f32 to vector<8x1xf32>
    %8 = arith.divf %6, %7 : vector<8x1xf32>
    %9 = vector.broadcast %8 : vector<8x1xf32> to vector<8x2xf32>
    %10 = arith.subf %2, %9 : vector<8x2xf32>
    %11 = arith.mulf %10, %10 : vector<8x2xf32>
    %cst_9 = arith.constant dense<0.000000e+00> : vector<8xf32>
    %12 = vector.multi_reduction <add>, %11, %cst_9 [1] : vector<8x2xf32> to vector<8xf32>
    %13 = vector.shape_cast %12 : vector<8xf32> to vector<8x1xf32>
    %cst_10 = arith.constant 2.000000e+00 : f32
    %14 = vector.broadcast %cst_10 : f32 to vector<8x1xf32>
    %15 = arith.divf %13, %14 : vector<8x1xf32>
    %16 = vector.broadcast %8 : vector<8x1xf32> to vector<8x2xf32>
    %17 = arith.subf %2, %16 : vector<8x2xf32>
    %cst_11 = arith.constant 9.99999974E-6 : f32
    %18 = vector.broadcast %cst_11 : f32 to vector<8x1xf32>
    %19 = arith.addf %15, %18 : vector<8x1xf32>
    %20 = math.rsqrt %19 : vector<8x1xf32>
    %21 = vector.broadcast %20 : vector<8x1xf32> to vector<8x2xf32>
    %22 = arith.mulf %17, %21 : vector<8x2xf32>
    %23 = vector.broadcast %3 : vector<8x1xf32> to vector<8x2xf32>
    %24 = arith.mulf %22, %23 : vector<8x2xf32>
    %25 = vector.broadcast %4 : vector<8x1xf32> to vector<8x2xf32>
    %26 = arith.addf %24, %25 : vector<8x2xf32>
    %cst_12 = arith.constant 0.000000e+00 : f32
    %27 = vector.broadcast %cst_12 : f32 to vector<8x2xf32>
    %28 = arith.maximumf %26, %27 : vector<8x2xf32>
    %29 = arith.truncf %28 : vector<8x2xf32> to vector<8x2xbf16>
    %c0_13 = arith.constant 0 : index
    %c0_14 = arith.constant 0 : index
    %30 = vector.load %arg5[%c0_13, %c0_14] : memref<8x2xbf16, #tpu.memory_space<vmem>>, vector<8x2xbf16>
    tpu.vector_store %arg5[%c0_13, %c0_14], %29 {strides = array<i32>} : memref<8x2xbf16, #tpu.memory_space<vmem>>, vector<8x2xbf16>,
    return
  }
  func.func @transform_0(%arg0: i32) -> (i32, i32) {
    %c0_i32 = arith.constant 0 : i32
    %c0_i32_0 = arith.constant 0 : i32
    return %arg0, %c0_i32 : i32, i32
  }
  func.func @transform_1(%arg0: i32) -> (i32, i32) {
    %c0_i32 = arith.constant 0 : i32
    %c0_i32_0 = arith.constant 0 : i32
    %c0_i32_1 = arith.constant 0 : i32
    return %c0_i32, %c0_i32_0 : i32, i32
  }
  func.func @transform_2(%arg0: i32) -> (i32, i32) {
    %c0_i32 = arith.constant 0 : i32
    %c0_i32_0 = arith.constant 0 : i32
    return %arg0, %c0_i32 : i32, i32
  }
  func.func @transform_3(%arg0: i32) -> (i32, i32) {
    %c0_i32 = arith.constant 0 : i32
    %c0_i32_0 = arith.constant 0 : i32
    return %arg0, %c0_i32 : i32, i32
  }
  func.func @transform_4(%arg0: i32) -> (i32, i32) {
    %c0_i32 = arith.constant 0 : i32
    %c0_i32_0 = arith.constant 0 : i32
    return %arg0, %c0_i32 : i32, i32
  }
}

module attributes {stable_mosaic.version = 11 : i64} {
  func.func @kernel(%arg0: i32, %arg1: memref<8x432xbf16, #tpu.memory_space<vmem>>, %arg2: memref<432x2xbf16, #tpu.memory_space<vmem>>, %arg3: memref<8x1xf32, #tpu.memory_space<vmem>>, %arg4: memref<8x1xf32, #tpu.memory_space<vmem>>, %arg5: memref<8x8xbf16, #tpu.memory_space<vmem>>, %arg6: memref<8x2xbf16, #tpu.memory_space<vmem>>, %arg7: memref<8x1xf32, #tpu.memory_space<vmem>>, %arg8: memref<8x1xf32, #tpu.memory_space<vmem>>, %arg9: memref<8x2xbf16, #tpu.memory_space<vmem>>) attributes {dimension_semantics = [#tpu.dimension_semantics<parallel>], iteration_bounds = array<i64: 2>, scalar_prefetch = 0 : i64, scratch_operands = 0 : i64, tpu.core_type = #tpu.core_type<tc>, window_params = [{transform_indices = @transform_0, window_bounds = array<i64: 8, 432>}, {pipeline_mode = #tpu.pipeline_mode<synchronous>, transform_indices = @transform_1, window_bounds = array<i64: 432, 2>}, {transform_indices = @transform_2, window_bounds = array<i64: 8, 1>}, {transform_indices = @transform_3, window_bounds = array<i64: 8, 1>}, {transform_indices = @transform_4, window_bounds = array<i64: 8, 8>}, {pipeline_mode = #tpu.pipeline_mode<synchronous>, transform_indices = @transform_5, window_bounds = array<i64: 8, 2>}, {transform_indices = @transform_6, window_bounds = array<i64: 8, 1>}, {transform_indices = @transform_7, window_bounds = array<i64: 8, 1>}, {transform_indices = @transform_8, window_bounds = array<i64: 8, 2>}]} {
    %c0 = arith.constant 0 : index
    %c0_0 = arith.constant 0 : index
    %0 = vector.load %arg1[%c0, %c0_0] : memref<8x432xbf16, #tpu.memory_space<vmem>>, vector<8x432xbf16>
    %c0_1 = arith.constant 0 : index
    %c0_2 = arith.constant 0 : index
    %1 = vector.load %arg2[%c0_1, %c0_2] : memref<432x2xbf16, #tpu.memory_space<vmem>>, vector<432x2xbf16>
    %cst = arith.constant dense<0.000000e+00> : vector<8x2xf32>
    %2 = tpu.matmul %0, %1, %cst {dimension_numbers = #tpu.dot_dimension_numbers<[1], [0], [0], [1], [0, 0, 1, 1], [], []>} : vector<8x432xbf16>, vector<432x2xbf16>, vector<8x2xf32> -> vector<8x2xf32>
    %c0_3 = arith.constant 0 : index
    %c0_4 = arith.constant 0 : index
    %3 = vector.load %arg3[%c0_3, %c0_4] : memref<8x1xf32, #tpu.memory_space<vmem>>, vector<8x1xf32>
    %c0_5 = arith.constant 0 : index
    %c0_6 = arith.constant 0 : index
    %4 = vector.load %arg4[%c0_5, %c0_6] : memref<8x1xf32, #tpu.memory_space<vmem>>, vector<8x1xf32>
    %cst_7 = arith.constant dense<0.000000e+00> : vector<8xf32>
    %5 = vector.multi_reduction <add>, %2, %cst_7 [1] : vector<8x2xf32> to vector<8xf32>
    %6 = vector.shape_cast %5 : vector<8xf32> to vector<8x1xf32>
    %cst_8 = arith.constant 2.000000e+00 : f32
    %7 = vector.broadcast %cst_8 : f32 to vector<8x1xf32>
    %8 = arith.divf %6, %7 : vector<8x1xf32>
    %9 = vector.broadcast %8 : vector<8x1xf32> to vector<8x2xf32>
    %10 = arith.subf %2, %9 : vector<8x2xf32>
    %11 = arith.mulf %10, %10 : vector<8x2xf32>
    %cst_9 = arith.constant dense<0.000000e+00> : vector<8xf32>
    %12 = vector.multi_reduction <add>, %11, %cst_9 [1] : vector<8x2xf32> to vector<8xf32>
    %13 = vector.shape_cast %12 : vector<8xf32> to vector<8x1xf32>
    %cst_10 = arith.constant 2.000000e+00 : f32
    %14 = vector.broadcast %cst_10 : f32 to vector<8x1xf32>
    %15 = arith.divf %13, %14 : vector<8x1xf32>
    %16 = vector.broadcast %8 : vector<8x1xf32> to vector<8x2xf32>
    %17 = arith.subf %2, %16 : vector<8x2xf32>
    %cst_11 = arith.constant 9.99999974E-6 : f32
    %18 = vector.broadcast %cst_11 : f32 to vector<8x1xf32>
    %19 = arith.addf %15, %18 : vector<8x1xf32>
    %20 = math.rsqrt %19 : vector<8x1xf32>
    %21 = vector.broadcast %20 : vector<8x1xf32> to vector<8x2xf32>
    %22 = arith.mulf %17, %21 : vector<8x2xf32>
    %23 = vector.broadcast %3 : vector<8x1xf32> to vector<8x2xf32>
    %24 = arith.mulf %22, %23 : vector<8x2xf32>
    %25 = vector.broadcast %4 : vector<8x1xf32> to vector<8x2xf32>
    %26 = arith.addf %24, %25 : vector<8x2xf32>
    %c0_12 = arith.constant 0 : index
    %c0_13 = arith.constant 0 : index
    %27 = vector.load %arg5[%c0_12, %c0_13] : memref<8x8xbf16, #tpu.memory_space<vmem>>, vector<8x8xbf16>
    %c0_14 = arith.constant 0 : index
    %c0_15 = arith.constant 0 : index
    %28 = vector.load %arg6[%c0_14, %c0_15] : memref<8x2xbf16, #tpu.memory_space<vmem>>, vector<8x2xbf16>
    %cst_16 = arith.constant dense<0.000000e+00> : vector<8x2xf32>
    %29 = tpu.matmul %27, %28, %cst_16 {dimension_numbers = #tpu.dot_dimension_numbers<[1], [0], [0], [1], [0, 0, 1, 1], [], []>} : vector<8x8xbf16>, vector<8x2xbf16>, vector<8x2xf32> -> vector<8x2xf32>
    %c0_17 = arith.constant 0 : index
    %c0_18 = arith.constant 0 : index
    %30 = vector.load %arg7[%c0_17, %c0_18] : memref<8x1xf32, #tpu.memory_space<vmem>>, vector<8x1xf32>
    %c0_19 = arith.constant 0 : index
    %c0_20 = arith.constant 0 : index
    %31 = vector.load %arg8[%c0_19, %c0_20] : memref<8x1xf32, #tpu.memory_space<vmem>>, vector<8x1xf32>
    %cst_21 = arith.constant dense<0.000000e+00> : vector<8xf32>
    %32 = vector.multi_reduction <add>, %29, %cst_21 [1] : vector<8x2xf32> to vector<8xf32>
    %33 = vector.shape_cast %32 : vector<8xf32> to vector<8x1xf32>
    %cst_22 = arith.constant 2.000000e+00 : f32
    %34 = vector.broadcast %cst_22 : f32 to vector<8x1xf32>
    %35 = arith.divf %33, %34 : vector<8x1xf32>
    %36 = vector.broadcast %35 : vector<8x1xf32> to vector<8x2xf32>
    %37 = arith.subf %29, %36 : vector<8x2xf32>
    %38 = arith.mulf %37, %37 : vector<8x2xf32>
    %cst_23 = arith.constant dense<0.000000e+00> : vector<8xf32>
    %39 = vector.multi_reduction <add>, %38, %cst_23 [1] : vector<8x2xf32> to vector<8xf32>
    %40 = vector.shape_cast %39 : vector<8xf32> to vector<8x1xf32>
    %cst_24 = arith.constant 2.000000e+00 : f32
    %41 = vector.broadcast %cst_24 : f32 to vector<8x1xf32>
    %42 = arith.divf %40, %41 : vector<8x1xf32>
    %43 = vector.broadcast %35 : vector<8x1xf32> to vector<8x2xf32>
    %44 = arith.subf %29, %43 : vector<8x2xf32>
    %cst_25 = arith.constant 9.99999974E-6 : f32
    %45 = vector.broadcast %cst_25 : f32 to vector<8x1xf32>
    %46 = arith.addf %42, %45 : vector<8x1xf32>
    %47 = math.rsqrt %46 : vector<8x1xf32>
    %48 = vector.broadcast %47 : vector<8x1xf32> to vector<8x2xf32>
    %49 = arith.mulf %44, %48 : vector<8x2xf32>
    %50 = vector.broadcast %30 : vector<8x1xf32> to vector<8x2xf32>
    %51 = arith.mulf %49, %50 : vector<8x2xf32>
    %52 = vector.broadcast %31 : vector<8x1xf32> to vector<8x2xf32>
    %53 = arith.addf %51, %52 : vector<8x2xf32>
    %54 = arith.addf %26, %53 : vector<8x2xf32>
    %cst_26 = arith.constant 0.000000e+00 : f32
    %55 = vector.broadcast %cst_26 : f32 to vector<8x2xf32>
    %56 = arith.maximumf %54, %55 : vector<8x2xf32>
    %57 = arith.truncf %56 : vector<8x2xf32> to vector<8x2xbf16>
    %c0_27 = arith.constant 0 : index
    %c0_28 = arith.constant 0 : index
    %58 = vector.load %arg9[%c0_27, %c0_28] : memref<8x2xbf16, #tpu.memory_space<vmem>>, vector<8x2xbf16>
    tpu.vector_store %arg9[%c0_27, %c0_28], %57 {strides = array<i32>} : memref<8x2xbf16, #tpu.memory_space<vmem>>, vector<8x2xbf16>,
    return
  }
  func.func @transform_0(%arg0: i32) -> (i32, i32) {
    %c0_i32 = arith.constant 0 : i32
    %c0_i32_0 = arith.constant 0 : i32
    return %arg0, %c0_i32 : i32, i32
  }
  func.func @transform_1(%arg0: i32) -> (i32, i32) {
    %c0_i32 = arith.constant 0 : i32
    %c0_i32_0 = arith.constant 0 : i32
    %c0_i32_1 = arith.constant 0 : i32
    return %c0_i32, %c0_i32_0 : i32, i32
  }
  func.func @transform_2(%arg0: i32) -> (i32, i32) {
    %c0_i32 = arith.constant 0 : i32
    %c0_i32_0 = arith.constant 0 : i32
    return %arg0, %c0_i32 : i32, i32
  }
  func.func @transform_3(%arg0: i32) -> (i32, i32) {
    %c0_i32 = arith.constant 0 : i32
    %c0_i32_0 = arith.constant 0 : i32
    return %arg0, %c0_i32 : i32, i32
  }
  func.func @transform_4(%arg0: i32) -> (i32, i32) {
    %c0_i32 = arith.constant 0 : i32
    %c0_i32_0 = arith.constant 0 : i32
    return %arg0, %c0_i32 : i32, i32
  }
  func.func @transform_5(%arg0: i32) -> (i32, i32) {
    %c0_i32 = arith.constant 0 : i32
    %c0_i32_0 = arith.constant 0 : i32
    %c0_i32_1 = arith.constant 0 : i32
    return %c0_i32, %c0_i32_0 : i32, i32
  }
  func.func @transform_6(%arg0: i32) -> (i32, i32) {
    %c0_i32 = arith.constant 0 : i32
    %c0_i32_0 = arith.constant 0 : i32
    return %arg0, %c0_i32 : i32, i32
  }
  func.func @transform_7(%arg0: i32) -> (i32, i32) {
    %c0_i32 = arith.constant 0 : i32
    %c0_i32_0 = arith.constant 0 : i32
    return %arg0, %c0_i32 : i32, i32
  }
  func.func @transform_8(%arg0: i32) -> (i32, i32) {
    %c0_i32 = arith.constant 0 : i32
    %c0_i32_0 = arith.constant 0 : i32
    return %arg0, %c0_i32 : i32, i32
  }
}

module attributes {stable_mosaic.version = 11 : i64} {
  func.func @kernel(%arg0: i32, %arg1: memref<16x432xbf16, #tpu.memory_space<vmem>>, %arg2: memref<432x2xbf16, #tpu.memory_space<vmem>>, %arg3: memref<16x1xf32, #tpu.memory_space<vmem>>, %arg4: memref<16x1xf32, #tpu.memory_space<vmem>>, %arg5: memref<16x2xbf16, #tpu.memory_space<vmem>>) attributes {dimension_semantics = [#tpu.dimension_semantics<parallel>], iteration_bounds = array<i64: 2>, scalar_prefetch = 0 : i64, scratch_operands = 0 : i64, tpu.core_type = #tpu.core_type<tc>, window_params = [{transform_indices = @transform_0, window_bounds = array<i64: 16, 432>}, {pipeline_mode = #tpu.pipeline_mode<synchronous>, transform_indices = @transform_1, window_bounds = array<i64: 432, 2>}, {transform_indices = @transform_2, window_bounds = array<i64: 16, 1>}, {transform_indices = @transform_3, window_bounds = array<i64: 16, 1>}, {transform_indices = @transform_4, window_bounds = array<i64: 16, 2>}]} {
    %c0 = arith.constant 0 : index
    %c0_0 = arith.constant 0 : index
    %0 = vector.load %arg1[%c0, %c0_0] : memref<16x432xbf16, #tpu.memory_space<vmem>>, vector<16x432xbf16>
    %c0_1 = arith.constant 0 : index
    %c0_2 = arith.constant 0 : index
    %1 = vector.load %arg2[%c0_1, %c0_2] : memref<432x2xbf16, #tpu.memory_space<vmem>>, vector<432x2xbf16>
    %cst = arith.constant dense<0.000000e+00> : vector<16x2xf32>
    %2 = tpu.matmul %0, %1, %cst {dimension_numbers = #tpu.dot_dimension_numbers<[1], [0], [0], [1], [0, 0, 1, 1], [], []>} : vector<16x432xbf16>, vector<432x2xbf16>, vector<16x2xf32> -> vector<16x2xf32>
    %c0_3 = arith.constant 0 : index
    %c0_4 = arith.constant 0 : index
    %3 = vector.load %arg3[%c0_3, %c0_4] : memref<16x1xf32, #tpu.memory_space<vmem>>, vector<16x1xf32>
    %c0_5 = arith.constant 0 : index
    %c0_6 = arith.constant 0 : index
    %4 = vector.load %arg4[%c0_5, %c0_6] : memref<16x1xf32, #tpu.memory_space<vmem>>, vector<16x1xf32>
    %cst_7 = arith.constant dense<0.000000e+00> : vector<16xf32>
    %5 = vector.multi_reduction <add>, %2, %cst_7 [1] : vector<16x2xf32> to vector<16xf32>
    %6 = vector.shape_cast %5 : vector<16xf32> to vector<16x1xf32>
    %cst_8 = arith.constant 2.000000e+00 : f32
    %7 = vector.broadcast %cst_8 : f32 to vector<16x1xf32>
    %8 = arith.divf %6, %7 : vector<16x1xf32>
    %9 = vector.broadcast %8 : vector<16x1xf32> to vector<16x2xf32>
    %10 = arith.subf %2, %9 : vector<16x2xf32>
    %11 = arith.mulf %10, %10 : vector<16x2xf32>
    %cst_9 = arith.constant dense<0.000000e+00> : vector<16xf32>
    %12 = vector.multi_reduction <add>, %11, %cst_9 [1] : vector<16x2xf32> to vector<16xf32>
    %13 = vector.shape_cast %12 : vector<16xf32> to vector<16x1xf32>
    %cst_10 = arith.constant 2.000000e+00 : f32
    %14 = vector.broadcast %cst_10 : f32 to vector<16x1xf32>
    %15 = arith.divf %13, %14 : vector<16x1xf32>
    %16 = vector.broadcast %8 : vector<16x1xf32> to vector<16x2xf32>
    %17 = arith.subf %2, %16 : vector<16x2xf32>
    %cst_11 = arith.constant 9.99999974E-6 : f32
    %18 = vector.broadcast %cst_11 : f32 to vector<16x1xf32>
    %19 = arith.addf %15, %18 : vector<16x1xf32>
    %20 = math.rsqrt %19 : vector<16x1xf32>
    %21 = vector.broadcast %20 : vector<16x1xf32> to vector<16x2xf32>
    %22 = arith.mulf %17, %21 : vector<16x2xf32>
    %23 = vector.broadcast %3 : vector<16x1xf32> to vector<16x2xf32>
    %24 = arith.mulf %22, %23 : vector<16x2xf32>
    %25 = vector.broadcast %4 : vector<16x1xf32> to vector<16x2xf32>
    %26 = arith.addf %24, %25 : vector<16x2xf32>
    %cst_12 = arith.constant 0.000000e+00 : f32
    %27 = vector.broadcast %cst_12 : f32 to vector<16x2xf32>
    %28 = arith.maximumf %26, %27 : vector<16x2xf32>
    %29 = arith.truncf %28 : vector<16x2xf32> to vector<16x2xbf16>
    %c0_13 = arith.constant 0 : index
    %c0_14 = arith.constant 0 : index
    %30 = vector.load %arg5[%c0_13, %c0_14] : memref<16x2xbf16, #tpu.memory_space<vmem>>, vector<16x2xbf16>
    tpu.vector_store %arg5[%c0_13, %c0_14], %29 {strides = array<i32>} : memref<16x2xbf16, #tpu.memory_space<vmem>>, vector<16x2xbf16>,
    return
  }
  func.func @transform_0(%arg0: i32) -> (i32, i32) {
    %c0_i32 = arith.constant 0 : i32
    %c0_i32_0 = arith.constant 0 : i32
    return %arg0, %c0_i32 : i32, i32
  }
  func.func @transform_1(%arg0: i32) -> (i32, i32) {
    %c0_i32 = arith.constant 0 : i32
    %c0_i32_0 = arith.constant 0 : i32
    %c0_i32_1 = arith.constant 0 : i32
    return %c0_i32, %c0_i32_0 : i32, i32
  }
  func.func @transform_2(%arg0: i32) -> (i32, i32) {
    %c0_i32 = arith.constant 0 : i32
    %c0_i32_0 = arith.constant 0 : i32
    return %arg0, %c0_i32 : i32, i32
  }
  func.func @transform_3(%arg0: i32) -> (i32, i32) {
    %c0_i32 = arith.constant 0 : i32
    %c0_i32_0 = arith.constant 0 : i32
    return %arg0, %c0_i32 : i32, i32
  }
  func.func @transform_4(%arg0: i32) -> (i32, i32) {
    %c0_i32 = arith.constant 0 : i32
    %c0_i32_0 = arith.constant 0 : i32
    return %arg0, %c0_i32 : i32, i32
  }
}

module attributes {stable_mosaic.version = 11 : i64} {
  func.func @kernel(%arg0: i32, %arg1: memref<16x864xbf16, #tpu.memory_space<vmem>>, %arg2: memref<864x2xbf16, #tpu.memory_space<vmem>>, %arg3: memref<16x1xf32, #tpu.memory_space<vmem>>, %arg4: memref<16x1xf32, #tpu.memory_space<vmem>>, %arg5: memref<16x16xbf16, #tpu.memory_space<vmem>>, %arg6: memref<16x2xbf16, #tpu.memory_space<vmem>>, %arg7: memref<16x1xf32, #tpu.memory_space<vmem>>, %arg8: memref<16x1xf32, #tpu.memory_space<vmem>>, %arg9: memref<16x2xbf16, #tpu.memory_space<vmem>>) attributes {dimension_semantics = [#tpu.dimension_semantics<parallel>], iteration_bounds = array<i64: 2>, scalar_prefetch = 0 : i64, scratch_operands = 0 : i64, tpu.core_type = #tpu.core_type<tc>, window_params = [{transform_indices = @transform_0, window_bounds = array<i64: 16, 864>}, {pipeline_mode = #tpu.pipeline_mode<synchronous>, transform_indices = @transform_1, window_bounds = array<i64: 864, 2>}, {transform_indices = @transform_2, window_bounds = array<i64: 16, 1>}, {transform_indices = @transform_3, window_bounds = array<i64: 16, 1>}, {transform_indices = @transform_4, window_bounds = array<i64: 16, 16>}, {pipeline_mode = #tpu.pipeline_mode<synchronous>, transform_indices = @transform_5, window_bounds = array<i64: 16, 2>}, {transform_indices = @transform_6, window_bounds = array<i64: 16, 1>}, {transform_indices = @transform_7, window_bounds = array<i64: 16, 1>}, {transform_indices = @transform_8, window_bounds = array<i64: 16, 2>}]} {
    %c0 = arith.constant 0 : index
    %c0_0 = arith.constant 0 : index
    %0 = vector.load %arg1[%c0, %c0_0] : memref<16x864xbf16, #tpu.memory_space<vmem>>, vector<16x864xbf16>
    %c0_1 = arith.constant 0 : index
    %c0_2 = arith.constant 0 : index
    %1 = vector.load %arg2[%c0_1, %c0_2] : memref<864x2xbf16, #tpu.memory_space<vmem>>, vector<864x2xbf16>
    %cst = arith.constant dense<0.000000e+00> : vector<16x2xf32>
    %2 = tpu.matmul %0, %1, %cst {dimension_numbers = #tpu.dot_dimension_numbers<[1], [0], [0], [1], [0, 0, 1, 1], [], []>} : vector<16x864xbf16>, vector<864x2xbf16>, vector<16x2xf32> -> vector<16x2xf32>
    %c0_3 = arith.constant 0 : index
    %c0_4 = arith.constant 0 : index
    %3 = vector.load %arg3[%c0_3, %c0_4] : memref<16x1xf32, #tpu.memory_space<vmem>>, vector<16x1xf32>
    %c0_5 = arith.constant 0 : index
    %c0_6 = arith.constant 0 : index
    %4 = vector.load %arg4[%c0_5, %c0_6] : memref<16x1xf32, #tpu.memory_space<vmem>>, vector<16x1xf32>
    %cst_7 = arith.constant dense<0.000000e+00> : vector<16xf32>
    %5 = vector.multi_reduction <add>, %2, %cst_7 [1] : vector<16x2xf32> to vector<16xf32>
    %6 = vector.shape_cast %5 : vector<16xf32> to vector<16x1xf32>
    %cst_8 = arith.constant 2.000000e+00 : f32
    %7 = vector.broadcast %cst_8 : f32 to vector<16x1xf32>
    %8 = arith.divf %6, %7 : vector<16x1xf32>
    %9 = vector.broadcast %8 : vector<16x1xf32> to vector<16x2xf32>
    %10 = arith.subf %2, %9 : vector<16x2xf32>
    %11 = arith.mulf %10, %10 : vector<16x2xf32>
    %cst_9 = arith.constant dense<0.000000e+00> : vector<16xf32>
    %12 = vector.multi_reduction <add>, %11, %cst_9 [1] : vector<16x2xf32> to vector<16xf32>
    %13 = vector.shape_cast %12 : vector<16xf32> to vector<16x1xf32>
    %cst_10 = arith.constant 2.000000e+00 : f32
    %14 = vector.broadcast %cst_10 : f32 to vector<16x1xf32>
    %15 = arith.divf %13, %14 : vector<16x1xf32>
    %16 = vector.broadcast %8 : vector<16x1xf32> to vector<16x2xf32>
    %17 = arith.subf %2, %16 : vector<16x2xf32>
    %cst_11 = arith.constant 9.99999974E-6 : f32
    %18 = vector.broadcast %cst_11 : f32 to vector<16x1xf32>
    %19 = arith.addf %15, %18 : vector<16x1xf32>
    %20 = math.rsqrt %19 : vector<16x1xf32>
    %21 = vector.broadcast %20 : vector<16x1xf32> to vector<16x2xf32>
    %22 = arith.mulf %17, %21 : vector<16x2xf32>
    %23 = vector.broadcast %3 : vector<16x1xf32> to vector<16x2xf32>
    %24 = arith.mulf %22, %23 : vector<16x2xf32>
    %25 = vector.broadcast %4 : vector<16x1xf32> to vector<16x2xf32>
    %26 = arith.addf %24, %25 : vector<16x2xf32>
    %c0_12 = arith.constant 0 : index
    %c0_13 = arith.constant 0 : index
    %27 = vector.load %arg5[%c0_12, %c0_13] : memref<16x16xbf16, #tpu.memory_space<vmem>>, vector<16x16xbf16>
    %c0_14 = arith.constant 0 : index
    %c0_15 = arith.constant 0 : index
    %28 = vector.load %arg6[%c0_14, %c0_15] : memref<16x2xbf16, #tpu.memory_space<vmem>>, vector<16x2xbf16>
    %cst_16 = arith.constant dense<0.000000e+00> : vector<16x2xf32>
    %29 = tpu.matmul %27, %28, %cst_16 {dimension_numbers = #tpu.dot_dimension_numbers<[1], [0], [0], [1], [0, 0, 1, 1], [], []>} : vector<16x16xbf16>, vector<16x2xbf16>, vector<16x2xf32> -> vector<16x2xf32>
    %c0_17 = arith.constant 0 : index
    %c0_18 = arith.constant 0 : index
    %30 = vector.load %arg7[%c0_17, %c0_18] : memref<16x1xf32, #tpu.memory_space<vmem>>, vector<16x1xf32>
    %c0_19 = arith.constant 0 : index
    %c0_20 = arith.constant 0 : index
    %31 = vector.load %arg8[%c0_19, %c0_20] : memref<16x1xf32, #tpu.memory_space<vmem>>, vector<16x1xf32>
    %cst_21 = arith.constant dense<0.000000e+00> : vector<16xf32>
    %32 = vector.multi_reduction <add>, %29, %cst_21 [1] : vector<16x2xf32> to vector<16xf32>
    %33 = vector.shape_cast %32 : vector<16xf32> to vector<16x1xf32>
    %cst_22 = arith.constant 2.000000e+00 : f32
    %34 = vector.broadcast %cst_22 : f32 to vector<16x1xf32>
    %35 = arith.divf %33, %34 : vector<16x1xf32>
    %36 = vector.broadcast %35 : vector<16x1xf32> to vector<16x2xf32>
    %37 = arith.subf %29, %36 : vector<16x2xf32>
    %38 = arith.mulf %37, %37 : vector<16x2xf32>
    %cst_23 = arith.constant dense<0.000000e+00> : vector<16xf32>
    %39 = vector.multi_reduction <add>, %38, %cst_23 [1] : vector<16x2xf32> to vector<16xf32>
    %40 = vector.shape_cast %39 : vector<16xf32> to vector<16x1xf32>
    %cst_24 = arith.constant 2.000000e+00 : f32
    %41 = vector.broadcast %cst_24 : f32 to vector<16x1xf32>
    %42 = arith.divf %40, %41 : vector<16x1xf32>
    %43 = vector.broadcast %35 : vector<16x1xf32> to vector<16x2xf32>
    %44 = arith.subf %29, %43 : vector<16x2xf32>
    %cst_25 = arith.constant 9.99999974E-6 : f32
    %45 = vector.broadcast %cst_25 : f32 to vector<16x1xf32>
    %46 = arith.addf %42, %45 : vector<16x1xf32>
    %47 = math.rsqrt %46 : vector<16x1xf32>
    %48 = vector.broadcast %47 : vector<16x1xf32> to vector<16x2xf32>
    %49 = arith.mulf %44, %48 : vector<16x2xf32>
    %50 = vector.broadcast %30 : vector<16x1xf32> to vector<16x2xf32>
    %51 = arith.mulf %49, %50 : vector<16x2xf32>
    %52 = vector.broadcast %31 : vector<16x1xf32> to vector<16x2xf32>
    %53 = arith.addf %51, %52 : vector<16x2xf32>
    %54 = arith.addf %26, %53 : vector<16x2xf32>
    %cst_26 = arith.constant 0.000000e+00 : f32
    %55 = vector.broadcast %cst_26 : f32 to vector<16x2xf32>
    %56 = arith.maximumf %54, %55 : vector<16x2xf32>
    %57 = arith.truncf %56 : vector<16x2xf32> to vector<16x2xbf16>
    %c0_27 = arith.constant 0 : index
    %c0_28 = arith.constant 0 : index
    %58 = vector.load %arg9[%c0_27, %c0_28] : memref<16x2xbf16, #tpu.memory_space<vmem>>, vector<16x2xbf16>
    tpu.vector_store %arg9[%c0_27, %c0_28], %57 {strides = array<i32>} : memref<16x2xbf16, #tpu.memory_space<vmem>>, vector<16x2xbf16>,
    return
  }
  func.func @transform_0(%arg0: i32) -> (i32, i32) {
    %c0_i32 = arith.constant 0 : i32
    %c0_i32_0 = arith.constant 0 : i32
    return %arg0, %c0_i32 : i32, i32
  }
  func.func @transform_1(%arg0: i32) -> (i32, i32) {
    %c0_i32 = arith.constant 0 : i32
    %c0_i32_0 = arith.constant 0 : i32
    %c0_i32_1 = arith.constant 0 : i32
    return %c0_i32, %c0_i32_0 : i32, i32
  }
  func.func @transform_2(%arg0: i32) -> (i32, i32) {
    %c0_i32 = arith.constant 0 : i32
    %c0_i32_0 = arith.constant 0 : i32
    return %arg0, %c0_i32 : i32, i32
  }
  func.func @transform_3(%arg0: i32) -> (i32, i32) {
    %c0_i32 = arith.constant 0 : i32
    %c0_i32_0 = arith.constant 0 : i32
    return %arg0, %c0_i32 : i32, i32
  }
  func.func @transform_4(%arg0: i32) -> (i32, i32) {
    %c0_i32 = arith.constant 0 : i32
    %c0_i32_0 = arith.constant 0 : i32
    return %arg0, %c0_i32 : i32, i32
  }
  func.func @transform_5(%arg0: i32) -> (i32, i32) {
    %c0_i32 = arith.constant 0 : i32
    %c0_i32_0 = arith.constant 0 : i32
    %c0_i32_1 = arith.constant 0 : i32
    return %c0_i32, %c0_i32_0 : i32, i32
  }
  func.func @transform_6(%arg0: i32) -> (i32, i32) {
    %c0_i32 = arith.constant 0 : i32
    %c0_i32_0 = arith.constant 0 : i32
    return %arg0, %c0_i32 : i32, i32
  }
  func.func @transform_7(%arg0: i32) -> (i32, i32) {
    %c0_i32 = arith.constant 0 : i32
    %c0_i32_0 = arith.constant 0 : i32
    return %arg0, %c0_i32 : i32, i32
  }
  func.func @transform_8(%arg0: i32) -> (i32, i32) {
    %c0_i32 = arith.constant 0 : i32
    %c0_i32_0 = arith.constant 0 : i32
    return %arg0, %c0_i32 : i32, i32
  }
}

module attributes {stable_mosaic.version = 11 : i64} {
  func.func @_head_kernel(%arg0: i32, %arg1: memref<32x2x1xbf16, #tpu.memory_space<vmem>>, %arg2: memref<16x32xbf16, #tpu.memory_space<vmem>>, %arg3: memref<16x1xf32, #tpu.memory_space<vmem>>, %arg4: memref<2x16xbf16, #tpu.memory_space<vmem>>, %arg5: memref<2x1xf32, #tpu.memory_space<vmem>>, %arg6: memref<32x32xbf16, #tpu.memory_space<vmem>>, %arg7: memref<32x1xf32, #tpu.memory_space<vmem>>, %arg8: memref<32x1xf32, #tpu.memory_space<vmem>>, %arg9: memref<32x1xf32, #tpu.memory_space<vmem>>, %arg10: memref<512x32xbf16, #tpu.memory_space<vmem>>, %arg11: memref<512x1xf32, #tpu.memory_space<vmem>>, %arg12: memref<512x2xf32, #tpu.memory_space<vmem>>, %arg13: memref<2x2xf32, #tpu.memory_space<vmem>>) attributes {dimension_semantics = [#tpu.dimension_semantics<arbitrary>], iteration_bounds = array<i64: 1>, scalar_prefetch = 0 : i64, scratch_operands = 0 : i64, tpu.core_type = #tpu.core_type<tc>, window_params = [{pipeline_mode = #tpu.pipeline_mode<synchronous>, transform_indices = @transform_0, window_bounds = array<i64: 32, 2, 1>}, {pipeline_mode = #tpu.pipeline_mode<synchronous>, transform_indices = @transform_1, window_bounds = array<i64: 16, 32>}, {pipeline_mode = #tpu.pipeline_mode<synchronous>, transform_indices = @transform_2, window_bounds = array<i64: 16, 1>}, {pipeline_mode = #tpu.pipeline_mode<synchronous>, transform_indices = @transform_3, window_bounds = array<i64: 2, 16>}, {pipeline_mode = #tpu.pipeline_mode<synchronous>, transform_indices = @transform_4, window_bounds = array<i64: 2, 1>}, {pipeline_mode = #tpu.pipeline_mode<synchronous>, transform_indices = @transform_5, window_bounds = array<i64: 32, 32>}, {pipeline_mode = #tpu.pipeline_mode<synchronous>, transform_indices = @transform_6, window_bounds = array<i64: 32, 1>}, {pipeline_mode = #tpu.pipeline_mode<synchronous>, transform_indices = @transform_7, window_bounds = array<i64: 32, 1>}, {pipeline_mode = #tpu.pipeline_mode<synchronous>, transform_indices = @transform_8, window_bounds = array<i64: 32, 1>}, {pipeline_mode = #tpu.pipeline_mode<synchronous>, transform_indices = @transform_9, window_bounds = array<i64: 512, 32>}, {pipeline_mode = #tpu.pipeline_mode<synchronous>, transform_indices = @transform_10, window_bounds = array<i64: 512, 1>}, {pipeline_mode = #tpu.pipeline_mode<synchronous>, transform_indices = @transform_11, window_bounds = array<i64: 512, 2>}, {pipeline_mode = #tpu.pipeline_mode<synchronous>, transform_indices = @transform_12, window_bounds = array<i64: 2, 2>}]} {
    %c0 = arith.constant 0 : index
    %c0_0 = arith.constant 0 : index
    %c0_1 = arith.constant 0 : index
    %0 = vector.load %arg1[%c0, %c0_0, %c0_1] : memref<32x2x1xbf16, #tpu.memory_space<vmem>>, vector<32x2x1xbf16>
    %1 = arith.extf %0 : vector<32x2x1xbf16> to vector<32x2x1xf32>
    %cst = arith.constant dense<0.000000e+00> : vector<32x2xf32>
    %2 = vector.multi_reduction <add>, %1, %cst [2] : vector<32x2x1xf32> to vector<32x2xf32>
    %cst_2 = arith.constant 1.000000e+00 : f32
    %3 = vector.broadcast %cst_2 : f32 to vector<32x2xf32>
    %4 = arith.divf %2, %3 : vector<32x2xf32>
    %5 = arith.truncf %4 : vector<32x2xf32> to vector<32x2xbf16>
    %c0_3 = arith.constant 0 : index
    %c0_4 = arith.constant 0 : index
    %6 = vector.load %arg2[%c0_3, %c0_4] : memref<16x32xbf16, #tpu.memory_space<vmem>>, vector<16x32xbf16>
    %cst_5 = arith.constant dense<0.000000e+00> : vector<16x2xf32>
    %7 = tpu.matmul %6, %5, %cst_5 {dimension_numbers = #tpu.dot_dimension_numbers<[1], [0], [0], [1], [0, 0, 1, 1], [], []>} : vector<16x32xbf16>, vector<32x2xbf16>, vector<16x2xf32> -> vector<16x2xf32>
    %c0_6 = arith.constant 0 : index
    %c0_7 = arith.constant 0 : index
    %8 = vector.load %arg3[%c0_6, %c0_7] : memref<16x1xf32, #tpu.memory_space<vmem>>, vector<16x1xf32>
    %9 = vector.broadcast %8 : vector<16x1xf32> to vector<16x2xf32>
    %10 = arith.addf %7, %9 : vector<16x2xf32>
    %cst_8 = arith.constant 0.000000e+00 : f32
    %11 = vector.broadcast %cst_8 : f32 to vector<16x2xf32>
    %12 = arith.maximumf %10, %11 : vector<16x2xf32>
    %c0_9 = arith.constant 0 : index
    %c0_10 = arith.constant 0 : index
    %13 = vector.load %arg4[%c0_9, %c0_10] : memref<2x16xbf16, #tpu.memory_space<vmem>>, vector<2x16xbf16>
    %14 = arith.truncf %12 : vector<16x2xf32> to vector<16x2xbf16>
    %cst_11 = arith.constant dense<0.000000e+00> : vector<2x2xf32>
    %15 = tpu.matmul %13, %14, %cst_11 {dimension_numbers = #tpu.dot_dimension_numbers<[1], [0], [0], [1], [0, 0, 1, 1], [], []>} : vector<2x16xbf16>, vector<16x2xbf16>, vector<2x2xf32> -> vector<2x2xf32>
    %c0_12 = arith.constant 0 : index
    %c0_13 = arith.constant 0 : index
    %16 = vector.load %arg5[%c0_12, %c0_13] : memref<2x1xf32, #tpu.memory_space<vmem>>, vector<2x1xf32>
    %17 = vector.broadcast %16 : vector<2x1xf32> to vector<2x2xf32>
    %18 = arith.addf %15, %17 : vector<2x2xf32>
    %c0_14 = arith.constant 0 : index
    %c0_15 = arith.constant 0 : index
    %19 = vector.load %arg13[%c0_14, %c0_15] : memref<2x2xf32, #tpu.memory_space<vmem>>, vector<2x2xf32>
    tpu.vector_store %arg13[%c0_14, %c0_15], %18 {strides = array<i32>} : memref<2x2xf32, #tpu.memory_space<vmem>>, vector<2x2xf32>,
    %c0_16 = arith.constant 0 : index
    %c0_17 = arith.constant 0 : index
    %20 = vector.load %arg6[%c0_16, %c0_17] : memref<32x32xbf16, #tpu.memory_space<vmem>>, vector<32x32xbf16>
    %cst_18 = arith.constant dense<0.000000e+00> : vector<32x2xf32>
    %21 = tpu.matmul %20, %5, %cst_18 {dimension_numbers = #tpu.dot_dimension_numbers<[1], [0], [0], [1], [0, 0, 1, 1], [], []>} : vector<32x32xbf16>, vector<32x2xbf16>, vector<32x2xf32> -> vector<32x2xf32>
    %c0_19 = arith.constant 0 : index
    %c0_20 = arith.constant 0 : index
    %22 = vector.load %arg7[%c0_19, %c0_20] : memref<32x1xf32, #tpu.memory_space<vmem>>, vector<32x1xf32>
    %23 = vector.broadcast %22 : vector<32x1xf32> to vector<32x2xf32>
    %24 = arith.addf %21, %23 : vector<32x2xf32>
    %c0_21 = arith.constant 0 : index
    %c0_22 = arith.constant 0 : index
    %25 = vector.load %arg8[%c0_21, %c0_22] : memref<32x1xf32, #tpu.memory_space<vmem>>, vector<32x1xf32>
    %c0_23 = arith.constant 0 : index
    %c0_24 = arith.constant 0 : index
    %26 = vector.load %arg9[%c0_23, %c0_24] : memref<32x1xf32, #tpu.memory_space<vmem>>, vector<32x1xf32>
    %cst_25 = arith.constant dense<0.000000e+00> : vector<32xf32>
    %27 = vector.multi_reduction <add>, %24, %cst_25 [1] : vector<32x2xf32> to vector<32xf32>
    %28 = vector.shape_cast %27 : vector<32xf32> to vector<32x1xf32>
    %cst_26 = arith.constant 2.000000e+00 : f32
    %29 = vector.broadcast %cst_26 : f32 to vector<32x1xf32>
    %30 = arith.divf %28, %29 : vector<32x1xf32>
    %31 = vector.broadcast %30 : vector<32x1xf32> to vector<32x2xf32>
    %32 = arith.subf %24, %31 : vector<32x2xf32>
    %33 = arith.mulf %32, %32 : vector<32x2xf32>
    %cst_27 = arith.constant dense<0.000000e+00> : vector<32xf32>
    %34 = vector.multi_reduction <add>, %33, %cst_27 [1] : vector<32x2xf32> to vector<32xf32>
    %35 = vector.shape_cast %34 : vector<32xf32> to vector<32x1xf32>
    %cst_28 = arith.constant 2.000000e+00 : f32
    %36 = vector.broadcast %cst_28 : f32 to vector<32x1xf32>
    %37 = arith.divf %35, %36 : vector<32x1xf32>
    %38 = vector.broadcast %30 : vector<32x1xf32> to vector<32x2xf32>
    %39 = arith.subf %24, %38 : vector<32x2xf32>
    %cst_29 = arith.constant 9.99999974E-6 : f32
    %40 = vector.broadcast %cst_29 : f32 to vector<32x1xf32>
    %41 = arith.addf %37, %40 : vector<32x1xf32>
    %42 = math.rsqrt %41 : vector<32x1xf32>
    %43 = vector.broadcast %42 : vector<32x1xf32> to vector<32x2xf32>
    %44 = arith.mulf %39, %43 : vector<32x2xf32>
    %45 = vector.broadcast %25 : vector<32x1xf32> to vector<32x2xf32>
    %46 = arith.mulf %44, %45 : vector<32x2xf32>
    %47 = vector.broadcast %26 : vector<32x1xf32> to vector<32x2xf32>
    %48 = arith.addf %46, %47 : vector<32x2xf32>
    %cst_30 = arith.constant 0.000000e+00 : f32
    %49 = vector.broadcast %cst_30 : f32 to vector<32x2xf32>
    %50 = arith.maximumf %48, %49 : vector<32x2xf32>
    %c0_31 = arith.constant 0 : index
    %c0_32 = arith.constant 0 : index
    %51 = vector.load %arg10[%c0_31, %c0_32] : memref<512x32xbf16, #tpu.memory_space<vmem>>, vector<512x32xbf16>
    %52 = arith.truncf %50 : vector<32x2xf32> to vector<32x2xbf16>
    %cst_33 = arith.constant dense<0.000000e+00> : vector<512x2xf32>
    %53 = tpu.matmul %51, %52, %cst_33 {dimension_numbers = #tpu.dot_dimension_numbers<[1], [0], [0], [1], [0, 0, 1, 1], [], []>} : vector<512x32xbf16>, vector<32x2xbf16>, vector<512x2xf32> -> vector<512x2xf32>
    %c0_34 = arith.constant 0 : index
    %c0_35 = arith.constant 0 : index
    %54 = vector.load %arg11[%c0_34, %c0_35] : memref<512x1xf32, #tpu.memory_space<vmem>>, vector<512x1xf32>
    %55 = vector.broadcast %54 : vector<512x1xf32> to vector<512x2xf32>
    %56 = arith.addf %53, %55 : vector<512x2xf32>
    %c0_36 = arith.constant 0 : index
    %c0_37 = arith.constant 0 : index
    %57 = vector.load %arg12[%c0_36, %c0_37] : memref<512x2xf32, #tpu.memory_space<vmem>>, vector<512x2xf32>
    tpu.vector_store %arg12[%c0_36, %c0_37], %56 {strides = array<i32>} : memref<512x2xf32, #tpu.memory_space<vmem>>, vector<512x2xf32>,
    return
  }
  func.func @transform_0(%arg0: i32) -> (i32, i32, i32) {
    %c0_i32 = arith.constant 0 : i32
    %c0_i32_0 = arith.constant 0 : i32
    %c0_i32_1 = arith.constant 0 : i32
    %c0_i32_2 = arith.constant 0 : i32
    return %c0_i32, %c0_i32_0, %c0_i32_1 : i32, i32, i32
  }
  func.func @transform_1(%arg0: i32) -> (i32, i32) {
    %c0_i32 = arith.constant 0 : i32
    %c0_i32_0 = arith.constant 0 : i32
    %c0_i32_1 = arith.constant 0 : i32
    return %c0_i32, %c0_i32_0 : i32, i32
  }
  func.func @transform_2(%arg0: i32) -> (i32, i32) {
    %c0_i32 = arith.constant 0 : i32
    %c0_i32_0 = arith.constant 0 : i32
    %c0_i32_1 = arith.constant 0 : i32
    return %c0_i32, %c0_i32_0 : i32, i32
  }
  func.func @transform_3(%arg0: i32) -> (i32, i32) {
    %c0_i32 = arith.constant 0 : i32
    %c0_i32_0 = arith.constant 0 : i32
    %c0_i32_1 = arith.constant 0 : i32
    return %c0_i32, %c0_i32_0 : i32, i32
  }
  func.func @transform_4(%arg0: i32) -> (i32, i32) {
    %c0_i32 = arith.constant 0 : i32
    %c0_i32_0 = arith.constant 0 : i32
    %c0_i32_1 = arith.constant 0 : i32
    return %c0_i32, %c0_i32_0 : i32, i32
  }
  func.func @transform_5(%arg0: i32) -> (i32, i32) {
    %c0_i32 = arith.constant 0 : i32
    %c0_i32_0 = arith.constant 0 : i32
    %c0_i32_1 = arith.constant 0 : i32
    return %c0_i32, %c0_i32_0 : i32, i32
  }
  func.func @transform_6(%arg0: i32) -> (i32, i32) {
    %c0_i32 = arith.constant 0 : i32
    %c0_i32_0 = arith.constant 0 : i32
    %c0_i32_1 = arith.constant 0 : i32
    return %c0_i32, %c0_i32_0 : i32, i32
  }
  func.func @transform_7(%arg0: i32) -> (i32, i32) {
    %c0_i32 = arith.constant 0 : i32
    %c0_i32_0 = arith.constant 0 : i32
    %c0_i32_1 = arith.constant 0 : i32
    return %c0_i32, %c0_i32_0 : i32, i32
  }
  func.func @transform_8(%arg0: i32) -> (i32, i32) {
    %c0_i32 = arith.constant 0 : i32
    %c0_i32_0 = arith.constant 0 : i32
    %c0_i32_1 = arith.constant 0 : i32
    return %c0_i32, %c0_i32_0 : i32, i32
  }
  func.func @transform_9(%arg0: i32) -> (i32, i32) {
    %c0_i32 = arith.constant 0 : i32
    %c0_i32_0 = arith.constant 0 : i32
    %c0_i32_1 = arith.constant 0 : i32
    return %c0_i32, %c0_i32_0 : i32, i32
  }
  func.func @transform_10(%arg0: i32) -> (i32, i32) {
    %c0_i32 = arith.constant 0 : i32
    %c0_i32_0 = arith.constant 0 : i32
    %c0_i32_1 = arith.constant 0 : i32
    return %c0_i32, %c0_i32_0 : i32, i32
  }
  func.func @transform_11(%arg0: i32) -> (i32, i32) {
    %c0_i32 = arith.constant 0 : i32
    %c0_i32_0 = arith.constant 0 : i32
    %c0_i32_1 = arith.constant 0 : i32
    return %c0_i32, %c0_i32_0 : i32, i32
  }
  func.func @transform_12(%arg0: i32) -> (i32, i32) {
    %c0_i32 = arith.constant 0 : i32
    %c0_i32_0 = arith.constant 0 : i32
    %c0_i32_1 = arith.constant 0 : i32
    return %c0_i32, %c0_i32_0 : i32, i32
  }
}

</mosaic_0001>

<llo_original>
// kernel: _lambda_.12
$region0: #{_lambda_.12}
  #allocation0 [shape = 'u32[]', space=smem, size = 0x4, offset = 0x4, fixed_abs, tag = 'smem constant byte address 0x4 - core index']
  #allocation1 [shape = 'u32[144,128]{1,0:T(1,128)}', space=vmem, size = 0x12000, scoped, tag = 'internal scratch']
  %s0 = inlined_call_operand.vmem [shape: bf16[8,8,8,8], index: 0, kind: input, shape index: {}]
  %s1 = inlined_call_operand.vmem [shape: bf16[8,8,8,8], index: 1, kind: output, shape index: {}]
  %s2 = sld [smem:[#allocation0]]
  $region37: #{_lambda_.12} parent=0
    _
  %s4 = ssub.s32 1, %s2
  %s5 = scalar_select 0, %s4, %s2
  loop: start=0, step=1, limit=4
  $region2: #{_lambda_.12} parent=0 // loop_pre_header
    _
  $region3: #{_lambda_.12} parent=0 // loop_header
    %s7 = sphi 0, %s11
    %p8 = scmp.ge.s32.totalorder %s7, 4
    %s17 = sphi 0, %s19
    %s20 = sphi 0, %s17
    %s21 = sphi 0, %s20
    %s37 = sphi 0, %s21
    %s43 = sphi 0, %s45
    %s46 = sphi 0, %s43
    %s47 = sphi 0, %s46
    %s63 = sphi 0, %s47
  $region4: #{_lambda_.12} parent=0 // loop_header_branch
    %10 = sbr.rel (%p8) target = $region8
  $region5: #{_lambda_.12} parent=0 // loop_body
    %s12 = ssub.s32 %s7, 1
    %s13 = ssub.s32 %s7, 2
    %s14 = sadd.s32 %s7, 1
    %s15 = ssub.s32 %s7, %s14
    %p16 = scmp.eq.s32.totalorder %s15, 0
    %s18 = sadd.s32 %s17, 1
    %s19 = scalar_select %p16, %s17, %s18
    %p22 = pneg %p16
    %p23 = scmp.eq.s32.totalorder %s7, 1
    %p24 = por %p22, %p23
    %p25 = scmp.ne.s32.totalorder %s17, %s20
    %p26 = scmp.eq.s32.totalorder %s7, 0
    %p27 = por %p25, %p26
    %p28 = scmp.ne.s32.totalorder %s17, %s20
    %p29 = scmp.eq.s32.totalorder %s12, 1
    %p30 = por %p28, %p29
    %p31 = scmp.ne.s32.totalorder %s20, %s21
    %p32 = scmp.eq.s32.totalorder %s12, 0
    %p33 = por %p31, %p32
    %p34 = scmp.ne.s32.totalorder %s20, %s21
    %p35 = scmp.eq.s32.totalorder %s13, 1
    %p36 = por %p34, %p35
    %p38 = scmp.ne.s32.totalorder %s21, %s37
    %p39 = scmp.eq.s32.totalorder %s13, 0
    %p40 = por %p38, %p39
    %s41 = ssub.s32 %s7, %s14
    %p42 = scmp.eq.s32.totalorder %s41, 0
    %s44 = sadd.s32 %s43, 1
    %s45 = scalar_select %p42, %s43, %s44
    %p48 = pneg %p42
    %p49 = scmp.eq.s32.totalorder %s7, 1
    %p50 = por %p48, %p49
    %p51 = scmp.ne.s32.totalorder %s43, %s46
    %p52 = scmp.eq.s32.totalorder %s7, 0
    %p53 = por %p51, %p52
    %p54 = scmp.ne.s32.totalorder %s43, %s46
    %p55 = scmp.eq.s32.totalorder %s12, 1
    %p56 = por %p54, %p55
    %p57 = scmp.ne.s32.totalorder %s46, %s47
    %p58 = scmp.eq.s32.totalorder %s12, 0
    %p59 = por %p57, %p58
    %p60 = scmp.ne.s32.totalorder %s46, %s47
    %p61 = scmp.eq.s32.totalorder %s13, 1
    %p62 = por %p60, %p61
    %p64 = scmp.ne.s32.totalorder %s47, %s63
    %p65 = scmp.eq.s32.totalorder %s13, 0
    %p66 = por %p64, %p65
    %p67 = scmp.le.s32.totalorder 1, %s7
    %p68 = scmp.lt.s32.totalorder %s7, 3
    %p69 = pnand %p67, %p68
    %p70 = pneg %p69
    // Predicated region
    $region9: #{_lambda_.12} parent=5 // pred_check
      _
    $region10: #{_lambda_.12} parent=5 // pred_check_branch
      %72 = sbr.rel (%p69) target = $region12
    $region11: #{_lambda_.12} parent=5 // pred_region
      %s73 = ssub.s32 %s7, 1
    $region12: #{_lambda_.12} parent=5 // pred_fallthru
      _
    %p74 = scmp.lt.s32.totalorder %s7, 2
    // Predicated region
    $region13: #{_lambda_.12} parent=5 // pred_check
      %p75 = pneg %p74
    $region14: #{_lambda_.12} parent=5 // pred_check_branch
      %77 = sbr.rel (%p75) target = $region16
    $region15: #{_lambda_.12} parent=5 // pred_region
      // Predicated region
      $region17: #{_lambda_.12} parent=15 // pred_check
        %p78 = pneg %p27
      $region18: #{_lambda_.12} parent=15 // pred_check_branch
        %80 = sbr.rel (%p78) target = $region20
      $region19: #{_lambda_.12} parent=15 // pred_region
        %s81 = smul.u32 4, %s7
        %p82 = scmp.lt.s32.totalorder %s81, 7
        %s83 = scalar_select %p82, %s81, 7
        %s84 = smul.addr %s83, 8
        %s85 = smul.addr %s84, 4
        %s86 = scalar_lea.vmem %s0, %s85
        %s87 = smul.u32 4, %s7
      $region20: #{_lambda_.12} parent=15 // pred_fallthru
        _
    $region16: #{_lambda_.12} parent=5 // pred_fallthru
      _
    %p88 = scmp.le.s32.totalorder 1, %s7
    %p89 = scmp.lt.s32.totalorder %s7, 3
    %p90 = pnand %p88, %p89
    %p91 = pneg %p90
    // Predicated region
    $region21: #{_lambda_.12} parent=5 // pred_check
      _
    $region22: #{_lambda_.12} parent=5 // pred_check_branch
      %93 = sbr.rel (%p90) target = $region24
    $region23: #{_lambda_.12} parent=5 // pred_region
      %s94 = ssub.s32 %s7, 1
      %s95 = smul.u32 4, %s12
      %p96 = scmp.lt.s32.totalorder %s95, 7
      %s97 = scalar_select %p96, %s95, 7
      %s98 = smul.addr %s97, 8
      %s99 = smul.addr %s98, 4
      %s100 = scalar_lea.vmem %s0, %s99
      %p101 = pneg %p33
      %p102 = pneg %p30
      %p103 = pneg %p59
      %p104 = pneg %p56
      %s105 = smul.u32 4, %s12
      %p106 = scmp.lt.s32.totalorder %s105, 7
      %s107 = scalar_select %p106, %s105, 7
      %s108 = smul.addr %s107, 8
      %s109 = smul.addr %s108, 4
      %s110 = scalar_lea.vmem %s1, %s109
      %s111 = smul.u32 4, %s12
      %p112 = scmp.lt.s32.totalorder %s111, 7
      %s113 = scalar_select %p112, %s111, 7
      %s114 = smul.addr %s113, 8
      %s115 = smul.addr %s114, 4
      %s116 = scalar_lea.vmem %s0, %s115
      %s117 = smul.u32 4, %s12
      %s118 = smul.u32 4, %s12
      %p119 = scmp.lt.s32.totalorder %s118, 7
      %s120 = scalar_select %p119, %s118, 7
      %s121 = smul.addr %s120, 8
      %s122 = smul.addr %s121, 4
      %s123 = scalar_lea.vmem %s1, %s122
      %s124 = smul.u32 4, %s12
      %v125 = vld [vmem:[%s116] sm:$0xf]
      %v126 = vld [vmem:[%s116 + $0x4] sm:$0xf]
      %v127 = vld [vmem:[%s116 + $0x8] sm:$0xf]
      %v128 = vld [vmem:[%s116 + $0xc] sm:$0xf]
      %v129 = vld [vmem:[%s116 + $0x10] sm:$0xf]
      %v130 = vld [vmem:[%s116 + $0x14] sm:$0xf]
      %v131 = vld [vmem:[%s116 + $0x18] sm:$0xf]
      %v132 = vld [vmem:[%s116 + $0x1c] sm:$0xf]
      %v133 = vld [vmem:[%s116 + $0x20] sm:$0xf]
      %v134 = vld [vmem:[%s116 + $0x24] sm:$0xf]
      %v135 = vld [vmem:[%s116 + $0x28] sm:$0xf]
      %v136 = vld [vmem:[%s116 + $0x2c] sm:$0xf]
      %v137 = vld [vmem:[%s116 + $0x30] sm:$0xf]
      %v138 = vld [vmem:[%s116 + $0x34] sm:$0xf]
      %v139 = vld [vmem:[%s116 + $0x38] sm:$0xf]
      %v140 = vld [vmem:[%s116 + $0x3c] sm:$0xf]
      %v141 = vld [vmem:[%s116 + $0x40] sm:$0xf]
      %v142 = vld [vmem:[%s116 + $0x44] sm:$0xf]
      %v143 = vld [vmem:[%s116 + $0x48] sm:$0xf]
      %v144 = vld [vmem:[%s116 + $0x4c] sm:$0xf]
      %v145 = vld [vmem:[%s116 + $0x50] sm:$0xf]
      %v146 = vld [vmem:[%s116 + $0x54] sm:$0xf]
      %v147 = vld [vmem:[%s116 + $0x58] sm:$0xf]
      %v148 = vld [vmem:[%s116 + $0x5c] sm:$0xf]
      %v149 = vld [vmem:[%s116 + $0x60] sm:$0xf]
      %v150 = vld [vmem:[%s116 + $0x64] sm:$0xf]
      %v151 = vld [vmem:[%s116 + $0x68] sm:$0xf]
      %v152 = vld [vmem:[%s116 + $0x6c] sm:$0xf]
      %v153 = vld [vmem:[%s116 + $0x70] sm:$0xf]
      %v154 = vld [vmem:[%s116 + $0x74] sm:$0xf]
      %v155 = vld [vmem:[%s116 + $0x78] sm:$0xf]
      %v156 = vld [vmem:[%s116 + $0x7c] sm:$0xf]
      %v157 = vmax.bf16 %v125, %v126
      %v158 = vmax.bf16 %v125, %v127
      %v159 = vmax.bf16 %v126, %v128
      %v160 = vmax.bf16 %v127, %v129
      %v161 = vmax.bf16 %v128, %v130
      %v162 = vmax.bf16 %v129, %v131
      %v163 = vmax.bf16 %v130, %v132
      %v164 = vmax.bf16 %v131, %v132
      %v165 = vmax.bf16 %v133, %v134
      %v166 = vmax.bf16 %v133, %v135
      %v167 = vmax.bf16 %v134, %v136
      %v168 = vmax.bf16 %v135, %v137
      %v169 = vmax.bf16 %v136, %v138
      %v170 = vmax.bf16 %v137, %v139
      %v171 = vmax.bf16 %v138, %v140
      %v172 = vmax.bf16 %v139, %v140
      %v173 = vmax.bf16 %v141, %v142
      %v174 = vmax.bf16 %v141, %v143
      %v175 = vmax.bf16 %v142, %v144
      %v176 = vmax.bf16 %v143, %v145
      %v177 = vmax.bf16 %v144, %v146
      %v178 = vmax.bf16 %v145, %v147
      %v179 = vmax.bf16 %v146, %v148
      %v180 = vmax.bf16 %v147, %v148
      %v181 = vmax.bf16 %v149, %v150
      %v182 = vmax.bf16 %v149, %v151
      %v183 = vmax.bf16 %v150, %v152
      %v184 = vmax.bf16 %v151, %v153
      %v185 = vmax.bf16 %v152, %v154
      %v186 = vmax.bf16 %v153, %v155
      %v187 = vmax.bf16 %v154, %v156
      %v188 = vmax.bf16 %v155, %v156
      %v189 = vmax.bf16 %v125, %v157
      %v190 = vmax.bf16 %v126, %v158
      %v191 = vmax.bf16 %v127, %v159
      %v192 = vmax.bf16 %v128, %v160
      %v193 = vmax.bf16 %v129, %v161
      %v194 = vmax.bf16 %v130, %v162
      %v195 = vmax.bf16 %v131, %v163
      %v196 = vmax.bf16 %v132, %v164
      %v197 = vmax.bf16 %v133, %v165
      %v198 = vmax.bf16 %v134, %v166
      %v199 = vmax.bf16 %v135, %v167
      %v200 = vmax.bf16 %v136, %v168
      %v201 = vmax.bf16 %v137, %v169
      %v202 = vmax.bf16 %v138, %v170
      %v203 = vmax.bf16 %v139, %v171
      %v204 = vmax.bf16 %v140, %v172
      %v205 = vmax.bf16 %v141, %v173
      %v206 = vmax.bf16 %v142, %v174
      %v207 = vmax.bf16 %v143, %v175
      %v208 = vmax.bf16 %v144, %v176
      %v209 = vmax.bf16 %v145, %v177
      %v210 = vmax.bf16 %v146, %v178
      %v211 = vmax.bf16 %v147, %v179
      %v212 = vmax.bf16 %v148, %v180
      %v213 = vmax.bf16 %v149, %v181
      %v214 = vmax.bf16 %v150, %v182
      %v215 = vmax.bf16 %v151, %v183
      %v216 = vmax.bf16 %v152, %v184
      %v217 = vmax.bf16 %v153, %v185
      %v218 = vmax.bf16 %v154, %v186
      %v219 = vmax.bf16 %v155, %v187
      %v220 = vmax.bf16 %v156, %v188
      %v253 = vunpack.c.l.b16 %v189
      %v254 = vunpack.c.l.b16 %v190
      %v255 = vunpack.c.l.b16 %v191
      %v256 = vunpack.c.l.b16 %v192
      %v257 = vunpack.c.l.b16 %v193
      %v258 = vunpack.c.l.b16 %v194
      %v259 = vunpack.c.l.b16 %v195
      %v260 = vunpack.c.l.b16 %v196
      %v261 = vunpack.c.l.b16 %v197
      %v262 = vunpack.c.l.b16 %v198
      %v263 = vunpack.c.l.b16 %v199
      %v264 = vunpack.c.l.b16 %v200
      %v265 = vunpack.c.l.b16 %v201
      %v266 = vunpack.c.l.b16 %v202
      %v267 = vunpack.c.l.b16 %v203
      %v268 = vunpack.c.l.b16 %v204
      %v269 = vunpack.c.l.b16 %v205
      %v270 = vunpack.c.l.b16 %v206
      %v271 = vunpack.c.l.b16 %v207
      %v272 = vunpack.c.l.b16 %v208
      %v273 = vunpack.c.l.b16 %v209
      %v274 = vunpack.c.l.b16 %v210
      %v275 = vunpack.c.l.b16 %v211
      %v276 = vunpack.c.l.b16 %v212
      %v277 = vunpack.c.l.b16 %v213
      %v278 = vunpack.c.l.b16 %v214
      %v279 = vunpack.c.l.b16 %v215
      %v280 = vunpack.c.l.b16 %v216
      %v281 = vunpack.c.l.b16 %v217
      %v282 = vunpack.c.l.b16 %v218
      %v283 = vunpack.c.l.b16 %v219
      %v284 = vunpack.c.l.b16 %v220
      %v285 = vpack.c.b16 %v253, %v253
      %v286 = vpack.c.b16 %v254, %v254
      %v287 = vpack.c.b16 %v255, %v255
      %v288 = vpack.c.b16 %v256, %v256
      %v289 = vpack.c.b16 %v257, %v257
      %v290 = vpack.c.b16 %v258, %v258
      %v291 = vpack.c.b16 %v259, %v259
      %v292 = vpack.c.b16 %v260, %v260
      %v293 = vpack.c.b16 %v261, %v261
      %v294 = vpack.c.b16 %v262, %v262
      %v295 = vpack.c.b16 %v263, %v263
      %v296 = vpack.c.b16 %v264, %v264
      %v297 = vpack.c.b16 %v265, %v265
      %v298 = vpack.c.b16 %v266, %v266
      %v299 = vpack.c.b16 %v267, %v267
      %v300 = vpack.c.b16 %v268, %v268
      %v301 = vpack.c.b16 %v269, %v269
      %v302 = vpack.c.b16 %v270, %v270
      %v303 = vpack.c.b16 %v271, %v271
      %v304 = vpack.c.b16 %v272, %v272
      %v305 = vpack.c.b16 %v273, %v273
      %v306 = vpack.c.b16 %v274, %v274
      %v307 = vpack.c.b16 %v275, %v275
      %v308 = vpack.c.b16 %v276, %v276
      %v309 = vpack.c.b16 %v277, %v277
      %v310 = vpack.c.b16 %v278, %v278
      %v311 = vpack.c.b16 %v279, %v279
      %v312 = vpack.c.b16 %v280, %v280
      %v313 = vpack.c.b16 %v281, %v281
      %v314 = vpack.c.b16 %v282, %v282
      %v315 = vpack.c.b16 %v283, %v283
      %v316 = vpack.c.b16 %v284, %v284
      %v318 = vshrl.u32 %v285, 16
      %v320 = vrot.slane %v318, 7
      %v321 = vshll.u32 %v285, 16
      %v323 = vor.u32 %v320, %v321
      %v325 = vshrl.u32 %v286, 16
      %v327 = vrot.slane %v325, 7
      %v328 = vshll.u32 %v286, 16
      %v330 = vor.u32 %v327, %v328
      %v332 = vshrl.u32 %v287, 16
      %v334 = vrot.slane %v332, 7
      %v335 = vshll.u32 %v287, 16
      %v337 = vor.u32 %v334, %v335
      %v339 = vshrl.u32 %v288, 16
      %v341 = vrot.slane %v339, 7
      %v342 = vshll.u32 %v288, 16
      %v344 = vor.u32 %v341, %v342
      %v346 = vshrl.u32 %v289, 16
      %v348 = vrot.slane %v346, 7
      %v349 = vshll.u32 %v289, 16
      %v351 = vor.u32 %v348, %v349
      %v353 = vshrl.u32 %v290, 16
      %v355 = vrot.slane %v353, 7
      %v356 = vshll.u32 %v290, 16
      %v358 = vor.u32 %v355, %v356
      %v360 = vshrl.u32 %v291, 16
      %v362 = vrot.slane %v360, 7
      %v363 = vshll.u32 %v291, 16
      %v365 = vor.u32 %v362, %v363
      %v367 = vshrl.u32 %v292, 16
      %v369 = vrot.slane %v367, 7
      %v370 = vshll.u32 %v292, 16
      %v372 = vor.u32 %v369, %v370
      %v374 = vshrl.u32 %v293, 16
      %v376 = vrot.slane %v374, 7
      %v377 = vshll.u32 %v293, 16
      %v379 = vor.u32 %v376, %v377
      %v381 = vshrl.u32 %v294, 16
      %v383 = vrot.slane %v381, 7
      %v384 = vshll.u32 %v294, 16
      %v386 = vor.u32 %v383, %v384
      %v388 = vshrl.u32 %v295, 16
      %v390 = vrot.slane %v388, 7
      %v391 = vshll.u32 %v295, 16
      %v393 = vor.u32 %v390, %v391
      %v395 = vshrl.u32 %v296, 16
      %v397 = vrot.slane %v395, 7
      %v398 = vshll.u32 %v296, 16
      %v400 = vor.u32 %v397, %v398
      %v402 = vshrl.u32 %v297, 16
      %v404 = vrot.slane %v402, 7
      %v405 = vshll.u32 %v297, 16
      %v407 = vor.u32 %v404, %v405
      %v409 = vshrl.u32 %v298, 16
      %v411 = vrot.slane %v409, 7
      %v412 = vshll.u32 %v298, 16
      %v414 = vor.u32 %v411, %v412
      %v416 = vshrl.u32 %v299, 16
      %v418 = vrot.slane %v416, 7
      %v419 = vshll.u32 %v299, 16
      %v421 = vor.u32 %v418, %v419
      %v423 = vshrl.u32 %v300, 16
      %v425 = vrot.slane %v423, 7
      %v426 = vshll.u32 %v300, 16
      %v428 = vor.u32 %v425, %v426
      %v430 = vshrl.u32 %v301, 16
      %v432 = vrot.slane %v430, 7
      %v433 = vshll.u32 %v301, 16
      %v435 = vor.u32 %v432, %v433
      %v437 = vshrl.u32 %v302, 16
      %v439 = vrot.slane %v437, 7
      %v440 = vshll.u32 %v302, 16
      %v442 = vor.u32 %v439, %v440
      %v444 = vshrl.u32 %v303, 16
      %v446 = vrot.slane %v444, 7
      %v447 = vshll.u32 %v303, 16
      %v449 = vor.u32 %v446, %v447
      %v451 = vshrl.u32 %v304, 16
      %v453 = vrot.slane %v451, 7
      %v454 = vshll.u32 %v304, 16
      %v456 = vor.u32 %v453, %v454
      %v458 = vshrl.u32 %v305, 16
      %v460 = vrot.slane %v458, 7
      %v461 = vshll.u32 %v305, 16
      %v463 = vor.u32 %v460, %v461
      %v465 = vshrl.u32 %v306, 16
      %v467 = vrot.slane %v465, 7
      %v468 = vshll.u32 %v306, 16
      %v470 = vor.u32 %v467, %v468
      %v472 = vshrl.u32 %v307, 16
      %v474 = vrot.slane %v472, 7
      %v475 = vshll.u32 %v307, 16
      %v477 = vor.u32 %v474, %v475
      %v479 = vshrl.u32 %v308, 16
      %v481 = vrot.slane %v479, 7
      %v482 = vshll.u32 %v308, 16
      %v484 = vor.u32 %v481, %v482
      %v486 = vshrl.u32 %v309, 16
      %v488 = vrot.slane %v486, 7
      %v489 = vshll.u32 %v309, 16
      %v491 = vor.u32 %v488, %v489
      %v493 = vshrl.u32 %v310, 16
      %v495 = vrot.slane %v493, 7
      %v496 = vshll.u32 %v310, 16
      %v498 = vor.u32 %v495, %v496
      %v500 = vshrl.u32 %v311, 16
      %v502 = vrot.slane %v500, 7
      %v503 = vshll.u32 %v311, 16
      %v505 = vor.u32 %v502, %v503
      %v507 = vshrl.u32 %v312, 16
      %v509 = vrot.slane %v507, 7
      %v510 = vshll.u32 %v312, 16
      %v512 = vor.u32 %v509, %v510
      %v514 = vshrl.u32 %v313, 16
      %v516 = vrot.slane %v514, 7
      %v517 = vshll.u32 %v313, 16
      %v519 = vor.u32 %v516, %v517
      %v521 = vshrl.u32 %v314, 16
      %v523 = vrot.slane %v521, 7
      %v524 = vshll.u32 %v314, 16
      %v526 = vor.u32 %v523, %v524
      %v528 = vshrl.u32 %v315, 16
      %v530 = vrot.slane %v528, 7
      %v531 = vshll.u32 %v315, 16
      %v533 = vor.u32 %v530, %v531
      %v535 = vshrl.u32 %v316, 16
      %v537 = vrot.slane %v535, 7
      %v538 = vshll.u32 %v316, 16
      %v540 = vor.u32 %v537, %v538
      %vm573 = vcmask 1040384
      %vm574 = vsmask.f32 256
      %vm575 = vmand %vm573, %vm574
      %v576 = vsel %vm575, %v189, %v323
      %v577 = vsel %vm575, %v190, %v330
      %v578 = vsel %vm575, %v191, %v337
      %v579 = vsel %vm575, %v192, %v344
      %v580 = vsel %vm575, %v193, %v351
      %v581 = vsel %vm575, %v194, %v358
      %v582 = vsel %vm575, %v195, %v365
      %v583 = vsel %vm575, %v196, %v372
      %v584 = vsel %vm575, %v197, %v379
      %v585 = vsel %vm575, %v198, %v386
      %v586 = vsel %vm575, %v199, %v393
      %v587 = vsel %vm575, %v200, %v400
      %v588 = vsel %vm575, %v201, %v407
      %v589 = vsel %vm575, %v202, %v414
      %v590 = vsel %vm575, %v203, %v421
      %v591 = vsel %vm575, %v204, %v428
      %v592 = vsel %vm575, %v205, %v435
      %v593 = vsel %vm575, %v206, %v442
      %v594 = vsel %vm575, %v207, %v449
      %v595 = vsel %vm575, %v208, %v456
      %v596 = vsel %vm575, %v209, %v463
      %v597 = vsel %vm575, %v210, %v470
      %v598 = vsel %vm575, %v211, %v477
      %v599 = vsel %vm575, %v212, %v484
      %v600 = vsel %vm575, %v213, %v491
      %v601 = vsel %vm575, %v214, %v498
      %v602 = vsel %vm575, %v215, %v505
      %v603 = vsel %vm575, %v216, %v512
      %v604 = vsel %vm575, %v217, %v519
      %v605 = vsel %vm575, %v218, %v526
      %v606 = vsel %vm575, %v219, %v533
      %v607 = vsel %vm575, %v220, %v540
      %v608 = vrot.slane %v321, 1
      %v609 = vor.u32 %v318, %v608
      %v610 = vrot.slane %v328, 1
      %v611 = vor.u32 %v325, %v610
      %v612 = vrot.slane %v335, 1
      %v613 = vor.u32 %v332, %v612
      %v614 = vrot.slane %v342, 1
      %v615 = vor.u32 %v339, %v614
      %v616 = vrot.slane %v349, 1
      %v617 = vor.u32 %v346, %v616
      %v618 = vrot.slane %v356, 1
      %v619 = vor.u32 %v353, %v618
      %v620 = vrot.slane %v363, 1
      %v621 = vor.u32 %v360, %v620
      %v622 = vrot.slane %v370, 1
      %v623 = vor.u32 %v367, %v622
      %v624 = vrot.slane %v377, 1
      %v625 = vor.u32 %v374, %v624
      %v626 = vrot.slane %v384, 1
      %v627 = vor.u32 %v381, %v626
      %v628 = vrot.slane %v391, 1
      %v629 = vor.u32 %v388, %v628
      %v630 = vrot.slane %v398, 1
      %v631 = vor.u32 %v395, %v630
      %v632 = vrot.slane %v405, 1
      %v633 = vor.u32 %v402, %v632
      %v634 = vrot.slane %v412, 1
      %v635 = vor.u32 %v409, %v634
      %v636 = vrot.slane %v419, 1
      %v637 = vor.u32 %v416, %v636
      %v638 = vrot.slane %v426, 1
      %v639 = vor.u32 %v423, %v638
      %v640 = vrot.slane %v433, 1
      %v641 = vor.u32 %v430, %v640
      %v642 = vrot.slane %v440, 1
      %v643 = vor.u32 %v437, %v642
      %v644 = vrot.slane %v447, 1
      %v645 = vor.u32 %v444, %v644
      %v646 = vrot.slane %v454, 1
      %v647 = vor.u32 %v451, %v646
      %v648 = vrot.slane %v461, 1
      %v649 = vor.u32 %v458, %v648
      %v650 = vrot.slane %v468, 1
      %v651 = vor.u32 %v465, %v650
      %v652 = vrot.slane %v475, 1
      %v653 = vor.u32 %v472, %v652
      %v654 = vrot.slane %v482, 1
      %v655 = vor.u32 %v479, %v654
      %v656 = vrot.slane %v489, 1
      %v657 = vor.u32 %v486, %v656
      %v658 = vrot.slane %v496, 1
      %v659 = vor.u32 %v493, %v658
      %v660 = vrot.slane %v503, 1
      %v661 = vor.u32 %v500, %v660
      %v662 = vrot.slane %v510, 1
      %v663 = vor.u32 %v507, %v662
      %v664 = vrot.slane %v517, 1
      %v665 = vor.u32 %v514, %v664
      %v666 = vrot.slane %v524, 1
      %v667 = vor.u32 %v521, %v666
      %v668 = vrot.slane %v531, 1
      %v669 = vor.u32 %v528, %v668
      %v670 = vrot.slane %v538, 1
      %v671 = vor.u32 %v535, %v670
      %vm704 = vcmask 1043456
      %vm705 = vsmask.f32 3328
      %vm706 = vmand %vm704, %vm705
      %v707 = vsel %vm706, %v609, %v189
      %v708 = vsel %vm706, %v611, %v190
      %v709 = vsel %vm706, %v613, %v191
      %v710 = vsel %vm706, %v615, %v192
      %v711 = vsel %vm706, %v617, %v193
      %v712 = vsel %vm706, %v619, %v194
      %v713 = vsel %vm706, %v621, %v195
      %v714 = vsel %vm706, %v623, %v196
      %v715 = vsel %vm706, %v625, %v197
      %v716 = vsel %vm706, %v627, %v198
      %v717 = vsel %vm706, %v629, %v199
      %v718 = vsel %vm706, %v631, %v200
      %v719 = vsel %vm706, %v633, %v201
      %v720 = vsel %vm706, %v635, %v202
      %v721 = vsel %vm706, %v637, %v203
      %v722 = vsel %vm706, %v639, %v204
      %v723 = vsel %vm706, %v641, %v205
      %v724 = vsel %vm706, %v643, %v206
      %v725 = vsel %vm706, %v645, %v207
      %v726 = vsel %vm706, %v647, %v208
      %v727 = vsel %vm706, %v649, %v209
      %v728 = vsel %vm706, %v651, %v210
      %v729 = vsel %vm706, %v653, %v211
      %v730 = vsel %vm706, %v655, %v212
      %v731 = vsel %vm706, %v657, %v213
      %v732 = vsel %vm706, %v659, %v214
      %v733 = vsel %vm706, %v661, %v215
      %v734 = vsel %vm706, %v663, %v216
      %v735 = vsel %vm706, %v665, %v217
      %v736 = vsel %vm706, %v667, %v218
      %v737 = vsel %vm706, %v669, %v219
      %v738 = vsel %vm706, %v671, %v220
      %v739 = vmax.bf16 %v576, %v707
      %v740 = vmax.bf16 %v577, %v708
      %v741 = vmax.bf16 %v578, %v709
      %v742 = vmax.bf16 %v579, %v710
      %v743 = vmax.bf16 %v580, %v711
      %v744 = vmax.bf16 %v581, %v712
      %v745 = vmax.bf16 %v582, %v713
      %v746 = vmax.bf16 %v583, %v714
      %v747 = vmax.bf16 %v584, %v715
      %v748 = vmax.bf16 %v585, %v716
      %v749 = vmax.bf16 %v586, %v717
      %v750 = vmax.bf16 %v587, %v718
      %v751 = vmax.bf16 %v588, %v719
      %v752 = vmax.bf16 %v589, %v720
      %v753 = vmax.bf16 %v590, %v721
      %v754 = vmax.bf16 %v591, %v722
      %v755 = vmax.bf16 %v592, %v723
      %v756 = vmax.bf16 %v593, %v724
      %v757 = vmax.bf16 %v594, %v725
      %v758 = vmax.bf16 %v595, %v726
      %v759 = vmax.bf16 %v596, %v727
      %v760 = vmax.bf16 %v597, %v728
      %v761 = vmax.bf16 %v598, %v729
      %v762 = vmax.bf16 %v599, %v730
      %v763 = vmax.bf16 %v600, %v731
      %v764 = vmax.bf16 %v601, %v732
      %v765 = vmax.bf16 %v602, %v733
      %v766 = vmax.bf16 %v603, %v734
      %v767 = vmax.bf16 %v604, %v735
      %v768 = vmax.bf16 %v605, %v736
      %v769 = vmax.bf16 %v606, %v737
      %v770 = vmax.bf16 %v607, %v738
      %v771 = vmax.bf16 %v189, %v739
      %v772 = vmax.bf16 %v190, %v740
      %v773 = vmax.bf16 %v191, %v741
      %v774 = vmax.bf16 %v192, %v742
      %v775 = vmax.bf16 %v193, %v743
      %v776 = vmax.bf16 %v194, %v744
      %v777 = vmax.bf16 %v195, %v745
      %v778 = vmax.bf16 %v196, %v746
      %v779 = vmax.bf16 %v197, %v747
      %v780 = vmax.bf16 %v198, %v748
      %v781 = vmax.bf16 %v199, %v749
      %v782 = vmax.bf16 %v200, %v750
      %v783 = vmax.bf16 %v201, %v751
      %v784 = vmax.bf16 %v202, %v752
      %v785 = vmax.bf16 %v203, %v753
      %v786 = vmax.bf16 %v204, %v754
      %v787 = vmax.bf16 %v205, %v755
      %v788 = vmax.bf16 %v206, %v756
      %v789 = vmax.bf16 %v207, %v757
      %v790 = vmax.bf16 %v208, %v758
      %v791 = vmax.bf16 %v209, %v759
      %v792 = vmax.bf16 %v210, %v760
      %v793 = vmax.bf16 %v211, %v761
      %v794 = vmax.bf16 %v212, %v762
      %v795 = vmax.bf16 %v213, %v763
      %v796 = vmax.bf16 %v214, %v764
      %v797 = vmax.bf16 %v215, %v765
      %v798 = vmax.bf16 %v216, %v766
      %v799 = vmax.bf16 %v217, %v767
      %v800 = vmax.bf16 %v218, %v768
      %v801 = vmax.bf16 %v219, %v769
      %v802 = vmax.bf16 %v220, %v770
      %v835 = vunpack.c.l.b16 %v771
      %v836 = vunpack.c.l.b16 %v772
      %v837 = vunpack.c.l.b16 %v773
      %v838 = vunpack.c.l.b16 %v774
      %v839 = vunpack.c.l.b16 %v775
      %v840 = vunpack.c.l.b16 %v776
      %v841 = vunpack.c.l.b16 %v777
      %v842 = vunpack.c.l.b16 %v778
      %v843 = vunpack.c.l.b16 %v779
      %v844 = vunpack.c.l.b16 %v780
      %v845 = vunpack.c.l.b16 %v781
      %v846 = vunpack.c.l.b16 %v782
      %v847 = vunpack.c.l.b16 %v783
      %v848 = vunpack.c.l.b16 %v784
      %v849 = vunpack.c.l.b16 %v785
      %v850 = vunpack.c.l.b16 %v786
      %v851 = vunpack.c.l.b16 %v787
      %v852 = vunpack.c.l.b16 %v788
      %v853 = vunpack.c.l.b16 %v789
      %v854 = vunpack.c.l.b16 %v790
      %v855 = vunpack.c.l.b16 %v791
      %v856 = vunpack.c.l.b16 %v792
      %v857 = vunpack.c.l.b16 %v793
      %v858 = vunpack.c.l.b16 %v794
      %v859 = vunpack.c.l.b16 %v795
      %v860 = vunpack.c.l.b16 %v796
      %v861 = vunpack.c.l.b16 %v797
      %v862 = vunpack.c.l.b16 %v798
      %v863 = vunpack.c.l.b16 %v799
      %v864 = vunpack.c.l.b16 %v800
      %v865 = vunpack.c.l.b16 %v801
      %v866 = vunpack.c.l.b16 %v802
      %v867 = vpack.c.b16 %v835, %v835
      %v868 = vpack.c.b16 %v836, %v836
      %v869 = vpack.c.b16 %v837, %v837
      %v870 = vpack.c.b16 %v838, %v838
      %v871 = vpack.c.b16 %v839, %v839
      %v872 = vpack.c.b16 %v840, %v840
      %v873 = vpack.c.b16 %v841, %v841
      %v874 = vpack.c.b16 %v842, %v842
      %v875 = vpack.c.b16 %v843, %v843
      %v876 = vpack.c.b16 %v844, %v844
      %v877 = vpack.c.b16 %v845, %v845
      %v878 = vpack.c.b16 %v846, %v846
      %v879 = vpack.c.b16 %v847, %v847
      %v880 = vpack.c.b16 %v848, %v848
      %v881 = vpack.c.b16 %v849, %v849
      %v882 = vpack.c.b16 %v850, %v850
      %v883 = vpack.c.b16 %v851, %v851
      %v884 = vpack.c.b16 %v852, %v852
      %v885 = vpack.c.b16 %v853, %v853
      %v886 = vpack.c.b16 %v854, %v854
      %v887 = vpack.c.b16 %v855, %v855
      %v888 = vpack.c.b16 %v856, %v856
      %v889 = vpack.c.b16 %v857, %v857
      %v890 = vpack.c.b16 %v858, %v858
      %v891 = vpack.c.b16 %v859, %v859
      %v892 = vpack.c.b16 %v860, %v860
      %v893 = vpack.c.b16 %v861, %v861
      %v894 = vpack.c.b16 %v862, %v862
      %v895 = vpack.c.b16 %v863, %v863
      %v896 = vpack.c.b16 %v864, %v864
      %v897 = vpack.c.b16 %v865, %v865
      %v898 = vpack.c.b16 %v866, %v866
      %899 = vrot.lane.b32.xlu0 %v867, 1
      %v900 = vpop.permute.xlu0 %899
      %901 = vrot.lane.b32.xlu0 %v868, 1
      %v902 = vpop.permute.xlu0 %901
      %903 = vrot.lane.b32.xlu0 %v869, 1
      %v904 = vpop.permute.xlu0 %903
      %905 = vrot.lane.b32.xlu0 %v870, 1
      %v906 = vpop.permute.xlu0 %905
      %907 = vrot.lane.b32.xlu0 %v871, 1
      %v908 = vpop.permute.xlu0 %907
      %909 = vrot.lane.b32.xlu0 %v872, 1
      %v910 = vpop.permute.xlu0 %909
      %911 = vrot.lane.b32.xlu0 %v873, 1
      %v912 = vpop.permute.xlu0 %911
      %913 = vrot.lane.b32.xlu0 %v874, 1
      %v914 = vpop.permute.xlu0 %913
      %915 = vrot.lane.b32.xlu0 %v875, 1
      %v916 = vpop.permute.xlu0 %915
      %917 = vrot.lane.b32.xlu0 %v876, 1
      %v918 = vpop.permute.xlu0 %917
      %919 = vrot.lane.b32.xlu0 %v877, 1
      %v920 = vpop.permute.xlu0 %919
      %921 = vrot.lane.b32.xlu0 %v878, 1
      %v922 = vpop.permute.xlu0 %921
      %923 = vrot.lane.b32.xlu0 %v879, 1
      %v924 = vpop.permute.xlu0 %923
      %925 = vrot.lane.b32.xlu0 %v880, 1
      %v926 = vpop.permute.xlu0 %925
      %927 = vrot.lane.b32.xlu0 %v881, 1
      %v928 = vpop.permute.xlu0 %927
      %929 = vrot.lane.b32.xlu0 %v882, 1
      %v930 = vpop.permute.xlu0 %929
      %931 = vrot.lane.b32.xlu0 %v883, 1
      %v932 = vpop.permute.xlu0 %931
      %933 = vrot.lane.b32.xlu0 %v884, 1
      %v934 = vpop.permute.xlu0 %933
      %935 = vrot.lane.b32.xlu0 %v885, 1
      %v936 = vpop.permute.xlu0 %935
      %937 = vrot.lane.b32.xlu0 %v886, 1
      %v938 = vpop.permute.xlu0 %937
      %939 = vrot.lane.b32.xlu0 %v887, 1
      %v940 = vpop.permute.xlu0 %939
      %941 = vrot.lane.b32.xlu0 %v888, 1
      %v942 = vpop.permute.xlu0 %941
      %943 = vrot.lane.b32.xlu0 %v889, 1
      %v944 = vpop.permute.xlu0 %943
      %945 = vrot.lane.b32.xlu0 %v890, 1
      %v946 = vpop.permute.xlu0 %945
      %947 = vrot.lane.b32.xlu0 %v891, 1
      %v948 = vpop.permute.xlu0 %947
      %949 = vrot.lane.b32.xlu0 %v892, 1
      %v950 = vpop.permute.xlu0 %949
      %951 = vrot.lane.b32.xlu0 %v893, 1
      %v952 = vpop.permute.xlu0 %951
      %953 = vrot.lane.b32.xlu0 %v894, 1
      %v954 = vpop.permute.xlu0 %953
      %955 = vrot.lane.b32.xlu0 %v895, 1
      %v956 = vpop.permute.xlu0 %955
      %957 = vrot.lane.b32.xlu0 %v896, 1
      %v958 = vpop.permute.xlu0 %957
      %959 = vrot.lane.b32.xlu0 %v897, 1
      %v960 = vpop.permute.xlu0 %959
      %961 = vrot.lane.b32.xlu0 %v898, 1
      %v962 = vpop.permute.xlu0 %961
      %vm963 = vcmask 7168
      %v966 = vsel %vm963, %v771, %v900
      %v970 = vsel %vm963, %v772, %v902
      %v974 = vsel %vm963, %v773, %v904
      %v978 = vsel %vm963, %v774, %v906
      %v982 = vsel %vm963, %v775, %v908
      %v986 = vsel %vm963, %v776, %v910
      %v990 = vsel %vm963, %v777, %v912
      %v994 = vsel %vm963, %v778, %v914
      %v998 = vsel %vm963, %v779, %v916
      %v1002 = vsel %vm963, %v780, %v918
      %v1006 = vsel %vm963, %v781, %v920
      %v1010 = vsel %vm963, %v782, %v922
      %v1014 = vsel %vm963, %v783, %v924
      %v1018 = vsel %vm963, %v784, %v926
      %v1022 = vsel %vm963, %v785, %v928
      %v1026 = vsel %vm963, %v786, %v930
      %v1030 = vsel %vm963, %v787, %v932
      %v1034 = vsel %vm963, %v788, %v934
      %v1038 = vsel %vm963, %v789, %v936
      %v1042 = vsel %vm963, %v790, %v938
      %v1046 = vsel %vm963, %v791, %v940
      %v1050 = vsel %vm963, %v792, %v942
      %v1054 = vsel %vm963, %v793, %v944
      %v1058 = vsel %vm963, %v794, %v946
      %v1062 = vsel %vm963, %v795, %v948
      %v1066 = vsel %vm963, %v796, %v950
      %v1070 = vsel %vm963, %v797, %v952
      %v1074 = vsel %vm963, %v798, %v954
      %v1078 = vsel %vm963, %v799, %v956
      %v1082 = vsel %vm963, %v800, %v958
      %v1086 = vsel %vm963, %v801, %v960
      %v1090 = vsel %vm963, %v802, %v962
      %1092 = vrot.lane.b32.xlu0 %v867, 127
      %v1093 = vpop.permute.xlu0 %1092
      %1094 = vrot.lane.b32.xlu0 %v868, 127
      %v1095 = vpop.permute.xlu0 %1094
      %1096 = vrot.lane.b32.xlu0 %v869, 127
      %v1097 = vpop.permute.xlu0 %1096
      %1098 = vrot.lane.b32.xlu0 %v870, 127
      %v1099 = vpop.permute.xlu0 %1098
      %1100 = vrot.lane.b32.xlu0 %v871, 127
      %v1101 = vpop.permute.xlu0 %1100
      %1102 = vrot.lane.b32.xlu0 %v872, 127
      %v1103 = vpop.permute.xlu0 %1102
      %1104 = vrot.lane.b32.xlu0 %v873, 127
      %v1105 = vpop.permute.xlu0 %1104
      %1106 = vrot.lane.b32.xlu0 %v874, 127
      %v1107 = vpop.permute.xlu0 %1106
      %1108 = vrot.lane.b32.xlu0 %v875, 127
      %v1109 = vpop.permute.xlu0 %1108
      %1110 = vrot.lane.b32.xlu0 %v876, 127
      %v1111 = vpop.permute.xlu0 %1110
      %1112 = vrot.lane.b32.xlu0 %v877, 127
      %v1113 = vpop.permute.xlu0 %1112
      %1114 = vrot.lane.b32.xlu0 %v878, 127
      %v1115 = vpop.permute.xlu0 %1114
      %1116 = vrot.lane.b32.xlu0 %v879, 127
      %v1117 = vpop.permute.xlu0 %1116
      %1118 = vrot.lane.b32.xlu0 %v880, 127
      %v1119 = vpop.permute.xlu0 %1118
      %1120 = vrot.lane.b32.xlu0 %v881, 127
      %v1121 = vpop.permute.xlu0 %1120
      %1122 = vrot.lane.b32.xlu0 %v882, 127
      %v1123 = vpop.permute.xlu0 %1122
      %1124 = vrot.lane.b32.xlu0 %v883, 127
      %v1125 = vpop.permute.xlu0 %1124
      %1126 = vrot.lane.b32.xlu0 %v884, 127
      %v1127 = vpop.permute.xlu0 %1126
      %1128 = vrot.lane.b32.xlu0 %v885, 127
      %v1129 = vpop.permute.xlu0 %1128
      %1130 = vrot.lane.b32.xlu0 %v886, 127
      %v1131 = vpop.permute.xlu0 %1130
      %1132 = vrot.lane.b32.xlu0 %v887, 127
      %v1133 = vpop.permute.xlu0 %1132
      %1134 = vrot.lane.b32.xlu0 %v888, 127
      %v1135 = vpop.permute.xlu0 %1134
      %1136 = vrot.lane.b32.xlu0 %v889, 127
      %v1137 = vpop.permute.xlu0 %1136
      %1138 = vrot.lane.b32.xlu0 %v890, 127
      %v1139 = vpop.permute.xlu0 %1138
      %1140 = vrot.lane.b32.xlu0 %v891, 127
      %v1141 = vpop.permute.xlu0 %1140
      %1142 = vrot.lane.b32.xlu0 %v892, 127
      %v1143 = vpop.permute.xlu0 %1142
      %1144 = vrot.lane.b32.xlu0 %v893, 127
      %v1145 = vpop.permute.xlu0 %1144
      %1146 = vrot.lane.b32.xlu0 %v894, 127
      %v1147 = vpop.permute.xlu0 %1146
      %1148 = vrot.lane.b32.xlu0 %v895, 127
      %v1149 = vpop.permute.xlu0 %1148
      %1150 = vrot.lane.b32.xlu0 %v896, 127
      %v1151 = vpop.permute.xlu0 %1150
      %1152 = vrot.lane.b32.xlu0 %v897, 127
      %v1153 = vpop.permute.xlu0 %1152
      %1154 = vrot.lane.b32.xlu0 %v898, 127
      %v1155 = vpop.permute.xlu0 %1154
      %vm1156 = vcmask 56320
      %v1158 = vsel %vm1156, %v1093, %v771
      %v1161 = vsel %vm1156, %v1095, %v772
      %v1164 = vsel %vm1156, %v1097, %v773
      %v1167 = vsel %vm1156, %v1099, %v774
      %v1170 = vsel %vm1156, %v1101, %v775
      %v1173 = vsel %vm1156, %v1103, %v776
      %v1176 = vsel %vm1156, %v1105, %v777
      %v1179 = vsel %vm1156, %v1107, %v778
      %v1182 = vsel %vm1156, %v1109, %v779
      %v1185 = vsel %vm1156, %v1111, %v780
      %v1188 = vsel %vm1156, %v1113, %v781
      %v1191 = vsel %vm1156, %v1115, %v782
      %v1194 = vsel %vm1156, %v1117, %v783
      %v1197 = vsel %vm1156, %v1119, %v784
      %v1200 = vsel %vm1156, %v1121, %v785
      %v1203 = vsel %vm1156, %v1123, %v786
      %v1206 = vsel %vm1156, %v1125, %v787
      %v1209 = vsel %vm1156, %v1127, %v788
      %v1212 = vsel %vm1156, %v1129, %v789
      %v1215 = vsel %vm1156, %v1131, %v790
      %v1218 = vsel %vm1156, %v1133, %v791
      %v1221 = vsel %vm1156, %v1135, %v792
      %v1224 = vsel %vm1156, %v1137, %v793
      %v1227 = vsel %vm1156, %v1139, %v794
      %v1230 = vsel %vm1156, %v1141, %v795
      %v1233 = vsel %vm1156, %v1143, %v796
      %v1236 = vsel %vm1156, %v1145, %v797
      %v1239 = vsel %vm1156, %v1147, %v798
      %v1242 = vsel %vm1156, %v1149, %v799
      %v1245 = vsel %vm1156, %v1151, %v800
      %v1248 = vsel %vm1156, %v1153, %v801
      %v1251 = vsel %vm1156, %v1155, %v802
      %v1253 = vmax.bf16 %v966, %v1158
      %v1254 = vmax.bf16 %v970, %v1161
      %v1255 = vmax.bf16 %v974, %v1164
      %v1256 = vmax.bf16 %v978, %v1167
      %v1257 = vmax.bf16 %v982, %v1170
      %v1258 = vmax.bf16 %v986, %v1173
      %v1259 = vmax.bf16 %v990, %v1176
      %v1260 = vmax.bf16 %v994, %v1179
      %v1261 = vmax.bf16 %v998, %v1182
      %v1262 = vmax.bf16 %v1002, %v1185
      %v1263 = vmax.bf16 %v1006, %v1188
      %v1264 = vmax.bf16 %v1010, %v1191
      %v1265 = vmax.bf16 %v1014, %v1194
      %v1266 = vmax.bf16 %v1018, %v1197
      %v1267 = vmax.bf16 %v1022, %v1200
      %v1268 = vmax.bf16 %v1026, %v1203
      %v1269 = vmax.bf16 %v1030, %v1206
      %v1270 = vmax.bf16 %v1034, %v1209
      %v1271 = vmax.bf16 %v1038, %v1212
      %v1272 = vmax.bf16 %v1042, %v1215
      %v1273 = vmax.bf16 %v1046, %v1218
      %v1274 = vmax.bf16 %v1050, %v1221
      %v1275 = vmax.bf16 %v1054, %v1224
      %v1276 = vmax.bf16 %v1058, %v1227
      %v1277 = vmax.bf16 %v1062, %v1230
      %v1278 = vmax.bf16 %v1066, %v1233
      %v1279 = vmax.bf16 %v1070, %v1236
      %v1280 = vmax.bf16 %v1074, %v1239
      %v1281 = vmax.bf16 %v1078, %v1242
      %v1282 = vmax.bf16 %v1082, %v1245
      %v1283 = vmax.bf16 %v1086, %v1248
      %v1284 = vmax.bf16 %v1090, %v1251
      %v1285 = vmax.bf16 %v771, %v1253
      %v1286 = vmax.bf16 %v772, %v1254
      %v1287 = vmax.bf16 %v773, %v1255
      %v1288 = vmax.bf16 %v774, %v1256
      %v1289 = vmax.bf16 %v775, %v1257
      %v1290 = vmax.bf16 %v776, %v1258
      %v1291 = vmax.bf16 %v777, %v1259
      %v1292 = vmax.bf16 %v778, %v1260
      %v1293 = vmax.bf16 %v779, %v1261
      %v1294 = vmax.bf16 %v780, %v1262
      %v1295 = vmax.bf16 %v781, %v1263
      %v1296 = vmax.bf16 %v782, %v1264
      %v1297 = vmax.bf16 %v783, %v1265
      %v1298 = vmax.bf16 %v784, %v1266
      %v1299 = vmax.bf16 %v785, %v1267
      %v1300 = vmax.bf16 %v786, %v1268
      %v1301 = vmax.bf16 %v787, %v1269
      %v1302 = vmax.bf16 %v788, %v1270
      %v1303 = vmax.bf16 %v789, %v1271
      %v1304 = vmax.bf16 %v790, %v1272
      %v1305 = vmax.bf16 %v791, %v1273
      %v1306 = vmax.bf16 %v792, %v1274
      %v1307 = vmax.bf16 %v793, %v1275
      %v1308 = vmax.bf16 %v794, %v1276
      %v1309 = vmax.bf16 %v795, %v1277
      %v1310 = vmax.bf16 %v796, %v1278
      %v1311 = vmax.bf16 %v797, %v1279
      %v1312 = vmax.bf16 %v798, %v1280
      %v1313 = vmax.bf16 %v799, %v1281
      %v1314 = vmax.bf16 %v800, %v1282
      %v1315 = vmax.bf16 %v801, %v1283
      %v1316 = vmax.bf16 %v802, %v1284
      %vm1317 = vcmask 60416
      %1318 = vst.msk [vmem:[%s123] sm:$0xf] %vm1317, %v1285
      %1319 = vst.msk [vmem:[%s123 + $0x4] sm:$0xf] %vm1317, %v1286
      %1320 = vst.msk [vmem:[%s123 + $0x8] sm:$0xf] %vm1317, %v1287
      %1321 = vst.msk [vmem:[%s123 + $0xc] sm:$0xf] %vm1317, %v1288
      %1322 = vst.msk [vmem:[%s123 + $0x10] sm:$0xf] %vm1317, %v1289
      %1323 = vst.msk [vmem:[%s123 + $0x14] sm:$0xf] %vm1317, %v1290
      %1324 = vst.msk [vmem:[%s123 + $0x18] sm:$0xf] %vm1317, %v1291
      %1325 = vst.msk [vmem:[%s123 + $0x1c] sm:$0xf] %vm1317, %v1292
      %1326 = vst.msk [vmem:[%s123 + $0x20] sm:$0xf] %vm1317, %v1293
      %1327 = vst.msk [vmem:[%s123 + $0x24] sm:$0xf] %vm1317, %v1294
      %1328 = vst.msk [vmem:[%s123 + $0x28] sm:$0xf] %vm1317, %v1295
      %1329 = vst.msk [vmem:[%s123 + $0x2c] sm:$0xf] %vm1317, %v1296
      %1330 = vst.msk [vmem:[%s123 + $0x30] sm:$0xf] %vm1317, %v1297
      %1331 = vst.msk [vmem:[%s123 + $0x34] sm:$0xf] %vm1317, %v1298
      %1332 = vst.msk [vmem:[%s123 + $0x38] sm:$0xf] %vm1317, %v1299
      %1333 = vst.msk [vmem:[%s123 + $0x3c] sm:$0xf] %vm1317, %v1300
      %1334 = vst.msk [vmem:[%s123 + $0x40] sm:$0xf] %vm1317, %v1301
      %1335 = vst.msk [vmem:[%s123 + $0x44] sm:$0xf] %vm1317, %v1302
      %1336 = vst.msk [vmem:[%s123 + $0x48] sm:$0xf] %vm1317, %v1303
      %1337 = vst.msk [vmem:[%s123 + $0x4c] sm:$0xf] %vm1317, %v1304
      %1338 = vst.msk [vmem:[%s123 + $0x50] sm:$0xf] %vm1317, %v1305
      %1339 = vst.msk [vmem:[%s123 + $0x54] sm:$0xf] %vm1317, %v1306
      %1340 = vst.msk [vmem:[%s123 + $0x58] sm:$0xf] %vm1317, %v1307
      %1341 = vst.msk [vmem:[%s123 + $0x5c] sm:$0xf] %vm1317, %v1308
      %1342 = vst.msk [vmem:[%s123 + $0x60] sm:$0xf] %vm1317, %v1309
      %1343 = vst.msk [vmem:[%s123 + $0x64] sm:$0xf] %vm1317, %v1310
      %1344 = vst.msk [vmem:[%s123 + $0x68] sm:$0xf] %vm1317, %v1311
      %1345 = vst.msk [vmem:[%s123 + $0x6c] sm:$0xf] %vm1317, %v1312
      %1346 = vst.msk [vmem:[%s123 + $0x70] sm:$0xf] %vm1317, %v1313
      %1347 = vst.msk [vmem:[%s123 + $0x74] sm:$0xf] %vm1317, %v1314
      %1348 = vst.msk [vmem:[%s123 + $0x78] sm:$0xf] %vm1317, %v1315
      %1349 = vst.msk [vmem:[%s123 + $0x7c] sm:$0xf] %vm1317, %v1316
      %s1350 = smul.u32 4, %s12
      %p1351 = scmp.lt.s32.totalorder %s1350, 7
      %s1352 = scalar_select %p1351, %s1350, 7
      %s1353 = smul.addr %s1352, 8
      %s1354 = smul.addr %s1353, 4
      %s1355 = scalar_lea.vmem %s1, %s1354
      // Predicated region
      $region25: #{_lambda_.12} parent=23 // pred_check
        %p1356 = pneg %p56
      $region26: #{_lambda_.12} parent=23 // pred_check_branch
        %1358 = sbr.rel (%p1356) target = $region28
      $region27: #{_lambda_.12} parent=23 // pred_region
        %s1359 = smul.u32 4, %s12
      $region28: #{_lambda_.12} parent=23 // pred_fallthru
        _
    $region24: #{_lambda_.12} parent=5 // pred_fallthru
      _
    %p1360 = scmp.le.s32.totalorder 2, %s7
    // Predicated region
    $region29: #{_lambda_.12} parent=5 // pred_check
      %p1361 = pneg %p1360
    $region30: #{_lambda_.12} parent=5 // pred_check_branch
      %1363 = sbr.rel (%p1361) target = $region32
    $region31: #{_lambda_.12} parent=5 // pred_region
      %s1364 = ssub.s32 %s7, 2
      // Predicated region
      $region33: #{_lambda_.12} parent=31 // pred_check
        %p1365 = pneg %p62
      $region34: #{_lambda_.12} parent=31 // pred_check_branch
        %1367 = sbr.rel (%p1365) target = $region36
      $region35: #{_lambda_.12} parent=31 // pred_region
        %s1368 = smul.u32 4, %s13
        %p1369 = scmp.lt.s32.totalorder %s1368, 7
        %s1370 = scalar_select %p1369, %s1368, 7
        %s1371 = smul.addr %s1370, 8
        %s1372 = smul.addr %s1371, 4
        %s1373 = scalar_lea.vmem %s1, %s1372
      $region36: #{_lambda_.12} parent=31 // pred_fallthru
        _
    $region32: #{_lambda_.12} parent=5 // pred_fallthru
      _
  $region6: #{_lambda_.12} parent=0 // loop_footer
    %s11 = sadd.s32 1, %s7
  $region7: #{_lambda_.12} parent=0 // loop_footer_branch
    %6 = sbr.rel target = $region3
  $region8: #{_lambda_.12} parent=0 // loop_exit
    _

// kernel: _lambda_.11
$region0: #{_lambda_.11}
  #allocation0 [shape = 'u32[]', space=smem, size = 0x4, offset = 0x4, fixed_abs, tag = 'smem constant byte address 0x4 - core index']
  #allocation1 [shape = 'u32[144,128]{1,0:T(1,128)}', space=vmem, size = 0x12000, scoped, tag = 'internal scratch']
  %s0 = inlined_call_operand.vmem [shape: bf16[4,343], index: 0, kind: input, shape index: {}]
  %s1 = inlined_call_operand.vmem [shape: bf16[343,1024], index: 1, kind: input, shape index: {}]
  %s2 = inlined_call_operand.vmem [shape: f32[4,1], index: 2, kind: input, shape index: {}]
  %s3 = inlined_call_operand.vmem [shape: f32[4,1], index: 3, kind: input, shape index: {}]
  %s4 = inlined_call_operand.vmem [shape: bf16[4,1024], index: 4, kind: output, shape index: {}]
  %s5 = sld [smem:[#allocation0]]
  $region26: #{_lambda_.11} parent=0
    _
  %s7 = ssub.s32 1, %s5
  %s8 = scalar_select 0, %s7, %s5
  // Predicated region
  $region2: #{_lambda_.11} parent=0 // pred_check
    _
  $region3: #{_lambda_.11} parent=0 // pred_check_branch
    %10 = sbr.rel (0) target = $region5
  $region4: #{_lambda_.11} parent=0 // pred_region
    _
  $region5: #{_lambda_.11} parent=0 // pred_fallthru
    _
  // Predicated region
  $region6: #{_lambda_.11} parent=0 // pred_check
    _
  $region7: #{_lambda_.11} parent=0 // pred_check_branch
    %12 = sbr.rel (0) target = $region9
  $region8: #{_lambda_.11} parent=0 // pred_region
    _
  $region9: #{_lambda_.11} parent=0 // pred_fallthru
    _
  // Predicated region
  $region10: #{_lambda_.11} parent=0 // pred_check
    _
  $region11: #{_lambda_.11} parent=0 // pred_check_branch
    %14 = sbr.rel (0) target = $region13
  $region12: #{_lambda_.11} parent=0 // pred_region
    _
  $region13: #{_lambda_.11} parent=0 // pred_fallthru
    _
  // Predicated region
  $region14: #{_lambda_.11} parent=0 // pred_check
    _
  $region15: #{_lambda_.11} parent=0 // pred_check_branch
    %16 = sbr.rel (0) target = $region17
  $region16: #{_lambda_.11} parent=0 // pred_region
    _
  $region17: #{_lambda_.11} parent=0 // pred_fallthru
    _
  %v18 = vld [vmem:[%s0] sm:$0x3f]
  %v19 = vld [vmem:[%s1] sm:$0xff]
  %v20 = vld [vmem:[%s1 + $0x8] sm:$0xff]
  %v21 = vld [vmem:[%s1 + $0x10] sm:$0xff]
  %v22 = vld [vmem:[%s1 + $0x18] sm:$0xff]
  %v23 = vld [vmem:[%s1 + $0x20] sm:$0xff]
  %v24 = vld [vmem:[%s1 + $0x28] sm:$0xff]
  %v25 = vld [vmem:[%s1 + $0x30] sm:$0xff]
  %v26 = vld [vmem:[%s1 + $0x38] sm:$0xff]
  %v27 = vld [vmem:[%s1 + $0x40] sm:$0xff]
  %v28 = vld [vmem:[%s1 + $0x48] sm:$0xff]
  %v29 = vld [vmem:[%s1 + $0x50] sm:$0xff]
  %v30 = vld [vmem:[%s1 + $0x58] sm:$0xff]
  %v31 = vld [vmem:[%s1 + $0x60] sm:$0xff]
  %v32 = vld [vmem:[%s1 + $0x68] sm:$0xff]
  %v33 = vld [vmem:[%s1 + $0x70] sm:$0xff]
  %v34 = vld [vmem:[%s1 + $0x78] sm:$0xff]
  %v35 = vld [vmem:[%s1 + $0x80] sm:$0xff]
  %v36 = vld [vmem:[%s1 + $0x88] sm:$0xff]
  %v37 = vld [vmem:[%s1 + $0x90] sm:$0xff]
  %v38 = vld [vmem:[%s1 + $0x98] sm:$0xff]
  %v39 = vld [vmem:[%s1 + $0xa0] sm:$0xff]
  %v40 = vld [vmem:[%s1 + $0xa8] sm:$0xff]
  %v41 = vld [vmem:[%s1 + $0xb0] sm:$0xff]
  %v42 = vld [vmem:[%s1 + $0xb8] sm:$0xff]
  %v43 = vld [vmem:[%s1 + $0xc0] sm:$0xff]
  %v44 = vld [vmem:[%s1 + $0xc8] sm:$0xff]
  %v45 = vld [vmem:[%s1 + $0xd0] sm:$0xff]
  %v46 = vld [vmem:[%s1 + $0xd8] sm:$0xff]
  %v47 = vld [vmem:[%s1 + $0xe0] sm:$0xff]
  %v48 = vld [vmem:[%s1 + $0xe8] sm:$0xff]
  %v49 = vld [vmem:[%s1 + $0xf0] sm:$0xff]
  %v50 = vld [vmem:[%s1 + $0xf8] sm:$0xff]
  %v51 = vld [vmem:[%s1 + $0x100] sm:$0xff]
  %v52 = vld [vmem:[%s1 + $0x108] sm:$0xff]
  %v53 = vld [vmem:[%s1 + $0x110] sm:$0xff]
  %v54 = vld [vmem:[%s1 + $0x118] sm:$0xff]
  %v55 = vld [vmem:[%s1 + $0x120] sm:$0xff]
  %v56 = vld [vmem:[%s1 + $0x128] sm:$0xff]
  %v57 = vld [vmem:[%s1 + $0x130] sm:$0xff]
  %v58 = vld [vmem:[%s1 + $0x138] sm:$0xff]
  %v59 = vld [vmem:[%s1 + $0x140] sm:$0xff]
  %v60 = vld [vmem:[%s1 + $0x148] sm:$0xff]
  %v61 = vld [vmem:[%s1 + $0x150] sm:$0xff]
  %v62 = vld [vmem:[%s1 + $0x158] sm:$0xff]
  %v63 = vld [vmem:[%s1 + $0x160] sm:$0xff]
  %v64 = vld [vmem:[%s1 + $0x168] sm:$0xff]
  %v65 = vld [vmem:[%s1 + $0x170] sm:$0xff]
  %v66 = vld [vmem:[%s1 + $0x178] sm:$0xff]
  %v67 = vld [vmem:[%s1 + $0x180] sm:$0xff]
  %v68 = vld [vmem:[%s1 + $0x188] sm:$0xff]
  %v69 = vld [vmem:[%s1 + $0x190] sm:$0xff]
  %v70 = vld [vmem:[%s1 + $0x198] sm:$0xff]
  %v71 = vld [vmem:[%s1 + $0x1a0] sm:$0xff]
  %v72 = vld [vmem:[%s1 + $0x1a8] sm:$0xff]
  %v73 = vld [vmem:[%s1 + $0x1b0] sm:$0xff]
  %v74 = vld [vmem:[%s1 + $0x1b8] sm:$0xff]
  %v75 = vld [vmem:[%s1 + $0x1c0] sm:$0xff]
  %v76 = vld [vmem:[%s1 + $0x1c8] sm:$0xff]
  %v77 = vld [vmem:[%s1 + $0x1d0] sm:$0xff]
  %v78 = vld [vmem:[%s1 + $0x1d8] sm:$0xff]
  %v79 = vld [vmem:[%s1 + $0x1e0] sm:$0xff]
  %v80 = vld [vmem:[%s1 + $0x1e8] sm:$0xff]
  %v81 = vld [vmem:[%s1 + $0x1f0] sm:$0xff]
  %v82 = vld [vmem:[%s1 + $0x1f8] sm:$0xff]
  %v83 = vld [vmem:[%s1 + $0x200] sm:$0xff]
  %v84 = vld [vmem:[%s1 + $0x208] sm:$0xff]
  %v85 = vld [vmem:[%s1 + $0x210] sm:$0xff]
  %v86 = vld [vmem:[%s1 + $0x218] sm:$0xff]
  %v87 = vld [vmem:[%s1 + $0x220] sm:$0xff]
  %v88 = vld [vmem:[%s1 + $0x228] sm:$0xff]
  %v89 = vld [vmem:[%s1 + $0x230] sm:$0xff]
  %v90 = vld [vmem:[%s1 + $0x238] sm:$0xff]
  %v91 = vld [vmem:[%s1 + $0x240] sm:$0xff]
  %v92 = vld [vmem:[%s1 + $0x248] sm:$0xff]
  %v93 = vld [vmem:[%s1 + $0x250] sm:$0xff]
  %v94 = vld [vmem:[%s1 + $0x258] sm:$0xff]
  %v95 = vld [vmem:[%s1 + $0x260] sm:$0xff]
  %v96 = vld [vmem:[%s1 + $0x268] sm:$0xff]
  %v97 = vld [vmem:[%s1 + $0x270] sm:$0xff]
  %v98 = vld [vmem:[%s1 + $0x278] sm:$0xff]
  %v99 = vld [vmem:[%s1 + $0x280] sm:$0xff]
  %v100 = vld [vmem:[%s1 + $0x288] sm:$0xff]
  %v101 = vld [vmem:[%s1 + $0x290] sm:$0xff]
  %v102 = vld [vmem:[%s1 + $0x298] sm:$0xff]
  %v103 = vld [vmem:[%s1 + $0x2a0] sm:$0xff]
  %v104 = vld [vmem:[%s1 + $0x2a8] sm:$0xff]
  %v105 = vld [vmem:[%s1 + $0x2b0] sm:$0xff]
  %v106 = vld [vmem:[%s1 + $0x2b8] sm:$0xff]
  %v107 = vld [vmem:[%s1 + $0x2c0] sm:$0xff]
  %v108 = vld [vmem:[%s1 + $0x2c8] sm:$0xff]
  %v109 = vld [vmem:[%s1 + $0x2d0] sm:$0xff]
  %v110 = vld [vmem:[%s1 + $0x2d8] sm:$0xff]
  %v111 = vld [vmem:[%s1 + $0x2e0] sm:$0xff]
  %v112 = vld [vmem:[%s1 + $0x2e8] sm:$0xff]
  %v113 = vld [vmem:[%s1 + $0x2f0] sm:$0xff]
  %v114 = vld [vmem:[%s1 + $0x2f8] sm:$0xff]
  %v115 = vld [vmem:[%s1 + $0x300] sm:$0xff]
  %v116 = vld [vmem:[%s1 + $0x308] sm:$0xff]
  %v117 = vld [vmem:[%s1 + $0x310] sm:$0xff]
  %v118 = vld [vmem:[%s1 + $0x318] sm:$0xff]
  %v119 = vld [vmem:[%s1 + $0x320] sm:$0xff]
  %v120 = vld [vmem:[%s1 + $0x328] sm:$0xff]
  %v121 = vld [vmem:[%s1 + $0x330] sm:$0xff]
  %v122 = vld [vmem:[%s1 + $0x338] sm:$0xff]
  %v123 = vld [vmem:[%s1 + $0x340] sm:$0xff]
  %v124 = vld [vmem:[%s1 + $0x348] sm:$0xff]
  %v125 = vld [vmem:[%s1 + $0x350] sm:$0xff]
  %v126 = vld [vmem:[%s1 + $0x358] sm:$0xff]
  %v127 = vld [vmem:[%s1 + $0x360] sm:$0xff]
  %v128 = vld [vmem:[%s1 + $0x368] sm:$0xff]
  %v129 = vld [vmem:[%s1 + $0x370] sm:$0xff]
  %v130 = vld [vmem:[%s1 + $0x378] sm:$0xff]
  %v131 = vld [vmem:[%s1 + $0x380] sm:$0xff]
  %v132 = vld [vmem:[%s1 + $0x388] sm:$0xff]
  %v133 = vld [vmem:[%s1 + $0x390] sm:$0xff]
  %v134 = vld [vmem:[%s1 + $0x398] sm:$0xff]
  %v135 = vld [vmem:[%s1 + $0x3a0] sm:$0xff]
  %v136 = vld [vmem:[%s1 + $0x3a8] sm:$0xff]
  %v137 = vld [vmem:[%s1 + $0x3b0] sm:$0xff]
  %v138 = vld [vmem:[%s1 + $0x3b8] sm:$0xff]
  %v139 = vld [vmem:[%s1 + $0x3c0] sm:$0xff]
  %v140 = vld [vmem:[%s1 + $0x3c8] sm:$0xff]
  %v141 = vld [vmem:[%s1 + $0x3d0] sm:$0xff]
  %v142 = vld [vmem:[%s1 + $0x3d8] sm:$0xff]
  %v143 = vld [vmem:[%s1 + $0x3e0] sm:$0xff]
  %v144 = vld [vmem:[%s1 + $0x3e8] sm:$0xff]
  %v145 = vld [vmem:[%s1 + $0x3f0] sm:$0xff]
  %v146 = vld [vmem:[%s1 + $0x3f8] sm:$0xff]
  %v147 = vld [vmem:[%s1 + $0x400] sm:$0xff]
  %v148 = vld [vmem:[%s1 + $0x408] sm:$0xff]
  %v149 = vld [vmem:[%s1 + $0x410] sm:$0xff]
  %v150 = vld [vmem:[%s1 + $0x418] sm:$0xff]
  %v151 = vld [vmem:[%s1 + $0x420] sm:$0xff]
  %v152 = vld [vmem:[%s1 + $0x428] sm:$0xff]
  %v153 = vld [vmem:[%s1 + $0x430] sm:$0xff]
  %v154 = vld [vmem:[%s1 + $0x438] sm:$0xff]
  %v155 = vld [vmem:[%s1 + $0x440] sm:$0xff]
  %v156 = vld [vmem:[%s1 + $0x448] sm:$0xff]
  %v157 = vld [vmem:[%s1 + $0x450] sm:$0xff]
  %v158 = vld [vmem:[%s1 + $0x458] sm:$0xff]
  %v159 = vld [vmem:[%s1 + $0x460] sm:$0xff]
  %v160 = vld [vmem:[%s1 + $0x468] sm:$0xff]
  %v161 = vld [vmem:[%s1 + $0x470] sm:$0xff]
  %v162 = vld [vmem:[%s1 + $0x478] sm:$0xff]
  %v163 = vld [vmem:[%s1 + $0x480] sm:$0xff]
  %v164 = vld [vmem:[%s1 + $0x488] sm:$0xff]
  %v165 = vld [vmem:[%s1 + $0x490] sm:$0xff]
  %v166 = vld [vmem:[%s1 + $0x498] sm:$0xff]
  %v167 = vld [vmem:[%s1 + $0x4a0] sm:$0xff]
  %v168 = vld [vmem:[%s1 + $0x4a8] sm:$0xff]
  %v169 = vld [vmem:[%s1 + $0x4b0] sm:$0xff]
  %v170 = vld [vmem:[%s1 + $0x4b8] sm:$0xff]
  %v171 = vld [vmem:[%s1 + $0x4c0] sm:$0xff]
  %v172 = vld [vmem:[%s1 + $0x4c8] sm:$0xff]
  %v173 = vld [vmem:[%s1 + $0x4d0] sm:$0xff]
  %v174 = vld [vmem:[%s1 + $0x4d8] sm:$0xff]
  %v175 = vld [vmem:[%s1 + $0x4e0] sm:$0xff]
  %v176 = vld [vmem:[%s1 + $0x4e8] sm:$0xff]
  %v177 = vld [vmem:[%s1 + $0x4f0] sm:$0xff]
  %v178 = vld [vmem:[%s1 + $0x4f8] sm:$0xff]
  %v179 = vld [vmem:[%s1 + $0x500] sm:$0xff]
  %v180 = vld [vmem:[%s1 + $0x508] sm:$0xff]
  %v181 = vld [vmem:[%s1 + $0x510] sm:$0xff]
  %v182 = vld [vmem:[%s1 + $0x518] sm:$0xff]
  %v183 = vld [vmem:[%s1 + $0x520] sm:$0xff]
  %v184 = vld [vmem:[%s1 + $0x528] sm:$0xff]
  %v185 = vld [vmem:[%s1 + $0x530] sm:$0xff]
  %v186 = vld [vmem:[%s1 + $0x538] sm:$0xff]
  %v187 = vld [vmem:[%s1 + $0x540] sm:$0xff]
  %v188 = vld [vmem:[%s1 + $0x548] sm:$0xff]
  %v189 = vld [vmem:[%s1 + $0x550] sm:$0xff]
  %v190 = vld [vmem:[%s1 + $0x558] sm:$0xff]
  %v192 = vcombine.high %v18, %v18
  %v194 = vunpack.c.l.s4 1983009808
  %v195 = vunpack.c.0.s8 %v194
  %v196 = vlaneseq
  %v197 = vshrl.u32 %v196, 7
  %v198 = vsub.s32 %v195, %v197
  %v199 = vrot.slane %v18, %v198
  %v201 = vunpack.c.l.s4 1983009808
  %v202 = vunpack.c.0.s8 %v201
  %v203 = vlaneseq
  %v204 = vshrl.u32 %v203, 7
  %v205 = vsub.s32 %v202, %v204
  %v206 = vrot.slane %v192, %v205
  %v207 = vcombine.high %v199, %v199
  %v382 = vunpack.c.l.b16 %v19
  %v383 = vunpack.c.h.b16 %v19
  %v384 = vunpack.c.l.b16 %v20
  %v385 = vunpack.c.h.b16 %v20
  %v386 = vunpack.c.l.b16 %v21
  %v387 = vunpack.c.h.b16 %v21
  %v388 = vunpack.c.l.b16 %v22
  %v389 = vunpack.c.h.b16 %v22
  %v390 = vunpack.c.l.b16 %v23
  %v391 = vunpack.c.h.b16 %v23
  %v392 = vunpack.c.l.b16 %v24
  %v393 = vunpack.c.h.b16 %v24
  %v394 = vunpack.c.l.b16 %v25
  %v395 = vunpack.c.h.b16 %v25
  %v396 = vunpack.c.l.b16 %v26
  %v397 = vunpack.c.h.b16 %v26
  %v398 = vunpack.c.l.b16 %v27
  %v399 = vunpack.c.h.b16 %v27
  %v400 = vunpack.c.l.b16 %v28
  %v401 = vunpack.c.h.b16 %v28
  %v402 = vunpack.c.l.b16 %v29
  %v403 = vunpack.c.h.b16 %v29
  %v404 = vunpack.c.l.b16 %v30
  %v405 = vunpack.c.h.b16 %v30
  %v406 = vunpack.c.l.b16 %v31
  %v407 = vunpack.c.h.b16 %v31
  %v408 = vunpack.c.l.b16 %v32
  %v409 = vunpack.c.h.b16 %v32
  %v410 = vunpack.c.l.b16 %v33
  %v411 = vunpack.c.h.b16 %v33
  %v412 = vunpack.c.l.b16 %v34
  %v413 = vunpack.c.h.b16 %v34
  %v414 = vunpack.c.l.b16 %v35
  %v415 = vunpack.c.h.b16 %v35
  %v416 = vunpack.c.l.b16 %v36
  %v417 = vunpack.c.h.b16 %v36
  %v418 = vunpack.c.l.b16 %v37
  %v419 = vunpack.c.h.b16 %v37
  %v420 = vunpack.c.l.b16 %v38
  %v421 = vunpack.c.h.b16 %v38
  %v422 = vunpack.c.l.b16 %v39
  %v423 = vunpack.c.h.b16 %v39
  %v424 = vunpack.c.l.b16 %v40
  %v425 = vunpack.c.h.b16 %v40
  %v426 = vunpack.c.l.b16 %v41
  %v427 = vunpack.c.h.b16 %v41
  %v428 = vunpack.c.l.b16 %v42
  %v429 = vunpack.c.h.b16 %v42
  %v430 = vunpack.c.l.b16 %v43
  %v431 = vunpack.c.h.b16 %v43
  %v432 = vunpack.c.l.b16 %v44
  %v433 = vunpack.c.h.b16 %v44
  %v434 = vunpack.c.l.b16 %v45
  %v435 = vunpack.c.h.b16 %v45
  %v436 = vunpack.c.l.b16 %v46
  %v437 = vunpack.c.h.b16 %v46
  %v438 = vunpack.c.l.b16 %v47
  %v439 = vunpack.c.h.b16 %v47
  %v440 = vunpack.c.l.b16 %v48
  %v441 = vunpack.c.h.b16 %v48
  %v442 = vunpack.c.l.b16 %v49
  %v443 = vunpack.c.h.b16 %v49
  %v444 = vunpack.c.l.b16 %v50
  %v445 = vunpack.c.h.b16 %v50
  %v446 = vunpack.c.l.b16 %v51
  %v447 = vunpack.c.h.b16 %v51
  %v448 = vunpack.c.l.b16 %v52
  %v449 = vunpack.c.h.b16 %v52
  %v450 = vunpack.c.l.b16 %v53
  %v451 = vunpack.c.h.b16 %v53
  %v452 = vunpack.c.l.b16 %v54
  %v453 = vunpack.c.h.b16 %v54
  %v454 = vunpack.c.l.b16 %v55
  %v455 = vunpack.c.h.b16 %v55
  %v456 = vunpack.c.l.b16 %v56
  %v457 = vunpack.c.h.b16 %v56
  %v458 = vunpack.c.l.b16 %v57
  %v459 = vunpack.c.h.b16 %v57
  %v460 = vunpack.c.l.b16 %v58
  %v461 = vunpack.c.h.b16 %v58
  %v462 = vunpack.c.l.b16 %v59
  %v463 = vunpack.c.h.b16 %v59
  %v464 = vunpack.c.l.b16 %v60
  %v465 = vunpack.c.h.b16 %v60
  %v466 = vunpack.c.l.b16 %v61
  %v467 = vunpack.c.h.b16 %v61
  %v468 = vunpack.c.l.b16 %v62
  %v469 = vunpack.c.h.b16 %v62
  %v470 = vunpack.c.l.b16 %v63
  %v471 = vunpack.c.h.b16 %v63
  %v472 = vunpack.c.l.b16 %v64
  %v473 = vunpack.c.h.b16 %v64
  %v474 = vunpack.c.l.b16 %v65
  %v475 = vunpack.c.h.b16 %v65
  %v476 = vunpack.c.l.b16 %v66
  %v477 = vunpack.c.h.b16 %v66
  %v478 = vunpack.c.l.b16 %v67
  %v479 = vunpack.c.h.b16 %v67
  %v480 = vunpack.c.l.b16 %v68
  %v481 = vunpack.c.h.b16 %v68
  %v482 = vunpack.c.l.b16 %v69
  %v483 = vunpack.c.h.b16 %v69
  %v484 = vunpack.c.l.b16 %v70
  %v485 = vunpack.c.h.b16 %v70
  %v486 = vunpack.c.l.b16 %v71
  %v487 = vunpack.c.h.b16 %v71
  %v488 = vunpack.c.l.b16 %v72
  %v489 = vunpack.c.h.b16 %v72
  %v490 = vunpack.c.l.b16 %v73
  %v491 = vunpack.c.h.b16 %v73
  %v492 = vunpack.c.l.b16 %v74
  %v493 = vunpack.c.h.b16 %v74
  %v494 = vunpack.c.l.b16 %v75
  %v495 = vunpack.c.h.b16 %v75
  %v496 = vunpack.c.l.b16 %v76
  %v497 = vunpack.c.h.b16 %v76
  %v498 = vunpack.c.l.b16 %v77
  %v499 = vunpack.c.h.b16 %v77
  %v500 = vunpack.c.l.b16 %v78
  %v501 = vunpack.c.h.b16 %v78
  %v502 = vunpack.c.l.b16 %v79
  %v503 = vunpack.c.h.b16 %v79
  %v504 = vunpack.c.l.b16 %v80
  %v505 = vunpack.c.h.b16 %v80
  %v506 = vunpack.c.l.b16 %v81
  %v507 = vunpack.c.h.b16 %v81
  %v508 = vunpack.c.l.b16 %v82
  %v509 = vunpack.c.h.b16 %v82
  %v510 = vunpack.c.l.b16 %v83
  %v511 = vunpack.c.h.b16 %v83
  %v512 = vunpack.c.l.b16 %v84
  %v513 = vunpack.c.h.b16 %v84
  %v514 = vunpack.c.l.b16 %v85
  %v515 = vunpack.c.h.b16 %v85
  %v516 = vunpack.c.l.b16 %v86
  %v517 = vunpack.c.h.b16 %v86
  %v518 = vunpack.c.l.b16 %v87
  %v519 = vunpack.c.h.b16 %v87
  %v520 = vunpack.c.l.b16 %v88
  %v521 = vunpack.c.h.b16 %v88
  %v522 = vunpack.c.l.b16 %v89
  %v523 = vunpack.c.h.b16 %v89
  %v524 = vunpack.c.l.b16 %v90
  %v525 = vunpack.c.h.b16 %v90
  %v526 = vunpack.c.l.b16 %v91
  %v527 = vunpack.c.h.b16 %v91
  %v528 = vunpack.c.l.b16 %v92
  %v529 = vunpack.c.h.b16 %v92
  %v530 = vunpack.c.l.b16 %v93
  %v531 = vunpack.c.h.b16 %v93
  %v532 = vunpack.c.l.b16 %v94
  %v533 = vunpack.c.h.b16 %v94
  %v534 = vunpack.c.l.b16 %v95
  %v535 = vunpack.c.h.b16 %v95
  %v536 = vunpack.c.l.b16 %v96
  %v537 = vunpack.c.h.b16 %v96
  %v538 = vunpack.c.l.b16 %v97
  %v539 = vunpack.c.h.b16 %v97
  %v540 = vunpack.c.l.b16 %v98
  %v541 = vunpack.c.h.b16 %v98
  %v542 = vunpack.c.l.b16 %v99
  %v543 = vunpack.c.h.b16 %v99
  %v544 = vunpack.c.l.b16 %v100
  %v545 = vunpack.c.h.b16 %v100
  %v546 = vunpack.c.l.b16 %v101
  %v547 = vunpack.c.h.b16 %v101
  %v548 = vunpack.c.l.b16 %v102
  %v549 = vunpack.c.h.b16 %v102
  %v550 = vunpack.c.l.b16 %v103
  %v551 = vunpack.c.h.b16 %v103
  %v552 = vunpack.c.l.b16 %v104
  %v553 = vunpack.c.h.b16 %v104
  %v554 = vunpack.c.l.b16 %v105
  %v555 = vunpack.c.h.b16 %v105
  %v556 = vunpack.c.l.b16 %v106
  %v557 = vunpack.c.h.b16 %v106
  %v558 = vunpack.c.l.b16 %v107
  %v559 = vunpack.c.h.b16 %v107
  %v560 = vunpack.c.l.b16 %v108
  %v561 = vunpack.c.h.b16 %v108
  %v562 = vunpack.c.l.b16 %v109
  %v563 = vunpack.c.h.b16 %v109
  %v564 = vunpack.c.l.b16 %v110
  %v565 = vunpack.c.h.b16 %v110
  %v566 = vunpack.c.l.b16 %v111
  %v567 = vunpack.c.h.b16 %v111
  %v568 = vunpack.c.l.b16 %v112
  %v569 = vunpack.c.h.b16 %v112
  %v570 = vunpack.c.l.b16 %v113
  %v571 = vunpack.c.h.b16 %v113
  %v572 = vunpack.c.l.b16 %v114
  %v573 = vunpack.c.h.b16 %v114
  %v574 = vunpack.c.l.b16 %v115
  %v575 = vunpack.c.h.b16 %v115
  %v576 = vunpack.c.l.b16 %v116
  %v577 = vunpack.c.h.b16 %v116
  %v578 = vunpack.c.l.b16 %v117
  %v579 = vunpack.c.h.b16 %v117
  %v580 = vunpack.c.l.b16 %v118
  %v581 = vunpack.c.h.b16 %v118
  %v582 = vunpack.c.l.b16 %v119
  %v583 = vunpack.c.h.b16 %v119
  %v584 = vunpack.c.l.b16 %v120
  %v585 = vunpack.c.h.b16 %v120
  %v586 = vunpack.c.l.b16 %v121
  %v587 = vunpack.c.h.b16 %v121
  %v588 = vunpack.c.l.b16 %v122
  %v589 = vunpack.c.h.b16 %v122
  %v590 = vunpack.c.l.b16 %v123
  %v591 = vunpack.c.h.b16 %v123
  %v592 = vunpack.c.l.b16 %v124
  %v593 = vunpack.c.h.b16 %v124
  %v594 = vunpack.c.l.b16 %v125
  %v595 = vunpack.c.h.b16 %v125
  %v596 = vunpack.c.l.b16 %v126
  %v597 = vunpack.c.h.b16 %v126
  %v598 = vunpack.c.l.b16 %v127
  %v599 = vunpack.c.h.b16 %v127
  %v600 = vunpack.c.l.b16 %v128
  %v601 = vunpack.c.h.b16 %v128
  %v602 = vunpack.c.l.b16 %v129
  %v603 = vunpack.c.h.b16 %v129
  %v604 = vunpack.c.l.b16 %v130
  %v605 = vunpack.c.h.b16 %v130
  %v606 = vunpack.c.l.b16 %v131
  %v607 = vunpack.c.h.b16 %v131
  %v608 = vunpack.c.l.b16 %v132
  %v609 = vunpack.c.h.b16 %v132
  %v610 = vunpack.c.l.b16 %v133
  %v611 = vunpack.c.h.b16 %v133
  %v612 = vunpack.c.l.b16 %v134
  %v613 = vunpack.c.h.b16 %v134
  %v614 = vunpack.c.l.b16 %v135
  %v615 = vunpack.c.h.b16 %v135
  %v616 = vunpack.c.l.b16 %v136
  %v617 = vunpack.c.h.b16 %v136
  %v618 = vunpack.c.l.b16 %v137
  %v619 = vunpack.c.h.b16 %v137
  %v620 = vunpack.c.l.b16 %v138
  %v621 = vunpack.c.h.b16 %v138
  %v622 = vunpack.c.l.b16 %v139
  %v623 = vunpack.c.h.b16 %v139
  %v624 = vunpack.c.l.b16 %v140
  %v625 = vunpack.c.h.b16 %v140
  %v626 = vunpack.c.l.b16 %v141
  %v627 = vunpack.c.h.b16 %v141
  %v628 = vunpack.c.l.b16 %v142
  %v629 = vunpack.c.h.b16 %v142
  %v630 = vunpack.c.l.b16 %v143
  %v631 = vunpack.c.h.b16 %v143
  %v632 = vunpack.c.l.b16 %v144
  %v633 = vunpack.c.h.b16 %v144
  %v634 = vunpack.c.l.b16 %v145
  %v635 = vunpack.c.h.b16 %v145
  %v636 = vunpack.c.l.b16 %v146
  %v637 = vunpack.c.h.b16 %v146
  %v638 = vunpack.c.l.b16 %v147
  %v639 = vunpack.c.h.b16 %v147
  %v640 = vunpack.c.l.b16 %v148
  %v641 = vunpack.c.h.b16 %v148
  %v642 = vunpack.c.l.b16 %v149
  %v643 = vunpack.c.h.b16 %v149
  %v644 = vunpack.c.l.b16 %v150
  %v645 = vunpack.c.h.b16 %v150
  %v646 = vunpack.c.l.b16 %v151
  %v647 = vunpack.c.h.b16 %v151
  %v648 = vunpack.c.l.b16 %v152
  %v649 = vunpack.c.h.b16 %v152
  %v650 = vunpack.c.l.b16 %v153
  %v651 = vunpack.c.h.b16 %v153
  %v652 = vunpack.c.l.b16 %v154
  %v653 = vunpack.c.h.b16 %v154
  %v654 = vunpack.c.l.b16 %v155
  %v655 = vunpack.c.h.b16 %v155
  %v656 = vunpack.c.l.b16 %v156
  %v657 = vunpack.c.h.b16 %v156
  %v658 = vunpack.c.l.b16 %v157
  %v659 = vunpack.c.h.b16 %v157
  %v660 = vunpack.c.l.b16 %v158
  %v661 = vunpack.c.h.b16 %v158
  %v662 = vunpack.c.l.b16 %v159
  %v663 = vunpack.c.h.b16 %v159
  %v664 = vunpack.c.l.b16 %v160
  %v665 = vunpack.c.h.b16 %v160
  %v666 = vunpack.c.l.b16 %v161
  %v667 = vunpack.c.h.b16 %v161
  %v668 = vunpack.c.l.b16 %v162
  %v669 = vunpack.c.h.b16 %v162
  %v670 = vunpack.c.l.b16 %v163
  %v671 = vunpack.c.h.b16 %v163
  %v672 = vunpack.c.l.b16 %v164
  %v673 = vunpack.c.h.b16 %v164
  %v674 = vunpack.c.l.b16 %v165
  %v675 = vunpack.c.h.b16 %v165
  %v676 = vunpack.c.l.b16 %v166
  %v677 = vunpack.c.h.b16 %v166
  %v678 = vunpack.c.l.b16 %v167
  %v679 = vunpack.c.h.b16 %v167
  %v680 = vunpack.c.l.b16 %v168
  %v681 = vunpack.c.h.b16 %v168
  %v682 = vunpack.c.l.b16 %v169
  %v683 = vunpack.c.h.b16 %v169
  %v684 = vunpack.c.l.b16 %v170
  %v685 = vunpack.c.h.b16 %v170
  %v686 = vunpack.c.l.b16 %v171
  %v687 = vunpack.c.h.b16 %v171
  %v688 = vunpack.c.l.b16 %v172
  %v689 = vunpack.c.h.b16 %v172
  %v690 = vunpack.c.l.b16 %v173
  %v691 = vunpack.c.h.b16 %v173
  %v692 = vunpack.c.l.b16 %v174
  %v693 = vunpack.c.h.b16 %v174
  %v694 = vunpack.c.l.b16 %v175
  %v695 = vunpack.c.h.b16 %v175
  %v696 = vunpack.c.l.b16 %v176
  %v697 = vunpack.c.h.b16 %v176
  %v698 = vunpack.c.l.b16 %v177
  %v699 = vunpack.c.h.b16 %v177
  %v700 = vunpack.c.l.b16 %v178
  %v701 = vunpack.c.h.b16 %v178
  %v702 = vunpack.c.l.b16 %v179
  %v703 = vunpack.c.h.b16 %v179
  %v704 = vunpack.c.l.b16 %v180
  %v705 = vunpack.c.h.b16 %v180
  %v706 = vunpack.c.l.b16 %v181
  %v707 = vunpack.c.h.b16 %v181
  %v708 = vunpack.c.l.b16 %v182
  %v709 = vunpack.c.h.b16 %v182
  %v710 = vunpack.c.l.b16 %v183
  %v711 = vunpack.c.h.b16 %v183
  %v712 = vunpack.c.l.b16 %v184
  %v713 = vunpack.c.h.b16 %v184
  %v714 = vunpack.c.l.b16 %v185
  %v715 = vunpack.c.h.b16 %v185
  %v716 = vunpack.c.l.b16 %v186
  %v717 = vunpack.c.h.b16 %v186
  %v718 = vunpack.c.l.b16 %v187
  %v719 = vunpack.c.h.b16 %v187
  %v720 = vunpack.c.l.b16 %v188
  %v721 = vunpack.c.h.b16 %v188
  %v722 = vunpack.c.l.b16 %v189
  %v723 = vunpack.c.h.b16 %v189
  %v724 = vunpack.c.l.b16 %v190
  %v725 = vunpack.c.h.b16 %v190
  %v726 = vpack.c.b16 %v390, %v382
  %v727 = vpack.c.b16 %v391, %v383
  %v728 = vpack.c.b16 %v392, %v384
  %v729 = vpack.c.b16 %v393, %v385
  %v730 = vpack.c.b16 %v394, %v386
  %v731 = vpack.c.b16 %v395, %v387
  %v732 = vpack.c.b16 %v396, %v388
  %v733 = vpack.c.b16 %v397, %v389
  %v734 = vpack.c.b16 %v406, %v398
  %v735 = vpack.c.b16 %v407, %v399
  %v736 = vpack.c.b16 %v408, %v400
  %v737 = vpack.c.b16 %v409, %v401
  %v738 = vpack.c.b16 %v410, %v402
  %v739 = vpack.c.b16 %v411, %v403
  %v740 = vpack.c.b16 %v412, %v404
  %v741 = vpack.c.b16 %v413, %v405
  %v742 = vpack.c.b16 %v422, %v414
  %v743 = vpack.c.b16 %v423, %v415
  %v744 = vpack.c.b16 %v424, %v416
  %v745 = vpack.c.b16 %v425, %v417
  %v746 = vpack.c.b16 %v426, %v418
  %v747 = vpack.c.b16 %v427, %v419
  %v748 = vpack.c.b16 %v428, %v420
  %v749 = vpack.c.b16 %v429, %v421
  %v750 = vpack.c.b16 %v438, %v430
  %v751 = vpack.c.b16 %v439, %v431
  %v752 = vpack.c.b16 %v440, %v432
  %v753 = vpack.c.b16 %v441, %v433
  %v754 = vpack.c.b16 %v442, %v434
  %v755 = vpack.c.b16 %v443, %v435
  %v756 = vpack.c.b16 %v444, %v436
  %v757 = vpack.c.b16 %v445, %v437
  %v758 = vpack.c.b16 %v454, %v446
  %v759 = vpack.c.b16 %v455, %v447
  %v760 = vpack.c.b16 %v456, %v448
  %v761 = vpack.c.b16 %v457, %v449
  %v762 = vpack.c.b16 %v458, %v450
  %v763 = vpack.c.b16 %v459, %v451
  %v764 = vpack.c.b16 %v460, %v452
  %v765 = vpack.c.b16 %v461, %v453
  %v766 = vpack.c.b16 %v470, %v462
  %v767 = vpack.c.b16 %v471, %v463
  %v768 = vpack.c.b16 %v472, %v464
  %v769 = vpack.c.b16 %v473, %v465
  %v770 = vpack.c.b16 %v474, %v466
  %v771 = vpack.c.b16 %v475, %v467
  %v772 = vpack.c.b16 %v476, %v468
  %v773 = vpack.c.b16 %v477, %v469
  %v774 = vpack.c.b16 %v486, %v478
  %v775 = vpack.c.b16 %v487, %v479
  %v776 = vpack.c.b16 %v488, %v480
  %v777 = vpack.c.b16 %v489, %v481
  %v778 = vpack.c.b16 %v490, %v482
  %v779 = vpack.c.b16 %v491, %v483
  %v780 = vpack.c.b16 %v492, %v484
  %v781 = vpack.c.b16 %v493, %v485
  %v782 = vpack.c.b16 %v502, %v494
  %v783 = vpack.c.b16 %v503, %v495
  %v784 = vpack.c.b16 %v504, %v496
  %v785 = vpack.c.b16 %v505, %v497
  %v786 = vpack.c.b16 %v506, %v498
  %v787 = vpack.c.b16 %v507, %v499
  %v788 = vpack.c.b16 %v508, %v500
  %v789 = vpack.c.b16 %v509, %v501
  %v790 = vpack.c.b16 %v518, %v510
  %v791 = vpack.c.b16 %v519, %v511
  %v792 = vpack.c.b16 %v520, %v512
  %v793 = vpack.c.b16 %v521, %v513
  %v794 = vpack.c.b16 %v522, %v514
  %v795 = vpack.c.b16 %v523, %v515
  %v796 = vpack.c.b16 %v524, %v516
  %v797 = vpack.c.b16 %v525, %v517
  %v798 = vpack.c.b16 %v534, %v526
  %v799 = vpack.c.b16 %v535, %v527
  %v800 = vpack.c.b16 %v536, %v528
  %v801 = vpack.c.b16 %v537, %v529
  %v802 = vpack.c.b16 %v538, %v530
  %v803 = vpack.c.b16 %v539, %v531
  %v804 = vpack.c.b16 %v540, %v532
  %v805 = vpack.c.b16 %v541, %v533
  %v806 = vpack.c.b16 %v550, %v542
  %v807 = vpack.c.b16 %v551, %v543
  %v808 = vpack.c.b16 %v552, %v544
  %v809 = vpack.c.b16 %v553, %v545
  %v810 = vpack.c.b16 %v554, %v546
  %v811 = vpack.c.b16 %v555, %v547
  %v812 = vpack.c.b16 %v556, %v548
  %v813 = vpack.c.b16 %v557, %v549
  %v814 = vpack.c.b16 %v566, %v558
  %v815 = vpack.c.b16 %v567, %v559
  %v816 = vpack.c.b16 %v568, %v560
  %v817 = vpack.c.b16 %v569, %v561
  %v818 = vpack.c.b16 %v570, %v562
  %v819 = vpack.c.b16 %v571, %v563
  %v820 = vpack.c.b16 %v572, %v564
  %v821 = vpack.c.b16 %v573, %v565
  %v822 = vpack.c.b16 %v582, %v574
  %v823 = vpack.c.b16 %v583, %v575
  %v824 = vpack.c.b16 %v584, %v576
  %v825 = vpack.c.b16 %v585, %v577
  %v826 = vpack.c.b16 %v586, %v578
  %v827 = vpack.c.b16 %v587, %v579
  %v828 = vpack.c.b16 %v588, %v580
  %v829 = vpack.c.b16 %v589, %v581
  %v830 = vpack.c.b16 %v598, %v590
  %v831 = vpack.c.b16 %v599, %v591
  %v832 = vpack.c.b16 %v600, %v592
  %v833 = vpack.c.b16 %v601, %v593
  %v834 = vpack.c.b16 %v602, %v594
  %v835 = vpack.c.b16 %v603, %v595
  %v836 = vpack.c.b16 %v604, %v596
  %v837 = vpack.c.b16 %v605, %v597
  %v838 = vpack.c.b16 %v614, %v606
  %v839 = vpack.c.b16 %v615, %v607
  %v840 = vpack.c.b16 %v616, %v608
  %v841 = vpack.c.b16 %v617, %v609
  %v842 = vpack.c.b16 %v618, %v610
  %v843 = vpack.c.b16 %v619, %v611
  %v844 = vpack.c.b16 %v620, %v612
  %v845 = vpack.c.b16 %v621, %v613
  %v846 = vpack.c.b16 %v630, %v622
  %v847 = vpack.c.b16 %v631, %v623
  %v848 = vpack.c.b16 %v632, %v624
  %v849 = vpack.c.b16 %v633, %v625
  %v850 = vpack.c.b16 %v634, %v626
  %v851 = vpack.c.b16 %v635, %v627
  %v852 = vpack.c.b16 %v636, %v628
  %v853 = vpack.c.b16 %v637, %v629
  %v854 = vpack.c.b16 %v646, %v638
  %v855 = vpack.c.b16 %v647, %v639
  %v856 = vpack.c.b16 %v648, %v640
  %v857 = vpack.c.b16 %v649, %v641
  %v858 = vpack.c.b16 %v650, %v642
  %v859 = vpack.c.b16 %v651, %v643
  %v860 = vpack.c.b16 %v652, %v644
  %v861 = vpack.c.b16 %v653, %v645
  %v862 = vpack.c.b16 %v662, %v654
  %v863 = vpack.c.b16 %v663, %v655
  %v864 = vpack.c.b16 %v664, %v656
  %v865 = vpack.c.b16 %v665, %v657
  %v866 = vpack.c.b16 %v666, %v658
  %v867 = vpack.c.b16 %v667, %v659
  %v868 = vpack.c.b16 %v668, %v660
  %v869 = vpack.c.b16 %v669, %v661
  %v870 = vpack.c.b16 %v678, %v670
  %v871 = vpack.c.b16 %v679, %v671
  %v872 = vpack.c.b16 %v680, %v672
  %v873 = vpack.c.b16 %v681, %v673
  %v874 = vpack.c.b16 %v682, %v674
  %v875 = vpack.c.b16 %v683, %v675
  %v876 = vpack.c.b16 %v684, %v676
  %v877 = vpack.c.b16 %v685, %v677
  %v878 = vpack.c.b16 %v694, %v686
  %v879 = vpack.c.b16 %v695, %v687
  %v880 = vpack.c.b16 %v696, %v688
  %v881 = vpack.c.b16 %v697, %v689
  %v882 = vpack.c.b16 %v698, %v690
  %v883 = vpack.c.b16 %v699, %v691
  %v884 = vpack.c.b16 %v700, %v692
  %v885 = vpack.c.b16 %v701, %v693
  %v886 = vpack.c.b16 %v710, %v702
  %v887 = vpack.c.b16 %v711, %v703
  %v888 = vpack.c.b16 %v712, %v704
  %v889 = vpack.c.b16 %v713, %v705
  %v890 = vpack.c.b16 %v714, %v706
  %v891 = vpack.c.b16 %v715, %v707
  %v892 = vpack.c.b16 %v716, %v708
  %v893 = vpack.c.b16 %v717, %v709
  %v894 = vpack.c.b16 %v718, %v718
  %v895 = vpack.c.b16 %v719, %v719
  %v896 = vpack.c.b16 %v720, %v720
  %v897 = vpack.c.b16 %v721, %v721
  %v898 = vpack.c.b16 %v722, %v722
  %v899 = vpack.c.b16 %v723, %v723
  %v900 = vpack.c.b16 %v724, %v724
  %v901 = vpack.c.b16 %v725, %v725
  %vm1070 = vcmask 711680
  %v1072 = vsel %vm1070, %v206, 0
  %vm1074 = vcmask 1042432
  %vm1075 = vcmask 1043456
  %v1076 = vsel %vm1074, 4294967295, 65535
  %v1077 = vsel %vm1075, %v1076, 0
  %v1079 = vand.u32 %v894, %v1077
  %v1082 = vand.u32 %v895, %v1077
  %v1085 = vand.u32 %v896, %v1077
  %v1088 = vand.u32 %v897, %v1077
  %v1091 = vand.u32 %v898, %v1077
  %v1094 = vand.u32 %v899, %v1077
  %v1097 = vand.u32 %v900, %v1077
  %v1100 = vand.u32 %v901, %v1077
  %1102 = vmatprep.subr.bf16.mxu0 %v727
  %1103 = vmatpush1.bf16.msra.mxu0 %v726
  %1104 = vmatprep.subr.bf16.mxu0 %v735
  %1105 = vmatpush1.bf16.msra.mxu0 %v734
  %1106 = vmatprep.subr.bf16.mxu0 %v743
  %1107 = vmatpush1.bf16.msra.mxu0 %v742
  %1108 = vmatprep.subr.bf16.mxu0 %v751
  %1109 = vmatpush1.bf16.msra.mxu0 %v750
  %1110 = vmatprep.subr.bf16.mxu0 %v759
  %1111 = vmatpush1.bf16.msra.mxu0 %v758
  %1112 = vmatprep.subr.bf16.mxu0 %v767
  %1113 = vmatpush1.bf16.msra.mxu0 %v766
  %1114 = vmatprep.subr.bf16.mxu0 %v775
  %1115 = vmatpush1.bf16.msra.mxu0 %v774
  %1116 = vmatprep.subr.bf16.mxu0 %v783
  %1117 = vmatpush1.bf16.msra.mxu0 %v782
  %1118 = vmatprep.subr.bf16.mxu0 %v791
  %1119 = vmatpush1.bf16.msra.mxu0 %v790
  %1120 = vmatprep.subr.bf16.mxu0 %v799
  %1121 = vmatpush1.bf16.msra.mxu0 %v798
  %1122 = vmatprep.subr.bf16.mxu0 %v807
  %1123 = vmatpush1.bf16.msra.mxu0 %v806
  %1124 = vmatprep.subr.bf16.mxu0 %v815
  %1125 = vmatpush1.bf16.msra.mxu0 %v814
  %1126 = vmatprep.subr.bf16.mxu0 %v823
  %1127 = vmatpush1.bf16.msra.mxu0 %v822
  %1128 = vmatprep.subr.bf16.mxu0 %v831
  %1129 = vmatpush1.bf16.msra.mxu0 %v830
  %1130 = vmatprep.subr.bf16.mxu0 %v839
  %1131 = vmatpush1.bf16.msra.mxu0 %v838
  %1132 = vmatprep.subr.bf16.mxu0 %v847
  %1133 = vmatpush1.bf16.msra.mxu0 %v846
  %1134 = vmatprep.mubr.bf16.mxu0 %v207
  %1135 = vmatmul.mubr.bf16.gmra.mrb[0].mxu0 %v199
  %v1136 = vpop.f32.mrb[0].mxu0
  %v1137 = vadd.f32 0.0, %v1136
  %v1138 = vpop.f32.mrb[0].mxu0
  %v1139 = vadd.f32 0.0, %v1138
  %v1140 = vpop.f32.mrb[0].mxu0
  %v1141 = vpop.f32.mrb[0].mxu0
  %1142 = vdwg.mxu0
  %1143 = vmatprep.subr.bf16.mxu0 %v855
  %1144 = vmatpush1.bf16.msra.mxu0 %v854
  %1145 = vmatprep.subr.bf16.mxu0 %v863
  %1146 = vmatpush1.bf16.msra.mxu0 %v862
  %1147 = vmatprep.subr.bf16.mxu0 %v871
  %1148 = vmatpush1.bf16.msra.mxu0 %v870
  %1149 = vmatprep.subr.bf16.mxu0 %v879
  %1150 = vmatpush1.bf16.msra.mxu0 %v878
  %1151 = vmatprep.subr.bf16.mxu0 %v887
  %1152 = vmatpush1.bf16.msra.mxu0 %v886
  %1153 = vmatprep.subr.bf16.mxu0 %v1082
  %1154 = vmatpush1.bf16.msra.mxu0 %v1079
  %1155 = vmatprep.subr.bf16.mxu0 0
  %1156 = vmatpush1.bf16.msra.mxu0 0
  %1157 = vmatprep.subr.bf16.mxu0 0
  %1158 = vmatpush1.bf16.msra.mxu0 0
  %1159 = vmatprep.subr.bf16.mxu0 0
  %1160 = vmatpush1.bf16.msra.mxu0 0
  %1161 = vmatprep.subr.bf16.mxu0 0
  %1162 = vmatpush1.bf16.msra.mxu0 0
  %1163 = vmatprep.subr.bf16.mxu0 0
  %1164 = vmatpush1.bf16.msra.mxu0 0
  %1165 = vmatprep.subr.bf16.mxu0 0
  %1166 = vmatpush1.bf16.msra.mxu0 0
  %1167 = vmatprep.subr.bf16.mxu0 0
  %1168 = vmatpush1.bf16.msra.mxu0 0
  %1169 = vmatprep.subr.bf16.mxu0 0
  %1170 = vmatpush1.bf16.msra.mxu0 0
  %1171 = vmatprep.subr.bf16.mxu0 0
  %1172 = vmatpush1.bf16.msra.mxu0 0
  %1173 = vmatprep.subr.bf16.mxu0 0
  %1174 = vmatpush1.bf16.msra.mxu0 0
  %1175 = vmatprep.mubr.bf16.mxu0 0
  %1176 = vmatmul.mubr.bf16.gmra.mrb[0].mxu0 %v1072
  %v1177 = vpop.f32.mrb[0].mxu0
  %v1178 = vadd.f32 %v1137, %v1177
  %v1179 = vpop.f32.mrb[0].mxu0
  %v1180 = vadd.f32 %v1139, %v1179
  %v1181 = vpop.f32.mrb[0].mxu0
  %v1182 = vpop.f32.mrb[0].mxu0
  %1183 = vdwg.mxu0
  %1184 = vmatprep.subr.bf16.mxu0 %v729
  %1185 = vmatpush1.bf16.msra.mxu0 %v728
  %1186 = vmatprep.subr.bf16.mxu0 %v737
  %1187 = vmatpush1.bf16.msra.mxu0 %v736
  %1188 = vmatprep.subr.bf16.mxu0 %v745
  %1189 = vmatpush1.bf16.msra.mxu0 %v744
  %1190 = vmatprep.subr.bf16.mxu0 %v753
  %1191 = vmatpush1.bf16.msra.mxu0 %v752
  %1192 = vmatprep.subr.bf16.mxu0 %v761
  %1193 = vmatpush1.bf16.msra.mxu0 %v760
  %1194 = vmatprep.subr.bf16.mxu0 %v769
  %1195 = vmatpush1.bf16.msra.mxu0 %v768
  %1196 = vmatprep.subr.bf16.mxu0 %v777
  %1197 = vmatpush1.bf16.msra.mxu0 %v776
  %1198 = vmatprep.subr.bf16.mxu0 %v785
  %1199 = vmatpush1.bf16.msra.mxu0 %v784
  %1200 = vmatprep.subr.bf16.mxu0 %v793
  %1201 = vmatpush1.bf16.msra.mxu0 %v792
  %1202 = vmatprep.subr.bf16.mxu0 %v801
  %1203 = vmatpush1.bf16.msra.mxu0 %v800
  %1204 = vmatprep.subr.bf16.mxu0 %v809
  %1205 = vmatpush1.bf16.msra.mxu0 %v808
  %1206 = vmatprep.subr.bf16.mxu0 %v817
  %1207 = vmatpush1.bf16.msra.mxu0 %v816
  %1208 = vmatprep.subr.bf16.mxu0 %v825
  %1209 = vmatpush1.bf16.msra.mxu0 %v824
  %1210 = vmatprep.subr.bf16.mxu0 %v833
  %1211 = vmatpush1.bf16.msra.mxu0 %v832
  %1212 = vmatprep.subr.bf16.mxu0 %v841
  %1213 = vmatpush1.bf16.msra.mxu0 %v840
  %1214 = vmatprep.subr.bf16.mxu0 %v849
  %1215 = vmatpush1.bf16.msra.mxu0 %v848
  %1216 = vmatprep.mubr.bf16.mxu0 %v207
  %1217 = vmatmul.mubr.bf16.gmra.mrb[0].mxu0 %v199
  %v1218 = vpop.f32.mrb[0].mxu0
  %v1219 = vadd.f32 0.0, %v1218
  %v1220 = vpop.f32.mrb[0].mxu0
  %v1221 = vadd.f32 0.0, %v1220
  %v1222 = vpop.f32.mrb[0].mxu0
  %v1223 = vpop.f32.mrb[0].mxu0
  %1224 = vdwg.mxu0
  %1225 = vmatprep.subr.bf16.mxu0 %v857
  %1226 = vmatpush1.bf16.msra.mxu0 %v856
  %1227 = vmatprep.subr.bf16.mxu0 %v865
  %1228 = vmatpush1.bf16.msra.mxu0 %v864
  %1229 = vmatprep.subr.bf16.mxu0 %v873
  %1230 = vmatpush1.bf16.msra.mxu0 %v872
  %1231 = vmatprep.subr.bf16.mxu0 %v881
  %1232 = vmatpush1.bf16.msra.mxu0 %v880
  %1233 = vmatprep.subr.bf16.mxu0 %v889
  %1234 = vmatpush1.bf16.msra.mxu0 %v888
  %1235 = vmatprep.subr.bf16.mxu0 %v1088
  %1236 = vmatpush1.bf16.msra.mxu0 %v1085
  %1237 = vmatprep.subr.bf16.mxu0 0
  %1238 = vmatpush1.bf16.msra.mxu0 0
  %1239 = vmatprep.subr.bf16.mxu0 0
  %1240 = vmatpush1.bf16.msra.mxu0 0
  %1241 = vmatprep.subr.bf16.mxu0 0
  %1242 = vmatpush1.bf16.msra.mxu0 0
  %1243 = vmatprep.subr.bf16.mxu0 0
  %1244 = vmatpush1.bf16.msra.mxu0 0
  %1245 = vmatprep.subr.bf16.mxu0 0
  %1246 = vmatpush1.bf16.msra.mxu0 0
  %1247 = vmatprep.subr.bf16.mxu0 0
  %1248 = vmatpush1.bf16.msra.mxu0 0
  %1249 = vmatprep.subr.bf16.mxu0 0
  %1250 = vmatpush1.bf16.msra.mxu0 0
  %1251 = vmatprep.subr.bf16.mxu0 0
  %1252 = vmatpush1.bf16.msra.mxu0 0
  %1253 = vmatprep.subr.bf16.mxu0 0
  %1254 = vmatpush1.bf16.msra.mxu0 0
  %1255 = vmatprep.subr.bf16.mxu0 0
  %1256 = vmatpush1.bf16.msra.mxu0 0
  %1257 = vmatprep.mubr.bf16.mxu0 0
  %1258 = vmatmul.mubr.bf16.gmra.mrb[0].mxu0 %v1072
  %v1259 = vpop.f32.mrb[0].mxu0
  %v1260 = vadd.f32 %v1219, %v1259
  %v1261 = vpop.f32.mrb[0].mxu0
  %v1262 = vadd.f32 %v1221, %v1261
  %v1263 = vpop.f32.mrb[0].mxu0
  %v1264 = vpop.f32.mrb[0].mxu0
  %1265 = vdwg.mxu0
  %1266 = vmatprep.subr.bf16.mxu0 %v731
  %1267 = vmatpush1.bf16.msra.mxu0 %v730
  %1268 = vmatprep.subr.bf16.mxu0 %v739
  %1269 = vmatpush1.bf16.msra.mxu0 %v738
  %1270 = vmatprep.subr.bf16.mxu0 %v747
  %1271 = vmatpush1.bf16.msra.mxu0 %v746
  %1272 = vmatprep.subr.bf16.mxu0 %v755
  %1273 = vmatpush1.bf16.msra.mxu0 %v754
  %1274 = vmatprep.subr.bf16.mxu0 %v763
  %1275 = vmatpush1.bf16.msra.mxu0 %v762
  %1276 = vmatprep.subr.bf16.mxu0 %v771
  %1277 = vmatpush1.bf16.msra.mxu0 %v770
  %1278 = vmatprep.subr.bf16.mxu0 %v779
  %1279 = vmatpush1.bf16.msra.mxu0 %v778
  %1280 = vmatprep.subr.bf16.mxu0 %v787
  %1281 = vmatpush1.bf16.msra.mxu0 %v786
  %1282 = vmatprep.subr.bf16.mxu0 %v795
  %1283 = vmatpush1.bf16.msra.mxu0 %v794
  %1284 = vmatprep.subr.bf16.mxu0 %v803
  %1285 = vmatpush1.bf16.msra.mxu0 %v802
  %1286 = vmatprep.subr.bf16.mxu0 %v811
  %1287 = vmatpush1.bf16.msra.mxu0 %v810
  %1288 = vmatprep.subr.bf16.mxu0 %v819
  %1289 = vmatpush1.bf16.msra.mxu0 %v818
  %1290 = vmatprep.subr.bf16.mxu0 %v827
  %1291 = vmatpush1.bf16.msra.mxu0 %v826
  %1292 = vmatprep.subr.bf16.mxu0 %v835
  %1293 = vmatpush1.bf16.msra.mxu0 %v834
  %1294 = vmatprep.subr.bf16.mxu0 %v843
  %1295 = vmatpush1.bf16.msra.mxu0 %v842
  %1296 = vmatprep.subr.bf16.mxu0 %v851
  %1297 = vmatpush1.bf16.msra.mxu0 %v850
  %1298 = vmatprep.mubr.bf16.mxu0 %v207
  %1299 = vmatmul.mubr.bf16.gmra.mrb[0].mxu0 %v199
  %v1300 = vpop.f32.mrb[0].mxu0
  %v1301 = vadd.f32 0.0, %v1300
  %v1302 = vpop.f32.mrb[0].mxu0
  %v1303 = vadd.f32 0.0, %v1302
  %v1304 = vpop.f32.mrb[0].mxu0
  %v1305 = vpop.f32.mrb[0].mxu0
  %1306 = vdwg.mxu0
  %1307 = vmatprep.subr.bf16.mxu0 %v859
  %1308 = vmatpush1.bf16.msra.mxu0 %v858
  %1309 = vmatprep.subr.bf16.mxu0 %v867
  %1310 = vmatpush1.bf16.msra.mxu0 %v866
  %1311 = vmatprep.subr.bf16.mxu0 %v875
  %1312 = vmatpush1.bf16.msra.mxu0 %v874
  %1313 = vmatprep.subr.bf16.mxu0 %v883
  %1314 = vmatpush1.bf16.msra.mxu0 %v882
  %1315 = vmatprep.subr.bf16.mxu0 %v891
  %1316 = vmatpush1.bf16.msra.mxu0 %v890
  %1317 = vmatprep.subr.bf16.mxu0 %v1094
  %1318 = vmatpush1.bf16.msra.mxu0 %v1091
  %1319 = vmatprep.subr.bf16.mxu0 0
  %1320 = vmatpush1.bf16.msra.mxu0 0
  %1321 = vmatprep.subr.bf16.mxu0 0
  %1322 = vmatpush1.bf16.msra.mxu0 0
  %1323 = vmatprep.subr.bf16.mxu0 0
  %1324 = vmatpush1.bf16.msra.mxu0 0
  %1325 = vmatprep.subr.bf16.mxu0 0
  %1326 = vmatpush1.bf16.msra.mxu0 0
  %1327 = vmatprep.subr.bf16.mxu0 0
  %1328 = vmatpush1.bf16.msra.mxu0 0
  %1329 = vmatprep.subr.bf16.mxu0 0
  %1330 = vmatpush1.bf16.msra.mxu0 0
  %1331 = vmatprep.subr.bf16.mxu0 0
  %1332 = vmatpush1.bf16.msra.mxu0 0
  %1333 = vmatprep.subr.bf16.mxu0 0
  %1334 = vmatpush1.bf16.msra.mxu0 0
  %1335 = vmatprep.subr.bf16.mxu0 0
  %1336 = vmatpush1.bf16.msra.mxu0 0
  %1337 = vmatprep.subr.bf16.mxu0 0
  %1338 = vmatpush1.bf16.msra.mxu0 0
  %1339 = vmatprep.mubr.bf16.mxu0 0
  %1340 = vmatmul.mubr.bf16.gmra.mrb[0].mxu0 %v1072
  %v1341 = vpop.f32.mrb[0].mxu0
  %v1342 = vadd.f32 %v1301, %v1341
  %v1343 = vpop.f32.mrb[0].mxu0
  %v1344 = vadd.f32 %v1303, %v1343
  %v1345 = vpop.f32.mrb[0].mxu0
  %v1346 = vpop.f32.mrb[0].mxu0
  %1347 = vdwg.mxu0
  %1348 = vmatprep.subr.bf16.mxu0 %v733
  %1349 = vmatpush1.bf16.msra.mxu0 %v732
  %1350 = vmatprep.subr.bf16.mxu0 %v741
  %1351 = vmatpush1.bf16.msra.mxu0 %v740
  %1352 = vmatprep.subr.bf16.mxu0 %v749
  %1353 = vmatpush1.bf16.msra.mxu0 %v748
  %1354 = vmatprep.subr.bf16.mxu0 %v757
  %1355 = vmatpush1.bf16.msra.mxu0 %v756
  %1356 = vmatprep.subr.bf16.mxu0 %v765
  %1357 = vmatpush1.bf16.msra.mxu0 %v764
  %1358 = vmatprep.subr.bf16.mxu0 %v773
  %1359 = vmatpush1.bf16.msra.mxu0 %v772
  %1360 = vmatprep.subr.bf16.mxu0 %v781
  %1361 = vmatpush1.bf16.msra.mxu0 %v780
  %1362 = vmatprep.subr.bf16.mxu0 %v789
  %1363 = vmatpush1.bf16.msra.mxu0 %v788
  %1364 = vmatprep.subr.bf16.mxu0 %v797
  %1365 = vmatpush1.bf16.msra.mxu0 %v796
  %1366 = vmatprep.subr.bf16.mxu0 %v805
  %1367 = vmatpush1.bf16.msra.mxu0 %v804
  %1368 = vmatprep.subr.bf16.mxu0 %v813
  %1369 = vmatpush1.bf16.msra.mxu0 %v812
  %1370 = vmatprep.subr.bf16.mxu0 %v821
  %1371 = vmatpush1.bf16.msra.mxu0 %v820
  %1372 = vmatprep.subr.bf16.mxu0 %v829
  %1373 = vmatpush1.bf16.msra.mxu0 %v828
  %1374 = vmatprep.subr.bf16.mxu0 %v837
  %1375 = vmatpush1.bf16.msra.mxu0 %v836
  %1376 = vmatprep.subr.bf16.mxu0 %v845
  %1377 = vmatpush1.bf16.msra.mxu0 %v844
  %1378 = vmatprep.subr.bf16.mxu0 %v853
  %1379 = vmatpush1.bf16.msra.mxu0 %v852
  %1380 = vmatprep.mubr.bf16.mxu0 %v207
  %1381 = vmatmul.mubr.bf16.gmra.mrb[0].mxu0 %v199
  %v1382 = vpop.f32.mrb[0].mxu0
  %v1383 = vadd.f32 0.0, %v1382
  %v1384 = vpop.f32.mrb[0].mxu0
  %v1385 = vadd.f32 0.0, %v1384
  %v1386 = vpop.f32.mrb[0].mxu0
  %v1387 = vpop.f32.mrb[0].mxu0
  %1388 = vdwg.mxu0
  %1389 = vmatprep.subr.bf16.mxu0 %v861
  %1390 = vmatpush1.bf16.msra.mxu0 %v860
  %1391 = vmatprep.subr.bf16.mxu0 %v869
  %1392 = vmatpush1.bf16.msra.mxu0 %v868
  %1393 = vmatprep.subr.bf16.mxu0 %v877
  %1394 = vmatpush1.bf16.msra.mxu0 %v876
  %1395 = vmatprep.subr.bf16.mxu0 %v885
  %1396 = vmatpush1.bf16.msra.mxu0 %v884
  %1397 = vmatprep.subr.bf16.mxu0 %v893
  %1398 = vmatpush1.bf16.msra.mxu0 %v892
  %1399 = vmatprep.subr.bf16.mxu0 %v1100
  %1400 = vmatpush1.bf16.msra.mxu0 %v1097
  %1401 = vmatprep.subr.bf16.mxu0 0
  %1402 = vmatpush1.bf16.msra.mxu0 0
  %1403 = vmatprep.subr.bf16.mxu0 0
  %1404 = vmatpush1.bf16.msra.mxu0 0
  %1405 = vmatprep.subr.bf16.mxu0 0
  %1406 = vmatpush1.bf16.msra.mxu0 0
  %1407 = vmatprep.subr.bf16.mxu0 0
  %1408 = vmatpush1.bf16.msra.mxu0 0
  %1409 = vmatprep.subr.bf16.mxu0 0
  %1410 = vmatpush1.bf16.msra.mxu0 0
  %1411 = vmatprep.subr.bf16.mxu0 0
  %1412 = vmatpush1.bf16.msra.mxu0 0
  %1413 = vmatprep.subr.bf16.mxu0 0
  %1414 = vmatpush1.bf16.msra.mxu0 0
  %1415 = vmatprep.subr.bf16.mxu0 0
  %1416 = vmatpush1.bf16.msra.mxu0 0
  %1417 = vmatprep.subr.bf16.mxu0 0
  %1418 = vmatpush1.bf16.msra.mxu0 0
  %1419 = vmatprep.subr.bf16.mxu0 0
  %1420 = vmatpush1.bf16.msra.mxu0 0
  %1421 = vmatprep.mubr.bf16.mxu0 0
  %1422 = vmatmul.mubr.bf16.gmra.mrb[0].mxu0 %v1072
  %v1423 = vpop.f32.mrb[0].mxu0
  %v1424 = vadd.f32 %v1383, %v1423
  %v1425 = vpop.f32.mrb[0].mxu0
  %v1426 = vadd.f32 %v1385, %v1425
  %v1427 = vpop.f32.mrb[0].mxu0
  %v1428 = vpop.f32.mrb[0].mxu0
  %1429 = vdwg.mxu0
  %v1430 = vld [vmem:[%s2] sm:$0xf]
  %v1431 = vld [vmem:[%s3] sm:$0xf]
  %v1432 = vsel %vm1075, %v1178, 0.0
  %v1433 = vsel %vm1075, %v1180, 0.0
  %v1434 = vadd.f32 %v1432, %v1433
  %v1435 = vsel %vm1075, %v1260, 0.0
  %v1436 = vadd.f32 %v1434, %v1435
  %v1437 = vsel %vm1075, %v1262, 0.0
  %v1438 = vadd.f32 %v1436, %v1437
  %v1439 = vsel %vm1075, %v1342, 0.0
  %v1440 = vadd.f32 %v1438, %v1439
  %v1441 = vsel %vm1075, %v1344, 0.0
  %v1442 = vadd.f32 %v1440, %v1441
  %v1443 = vsel %vm1075, %v1424, 0.0
  %v1444 = vadd.f32 %v1442, %v1443
  %v1445 = vsel %vm1075, %v1426, 0.0
  %v1446 = vadd.f32 %v1444, %v1445
  %1447 = vadd.xlane.f32.xlu0 %v1446
  %v1448 = vpop.xlane.xlu0 %1447
  %v1449 = vrcp.pop 1024.0
  %v1450 = vmul.f32 %v1448, %v1449
  %v1451 = vsub.f32 %v1178, %v1450
  %v1452 = vsub.f32 %v1180, %v1450
  %v1453 = vsub.f32 %v1260, %v1450
  %v1454 = vsub.f32 %v1262, %v1450
  %v1455 = vsub.f32 %v1342, %v1450
  %v1456 = vsub.f32 %v1344, %v1450
  %v1457 = vsub.f32 %v1424, %v1450
  %v1458 = vsub.f32 %v1426, %v1450
  %v1459 = vmul.f32 %v1451, %v1451
  %v1460 = vmul.f32 %v1452, %v1452
  %v1461 = vmul.f32 %v1453, %v1453
  %v1462 = vmul.f32 %v1454, %v1454
  %v1463 = vmul.f32 %v1455, %v1455
  %v1464 = vmul.f32 %v1456, %v1456
  %v1465 = vmul.f32 %v1457, %v1457
  %v1466 = vmul.f32 %v1458, %v1458
  %v1467 = vsel %vm1075, %v1459, 0.0
  %v1468 = vsel %vm1075, %v1460, 0.0
  %v1469 = vadd.f32 %v1467, %v1468
  %v1470 = vsel %vm1075, %v1461, 0.0
  %v1471 = vadd.f32 %v1469, %v1470
  %v1472 = vsel %vm1075, %v1462, 0.0
  %v1473 = vadd.f32 %v1471, %v1472
  %v1474 = vsel %vm1075, %v1463, 0.0
  %v1475 = vadd.f32 %v1473, %v1474
  %v1476 = vsel %vm1075, %v1464, 0.0
  %v1477 = vadd.f32 %v1475, %v1476
  %v1478 = vsel %vm1075, %v1465, 0.0
  %v1479 = vadd.f32 %v1477, %v1478
  %v1480 = vsel %vm1075, %v1466, 0.0
  %v1481 = vadd.f32 %v1479, %v1480
  %1482 = vadd.xlane.f32.xlu0 %v1481
  %v1483 = vpop.xlane.xlu0 %1482
  %v1484 = vmul.f32 %v1483, %v1449
  %v1485 = vadd.f32 %v1484, 1e-05
  %v1486 = vrsqrt.pop %v1485
  %v1487 = vmul.f32 %v1451, %v1486
  %v1488 = vmul.f32 %v1452, %v1486
  %v1489 = vmul.f32 %v1453, %v1486
  %v1490 = vmul.f32 %v1454, %v1486
  %v1491 = vmul.f32 %v1455, %v1486
  %v1492 = vmul.f32 %v1456, %v1486
  %v1493 = vmul.f32 %v1457, %v1486
  %v1494 = vmul.f32 %v1458, %v1486
  %1496 = vset.pattern.permute.xlu0 0
  %1497 = vperm.xlu0 %1496, %v1430
  %v1498 = vpop.permute.xlu0 %1497
  %v1500 = vmul.f32 %v1487, %v1498
  %v1501 = vmul.f32 %v1488, %v1498
  %v1502 = vmul.f32 %v1489, %v1498
  %v1503 = vmul.f32 %v1490, %v1498
  %v1504 = vmul.f32 %v1491, %v1498
  %v1505 = vmul.f32 %v1492, %v1498
  %v1506 = vmul.f32 %v1493, %v1498
  %v1507 = vmul.f32 %v1494, %v1498
  %1509 = vset.pattern.permute.xlu0 0
  %1510 = vperm.xlu0 %1509, %v1431
  %v1511 = vpop.permute.xlu0 %1510
  %v1513 = vadd.f32 %v1500, %v1511
  %v1514 = vadd.f32 %v1501, %v1511
  %v1515 = vadd.f32 %v1502, %v1511
  %v1516 = vadd.f32 %v1503, %v1511
  %v1517 = vadd.f32 %v1504, %v1511
  %v1518 = vadd.f32 %v1505, %v1511
  %v1519 = vadd.f32 %v1506, %v1511
  %v1520 = vadd.f32 %v1507, %v1511
  %v1521 = vmax.f32 %v1513, 0.0
  %v1522 = vmax.f32 %v1514, 0.0
  %v1523 = vmax.f32 %v1515, 0.0
  %v1524 = vmax.f32 %v1516, 0.0
  %v1525 = vmax.f32 %v1517, 0.0
  %v1526 = vmax.f32 %v1518, 0.0
  %v1527 = vmax.f32 %v1519, 0.0
  %v1528 = vmax.f32 %v1520, 0.0
  %v1529 = vpack.c.bf16 %v1521, %v1521
  %v1530 = vpack.c.bf16 %v1522, %v1522
  %v1531 = vpack.c.bf16 %v1523, %v1523
  %v1532 = vpack.c.bf16 %v1524, %v1524
  %v1533 = vpack.c.bf16 %v1525, %v1525
  %v1534 = vpack.c.bf16 %v1526, %v1526
  %v1535 = vpack.c.bf16 %v1527, %v1527
  %v1536 = vpack.c.bf16 %v1528, %v1528
  %v1545 = vcombine.low %v1529, %v1530
  %v1546 = vcombine.low %v1531, %v1532
  %v1548 = vunpack.c.l.s4 1983009808
  %v1549 = vunpack.c.0.s8 %v1548
  %v1550 = vlaneseq
  %v1551 = vshrl.u32 %v1550, 7
  %v1552 = vsub.s32 %v1549, %v1551
  %v1553 = vrot.slane %v1545, %v1552
  %v1555 = vunpack.c.l.s4 1983009808
  %v1556 = vunpack.c.0.s8 %v1555
  %v1557 = vlaneseq
  %v1558 = vshrl.u32 %v1557, 7
  %v1559 = vsub.s32 %v1556, %v1558
  %v1560 = vrot.slane %v1546, %v1559
  %v1561 = vcombine.low %v1553, %v1560
  %v1562 = vcombine.low %v1533, %v1534
  %v1563 = vcombine.low %v1535, %v1536
  %v1565 = vunpack.c.l.s4 1983009808
  %v1566 = vunpack.c.0.s8 %v1565
  %v1567 = vlaneseq
  %v1568 = vshrl.u32 %v1567, 7
  %v1569 = vsub.s32 %v1566, %v1568
  %v1570 = vrot.slane %v1562, %v1569
  %v1572 = vunpack.c.l.s4 1983009808
  %v1573 = vunpack.c.0.s8 %v1572
  %v1574 = vlaneseq
  %v1575 = vshrl.u32 %v1574, 7
  %v1576 = vsub.s32 %v1573, %v1575
  %v1577 = vrot.slane %v1563, %v1576
  %v1578 = vcombine.low %v1570, %v1577
  %1581 = vst [vmem:[%s4] sm:$0xff] %v1561
  %1582 = vst [vmem:[%s4 + $0x8] sm:$0xff] %v1578
  // Predicated region
  $region18: #{_lambda_.11} parent=0 // pred_check
    _
  $region19: #{_lambda_.11} parent=0 // pred_check_branch
    %1584 = sbr.rel (0) target = $region21
  $region20: #{_lambda_.11} parent=0 // pred_region
    _
  $region21: #{_lambda_.11} parent=0 // pred_fallthru
    _
  // Predicated region
  $region22: #{_lambda_.11} parent=0 // pred_check
    _
  $region23: #{_lambda_.11} parent=0 // pred_check_branch
    %1586 = sbr.rel (0) target = $region25
  $region24: #{_lambda_.11} parent=0 // pred_region
    _
  $region25: #{_lambda_.11} parent=0 // pred_fallthru
    _

// kernel: _lambda_.13
$region0: #{_lambda_.13}
  #allocation0 [shape = 'u32[]', space=smem, size = 0x4, offset = 0x4, fixed_abs, tag = 'smem constant byte address 0x4 - core index']
  #allocation1 [shape = 'u32[144,128]{1,0:T(1,128)}', space=vmem, size = 0x12000, scoped, tag = 'internal scratch']
  %s0 = inlined_call_operand.vmem [shape: bf16[4,108], index: 0, kind: input, shape index: {}]
  %s1 = inlined_call_operand.vmem [shape: bf16[108,128], index: 1, kind: input, shape index: {}]
  %s2 = inlined_call_operand.vmem [shape: f32[4,1], index: 2, kind: input, shape index: {}]
  %s3 = inlined_call_operand.vmem [shape: f32[4,1], index: 3, kind: input, shape index: {}]
  %s4 = inlined_call_operand.vmem [shape: bf16[4,128], index: 4, kind: output, shape index: {}]
  %s5 = sld [smem:[#allocation0]]
  $region26: #{_lambda_.13} parent=0
    _
  %s7 = ssub.s32 1, %s5
  %s8 = scalar_select 0, %s7, %s5
  // Predicated region
  $region2: #{_lambda_.13} parent=0 // pred_check
    _
  $region3: #{_lambda_.13} parent=0 // pred_check_branch
    %10 = sbr.rel (0) target = $region5
  $region4: #{_lambda_.13} parent=0 // pred_region
    _
  $region5: #{_lambda_.13} parent=0 // pred_fallthru
    _
  // Predicated region
  $region6: #{_lambda_.13} parent=0 // pred_check
    _
  $region7: #{_lambda_.13} parent=0 // pred_check_branch
    %12 = sbr.rel (0) target = $region9
  $region8: #{_lambda_.13} parent=0 // pred_region
    _
  $region9: #{_lambda_.13} parent=0 // pred_fallthru
    _
  // Predicated region
  $region10: #{_lambda_.13} parent=0 // pred_check
    _
  $region11: #{_lambda_.13} parent=0 // pred_check_branch
    %14 = sbr.rel (0) target = $region13
  $region12: #{_lambda_.13} parent=0 // pred_region
    _
  $region13: #{_lambda_.13} parent=0 // pred_fallthru
    _
  // Predicated region
  $region14: #{_lambda_.13} parent=0 // pred_check
    _
  $region15: #{_lambda_.13} parent=0 // pred_check_branch
    %16 = sbr.rel (0) target = $region17
  $region16: #{_lambda_.13} parent=0 // pred_region
    _
  $region17: #{_lambda_.13} parent=0 // pred_fallthru
    _
  %v18 = vld [vmem:[%s0] sm:$0x3]
  %v19 = vld [vmem:[%s1] sm:$0xf]
  %v20 = vld [vmem:[%s1 + $0x4] sm:$0xf]
  %v21 = vld [vmem:[%s1 + $0x8] sm:$0xf]
  %v22 = vld [vmem:[%s1 + $0xc] sm:$0xf]
  %v23 = vld [vmem:[%s1 + $0x10] sm:$0xf]
  %v24 = vld [vmem:[%s1 + $0x14] sm:$0xf]
  %v25 = vld [vmem:[%s1 + $0x18] sm:$0xf]
  %v26 = vld [vmem:[%s1 + $0x1c] sm:$0xf]
  %v27 = vld [vmem:[%s1 + $0x20] sm:$0xf]
  %v28 = vld [vmem:[%s1 + $0x24] sm:$0xf]
  %v29 = vld [vmem:[%s1 + $0x28] sm:$0xf]
  %v30 = vld [vmem:[%s1 + $0x2c] sm:$0xf]
  %v31 = vld [vmem:[%s1 + $0x30] sm:$0xf]
  %v32 = vld [vmem:[%s1 + $0x34] sm:$0x3]
  %v47 = vunpack.c.l.b16 %v19
  %v48 = vunpack.c.l.b16 %v20
  %v49 = vunpack.c.l.b16 %v21
  %v50 = vunpack.c.l.b16 %v22
  %v51 = vunpack.c.l.b16 %v23
  %v52 = vunpack.c.l.b16 %v24
  %v53 = vunpack.c.l.b16 %v25
  %v54 = vunpack.c.l.b16 %v26
  %v55 = vunpack.c.l.b16 %v27
  %v56 = vunpack.c.l.b16 %v28
  %v57 = vunpack.c.l.b16 %v29
  %v58 = vunpack.c.l.b16 %v30
  %v59 = vunpack.c.l.b16 %v31
  %v60 = vunpack.c.l.b16 %v32
  %v61 = vpack.c.b16 %v48, %v47
  %v62 = vpack.c.b16 %v50, %v49
  %v63 = vpack.c.b16 %v52, %v51
  %v64 = vpack.c.b16 %v54, %v53
  %v65 = vpack.c.b16 %v56, %v55
  %v66 = vpack.c.b16 %v58, %v57
  %v67 = vpack.c.b16 %v60, %v59
  %vm74 = vcmask 883712
  %v76 = vsel %vm74, %v18, 0
  %vm78 = vcmask 1045504
  %v80 = vsel %vm78, %v67, 0
  %82 = vmatprep.subr.bf16.mxu0 0
  %83 = vmatpush1.bf16.msra.mxu0 %v61
  %84 = vmatprep.subr.bf16.mxu0 0
  %85 = vmatpush1.bf16.msra.mxu0 %v62
  %86 = vmatprep.subr.bf16.mxu0 0
  %87 = vmatpush1.bf16.msra.mxu0 %v63
  %88 = vmatprep.subr.bf16.mxu0 0
  %89 = vmatpush1.bf16.msra.mxu0 %v64
  %90 = vmatprep.subr.bf16.mxu0 0
  %91 = vmatpush1.bf16.msra.mxu0 %v65
  %92 = vmatprep.subr.bf16.mxu0 0
  %93 = vmatpush1.bf16.msra.mxu0 %v66
  %94 = vmatprep.subr.bf16.mxu0 0
  %95 = vmatpush1.bf16.msra.mxu0 %v80
  %96 = vmatprep.subr.bf16.mxu0 0
  %97 = vmatpush1.bf16.msra.mxu0 0
  %98 = vmatprep.subr.bf16.mxu0 0
  %99 = vmatpush1.bf16.msra.mxu0 0
  %100 = vmatprep.subr.bf16.mxu0 0
  %101 = vmatpush1.bf16.msra.mxu0 0
  %102 = vmatprep.subr.bf16.mxu0 0
  %103 = vmatpush1.bf16.msra.mxu0 0
  %104 = vmatprep.subr.bf16.mxu0 0
  %105 = vmatpush1.bf16.msra.mxu0 0
  %106 = vmatprep.subr.bf16.mxu0 0
  %107 = vmatpush1.bf16.msra.mxu0 0
  %108 = vmatprep.subr.bf16.mxu0 0
  %109 = vmatpush1.bf16.msra.mxu0 0
  %110 = vmatprep.subr.bf16.mxu0 0
  %111 = vmatpush1.bf16.msra.mxu0 0
  %112 = vmatprep.subr.bf16.mxu0 0
  %113 = vmatpush1.bf16.msra.mxu0 0
  %114 = vmatprep.mubr.bf16.mxu0 0
  %115 = vmatmul.mubr.bf16.gmra.mrb[0].mxu0 %v76
  %v116 = vpop.f32.mrb[0].mxu0
  %v117 = vadd.f32 0.0, %v116
  %v118 = vpop.f32.mrb[0].mxu0
  %v119 = vpop.f32.mrb[0].mxu0
  %v120 = vpop.f32.mrb[0].mxu0
  %121 = vdwg.mxu0
  %v122 = vld [vmem:[%s2] sm:$0xf]
  %v123 = vld [vmem:[%s3] sm:$0xf]
  %vm124 = vcmask 1043456
  %v125 = vsel %vm124, %v117, 0.0
  %126 = vadd.xlane.f32.xlu0 %v125
  %v127 = vpop.xlane.xlu0 %126
  %v128 = vrcp.pop 128.0
  %v129 = vmul.f32 %v127, %v128
  %v130 = vsub.f32 %v117, %v129
  %v131 = vmul.f32 %v130, %v130
  %v132 = vsel %vm124, %v131, 0.0
  %133 = vadd.xlane.f32.xlu0 %v132
  %v134 = vpop.xlane.xlu0 %133
  %v135 = vmul.f32 %v134, %v128
  %v136 = vadd.f32 %v135, 1e-05
  %v137 = vrsqrt.pop %v136
  %v138 = vmul.f32 %v130, %v137
  %140 = vset.pattern.permute.xlu0 0
  %141 = vperm.xlu0 %140, %v122
  %v142 = vpop.permute.xlu0 %141
  %v144 = vmul.f32 %v138, %v142
  %146 = vset.pattern.permute.xlu0 0
  %147 = vperm.xlu0 %146, %v123
  %v148 = vpop.permute.xlu0 %147
  %v150 = vadd.f32 %v144, %v148
  %v151 = vmax.f32 %v150, 0.0
  %v152 = vpack.c.bf16 %v151, %v151
  %153 = vst [vmem:[%s4] sm:$0x3] %v152
  // Predicated region
  $region18: #{_lambda_.13} parent=0 // pred_check
    _
  $region19: #{_lambda_.13} parent=0 // pred_check_branch
    %155 = sbr.rel (0) target = $region21
  $region20: #{_lambda_.13} parent=0 // pred_region
    _
  $region21: #{_lambda_.13} parent=0 // pred_fallthru
    _
  // Predicated region
  $region22: #{_lambda_.13} parent=0 // pred_check
    _
  $region23: #{_lambda_.13} parent=0 // pred_check_branch
    %157 = sbr.rel (0) target = $region25
  $region24: #{_lambda_.13} parent=0 // pred_region
    _
  $region25: #{_lambda_.13} parent=0 // pred_fallthru
    _

// kernel: _lambda_.14
$region0: #{_lambda_.14}
  #allocation0 [shape = 'u32[]', space=smem, size = 0x4, offset = 0x4, fixed_abs, tag = 'smem constant byte address 0x4 - core index']
  #allocation1 [shape = 'u32[144,128]{1,0:T(1,128)}', space=vmem, size = 0x12000, scoped, tag = 'internal scratch']
  %s0 = inlined_call_operand.vmem [shape: bf16[4,108], index: 0, kind: input, shape index: {}]
  %s1 = inlined_call_operand.vmem [shape: bf16[108,128], index: 1, kind: input, shape index: {}]
  %s2 = inlined_call_operand.vmem [shape: f32[4,1], index: 2, kind: input, shape index: {}]
  %s3 = inlined_call_operand.vmem [shape: f32[4,1], index: 3, kind: input, shape index: {}]
  %s4 = inlined_call_operand.vmem [shape: bf16[4,128], index: 4, kind: input, shape index: {}]
  %s5 = inlined_call_operand.vmem [shape: bf16[4,128], index: 5, kind: output, shape index: {}]
  %s6 = sld [smem:[#allocation0]]
  $region30: #{_lambda_.14} parent=0
    _
  %s8 = ssub.s32 1, %s6
  %s9 = scalar_select 0, %s8, %s6
  // Predicated region
  $region2: #{_lambda_.14} parent=0 // pred_check
    _
  $region3: #{_lambda_.14} parent=0 // pred_check_branch
    %11 = sbr.rel (0) target = $region5
  $region4: #{_lambda_.14} parent=0 // pred_region
    _
  $region5: #{_lambda_.14} parent=0 // pred_fallthru
    _
  // Predicated region
  $region6: #{_lambda_.14} parent=0 // pred_check
    _
  $region7: #{_lambda_.14} parent=0 // pred_check_branch
    %13 = sbr.rel (0) target = $region9
  $region8: #{_lambda_.14} parent=0 // pred_region
    _
  $region9: #{_lambda_.14} parent=0 // pred_fallthru
    _
  // Predicated region
  $region10: #{_lambda_.14} parent=0 // pred_check
    _
  $region11: #{_lambda_.14} parent=0 // pred_check_branch
    %15 = sbr.rel (0) target = $region13
  $region12: #{_lambda_.14} parent=0 // pred_region
    _
  $region13: #{_lambda_.14} parent=0 // pred_fallthru
    _
  // Predicated region
  $region14: #{_lambda_.14} parent=0 // pred_check
    _
  $region15: #{_lambda_.14} parent=0 // pred_check_branch
    %17 = sbr.rel (0) target = $region17
  $region16: #{_lambda_.14} parent=0 // pred_region
    _
  $region17: #{_lambda_.14} parent=0 // pred_fallthru
    _
  // Predicated region
  $region18: #{_lambda_.14} parent=0 // pred_check
    _
  $region19: #{_lambda_.14} parent=0 // pred_check_branch
    %19 = sbr.rel (0) target = $region21
  $region20: #{_lambda_.14} parent=0 // pred_region
    _
  $region21: #{_lambda_.14} parent=0 // pred_fallthru
    _
  %v21 = vld [vmem:[%s0] sm:$0x3]
  %v22 = vld [vmem:[%s1] sm:$0xf]
  %v23 = vld [vmem:[%s1 + $0x4] sm:$0xf]
  %v24 = vld [vmem:[%s1 + $0x8] sm:$0xf]
  %v25 = vld [vmem:[%s1 + $0xc] sm:$0xf]
  %v26 = vld [vmem:[%s1 + $0x10] sm:$0xf]
  %v27 = vld [vmem:[%s1 + $0x14] sm:$0xf]
  %v28 = vld [vmem:[%s1 + $0x18] sm:$0xf]
  %v29 = vld [vmem:[%s1 + $0x1c] sm:$0xf]
  %v30 = vld [vmem:[%s1 + $0x20] sm:$0xf]
  %v31 = vld [vmem:[%s1 + $0x24] sm:$0xf]
  %v32 = vld [vmem:[%s1 + $0x28] sm:$0xf]
  %v33 = vld [vmem:[%s1 + $0x2c] sm:$0xf]
  %v34 = vld [vmem:[%s1 + $0x30] sm:$0xf]
  %v35 = vld [vmem:[%s1 + $0x34] sm:$0x3]
  %v50 = vunpack.c.l.b16 %v22
  %v51 = vunpack.c.l.b16 %v23
  %v52 = vunpack.c.l.b16 %v24
  %v53 = vunpack.c.l.b16 %v25
  %v54 = vunpack.c.l.b16 %v26
  %v55 = vunpack.c.l.b16 %v27
  %v56 = vunpack.c.l.b16 %v28
  %v57 = vunpack.c.l.b16 %v29
  %v58 = vunpack.c.l.b16 %v30
  %v59 = vunpack.c.l.b16 %v31
  %v60 = vunpack.c.l.b16 %v32
  %v61 = vunpack.c.l.b16 %v33
  %v62 = vunpack.c.l.b16 %v34
  %v63 = vunpack.c.l.b16 %v35
  %v64 = vpack.c.b16 %v51, %v50
  %v65 = vpack.c.b16 %v53, %v52
  %v66 = vpack.c.b16 %v55, %v54
  %v67 = vpack.c.b16 %v57, %v56
  %v68 = vpack.c.b16 %v59, %v58
  %v69 = vpack.c.b16 %v61, %v60
  %v70 = vpack.c.b16 %v63, %v62
  %vm77 = vcmask 883712
  %v79 = vsel %vm77, %v21, 0
  %vm81 = vcmask 1045504
  %v83 = vsel %vm81, %v70, 0
  %85 = vmatprep.subr.bf16.mxu0 0
  %86 = vmatpush1.bf16.msra.mxu0 %v64
  %87 = vmatprep.subr.bf16.mxu0 0
  %88 = vmatpush1.bf16.msra.mxu0 %v65
  %89 = vmatprep.subr.bf16.mxu0 0
  %90 = vmatpush1.bf16.msra.mxu0 %v66
  %91 = vmatprep.subr.bf16.mxu0 0
  %92 = vmatpush1.bf16.msra.mxu0 %v67
  %93 = vmatprep.subr.bf16.mxu0 0
  %94 = vmatpush1.bf16.msra.mxu0 %v68
  %95 = vmatprep.subr.bf16.mxu0 0
  %96 = vmatpush1.bf16.msra.mxu0 %v69
  %97 = vmatprep.subr.bf16.mxu0 0
  %98 = vmatpush1.bf16.msra.mxu0 %v83
  %99 = vmatprep.subr.bf16.mxu0 0
  %100 = vmatpush1.bf16.msra.mxu0 0
  %101 = vmatprep.subr.bf16.mxu0 0
  %102 = vmatpush1.bf16.msra.mxu0 0
  %103 = vmatprep.subr.bf16.mxu0 0
  %104 = vmatpush1.bf16.msra.mxu0 0
  %105 = vmatprep.subr.bf16.mxu0 0
  %106 = vmatpush1.bf16.msra.mxu0 0
  %107 = vmatprep.subr.bf16.mxu0 0
  %108 = vmatpush1.bf16.msra.mxu0 0
  %109 = vmatprep.subr.bf16.mxu0 0
  %110 = vmatpush1.bf16.msra.mxu0 0
  %111 = vmatprep.subr.bf16.mxu0 0
  %112 = vmatpush1.bf16.msra.mxu0 0
  %113 = vmatprep.subr.bf16.mxu0 0
  %114 = vmatpush1.bf16.msra.mxu0 0
  %115 = vmatprep.subr.bf16.mxu0 0
  %116 = vmatpush1.bf16.msra.mxu0 0
  %117 = vmatprep.mubr.bf16.mxu0 0
  %118 = vmatmul.mubr.bf16.gmra.mrb[0].mxu0 %v79
  %v119 = vpop.f32.mrb[0].mxu0
  %v120 = vadd.f32 0.0, %v119
  %v121 = vpop.f32.mrb[0].mxu0
  %v122 = vpop.f32.mrb[0].mxu0
  %v123 = vpop.f32.mrb[0].mxu0
  %124 = vdwg.mxu0
  %v125 = vld [vmem:[%s2] sm:$0xf]
  %v126 = vld [vmem:[%s3] sm:$0xf]
  %vm127 = vcmask 1043456
  %v128 = vsel %vm127, %v120, 0.0
  %129 = vadd.xlane.f32.xlu0 %v128
  %v130 = vpop.xlane.xlu0 %129
  %v131 = vrcp.pop 128.0
  %v132 = vmul.f32 %v130, %v131
  %v133 = vsub.f32 %v120, %v132
  %v134 = vmul.f32 %v133, %v133
  %v135 = vsel %vm127, %v134, 0.0
  %136 = vadd.xlane.f32.xlu0 %v135
  %v137 = vpop.xlane.xlu0 %136
  %v138 = vmul.f32 %v137, %v131
  %v139 = vadd.f32 %v138, 1e-05
  %v140 = vrsqrt.pop %v139
  %v141 = vmul.f32 %v133, %v140
  %143 = vset.pattern.permute.xlu0 0
  %144 = vperm.xlu0 %143, %v125
  %v145 = vpop.permute.xlu0 %144
  %v147 = vmul.f32 %v141, %v145
  %149 = vset.pattern.permute.xlu0 0
  %150 = vperm.xlu0 %149, %v126
  %v151 = vpop.permute.xlu0 %150
  %v153 = vadd.f32 %v147, %v151
  %v154 = vld [vmem:[%s4] sm:$0x3]
  %v155 = vunpack.c.l.bf16 %v154
  %v156 = vadd.f32 %v153, %v155
  %v157 = vmax.f32 %v156, 0.0
  %v158 = vpack.c.bf16 %v157, %v157
  %159 = vst [vmem:[%s5] sm:$0x3] %v158
  // Predicated region
  $region22: #{_lambda_.14} parent=0 // pred_check
    _
  $region23: #{_lambda_.14} parent=0 // pred_check_branch
    %161 = sbr.rel (0) target = $region25
  $region24: #{_lambda_.14} parent=0 // pred_region
    _
  $region25: #{_lambda_.14} parent=0 // pred_fallthru
    _
  // Predicated region
  $region26: #{_lambda_.14} parent=0 // pred_check
    _
  $region27: #{_lambda_.14} parent=0 // pred_check_branch
    %163 = sbr.rel (0) target = $region29
  $region28: #{_lambda_.14} parent=0 // pred_region
    _
  $region29: #{_lambda_.14} parent=0 // pred_fallthru
    _

// kernel: _lambda_.15
$region0: #{_lambda_.15}
  #allocation0 [shape = 'u32[]', space=smem, size = 0x4, offset = 0x4, fixed_abs, tag = 'smem constant byte address 0x4 - core index']
  #allocation1 [shape = 'u32[144,128]{1,0:T(1,128)}', space=vmem, size = 0x12000, scoped, tag = 'internal scratch']
  %s0 = inlined_call_operand.vmem [shape: bf16[8,108], index: 0, kind: input, shape index: {}]
  %s1 = inlined_call_operand.vmem [shape: bf16[108,16], index: 1, kind: input, shape index: {}]
  %s2 = inlined_call_operand.vmem [shape: f32[8,1], index: 2, kind: input, shape index: {}]
  %s3 = inlined_call_operand.vmem [shape: f32[8,1], index: 3, kind: input, shape index: {}]
  %s4 = inlined_call_operand.vmem [shape: bf16[8,16], index: 4, kind: output, shape index: {}]
  %s5 = sld [smem:[#allocation0]]
  $region26: #{_lambda_.15} parent=0
    _
  %s7 = ssub.s32 1, %s5
  %s8 = scalar_select 0, %s7, %s5
  // Predicated region
  $region2: #{_lambda_.15} parent=0 // pred_check
    _
  $region3: #{_lambda_.15} parent=0 // pred_check_branch
    %10 = sbr.rel (0) target = $region5
  $region4: #{_lambda_.15} parent=0 // pred_region
    _
  $region5: #{_lambda_.15} parent=0 // pred_fallthru
    _
  // Predicated region
  $region6: #{_lambda_.15} parent=0 // pred_check
    _
  $region7: #{_lambda_.15} parent=0 // pred_check_branch
    %12 = sbr.rel (0) target = $region9
  $region8: #{_lambda_.15} parent=0 // pred_region
    _
  $region9: #{_lambda_.15} parent=0 // pred_fallthru
    _
  // Predicated region
  $region10: #{_lambda_.15} parent=0 // pred_check
    _
  $region11: #{_lambda_.15} parent=0 // pred_check_branch
    %14 = sbr.rel (0) target = $region13
  $region12: #{_lambda_.15} parent=0 // pred_region
    _
  $region13: #{_lambda_.15} parent=0 // pred_fallthru
    _
  // Predicated region
  $region14: #{_lambda_.15} parent=0 // pred_check
    _
  $region15: #{_lambda_.15} parent=0 // pred_check_branch
    %16 = sbr.rel (0) target = $region17
  $region16: #{_lambda_.15} parent=0 // pred_region
    _
  $region17: #{_lambda_.15} parent=0 // pred_fallthru
    _
  %v18 = vld [vmem:[%s0] sm:$0xf]
  %v19 = vld [vmem:[%s1] sm:$0xf]
  %v20 = vld [vmem:[%s1 + $0x4] sm:$0xf]
  %v21 = vld [vmem:[%s1 + $0x8] sm:$0xf]
  %v22 = vld [vmem:[%s1 + $0xc] sm:$0xf]
  %v23 = vld [vmem:[%s1 + $0x10] sm:$0xf]
  %v24 = vld [vmem:[%s1 + $0x14] sm:$0xf]
  %v25 = vld [vmem:[%s1 + $0x18] sm:$0xf]
  %v26 = vld [vmem:[%s1 + $0x1c] sm:$0xf]
  %v27 = vld [vmem:[%s1 + $0x20] sm:$0xf]
  %v28 = vld [vmem:[%s1 + $0x24] sm:$0xf]
  %v29 = vld [vmem:[%s1 + $0x28] sm:$0xf]
  %v30 = vld [vmem:[%s1 + $0x2c] sm:$0xf]
  %v31 = vld [vmem:[%s1 + $0x30] sm:$0xf]
  %v32 = vld [vmem:[%s1 + $0x34] sm:$0x3]
  %v47 = vunpack.c.l.b16 %v19
  %v48 = vunpack.c.l.b16 %v20
  %v49 = vunpack.c.l.b16 %v21
  %v50 = vunpack.c.l.b16 %v22
  %v51 = vunpack.c.l.b16 %v23
  %v52 = vunpack.c.l.b16 %v24
  %v53 = vunpack.c.l.b16 %v25
  %v54 = vunpack.c.l.b16 %v26
  %v55 = vunpack.c.l.b16 %v27
  %v56 = vunpack.c.l.b16 %v28
  %v57 = vunpack.c.l.b16 %v29
  %v58 = vunpack.c.l.b16 %v30
  %v59 = vunpack.c.l.b16 %v31
  %v60 = vunpack.c.l.b16 %v32
  %v61 = vpack.c.b16 %v48, %v47
  %v62 = vpack.c.b16 %v50, %v49
  %v63 = vpack.c.b16 %v52, %v51
  %v64 = vpack.c.b16 %v54, %v53
  %v65 = vpack.c.b16 %v56, %v55
  %v66 = vpack.c.b16 %v58, %v57
  %v67 = vpack.c.b16 %v60, %v59
  %vm74 = vcmask 883712
  %v76 = vsel %vm74, %v18, 0
  %vm78 = vcmask 1045504
  %v80 = vsel %vm78, %v67, 0
  %82 = vmatprep.subr.bf16.mxu0 0
  %83 = vmatpush1.bf16.msra.mxu0 %v61
  %84 = vmatprep.subr.bf16.mxu0 0
  %85 = vmatpush1.bf16.msra.mxu0 %v62
  %86 = vmatprep.subr.bf16.mxu0 0
  %87 = vmatpush1.bf16.msra.mxu0 %v63
  %88 = vmatprep.subr.bf16.mxu0 0
  %89 = vmatpush1.bf16.msra.mxu0 %v64
  %90 = vmatprep.subr.bf16.mxu0 0
  %91 = vmatpush1.bf16.msra.mxu0 %v65
  %92 = vmatprep.subr.bf16.mxu0 0
  %93 = vmatpush1.bf16.msra.mxu0 %v66
  %94 = vmatprep.subr.bf16.mxu0 0
  %95 = vmatpush1.bf16.msra.mxu0 %v80
  %96 = vmatprep.subr.bf16.mxu0 0
  %97 = vmatpush1.bf16.msra.mxu0 0
  %98 = vmatprep.subr.bf16.mxu0 0
  %99 = vmatpush1.bf16.msra.mxu0 0
  %100 = vmatprep.subr.bf16.mxu0 0
  %101 = vmatpush1.bf16.msra.mxu0 0
  %102 = vmatprep.subr.bf16.mxu0 0
  %103 = vmatpush1.bf16.msra.mxu0 0
  %104 = vmatprep.subr.bf16.mxu0 0
  %105 = vmatpush1.bf16.msra.mxu0 0
  %106 = vmatprep.subr.bf16.mxu0 0
  %107 = vmatpush1.bf16.msra.mxu0 0
  %108 = vmatprep.subr.bf16.mxu0 0
  %109 = vmatpush1.bf16.msra.mxu0 0
  %110 = vmatprep.subr.bf16.mxu0 0
  %111 = vmatpush1.bf16.msra.mxu0 0
  %112 = vmatprep.subr.bf16.mxu0 0
  %113 = vmatpush1.bf16.msra.mxu0 0
  %114 = vmatprep.mubr.bf16.mxu0 0
  %115 = vmatmul.mubr.bf16.gmra.mrb[0].mxu0 %v76
  %v116 = vpop.f32.mrb[0].mxu0
  %v117 = vadd.f32 0.0, %v116
  %v118 = vpop.f32.mrb[0].mxu0
  %v119 = vpop.f32.mrb[0].mxu0
  %v120 = vpop.f32.mrb[0].mxu0
  %121 = vdwg.mxu0
  %v122 = vld [vmem:[%s2] sm:$0xff]
  %v123 = vld [vmem:[%s3] sm:$0xff]
  %vm124 = vcmask 130048
  %v125 = vsel %vm124, %v117, 0.0
  %126 = vadd.xlane.f32.xlu0 %v125
  %v127 = vpop.xlane.xlu0 %126
  %v128 = vrcp.pop 16.0
  %v129 = vmul.f32 %v127, %v128
  %v130 = vsub.f32 %v117, %v129
  %v131 = vmul.f32 %v130, %v130
  %v132 = vsel %vm124, %v131, 0.0
  %133 = vadd.xlane.f32.xlu0 %v132
  %v134 = vpop.xlane.xlu0 %133
  %v135 = vmul.f32 %v134, %v128
  %v136 = vadd.f32 %v135, 1e-05
  %v137 = vrsqrt.pop %v136
  %v138 = vmul.f32 %v130, %v137
  %140 = vset.pattern.permute.xlu0 0
  %141 = vperm.xlu0 %140, %v122
  %v142 = vpop.permute.xlu0 %141
  %v144 = vmul.f32 %v138, %v142
  %146 = vset.pattern.permute.xlu0 0
  %147 = vperm.xlu0 %146, %v123
  %v148 = vpop.permute.xlu0 %147
  %v150 = vadd.f32 %v144, %v148
  %v151 = vmax.f32 %v150, 0.0
  %v152 = vpack.c.bf16 %v151, %v151
  %vm153 = vcmask 125952
  %154 = vst.msk [vmem:[%s4] sm:$0xf] %vm153, %v152
  // Predicated region
  $region18: #{_lambda_.15} parent=0 // pred_check
    _
  $region19: #{_lambda_.15} parent=0 // pred_check_branch
    %156 = sbr.rel (0) target = $region21
  $region20: #{_lambda_.15} parent=0 // pred_region
    _
  $region21: #{_lambda_.15} parent=0 // pred_fallthru
    _
  // Predicated region
  $region22: #{_lambda_.15} parent=0 // pred_check
    _
  $region23: #{_lambda_.15} parent=0 // pred_check_branch
    %158 = sbr.rel (0) target = $region25
  $region24: #{_lambda_.15} parent=0 // pred_region
    _
  $region25: #{_lambda_.15} parent=0 // pred_fallthru
    _

// kernel: _lambda_.16
$region0: #{_lambda_.16}
  #allocation0 [shape = 'u32[]', space=smem, size = 0x4, offset = 0x4, fixed_abs, tag = 'smem constant byte address 0x4 - core index']
  #allocation1 [shape = 'u32[144,128]{1,0:T(1,128)}', space=vmem, size = 0x12000, scoped, tag = 'internal scratch']
  %s0 = inlined_call_operand.vmem [shape: bf16[8,216], index: 0, kind: input, shape index: {}]
  %s1 = inlined_call_operand.vmem [shape: bf16[216,16], index: 1, kind: input, shape index: {}]
  %s2 = inlined_call_operand.vmem [shape: f32[8,1], index: 2, kind: input, shape index: {}, may-alias: {2,6}]
  %s3 = inlined_call_operand.vmem [shape: f32[8,1], index: 3, kind: input, shape index: {}, may-alias: {3,7}]
  %s4 = inlined_call_operand.vmem [shape: bf16[8,4], index: 4, kind: input, shape index: {}]
  %s5 = inlined_call_operand.vmem [shape: bf16[4,16], index: 5, kind: input, shape index: {}]
  %s6 = inlined_call_operand.vmem [shape: f32[8,1], index: 6, kind: input, shape index: {}, may-alias: {2,6}]
  %s7 = inlined_call_operand.vmem [shape: f32[8,1], index: 7, kind: input, shape index: {}, may-alias: {3,7}]
  %s8 = inlined_call_operand.vmem [shape: bf16[8,16], index: 8, kind: output, shape index: {}]
  %s9 = sld [smem:[#allocation0]]
  $region42: #{_lambda_.16} parent=0
    _
  %s11 = ssub.s32 1, %s9
  %s12 = scalar_select 0, %s11, %s9
  // Predicated region
  $region2: #{_lambda_.16} parent=0 // pred_check
    _
  $region3: #{_lambda_.16} parent=0 // pred_check_branch
    %14 = sbr.rel (0) target = $region5
  $region4: #{_lambda_.16} parent=0 // pred_region
    _
  $region5: #{_lambda_.16} parent=0 // pred_fallthru
    _
  // Predicated region
  $region6: #{_lambda_.16} parent=0 // pred_check
    _
  $region7: #{_lambda_.16} parent=0 // pred_check_branch
    %16 = sbr.rel (0) target = $region9
  $region8: #{_lambda_.16} parent=0 // pred_region
    _
  $region9: #{_lambda_.16} parent=0 // pred_fallthru
    _
  // Predicated region
  $region10: #{_lambda_.16} parent=0 // pred_check
    _
  $region11: #{_lambda_.16} parent=0 // pred_check_branch
    %18 = sbr.rel (0) target = $region13
  $region12: #{_lambda_.16} parent=0 // pred_region
    _
  $region13: #{_lambda_.16} parent=0 // pred_fallthru
    _
  // Predicated region
  $region14: #{_lambda_.16} parent=0 // pred_check
    _
  $region15: #{_lambda_.16} parent=0 // pred_check_branch
    %20 = sbr.rel (0) target = $region17
  $region16: #{_lambda_.16} parent=0 // pred_region
    _
  $region17: #{_lambda_.16} parent=0 // pred_fallthru
    _
  // Predicated region
  $region18: #{_lambda_.16} parent=0 // pred_check
    _
  $region19: #{_lambda_.16} parent=0 // pred_check_branch
    %22 = sbr.rel (0) target = $region21
  $region20: #{_lambda_.16} parent=0 // pred_region
    _
  $region21: #{_lambda_.16} parent=0 // pred_fallthru
    _
  // Predicated region
  $region22: #{_lambda_.16} parent=0 // pred_check
    _
  $region23: #{_lambda_.16} parent=0 // pred_check_branch
    %24 = sbr.rel (0) target = $region25
  $region24: #{_lambda_.16} parent=0 // pred_region
    _
  $region25: #{_lambda_.16} parent=0 // pred_fallthru
    _
  // Predicated region
  $region26: #{_lambda_.16} parent=0 // pred_check
    _
  $region27: #{_lambda_.16} parent=0 // pred_check_branch
    %26 = sbr.rel (0) target = $region29
  $region28: #{_lambda_.16} parent=0 // pred_region
    _
  $region29: #{_lambda_.16} parent=0 // pred_fallthru
    _
  // Predicated region
  $region30: #{_lambda_.16} parent=0 // pred_check
    _
  $region31: #{_lambda_.16} parent=0 // pred_check_branch
    %28 = sbr.rel (0) target = $region33
  $region32: #{_lambda_.16} parent=0 // pred_region
    _
  $region33: #{_lambda_.16} parent=0 // pred_fallthru
    _
  %v30 = vld [vmem:[%s0] sm:$0xff]
  %v31 = vld [vmem:[%s1] sm:$0xf]
  %v32 = vld [vmem:[%s1 + $0x4] sm:$0xf]
  %v33 = vld [vmem:[%s1 + $0x8] sm:$0xf]
  %v34 = vld [vmem:[%s1 + $0xc] sm:$0xf]
  %v35 = vld [vmem:[%s1 + $0x10] sm:$0xf]
  %v36 = vld [vmem:[%s1 + $0x14] sm:$0xf]
  %v37 = vld [vmem:[%s1 + $0x18] sm:$0xf]
  %v38 = vld [vmem:[%s1 + $0x1c] sm:$0xf]
  %v39 = vld [vmem:[%s1 + $0x20] sm:$0xf]
  %v40 = vld [vmem:[%s1 + $0x24] sm:$0xf]
  %v41 = vld [vmem:[%s1 + $0x28] sm:$0xf]
  %v42 = vld [vmem:[%s1 + $0x2c] sm:$0xf]
  %v43 = vld [vmem:[%s1 + $0x30] sm:$0xf]
  %v44 = vld [vmem:[%s1 + $0x34] sm:$0xf]
  %v45 = vld [vmem:[%s1 + $0x38] sm:$0xf]
  %v46 = vld [vmem:[%s1 + $0x3c] sm:$0xf]
  %v47 = vld [vmem:[%s1 + $0x40] sm:$0xf]
  %v48 = vld [vmem:[%s1 + $0x44] sm:$0xf]
  %v49 = vld [vmem:[%s1 + $0x48] sm:$0xf]
  %v50 = vld [vmem:[%s1 + $0x4c] sm:$0xf]
  %v51 = vld [vmem:[%s1 + $0x50] sm:$0xf]
  %v52 = vld [vmem:[%s1 + $0x54] sm:$0xf]
  %v53 = vld [vmem:[%s1 + $0x58] sm:$0xf]
  %v54 = vld [vmem:[%s1 + $0x5c] sm:$0xf]
  %v55 = vld [vmem:[%s1 + $0x60] sm:$0xf]
  %v56 = vld [vmem:[%s1 + $0x64] sm:$0xf]
  %v57 = vld [vmem:[%s1 + $0x68] sm:$0xf]
  %v59 = vunpack.c.l.b16 %v30
  %v60 = vunpack.c.h.b16 %v30
  %v61 = vpack.c.b16 %v59, %v59
  %v62 = vpack.c.b16 %v60, %v60
  %v91 = vunpack.c.l.b16 %v31
  %v92 = vunpack.c.l.b16 %v32
  %v93 = vunpack.c.l.b16 %v33
  %v94 = vunpack.c.l.b16 %v34
  %v95 = vunpack.c.l.b16 %v35
  %v96 = vunpack.c.l.b16 %v36
  %v97 = vunpack.c.l.b16 %v37
  %v98 = vunpack.c.l.b16 %v38
  %v99 = vunpack.c.l.b16 %v39
  %v100 = vunpack.c.l.b16 %v40
  %v101 = vunpack.c.l.b16 %v41
  %v102 = vunpack.c.l.b16 %v42
  %v103 = vunpack.c.l.b16 %v43
  %v104 = vunpack.c.l.b16 %v44
  %v105 = vunpack.c.l.b16 %v45
  %v106 = vunpack.c.l.b16 %v46
  %v107 = vunpack.c.l.b16 %v47
  %v108 = vunpack.c.l.b16 %v48
  %v109 = vunpack.c.l.b16 %v49
  %v110 = vunpack.c.l.b16 %v50
  %v111 = vunpack.c.l.b16 %v51
  %v112 = vunpack.c.l.b16 %v52
  %v113 = vunpack.c.l.b16 %v53
  %v114 = vunpack.c.l.b16 %v54
  %v115 = vunpack.c.l.b16 %v55
  %v116 = vunpack.c.l.b16 %v56
  %v117 = vunpack.c.l.b16 %v57
  %v118 = vpack.c.b16 %v92, %v91
  %v119 = vpack.c.b16 %v94, %v93
  %v120 = vpack.c.b16 %v96, %v95
  %v121 = vpack.c.b16 %v98, %v97
  %v122 = vpack.c.b16 %v100, %v99
  %v123 = vpack.c.b16 %v102, %v101
  %v124 = vpack.c.b16 %v104, %v103
  %v125 = vpack.c.b16 %v106, %v105
  %v126 = vpack.c.b16 %v108, %v107
  %v127 = vpack.c.b16 %v110, %v109
  %v128 = vpack.c.b16 %v112, %v111
  %v129 = vpack.c.b16 %v114, %v113
  %v130 = vpack.c.b16 %v116, %v115
  %v131 = vpack.c.b16 %v117, %v117
  %vm145 = vcmask 719872
  %v147 = vsel %vm145, %v62, 0
  %vm149 = vcmask 1043456
  %v151 = vsel %vm149, %v131, 0
  %153 = vmatprep.subr.bf16.mxu0 0
  %154 = vmatpush1.bf16.msra.mxu0 %v118
  %155 = vmatprep.subr.bf16.mxu0 0
  %156 = vmatpush1.bf16.msra.mxu0 %v119
  %157 = vmatprep.subr.bf16.mxu0 0
  %158 = vmatpush1.bf16.msra.mxu0 %v120
  %159 = vmatprep.subr.bf16.mxu0 0
  %160 = vmatpush1.bf16.msra.mxu0 %v121
  %161 = vmatprep.subr.bf16.mxu0 0
  %162 = vmatpush1.bf16.msra.mxu0 %v122
  %163 = vmatprep.subr.bf16.mxu0 0
  %164 = vmatpush1.bf16.msra.mxu0 %v123
  %165 = vmatprep.subr.bf16.mxu0 0
  %166 = vmatpush1.bf16.msra.mxu0 %v124
  %167 = vmatprep.subr.bf16.mxu0 0
  %168 = vmatpush1.bf16.msra.mxu0 %v125
  %169 = vmatprep.subr.bf16.mxu0 0
  %170 = vmatpush1.bf16.msra.mxu0 %v126
  %171 = vmatprep.subr.bf16.mxu0 0
  %172 = vmatpush1.bf16.msra.mxu0 %v127
  %173 = vmatprep.subr.bf16.mxu0 0
  %174 = vmatpush1.bf16.msra.mxu0 %v128
  %175 = vmatprep.subr.bf16.mxu0 0
  %176 = vmatpush1.bf16.msra.mxu0 %v129
  %177 = vmatprep.subr.bf16.mxu0 0
  %178 = vmatpush1.bf16.msra.mxu0 %v130
  %179 = vmatprep.subr.bf16.mxu0 0
  %180 = vmatpush1.bf16.msra.mxu0 %v151
  %181 = vmatprep.subr.bf16.mxu0 0
  %182 = vmatpush1.bf16.msra.mxu0 0
  %183 = vmatprep.subr.bf16.mxu0 0
  %184 = vmatpush1.bf16.msra.mxu0 0
  %185 = vmatprep.mubr.bf16.mxu0 %v147
  %186 = vmatmul.mubr.bf16.gmra.mrb[0].mxu0 %v61
  %v187 = vpop.f32.mrb[0].mxu0
  %v188 = vadd.f32 0.0, %v187
  %v189 = vpop.f32.mrb[0].mxu0
  %v190 = vpop.f32.mrb[0].mxu0
  %v191 = vpop.f32.mrb[0].mxu0
  %192 = vdwg.mxu0
  %v193 = vld [vmem:[%s2] sm:$0xff]
  %v194 = vld [vmem:[%s3] sm:$0xff]
  %vm195 = vcmask 130048
  %v196 = vsel %vm195, %v188, 0.0
  %197 = vadd.xlane.f32.xlu0 %v196
  %v198 = vpop.xlane.xlu0 %197
  %v199 = vrcp.pop 16.0
  %v200 = vmul.f32 %v198, %v199
  %v201 = vsub.f32 %v188, %v200
  %v202 = vmul.f32 %v201, %v201
  %v203 = vsel %vm195, %v202, 0.0
  %204 = vadd.xlane.f32.xlu0 %v203
  %v205 = vpop.xlane.xlu0 %204
  %v206 = vmul.f32 %v205, %v199
  %v207 = vadd.f32 %v206, 1e-05
  %v208 = vrsqrt.pop %v207
  %v209 = vmul.f32 %v201, %v208
  %211 = vset.pattern.permute.xlu0 0
  %212 = vperm.xlu0 %211, %v193
  %v213 = vpop.permute.xlu0 %212
  %v215 = vmul.f32 %v209, %v213
  %217 = vset.pattern.permute.xlu0 0
  %218 = vperm.xlu0 %217, %v194
  %v219 = vpop.permute.xlu0 %218
  %v221 = vadd.f32 %v215, %v219
  %v222 = vld [vmem:[%s4] sm:$0xf]
  %v223 = vld [vmem:[%s5] sm:$0x3]
  %vm224 = vcmask 31744
  %v226 = vsel %vm224, %v222, 0
  %vm228 = vcmask 1041408
  %v230 = vsel %vm228, %v223, 0
  %232 = vmatprep.subr.bf16.mxu0 0
  %233 = vmatpush1.bf16.msra.mxu0 %v230
  %234 = vmatprep.subr.bf16.mxu0 0
  %235 = vmatpush1.bf16.msra.mxu0 0
  %236 = vmatprep.subr.bf16.mxu0 0
  %237 = vmatpush1.bf16.msra.mxu0 0
  %238 = vmatprep.subr.bf16.mxu0 0
  %239 = vmatpush1.bf16.msra.mxu0 0
  %240 = vmatprep.subr.bf16.mxu0 0
  %241 = vmatpush1.bf16.msra.mxu0 0
  %242 = vmatprep.subr.bf16.mxu0 0
  %243 = vmatpush1.bf16.msra.mxu0 0
  %244 = vmatprep.subr.bf16.mxu0 0
  %245 = vmatpush1.bf16.msra.mxu0 0
  %246 = vmatprep.subr.bf16.mxu0 0
  %247 = vmatpush1.bf16.msra.mxu0 0
  %248 = vmatprep.subr.bf16.mxu0 0
  %249 = vmatpush1.bf16.msra.mxu0 0
  %250 = vmatprep.subr.bf16.mxu0 0
  %251 = vmatpush1.bf16.msra.mxu0 0
  %252 = vmatprep.subr.bf16.mxu0 0
  %253 = vmatpush1.bf16.msra.mxu0 0
  %254 = vmatprep.subr.bf16.mxu0 0
  %255 = vmatpush1.bf16.msra.mxu0 0
  %256 = vmatprep.subr.bf16.mxu0 0
  %257 = vmatpush1.bf16.msra.mxu0 0
  %258 = vmatprep.subr.bf16.mxu0 0
  %259 = vmatpush1.bf16.msra.mxu0 0
  %260 = vmatprep.subr.bf16.mxu0 0
  %261 = vmatpush1.bf16.msra.mxu0 0
  %262 = vmatprep.subr.bf16.mxu0 0
  %263 = vmatpush1.bf16.msra.mxu0 0
  %264 = vmatprep.mubr.bf16.mxu0 0
  %265 = vmatmul.mubr.bf16.gmra.mrb[0].mxu0 %v226
  %v266 = vpop.f32.mrb[0].mxu0
  %v267 = vadd.f32 0.0, %v266
  %v268 = vpop.f32.mrb[0].mxu0
  %v269 = vpop.f32.mrb[0].mxu0
  %v270 = vpop.f32.mrb[0].mxu0
  %271 = vdwg.mxu0
  %v272 = vld [vmem:[%s6] sm:$0xff]
  %v273 = vld [vmem:[%s7] sm:$0xff]
  %v274 = vsel %vm195, %v267, 0.0
  %275 = vadd.xlane.f32.xlu0 %v274
  %v276 = vpop.xlane.xlu0 %275
  %v277 = vmul.f32 %v276, %v199
  %v278 = vsub.f32 %v267, %v277
  %v279 = vmul.f32 %v278, %v278
  %v280 = vsel %vm195, %v279, 0.0
  %281 = vadd.xlane.f32.xlu0 %v280
  %v282 = vpop.xlane.xlu0 %281
  %v283 = vmul.f32 %v282, %v199
  %v284 = vadd.f32 %v283, 1e-05
  %v285 = vrsqrt.pop %v284
  %v286 = vmul.f32 %v278, %v285
  %288 = vset.pattern.permute.xlu0 0
  %289 = vperm.xlu0 %288, %v272
  %v290 = vpop.permute.xlu0 %289
  %v292 = vmul.f32 %v286, %v290
  %294 = vset.pattern.permute.xlu0 0
  %295 = vperm.xlu0 %294, %v273
  %v296 = vpop.permute.xlu0 %295
  %v298 = vadd.f32 %v292, %v296
  %v299 = vadd.f32 %v221, %v298
  %v300 = vmax.f32 %v299, 0.0
  %v301 = vpack.c.bf16 %v300, %v300
  %vm302 = vcmask 125952
  %303 = vst.msk [vmem:[%s8] sm:$0xf] %vm302, %v301
  // Predicated region
  $region34: #{_lambda_.16} parent=0 // pred_check
    _
  $region35: #{_lambda_.16} parent=0 // pred_check_branch
    %305 = sbr.rel (0) target = $region37
  $region36: #{_lambda_.16} parent=0 // pred_region
    _
  $region37: #{_lambda_.16} parent=0 // pred_fallthru
    _
  // Predicated region
  $region38: #{_lambda_.16} parent=0 // pred_check
    _
  $region39: #{_lambda_.16} parent=0 // pred_check_branch
    %307 = sbr.rel (0) target = $region41
  $region40: #{_lambda_.16} parent=0 // pred_region
    _
  $region41: #{_lambda_.16} parent=0 // pred_fallthru
    _

// kernel: _lambda_.17
$region0: #{_lambda_.17}
  #allocation0 [shape = 'u32[]', space=smem, size = 0x4, offset = 0x4, fixed_abs, tag = 'smem constant byte address 0x4 - core index']
  #allocation1 [shape = 'u32[144,128]{1,0:T(1,128)}', space=vmem, size = 0x12000, scoped, tag = 'internal scratch']
  %s0 = inlined_call_operand.vmem [shape: bf16[16,216], index: 0, kind: input, shape index: {}]
  %s1 = inlined_call_operand.vmem [shape: bf16[216,2], index: 1, kind: input, shape index: {}]
  %s2 = inlined_call_operand.vmem [shape: f32[16,1], index: 2, kind: input, shape index: {}]
  %s3 = inlined_call_operand.vmem [shape: f32[16,1], index: 3, kind: input, shape index: {}]
  %s4 = inlined_call_operand.vmem [shape: bf16[16,2], index: 4, kind: output, shape index: {}]
  %s5 = sld [smem:[#allocation0]]
  $region49: #{_lambda_.17} parent=0
    _
  %s7 = ssub.s32 1, %s5
  %s8 = scalar_select 0, %s7, %s5
  loop: start=0, step=1, limit=4
  $region2: #{_lambda_.17} parent=0 // loop_pre_header
    _
  $region3: #{_lambda_.17} parent=0 // loop_header
    %s10 = sphi 0, %s14
    %p11 = scmp.ge.s32.totalorder %s10, 4
    %s20 = sphi 0, %s22
    %s23 = sphi 0, %s20
    %s24 = sphi 0, %s23
    %s40 = sphi 0, %s24
    %s44 = sphi 0, %s44
    %s46 = sphi 0, %s44
    %s47 = sphi 0, %s46
    %s61 = sphi 0, %s47
    %s67 = sphi 0, %s69
    %s70 = sphi 0, %s67
    %s71 = sphi 0, %s70
    %s87 = sphi 0, %s71
    %s93 = sphi 0, %s95
    %s96 = sphi 0, %s93
    %s97 = sphi 0, %s96
    %s113 = sphi 0, %s97
    %s119 = sphi 0, %s121
    %s122 = sphi 0, %s119
    %s123 = sphi 0, %s122
    %s139 = sphi 0, %s123
  $region4: #{_lambda_.17} parent=0 // loop_header_branch
    %13 = sbr.rel (%p11) target = $region8
  $region5: #{_lambda_.17} parent=0 // loop_body
    %s15 = ssub.s32 %s10, 1
    %s16 = ssub.s32 %s10, 2
    %s17 = sadd.s32 %s10, 1
    %s18 = ssub.s32 %s10, %s17
    %p19 = scmp.eq.s32.totalorder %s18, 0
    %s21 = sadd.s32 %s20, 1
    %s22 = scalar_select %p19, %s20, %s21
    %p25 = pneg %p19
    %p26 = scmp.eq.s32.totalorder %s10, 1
    %p27 = por %p25, %p26
    %p28 = scmp.ne.s32.totalorder %s20, %s23
    %p29 = scmp.eq.s32.totalorder %s10, 0
    %p30 = por %p28, %p29
    %p31 = scmp.ne.s32.totalorder %s20, %s23
    %p32 = scmp.eq.s32.totalorder %s15, 1
    %p33 = por %p31, %p32
    %p34 = scmp.ne.s32.totalorder %s23, %s24
    %p35 = scmp.eq.s32.totalorder %s15, 0
    %p36 = por %p34, %p35
    %p37 = scmp.ne.s32.totalorder %s23, %s24
    %p38 = scmp.eq.s32.totalorder %s16, 1
    %p39 = por %p37, %p38
    %p41 = scmp.ne.s32.totalorder %s24, %s40
    %p42 = scmp.eq.s32.totalorder %s16, 0
    %p43 = por %p41, %p42
    %s45 = sadd.s32 %s44, 1
    %p48 = scmp.eq.s32.totalorder %s10, 1
    %p49 = scmp.ne.s32.totalorder %s44, %s46
    %p50 = scmp.eq.s32.totalorder %s10, 0
    %p51 = por %p49, %p50
    %p52 = scmp.ne.s32.totalorder %s44, %s46
    %p53 = scmp.eq.s32.totalorder %s15, 1
    %p54 = por %p52, %p53
    %p55 = scmp.ne.s32.totalorder %s46, %s47
    %p56 = scmp.eq.s32.totalorder %s15, 0
    %p57 = por %p55, %p56
    %p58 = scmp.ne.s32.totalorder %s46, %s47
    %p59 = scmp.eq.s32.totalorder %s16, 1
    %p60 = por %p58, %p59
    %p62 = scmp.ne.s32.totalorder %s47, %s61
    %p63 = scmp.eq.s32.totalorder %s16, 0
    %p64 = por %p62, %p63
    %s65 = ssub.s32 %s10, %s17
    %p66 = scmp.eq.s32.totalorder %s65, 0
    %s68 = sadd.s32 %s67, 1
    %s69 = scalar_select %p66, %s67, %s68
    %p72 = pneg %p66
    %p73 = scmp.eq.s32.totalorder %s10, 1
    %p74 = por %p72, %p73
    %p75 = scmp.ne.s32.totalorder %s67, %s70
    %p76 = scmp.eq.s32.totalorder %s10, 0
    %p77 = por %p75, %p76
    %p78 = scmp.ne.s32.totalorder %s67, %s70
    %p79 = scmp.eq.s32.totalorder %s15, 1
    %p80 = por %p78, %p79
    %p81 = scmp.ne.s32.totalorder %s70, %s71
    %p82 = scmp.eq.s32.totalorder %s15, 0
    %p83 = por %p81, %p82
    %p84 = scmp.ne.s32.totalorder %s70, %s71
    %p85 = scmp.eq.s32.totalorder %s16, 1
    %p86 = por %p84, %p85
    %p88 = scmp.ne.s32.totalorder %s71, %s87
    %p89 = scmp.eq.s32.totalorder %s16, 0
    %p90 = por %p88, %p89
    %s91 = ssub.s32 %s10, %s17
    %p92 = scmp.eq.s32.totalorder %s91, 0
    %s94 = sadd.s32 %s93, 1
    %s95 = scalar_select %p92, %s93, %s94
    %p98 = pneg %p92
    %p99 = scmp.eq.s32.totalorder %s10, 1
    %p100 = por %p98, %p99
    %p101 = scmp.ne.s32.totalorder %s93, %s96
    %p102 = scmp.eq.s32.totalorder %s10, 0
    %p103 = por %p101, %p102
    %p104 = scmp.ne.s32.totalorder %s93, %s96
    %p105 = scmp.eq.s32.totalorder %s15, 1
    %p106 = por %p104, %p105
    %p107 = scmp.ne.s32.totalorder %s96, %s97
    %p108 = scmp.eq.s32.totalorder %s15, 0
    %p109 = por %p107, %p108
    %p110 = scmp.ne.s32.totalorder %s96, %s97
    %p111 = scmp.eq.s32.totalorder %s16, 1
    %p112 = por %p110, %p111
    %p114 = scmp.ne.s32.totalorder %s97, %s113
    %p115 = scmp.eq.s32.totalorder %s16, 0
    %p116 = por %p114, %p115
    %s117 = ssub.s32 %s10, %s17
    %p118 = scmp.eq.s32.totalorder %s117, 0
    %s120 = sadd.s32 %s119, 1
    %s121 = scalar_select %p118, %s119, %s120
    %p124 = pneg %p118
    %p125 = scmp.eq.s32.totalorder %s10, 1
    %p126 = por %p124, %p125
    %p127 = scmp.ne.s32.totalorder %s119, %s122
    %p128 = scmp.eq.s32.totalorder %s10, 0
    %p129 = por %p127, %p128
    %p130 = scmp.ne.s32.totalorder %s119, %s122
    %p131 = scmp.eq.s32.totalorder %s15, 1
    %p132 = por %p130, %p131
    %p133 = scmp.ne.s32.totalorder %s122, %s123
    %p134 = scmp.eq.s32.totalorder %s15, 0
    %p135 = por %p133, %p134
    %p136 = scmp.ne.s32.totalorder %s122, %s123
    %p137 = scmp.eq.s32.totalorder %s16, 1
    %p138 = por %p136, %p137
    %p140 = scmp.ne.s32.totalorder %s123, %s139
    %p141 = scmp.eq.s32.totalorder %s16, 0
    %p142 = por %p140, %p141
    %p143 = scmp.le.s32.totalorder 1, %s10
    %p144 = scmp.lt.s32.totalorder %s10, 3
    %p145 = pnand %p143, %p144
    %p146 = pneg %p145
    // Predicated region
    $region9: #{_lambda_.17} parent=5 // pred_check
      _
    $region10: #{_lambda_.17} parent=5 // pred_check_branch
      %148 = sbr.rel (%p145) target = $region12
    $region11: #{_lambda_.17} parent=5 // pred_region
      %s149 = ssub.s32 %s10, 1
      // Predicated region
      $region13: #{_lambda_.17} parent=11 // pred_check
        %p150 = pneg %p57
      $region14: #{_lambda_.17} parent=11 // pred_check_branch
        %152 = sbr.rel (%p150) target = $region16
      $region15: #{_lambda_.17} parent=11 // pred_region
        _
      $region16: #{_lambda_.17} parent=11 // pred_fallthru
        _
    $region12: #{_lambda_.17} parent=5 // pred_fallthru
      _
    %p153 = scmp.lt.s32.totalorder %s10, 2
    // Predicated region
    $region17: #{_lambda_.17} parent=5 // pred_check
      %p154 = pneg %p153
    $region18: #{_lambda_.17} parent=5 // pred_check_branch
      %156 = sbr.rel (%p154) target = $region20
    $region19: #{_lambda_.17} parent=5 // pred_region
      // Predicated region
      $region21: #{_lambda_.17} parent=19 // pred_check
        %p157 = pneg %p30
      $region22: #{_lambda_.17} parent=19 // pred_check_branch
        %159 = sbr.rel (%p157) target = $region24
      $region23: #{_lambda_.17} parent=19 // pred_region
        %p160 = scmp.lt.s32.totalorder %s10, 1
        %s161 = scalar_select %p160, %s10, 1
        %s162 = smul.addr %s161, 2
        %s163 = smul.addr %s162, 4
        %s164 = scalar_lea.vmem %s0, %s163
      $region24: #{_lambda_.17} parent=19 // pred_fallthru
        _
      // Predicated region
      $region25: #{_lambda_.17} parent=19 // pred_check
        %p165 = pneg %p77
      $region26: #{_lambda_.17} parent=19 // pred_check_branch
        %167 = sbr.rel (%p165) target = $region28
      $region27: #{_lambda_.17} parent=19 // pred_region
        %p168 = scmp.lt.s32.totalorder %s10, 1
        %s169 = scalar_select %p168, %s10, 1
        %s170 = smul.addr %s169, 8
        %s171 = scalar_lea.vmem %s2, %s170
      $region28: #{_lambda_.17} parent=19 // pred_fallthru
        _
      // Predicated region
      $region29: #{_lambda_.17} parent=19 // pred_check
        %p172 = pneg %p103
      $region30: #{_lambda_.17} parent=19 // pred_check_branch
        %174 = sbr.rel (%p172) target = $region32
      $region31: #{_lambda_.17} parent=19 // pred_region
        %p175 = scmp.lt.s32.totalorder %s10, 1
        %s176 = scalar_select %p175, %s10, 1
        %s177 = smul.addr %s176, 8
        %s178 = scalar_lea.vmem %s3, %s177
      $region32: #{_lambda_.17} parent=19 // pred_fallthru
        _
    $region20: #{_lambda_.17} parent=5 // pred_fallthru
      _
    %p179 = scmp.le.s32.totalorder 1, %s10
    %p180 = scmp.lt.s32.totalorder %s10, 3
    %p181 = pnand %p179, %p180
    %p182 = pneg %p181
    // Predicated region
    $region33: #{_lambda_.17} parent=5 // pred_check
      _
    $region34: #{_lambda_.17} parent=5 // pred_check_branch
      %184 = sbr.rel (%p181) target = $region36
    $region35: #{_lambda_.17} parent=5 // pred_region
      %s185 = ssub.s32 %s10, 1
      %p186 = scmp.lt.s32.totalorder %s15, 1
      %s187 = scalar_select %p186, %s15, 1
      %s188 = smul.addr %s187, 2
      %s189 = smul.addr %s188, 4
      %s190 = scalar_lea.vmem %s0, %s189
      %p191 = pneg %p36
      %p192 = pneg %p33
      %p193 = pneg %p57
      %p194 = pneg %p54
      %p195 = scmp.lt.s32.totalorder %s15, 1
      %s196 = scalar_select %p195, %s15, 1
      %s197 = smul.addr %s196, 8
      %s198 = scalar_lea.vmem %s2, %s197
      %p199 = pneg %p83
      %p200 = pneg %p80
      %p201 = scmp.lt.s32.totalorder %s15, 1
      %s202 = scalar_select %p201, %s15, 1
      %s203 = smul.addr %s202, 8
      %s204 = scalar_lea.vmem %s3, %s203
      %p205 = pneg %p109
      %p206 = pneg %p106
      %p207 = pneg %p135
      %p208 = pneg %p132
      %p209 = scmp.lt.s32.totalorder %s15, 1
      %s210 = scalar_select %p209, %s15, 1
      %s211 = smul.addr %s210, 4
      %s212 = scalar_lea.vmem %s4, %s211
      %p213 = scmp.lt.s32.totalorder %s15, 1
      %s214 = scalar_select %p213, %s15, 1
      %s215 = smul.addr %s214, 2
      %s216 = smul.addr %s215, 4
      %s217 = scalar_lea.vmem %s0, %s216
      %p218 = scmp.lt.s32.totalorder %s15, 1
      %s219 = scalar_select %p218, %s15, 1
      %s220 = smul.addr %s219, 8
      %s221 = scalar_lea.vmem %s2, %s220
      %p222 = scmp.lt.s32.totalorder %s15, 1
      %s223 = scalar_select %p222, %s15, 1
      %s224 = smul.addr %s223, 8
      %s225 = scalar_lea.vmem %s3, %s224
      %p226 = scmp.lt.s32.totalorder %s15, 1
      %s227 = scalar_select %p226, %s15, 1
      %s228 = smul.addr %s227, 4
      %s229 = scalar_lea.vmem %s4, %s228
      %v231 = vld [vmem:[%s217] sm:$0xff]
      %v232 = vld [vmem:[%s1] sm:$0xf]
      %v233 = vld [vmem:[%s1 + $0x4] sm:$0xf]
      %v234 = vld [vmem:[%s1 + $0x8] sm:$0xf]
      %v235 = vld [vmem:[%s1 + $0xc] sm:$0xf]
      %v236 = vld [vmem:[%s1 + $0x10] sm:$0xf]
      %v237 = vld [vmem:[%s1 + $0x14] sm:$0xf]
      %v238 = vld [vmem:[%s1 + $0x18] sm:$0xf]
      %v239 = vld [vmem:[%s1 + $0x1c] sm:$0xf]
      %v240 = vld [vmem:[%s1 + $0x20] sm:$0xf]
      %v241 = vld [vmem:[%s1 + $0x24] sm:$0xf]
      %v242 = vld [vmem:[%s1 + $0x28] sm:$0xf]
      %v243 = vld [vmem:[%s1 + $0x2c] sm:$0xf]
      %v244 = vld [vmem:[%s1 + $0x30] sm:$0xf]
      %v245 = vld [vmem:[%s1 + $0x34] sm:$0xf]
      %v246 = vld [vmem:[%s1 + $0x38] sm:$0xf]
      %v247 = vld [vmem:[%s1 + $0x3c] sm:$0xf]
      %v248 = vld [vmem:[%s1 + $0x40] sm:$0xf]
      %v249 = vld [vmem:[%s1 + $0x44] sm:$0xf]
      %v250 = vld [vmem:[%s1 + $0x48] sm:$0xf]
      %v251 = vld [vmem:[%s1 + $0x4c] sm:$0xf]
      %v252 = vld [vmem:[%s1 + $0x50] sm:$0xf]
      %v253 = vld [vmem:[%s1 + $0x54] sm:$0xf]
      %v254 = vld [vmem:[%s1 + $0x58] sm:$0xf]
      %v255 = vld [vmem:[%s1 + $0x5c] sm:$0xf]
      %v256 = vld [vmem:[%s1 + $0x60] sm:$0xf]
      %v257 = vld [vmem:[%s1 + $0x64] sm:$0xf]
      %v258 = vld [vmem:[%s1 + $0x68] sm:$0xf]
      %v260 = vunpack.c.l.b16 %v231
      %v261 = vunpack.c.h.b16 %v231
      %v262 = vpack.c.b16 %v260, %v260
      %v263 = vpack.c.b16 %v261, %v261
      %v292 = vunpack.c.l.b16 %v232
      %v293 = vunpack.c.l.b16 %v233
      %v294 = vunpack.c.l.b16 %v234
      %v295 = vunpack.c.l.b16 %v235
      %v296 = vunpack.c.l.b16 %v236
      %v297 = vunpack.c.l.b16 %v237
      %v298 = vunpack.c.l.b16 %v238
      %v299 = vunpack.c.l.b16 %v239
      %v300 = vunpack.c.l.b16 %v240
      %v301 = vunpack.c.l.b16 %v241
      %v302 = vunpack.c.l.b16 %v242
      %v303 = vunpack.c.l.b16 %v243
      %v304 = vunpack.c.l.b16 %v244
      %v305 = vunpack.c.l.b16 %v245
      %v306 = vunpack.c.l.b16 %v246
      %v307 = vunpack.c.l.b16 %v247
      %v308 = vunpack.c.l.b16 %v248
      %v309 = vunpack.c.l.b16 %v249
      %v310 = vunpack.c.l.b16 %v250
      %v311 = vunpack.c.l.b16 %v251
      %v312 = vunpack.c.l.b16 %v252
      %v313 = vunpack.c.l.b16 %v253
      %v314 = vunpack.c.l.b16 %v254
      %v315 = vunpack.c.l.b16 %v255
      %v316 = vunpack.c.l.b16 %v256
      %v317 = vunpack.c.l.b16 %v257
      %v318 = vunpack.c.l.b16 %v258
      %v319 = vpack.c.b16 %v293, %v292
      %v320 = vpack.c.b16 %v295, %v294
      %v321 = vpack.c.b16 %v297, %v296
      %v322 = vpack.c.b16 %v299, %v298
      %v323 = vpack.c.b16 %v301, %v300
      %v324 = vpack.c.b16 %v303, %v302
      %v325 = vpack.c.b16 %v305, %v304
      %v326 = vpack.c.b16 %v307, %v306
      %v327 = vpack.c.b16 %v309, %v308
      %v328 = vpack.c.b16 %v311, %v310
      %v329 = vpack.c.b16 %v313, %v312
      %v330 = vpack.c.b16 %v315, %v314
      %v331 = vpack.c.b16 %v317, %v316
      %v332 = vpack.c.b16 %v318, %v318
      %vm346 = vcmask 719872
      %v348 = vsel %vm346, %v263, 0
      %vm350 = vcmask 1043456
      %v352 = vsel %vm350, %v332, 0
      %354 = vmatprep.subr.bf16.mxu0 0
      %355 = vmatpush1.bf16.msra.mxu0 %v319
      %356 = vmatprep.subr.bf16.mxu0 0
      %357 = vmatpush1.bf16.msra.mxu0 %v320
      %358 = vmatprep.subr.bf16.mxu0 0
      %359 = vmatpush1.bf16.msra.mxu0 %v321
      %360 = vmatprep.subr.bf16.mxu0 0
      %361 = vmatpush1.bf16.msra.mxu0 %v322
      %362 = vmatprep.subr.bf16.mxu0 0
      %363 = vmatpush1.bf16.msra.mxu0 %v323
      %364 = vmatprep.subr.bf16.mxu0 0
      %365 = vmatpush1.bf16.msra.mxu0 %v324
      %366 = vmatprep.subr.bf16.mxu0 0
      %367 = vmatpush1.bf16.msra.mxu0 %v325
      %368 = vmatprep.subr.bf16.mxu0 0
      %369 = vmatpush1.bf16.msra.mxu0 %v326
      %370 = vmatprep.subr.bf16.mxu0 0
      %371 = vmatpush1.bf16.msra.mxu0 %v327
      %372 = vmatprep.subr.bf16.mxu0 0
      %373 = vmatpush1.bf16.msra.mxu0 %v328
      %374 = vmatprep.subr.bf16.mxu0 0
      %375 = vmatpush1.bf16.msra.mxu0 %v329
      %376 = vmatprep.subr.bf16.mxu0 0
      %377 = vmatpush1.bf16.msra.mxu0 %v330
      %378 = vmatprep.subr.bf16.mxu0 0
      %379 = vmatpush1.bf16.msra.mxu0 %v331
      %380 = vmatprep.subr.bf16.mxu0 0
      %381 = vmatpush1.bf16.msra.mxu0 %v352
      %382 = vmatprep.subr.bf16.mxu0 0
      %383 = vmatpush1.bf16.msra.mxu0 0
      %384 = vmatprep.subr.bf16.mxu0 0
      %385 = vmatpush1.bf16.msra.mxu0 0
      %386 = vmatprep.mubr.bf16.mxu0 %v348
      %387 = vmatmul.mubr.bf16.gmra.mrb[0].mxu0 %v262
      %v388 = vpop.f32.mrb[0].mxu0
      %v389 = vadd.f32 0.0, %v388
      %v390 = vpop.f32.mrb[0].mxu0
      %v391 = vpop.f32.mrb[0].mxu0
      %v392 = vpop.f32.mrb[0].mxu0
      %393 = vdwg.mxu0
      %v394 = vld [vmem:[%s221] sm:$0xff]
      %v395 = vld [vmem:[%s225] sm:$0xff]
      %vm396 = vcmask 15360
      %v397 = vsel %vm396, %v389, 0.0
      %398 = vadd.xlane.f32.xlu0 %v397
      %v399 = vpop.xlane.xlu0 %398
      %v400 = vrcp.pop 2.0
      %v401 = vmul.f32 %v399, %v400
      %v402 = vsub.f32 %v389, %v401
      %v403 = vmul.f32 %v402, %v402
      %v404 = vsel %vm396, %v403, 0.0
      %405 = vadd.xlane.f32.xlu0 %v404
      %v406 = vpop.xlane.xlu0 %405
      %v407 = vmul.f32 %v406, %v400
      %v408 = vadd.f32 %v407, 1e-05
      %v409 = vrsqrt.pop %v408
      %v410 = vmul.f32 %v402, %v409
      %412 = vset.pattern.permute.xlu0 0
      %413 = vperm.xlu0 %412, %v394
      %v414 = vpop.permute.xlu0 %413
      %v416 = vmul.f32 %v410, %v414
      %418 = vset.pattern.permute.xlu0 0
      %419 = vperm.xlu0 %418, %v395
      %v420 = vpop.permute.xlu0 %419
      %v422 = vadd.f32 %v416, %v420
      %v423 = vmax.f32 %v422, 0.0
      %v424 = vpack.c.bf16 %v423, %v423
      %vm425 = vcmask 11264
      %426 = vst.msk [vmem:[%s229] sm:$0xf] %vm425, %v424
      %p427 = scmp.lt.s32.totalorder %s15, 1
      %s428 = scalar_select %p427, %s15, 1
      %s429 = smul.addr %s428, 4
      %s430 = scalar_lea.vmem %s4, %s429
      // Predicated region
      $region37: #{_lambda_.17} parent=35 // pred_check
        %p431 = pneg %p132
      $region38: #{_lambda_.17} parent=35 // pred_check_branch
        %433 = sbr.rel (%p431) target = $region40
      $region39: #{_lambda_.17} parent=35 // pred_region
        _
      $region40: #{_lambda_.17} parent=35 // pred_fallthru
        _
    $region36: #{_lambda_.17} parent=5 // pred_fallthru
      _
    %p434 = scmp.le.s32.totalorder 2, %s10
    // Predicated region
    $region41: #{_lambda_.17} parent=5 // pred_check
      %p435 = pneg %p434
    $region42: #{_lambda_.17} parent=5 // pred_check_branch
      %437 = sbr.rel (%p435) target = $region44
    $region43: #{_lambda_.17} parent=5 // pred_region
      %s438 = ssub.s32 %s10, 2
      // Predicated region
      $region45: #{_lambda_.17} parent=43 // pred_check
        %p439 = pneg %p138
      $region46: #{_lambda_.17} parent=43 // pred_check_branch
        %441 = sbr.rel (%p439) target = $region48
      $region47: #{_lambda_.17} parent=43 // pred_region
        %p442 = scmp.lt.s32.totalorder %s16, 1
        %s443 = scalar_select %p442, %s16, 1
        %s444 = smul.addr %s443, 4
        %s445 = scalar_lea.vmem %s4, %s444
      $region48: #{_lambda_.17} parent=43 // pred_fallthru
        _
    $region44: #{_lambda_.17} parent=5 // pred_fallthru
      _
  $region6: #{_lambda_.17} parent=0 // loop_footer
    %s14 = sadd.s32 1, %s10
  $region7: #{_lambda_.17} parent=0 // loop_footer_branch
    %9 = sbr.rel target = $region3
  $region8: #{_lambda_.17} parent=0 // loop_exit
    _

// kernel: _lambda_.18
$region0: #{_lambda_.18}
  #allocation0 [shape = 'u32[]', space=smem, size = 0x4, offset = 0x4, fixed_abs, tag = 'smem constant byte address 0x4 - core index']
  #allocation1 [shape = 'u32[144,128]{1,0:T(1,128)}', space=vmem, size = 0x12000, scoped, tag = 'internal scratch']
  %s0 = inlined_call_operand.vmem [shape: bf16[16,432], index: 0, kind: input, shape index: {}]
  %s1 = inlined_call_operand.vmem [shape: bf16[432,2], index: 1, kind: input, shape index: {}]
  %s2 = inlined_call_operand.vmem [shape: f32[16,1], index: 2, kind: input, shape index: {}, may-alias: {2,6}]
  %s3 = inlined_call_operand.vmem [shape: f32[16,1], index: 3, kind: input, shape index: {}, may-alias: {3,7}]
  %s4 = inlined_call_operand.vmem [shape: bf16[16,8], index: 4, kind: input, shape index: {}]
  %s5 = inlined_call_operand.vmem [shape: bf16[8,2], index: 5, kind: input, shape index: {}]
  %s6 = inlined_call_operand.vmem [shape: f32[16,1], index: 6, kind: input, shape index: {}, may-alias: {2,6}]
  %s7 = inlined_call_operand.vmem [shape: f32[16,1], index: 7, kind: input, shape index: {}, may-alias: {3,7}]
  %s8 = inlined_call_operand.vmem [shape: bf16[16,2], index: 8, kind: output, shape index: {}]
  %s9 = sld [smem:[#allocation0]]
  $region65: #{_lambda_.18} parent=0
    _
  %s11 = ssub.s32 1, %s9
  %s12 = scalar_select 0, %s11, %s9
  loop: start=0, step=1, limit=4
  $region2: #{_lambda_.18} parent=0 // loop_pre_header
    _
  $region3: #{_lambda_.18} parent=0 // loop_header
    %s14 = sphi 0, %s18
    %p15 = scmp.ge.s32.totalorder %s14, 4
    %s24 = sphi 0, %s26
    %s27 = sphi 0, %s24
    %s28 = sphi 0, %s27
    %s44 = sphi 0, %s28
    %s48 = sphi 0, %s48
    %s50 = sphi 0, %s48
    %s51 = sphi 0, %s50
    %s65 = sphi 0, %s51
    %s71 = sphi 0, %s73
    %s74 = sphi 0, %s71
    %s75 = sphi 0, %s74
    %s91 = sphi 0, %s75
    %s97 = sphi 0, %s99
    %s100 = sphi 0, %s97
    %s101 = sphi 0, %s100
    %s117 = sphi 0, %s101
    %s123 = sphi 0, %s125
    %s126 = sphi 0, %s123
    %s127 = sphi 0, %s126
    %s143 = sphi 0, %s127
    %s147 = sphi 0, %s147
    %s149 = sphi 0, %s147
    %s150 = sphi 0, %s149
    %s164 = sphi 0, %s150
    %s170 = sphi 0, %s172
    %s173 = sphi 0, %s170
    %s174 = sphi 0, %s173
    %s190 = sphi 0, %s174
    %s196 = sphi 0, %s198
    %s199 = sphi 0, %s196
    %s200 = sphi 0, %s199
    %s216 = sphi 0, %s200
    %s222 = sphi 0, %s224
    %s225 = sphi 0, %s222
    %s226 = sphi 0, %s225
    %s242 = sphi 0, %s226
  $region4: #{_lambda_.18} parent=0 // loop_header_branch
    %17 = sbr.rel (%p15) target = $region8
  $region5: #{_lambda_.18} parent=0 // loop_body
    %s19 = ssub.s32 %s14, 1
    %s20 = ssub.s32 %s14, 2
    %s21 = sadd.s32 %s14, 1
    %s22 = ssub.s32 %s14, %s21
    %p23 = scmp.eq.s32.totalorder %s22, 0
    %s25 = sadd.s32 %s24, 1
    %s26 = scalar_select %p23, %s24, %s25
    %p29 = pneg %p23
    %p30 = scmp.eq.s32.totalorder %s14, 1
    %p31 = por %p29, %p30
    %p32 = scmp.ne.s32.totalorder %s24, %s27
    %p33 = scmp.eq.s32.totalorder %s14, 0
    %p34 = por %p32, %p33
    %p35 = scmp.ne.s32.totalorder %s24, %s27
    %p36 = scmp.eq.s32.totalorder %s19, 1
    %p37 = por %p35, %p36
    %p38 = scmp.ne.s32.totalorder %s27, %s28
    %p39 = scmp.eq.s32.totalorder %s19, 0
    %p40 = por %p38, %p39
    %p41 = scmp.ne.s32.totalorder %s27, %s28
    %p42 = scmp.eq.s32.totalorder %s20, 1
    %p43 = por %p41, %p42
    %p45 = scmp.ne.s32.totalorder %s28, %s44
    %p46 = scmp.eq.s32.totalorder %s20, 0
    %p47 = por %p45, %p46
    %s49 = sadd.s32 %s48, 1
    %p52 = scmp.eq.s32.totalorder %s14, 1
    %p53 = scmp.ne.s32.totalorder %s48, %s50
    %p54 = scmp.eq.s32.totalorder %s14, 0
    %p55 = por %p53, %p54
    %p56 = scmp.ne.s32.totalorder %s48, %s50
    %p57 = scmp.eq.s32.totalorder %s19, 1
    %p58 = por %p56, %p57
    %p59 = scmp.ne.s32.totalorder %s50, %s51
    %p60 = scmp.eq.s32.totalorder %s19, 0
    %p61 = por %p59, %p60
    %p62 = scmp.ne.s32.totalorder %s50, %s51
    %p63 = scmp.eq.s32.totalorder %s20, 1
    %p64 = por %p62, %p63
    %p66 = scmp.ne.s32.totalorder %s51, %s65
    %p67 = scmp.eq.s32.totalorder %s20, 0
    %p68 = por %p66, %p67
    %s69 = ssub.s32 %s14, %s21
    %p70 = scmp.eq.s32.totalorder %s69, 0
    %s72 = sadd.s32 %s71, 1
    %s73 = scalar_select %p70, %s71, %s72
    %p76 = pneg %p70
    %p77 = scmp.eq.s32.totalorder %s14, 1
    %p78 = por %p76, %p77
    %p79 = scmp.ne.s32.totalorder %s71, %s74
    %p80 = scmp.eq.s32.totalorder %s14, 0
    %p81 = por %p79, %p80
    %p82 = scmp.ne.s32.totalorder %s71, %s74
    %p83 = scmp.eq.s32.totalorder %s19, 1
    %p84 = por %p82, %p83
    %p85 = scmp.ne.s32.totalorder %s74, %s75
    %p86 = scmp.eq.s32.totalorder %s19, 0
    %p87 = por %p85, %p86
    %p88 = scmp.ne.s32.totalorder %s74, %s75
    %p89 = scmp.eq.s32.totalorder %s20, 1
    %p90 = por %p88, %p89
    %p92 = scmp.ne.s32.totalorder %s75, %s91
    %p93 = scmp.eq.s32.totalorder %s20, 0
    %p94 = por %p92, %p93
    %s95 = ssub.s32 %s14, %s21
    %p96 = scmp.eq.s32.totalorder %s95, 0
    %s98 = sadd.s32 %s97, 1
    %s99 = scalar_select %p96, %s97, %s98
    %p102 = pneg %p96
    %p103 = scmp.eq.s32.totalorder %s14, 1
    %p104 = por %p102, %p103
    %p105 = scmp.ne.s32.totalorder %s97, %s100
    %p106 = scmp.eq.s32.totalorder %s14, 0
    %p107 = por %p105, %p106
    %p108 = scmp.ne.s32.totalorder %s97, %s100
    %p109 = scmp.eq.s32.totalorder %s19, 1
    %p110 = por %p108, %p109
    %p111 = scmp.ne.s32.totalorder %s100, %s101
    %p112 = scmp.eq.s32.totalorder %s19, 0
    %p113 = por %p111, %p112
    %p114 = scmp.ne.s32.totalorder %s100, %s101
    %p115 = scmp.eq.s32.totalorder %s20, 1
    %p116 = por %p114, %p115
    %p118 = scmp.ne.s32.totalorder %s101, %s117
    %p119 = scmp.eq.s32.totalorder %s20, 0
    %p120 = por %p118, %p119
    %s121 = ssub.s32 %s14, %s21
    %p122 = scmp.eq.s32.totalorder %s121, 0
    %s124 = sadd.s32 %s123, 1
    %s125 = scalar_select %p122, %s123, %s124
    %p128 = pneg %p122
    %p129 = scmp.eq.s32.totalorder %s14, 1
    %p130 = por %p128, %p129
    %p131 = scmp.ne.s32.totalorder %s123, %s126
    %p132 = scmp.eq.s32.totalorder %s14, 0
    %p133 = por %p131, %p132
    %p134 = scmp.ne.s32.totalorder %s123, %s126
    %p135 = scmp.eq.s32.totalorder %s19, 1
    %p136 = por %p134, %p135
    %p137 = scmp.ne.s32.totalorder %s126, %s127
    %p138 = scmp.eq.s32.totalorder %s19, 0
    %p139 = por %p137, %p138
    %p140 = scmp.ne.s32.totalorder %s126, %s127
    %p141 = scmp.eq.s32.totalorder %s20, 1
    %p142 = por %p140, %p141
    %p144 = scmp.ne.s32.totalorder %s127, %s143
    %p145 = scmp.eq.s32.totalorder %s20, 0
    %p146 = por %p144, %p145
    %s148 = sadd.s32 %s147, 1
    %p151 = scmp.eq.s32.totalorder %s14, 1
    %p152 = scmp.ne.s32.totalorder %s147, %s149
    %p153 = scmp.eq.s32.totalorder %s14, 0
    %p154 = por %p152, %p153
    %p155 = scmp.ne.s32.totalorder %s147, %s149
    %p156 = scmp.eq.s32.totalorder %s19, 1
    %p157 = por %p155, %p156
    %p158 = scmp.ne.s32.totalorder %s149, %s150
    %p159 = scmp.eq.s32.totalorder %s19, 0
    %p160 = por %p158, %p159
    %p161 = scmp.ne.s32.totalorder %s149, %s150
    %p162 = scmp.eq.s32.totalorder %s20, 1
    %p163 = por %p161, %p162
    %p165 = scmp.ne.s32.totalorder %s150, %s164
    %p166 = scmp.eq.s32.totalorder %s20, 0
    %p167 = por %p165, %p166
    %s168 = ssub.s32 %s14, %s21
    %p169 = scmp.eq.s32.totalorder %s168, 0
    %s171 = sadd.s32 %s170, 1
    %s172 = scalar_select %p169, %s170, %s171
    %p175 = pneg %p169
    %p176 = scmp.eq.s32.totalorder %s14, 1
    %p177 = por %p175, %p176
    %p178 = scmp.ne.s32.totalorder %s170, %s173
    %p179 = scmp.eq.s32.totalorder %s14, 0
    %p180 = por %p178, %p179
    %p181 = scmp.ne.s32.totalorder %s170, %s173
    %p182 = scmp.eq.s32.totalorder %s19, 1
    %p183 = por %p181, %p182
    %p184 = scmp.ne.s32.totalorder %s173, %s174
    %p185 = scmp.eq.s32.totalorder %s19, 0
    %p186 = por %p184, %p185
    %p187 = scmp.ne.s32.totalorder %s173, %s174
    %p188 = scmp.eq.s32.totalorder %s20, 1
    %p189 = por %p187, %p188
    %p191 = scmp.ne.s32.totalorder %s174, %s190
    %p192 = scmp.eq.s32.totalorder %s20, 0
    %p193 = por %p191, %p192
    %s194 = ssub.s32 %s14, %s21
    %p195 = scmp.eq.s32.totalorder %s194, 0
    %s197 = sadd.s32 %s196, 1
    %s198 = scalar_select %p195, %s196, %s197
    %p201 = pneg %p195
    %p202 = scmp.eq.s32.totalorder %s14, 1
    %p203 = por %p201, %p202
    %p204 = scmp.ne.s32.totalorder %s196, %s199
    %p205 = scmp.eq.s32.totalorder %s14, 0
    %p206 = por %p204, %p205
    %p207 = scmp.ne.s32.totalorder %s196, %s199
    %p208 = scmp.eq.s32.totalorder %s19, 1
    %p209 = por %p207, %p208
    %p210 = scmp.ne.s32.totalorder %s199, %s200
    %p211 = scmp.eq.s32.totalorder %s19, 0
    %p212 = por %p210, %p211
    %p213 = scmp.ne.s32.totalorder %s199, %s200
    %p214 = scmp.eq.s32.totalorder %s20, 1
    %p215 = por %p213, %p214
    %p217 = scmp.ne.s32.totalorder %s200, %s216
    %p218 = scmp.eq.s32.totalorder %s20, 0
    %p219 = por %p217, %p218
    %s220 = ssub.s32 %s14, %s21
    %p221 = scmp.eq.s32.totalorder %s220, 0
    %s223 = sadd.s32 %s222, 1
    %s224 = scalar_select %p221, %s222, %s223
    %p227 = pneg %p221
    %p228 = scmp.eq.s32.totalorder %s14, 1
    %p229 = por %p227, %p228
    %p230 = scmp.ne.s32.totalorder %s222, %s225
    %p231 = scmp.eq.s32.totalorder %s14, 0
    %p232 = por %p230, %p231
    %p233 = scmp.ne.s32.totalorder %s222, %s225
    %p234 = scmp.eq.s32.totalorder %s19, 1
    %p235 = por %p233, %p234
    %p236 = scmp.ne.s32.totalorder %s225, %s226
    %p237 = scmp.eq.s32.totalorder %s19, 0
    %p238 = por %p236, %p237
    %p239 = scmp.ne.s32.totalorder %s225, %s226
    %p240 = scmp.eq.s32.totalorder %s20, 1
    %p241 = por %p239, %p240
    %p243 = scmp.ne.s32.totalorder %s226, %s242
    %p244 = scmp.eq.s32.totalorder %s20, 0
    %p245 = por %p243, %p244
    %p246 = scmp.le.s32.totalorder 1, %s14
    %p247 = scmp.lt.s32.totalorder %s14, 3
    %p248 = pnand %p246, %p247
    %p249 = pneg %p248
    // Predicated region
    $region9: #{_lambda_.18} parent=5 // pred_check
      _
    $region10: #{_lambda_.18} parent=5 // pred_check_branch
      %251 = sbr.rel (%p248) target = $region12
    $region11: #{_lambda_.18} parent=5 // pred_region
      %s252 = ssub.s32 %s14, 1
      // Predicated region
      $region13: #{_lambda_.18} parent=11 // pred_check
        %p253 = pneg %p61
      $region14: #{_lambda_.18} parent=11 // pred_check_branch
        %255 = sbr.rel (%p253) target = $region16
      $region15: #{_lambda_.18} parent=11 // pred_region
        _
      $region16: #{_lambda_.18} parent=11 // pred_fallthru
        _
      // Predicated region
      $region17: #{_lambda_.18} parent=11 // pred_check
        %p256 = pneg %p160
      $region18: #{_lambda_.18} parent=11 // pred_check_branch
        %258 = sbr.rel (%p256) target = $region20
      $region19: #{_lambda_.18} parent=11 // pred_region
        _
      $region20: #{_lambda_.18} parent=11 // pred_fallthru
        _
    $region12: #{_lambda_.18} parent=5 // pred_fallthru
      _
    %p259 = scmp.lt.s32.totalorder %s14, 2
    // Predicated region
    $region21: #{_lambda_.18} parent=5 // pred_check
      %p260 = pneg %p259
    $region22: #{_lambda_.18} parent=5 // pred_check_branch
      %262 = sbr.rel (%p260) target = $region24
    $region23: #{_lambda_.18} parent=5 // pred_region
      // Predicated region
      $region25: #{_lambda_.18} parent=23 // pred_check
        %p263 = pneg %p34
      $region26: #{_lambda_.18} parent=23 // pred_check_branch
        %265 = sbr.rel (%p263) target = $region28
      $region27: #{_lambda_.18} parent=23 // pred_region
        %p266 = scmp.lt.s32.totalorder %s14, 1
        %s267 = scalar_select %p266, %s14, 1
        %s268 = smul.addr %s267, 4
        %s269 = smul.addr %s268, 4
        %s270 = scalar_lea.vmem %s0, %s269
      $region28: #{_lambda_.18} parent=23 // pred_fallthru
        _
      // Predicated region
      $region29: #{_lambda_.18} parent=23 // pred_check
        %p271 = pneg %p81
      $region30: #{_lambda_.18} parent=23 // pred_check_branch
        %273 = sbr.rel (%p271) target = $region32
      $region31: #{_lambda_.18} parent=23 // pred_region
        %p274 = scmp.lt.s32.totalorder %s14, 1
        %s275 = scalar_select %p274, %s14, 1
        %s276 = smul.addr %s275, 8
        %s277 = scalar_lea.vmem %s2, %s276
      $region32: #{_lambda_.18} parent=23 // pred_fallthru
        _
      // Predicated region
      $region33: #{_lambda_.18} parent=23 // pred_check
        %p278 = pneg %p107
      $region34: #{_lambda_.18} parent=23 // pred_check_branch
        %280 = sbr.rel (%p278) target = $region36
      $region35: #{_lambda_.18} parent=23 // pred_region
        %p281 = scmp.lt.s32.totalorder %s14, 1
        %s282 = scalar_select %p281, %s14, 1
        %s283 = smul.addr %s282, 8
        %s284 = scalar_lea.vmem %s3, %s283
      $region36: #{_lambda_.18} parent=23 // pred_fallthru
        _
      // Predicated region
      $region37: #{_lambda_.18} parent=23 // pred_check
        %p285 = pneg %p133
      $region38: #{_lambda_.18} parent=23 // pred_check_branch
        %287 = sbr.rel (%p285) target = $region40
      $region39: #{_lambda_.18} parent=23 // pred_region
        %p288 = scmp.lt.s32.totalorder %s14, 1
        %s289 = scalar_select %p288, %s14, 1
        %s290 = smul.addr %s289, 4
        %s291 = scalar_lea.vmem %s4, %s290
      $region40: #{_lambda_.18} parent=23 // pred_fallthru
        _
      // Predicated region
      $region41: #{_lambda_.18} parent=23 // pred_check
        %p292 = pneg %p180
      $region42: #{_lambda_.18} parent=23 // pred_check_branch
        %294 = sbr.rel (%p292) target = $region44
      $region43: #{_lambda_.18} parent=23 // pred_region
        %p295 = scmp.lt.s32.totalorder %s14, 1
        %s296 = scalar_select %p295, %s14, 1
        %s297 = smul.addr %s296, 8
        %s298 = scalar_lea.vmem %s6, %s297
      $region44: #{_lambda_.18} parent=23 // pred_fallthru
        _
      // Predicated region
      $region45: #{_lambda_.18} parent=23 // pred_check
        %p299 = pneg %p206
      $region46: #{_lambda_.18} parent=23 // pred_check_branch
        %301 = sbr.rel (%p299) target = $region48
      $region47: #{_lambda_.18} parent=23 // pred_region
        %p302 = scmp.lt.s32.totalorder %s14, 1
        %s303 = scalar_select %p302, %s14, 1
        %s304 = smul.addr %s303, 8
        %s305 = scalar_lea.vmem %s7, %s304
      $region48: #{_lambda_.18} parent=23 // pred_fallthru
        _
    $region24: #{_lambda_.18} parent=5 // pred_fallthru
      _
    %p306 = scmp.le.s32.totalorder 1, %s14
    %p307 = scmp.lt.s32.totalorder %s14, 3
    %p308 = pnand %p306, %p307
    %p309 = pneg %p308
    // Predicated region
    $region49: #{_lambda_.18} parent=5 // pred_check
      _
    $region50: #{_lambda_.18} parent=5 // pred_check_branch
      %311 = sbr.rel (%p308) target = $region52
    $region51: #{_lambda_.18} parent=5 // pred_region
      %s312 = ssub.s32 %s14, 1
      %p313 = scmp.lt.s32.totalorder %s19, 1
      %s314 = scalar_select %p313, %s19, 1
      %s315 = smul.addr %s314, 4
      %s316 = smul.addr %s315, 4
      %s317 = scalar_lea.vmem %s0, %s316
      %p318 = pneg %p40
      %p319 = pneg %p37
      %p320 = pneg %p61
      %p321 = pneg %p58
      %p322 = scmp.lt.s32.totalorder %s19, 1
      %s323 = scalar_select %p322, %s19, 1
      %s324 = smul.addr %s323, 8
      %s325 = scalar_lea.vmem %s2, %s324
      %p326 = pneg %p87
      %p327 = pneg %p84
      %p328 = scmp.lt.s32.totalorder %s19, 1
      %s329 = scalar_select %p328, %s19, 1
      %s330 = smul.addr %s329, 8
      %s331 = scalar_lea.vmem %s3, %s330
      %p332 = pneg %p113
      %p333 = pneg %p110
      %p334 = scmp.lt.s32.totalorder %s19, 1
      %s335 = scalar_select %p334, %s19, 1
      %s336 = smul.addr %s335, 4
      %s337 = scalar_lea.vmem %s4, %s336
      %p338 = pneg %p139
      %p339 = pneg %p136
      %p340 = pneg %p160
      %p341 = pneg %p157
      %p342 = scmp.lt.s32.totalorder %s19, 1
      %s343 = scalar_select %p342, %s19, 1
      %s344 = smul.addr %s343, 8
      %s345 = scalar_lea.vmem %s6, %s344
      %p346 = pneg %p186
      %p347 = pneg %p183
      %p348 = scmp.lt.s32.totalorder %s19, 1
      %s349 = scalar_select %p348, %s19, 1
      %s350 = smul.addr %s349, 8
      %s351 = scalar_lea.vmem %s7, %s350
      %p352 = pneg %p212
      %p353 = pneg %p209
      %p354 = pneg %p238
      %p355 = pneg %p235
      %p356 = scmp.lt.s32.totalorder %s19, 1
      %s357 = scalar_select %p356, %s19, 1
      %s358 = smul.addr %s357, 4
      %s359 = scalar_lea.vmem %s8, %s358
      %p360 = scmp.lt.s32.totalorder %s19, 1
      %s361 = scalar_select %p360, %s19, 1
      %s362 = smul.addr %s361, 4
      %s363 = smul.addr %s362, 4
      %s364 = scalar_lea.vmem %s0, %s363
      %p365 = scmp.lt.s32.totalorder %s19, 1
      %s366 = scalar_select %p365, %s19, 1
      %s367 = smul.addr %s366, 8
      %s368 = scalar_lea.vmem %s2, %s367
      %p369 = scmp.lt.s32.totalorder %s19, 1
      %s370 = scalar_select %p369, %s19, 1
      %s371 = smul.addr %s370, 8
      %s372 = scalar_lea.vmem %s3, %s371
      %p373 = scmp.lt.s32.totalorder %s19, 1
      %s374 = scalar_select %p373, %s19, 1
      %s375 = smul.addr %s374, 4
      %s376 = scalar_lea.vmem %s4, %s375
      %p377 = scmp.lt.s32.totalorder %s19, 1
      %s378 = scalar_select %p377, %s19, 1
      %s379 = smul.addr %s378, 8
      %s380 = scalar_lea.vmem %s6, %s379
      %p381 = scmp.lt.s32.totalorder %s19, 1
      %s382 = scalar_select %p381, %s19, 1
      %s383 = smul.addr %s382, 8
      %s384 = scalar_lea.vmem %s7, %s383
      %p385 = scmp.lt.s32.totalorder %s19, 1
      %s386 = scalar_select %p385, %s19, 1
      %s387 = smul.addr %s386, 4
      %s388 = scalar_lea.vmem %s8, %s387
      %v390 = vld [vmem:[%s364] sm:$0xff]
      %v391 = vld [vmem:[%s364 + $0x8] sm:$0xff]
      %v392 = vld [vmem:[%s1] sm:$0xf]
      %v393 = vld [vmem:[%s1 + $0x4] sm:$0xf]
      %v394 = vld [vmem:[%s1 + $0x8] sm:$0xf]
      %v395 = vld [vmem:[%s1 + $0xc] sm:$0xf]
      %v396 = vld [vmem:[%s1 + $0x10] sm:$0xf]
      %v397 = vld [vmem:[%s1 + $0x14] sm:$0xf]
      %v398 = vld [vmem:[%s1 + $0x18] sm:$0xf]
      %v399 = vld [vmem:[%s1 + $0x1c] sm:$0xf]
      %v400 = vld [vmem:[%s1 + $0x20] sm:$0xf]
      %v401 = vld [vmem:[%s1 + $0x24] sm:$0xf]
      %v402 = vld [vmem:[%s1 + $0x28] sm:$0xf]
      %v403 = vld [vmem:[%s1 + $0x2c] sm:$0xf]
      %v404 = vld [vmem:[%s1 + $0x30] sm:$0xf]
      %v405 = vld [vmem:[%s1 + $0x34] sm:$0xf]
      %v406 = vld [vmem:[%s1 + $0x38] sm:$0xf]
      %v407 = vld [vmem:[%s1 + $0x3c] sm:$0xf]
      %v408 = vld [vmem:[%s1 + $0x40] sm:$0xf]
      %v409 = vld [vmem:[%s1 + $0x44] sm:$0xf]
      %v410 = vld [vmem:[%s1 + $0x48] sm:$0xf]
      %v411 = vld [vmem:[%s1 + $0x4c] sm:$0xf]
      %v412 = vld [vmem:[%s1 + $0x50] sm:$0xf]
      %v413 = vld [vmem:[%s1 + $0x54] sm:$0xf]
      %v414 = vld [vmem:[%s1 + $0x58] sm:$0xf]
      %v415 = vld [vmem:[%s1 + $0x5c] sm:$0xf]
      %v416 = vld [vmem:[%s1 + $0x60] sm:$0xf]
      %v417 = vld [vmem:[%s1 + $0x64] sm:$0xf]
      %v418 = vld [vmem:[%s1 + $0x68] sm:$0xf]
      %v419 = vld [vmem:[%s1 + $0x6c] sm:$0xf]
      %v420 = vld [vmem:[%s1 + $0x70] sm:$0xf]
      %v421 = vld [vmem:[%s1 + $0x74] sm:$0xf]
      %v422 = vld [vmem:[%s1 + $0x78] sm:$0xf]
      %v423 = vld [vmem:[%s1 + $0x7c] sm:$0xf]
      %v424 = vld [vmem:[%s1 + $0x80] sm:$0xf]
      %v425 = vld [vmem:[%s1 + $0x84] sm:$0xf]
      %v426 = vld [vmem:[%s1 + $0x88] sm:$0xf]
      %v427 = vld [vmem:[%s1 + $0x8c] sm:$0xf]
      %v428 = vld [vmem:[%s1 + $0x90] sm:$0xf]
      %v429 = vld [vmem:[%s1 + $0x94] sm:$0xf]
      %v430 = vld [vmem:[%s1 + $0x98] sm:$0xf]
      %v431 = vld [vmem:[%s1 + $0x9c] sm:$0xf]
      %v432 = vld [vmem:[%s1 + $0xa0] sm:$0xf]
      %v433 = vld [vmem:[%s1 + $0xa4] sm:$0xf]
      %v434 = vld [vmem:[%s1 + $0xa8] sm:$0xf]
      %v435 = vld [vmem:[%s1 + $0xac] sm:$0xf]
      %v436 = vld [vmem:[%s1 + $0xb0] sm:$0xf]
      %v437 = vld [vmem:[%s1 + $0xb4] sm:$0xf]
      %v438 = vld [vmem:[%s1 + $0xb8] sm:$0xf]
      %v439 = vld [vmem:[%s1 + $0xbc] sm:$0xf]
      %v440 = vld [vmem:[%s1 + $0xc0] sm:$0xf]
      %v441 = vld [vmem:[%s1 + $0xc4] sm:$0xf]
      %v442 = vld [vmem:[%s1 + $0xc8] sm:$0xf]
      %v443 = vld [vmem:[%s1 + $0xcc] sm:$0xf]
      %v444 = vld [vmem:[%s1 + $0xd0] sm:$0xf]
      %v445 = vld [vmem:[%s1 + $0xd4] sm:$0xf]
      %v448 = vunpack.c.l.b16 %v390
      %v449 = vunpack.c.h.b16 %v390
      %v450 = vunpack.c.l.b16 %v391
      %v451 = vunpack.c.h.b16 %v391
      %v452 = vpack.c.b16 %v448, %v448
      %v453 = vpack.c.b16 %v449, %v449
      %v454 = vpack.c.b16 %v450, %v450
      %v455 = vpack.c.b16 %v451, %v451
      %v513 = vunpack.c.l.b16 %v392
      %v514 = vunpack.c.l.b16 %v393
      %v515 = vunpack.c.l.b16 %v394
      %v516 = vunpack.c.l.b16 %v395
      %v517 = vunpack.c.l.b16 %v396
      %v518 = vunpack.c.l.b16 %v397
      %v519 = vunpack.c.l.b16 %v398
      %v520 = vunpack.c.l.b16 %v399
      %v521 = vunpack.c.l.b16 %v400
      %v522 = vunpack.c.l.b16 %v401
      %v523 = vunpack.c.l.b16 %v402
      %v524 = vunpack.c.l.b16 %v403
      %v525 = vunpack.c.l.b16 %v404
      %v526 = vunpack.c.l.b16 %v405
      %v527 = vunpack.c.l.b16 %v406
      %v528 = vunpack.c.l.b16 %v407
      %v529 = vunpack.c.l.b16 %v408
      %v530 = vunpack.c.l.b16 %v409
      %v531 = vunpack.c.l.b16 %v410
      %v532 = vunpack.c.l.b16 %v411
      %v533 = vunpack.c.l.b16 %v412
      %v534 = vunpack.c.l.b16 %v413
      %v535 = vunpack.c.l.b16 %v414
      %v536 = vunpack.c.l.b16 %v415
      %v537 = vunpack.c.l.b16 %v416
      %v538 = vunpack.c.l.b16 %v417
      %v539 = vunpack.c.l.b16 %v418
      %v540 = vunpack.c.l.b16 %v419
      %v541 = vunpack.c.l.b16 %v420
      %v542 = vunpack.c.l.b16 %v421
      %v543 = vunpack.c.l.b16 %v422
      %v544 = vunpack.c.l.b16 %v423
      %v545 = vunpack.c.l.b16 %v424
      %v546 = vunpack.c.l.b16 %v425
      %v547 = vunpack.c.l.b16 %v426
      %v548 = vunpack.c.l.b16 %v427
      %v549 = vunpack.c.l.b16 %v428
      %v550 = vunpack.c.l.b16 %v429
      %v551 = vunpack.c.l.b16 %v430
      %v552 = vunpack.c.l.b16 %v431
      %v553 = vunpack.c.l.b16 %v432
      %v554 = vunpack.c.l.b16 %v433
      %v555 = vunpack.c.l.b16 %v434
      %v556 = vunpack.c.l.b16 %v435
      %v557 = vunpack.c.l.b16 %v436
      %v558 = vunpack.c.l.b16 %v437
      %v559 = vunpack.c.l.b16 %v438
      %v560 = vunpack.c.l.b16 %v439
      %v561 = vunpack.c.l.b16 %v440
      %v562 = vunpack.c.l.b16 %v441
      %v563 = vunpack.c.l.b16 %v442
      %v564 = vunpack.c.l.b16 %v443
      %v565 = vunpack.c.l.b16 %v444
      %v566 = vunpack.c.l.b16 %v445
      %v567 = vpack.c.b16 %v514, %v513
      %v568 = vpack.c.b16 %v516, %v515
      %v569 = vpack.c.b16 %v518, %v517
      %v570 = vpack.c.b16 %v520, %v519
      %v571 = vpack.c.b16 %v522, %v521
      %v572 = vpack.c.b16 %v524, %v523
      %v573 = vpack.c.b16 %v526, %v525
      %v574 = vpack.c.b16 %v528, %v527
      %v575 = vpack.c.b16 %v530, %v529
      %v576 = vpack.c.b16 %v532, %v531
      %v577 = vpack.c.b16 %v534, %v533
      %v578 = vpack.c.b16 %v536, %v535
      %v579 = vpack.c.b16 %v538, %v537
      %v580 = vpack.c.b16 %v540, %v539
      %v581 = vpack.c.b16 %v542, %v541
      %v582 = vpack.c.b16 %v544, %v543
      %v583 = vpack.c.b16 %v546, %v545
      %v584 = vpack.c.b16 %v548, %v547
      %v585 = vpack.c.b16 %v550, %v549
      %v586 = vpack.c.b16 %v552, %v551
      %v587 = vpack.c.b16 %v554, %v553
      %v588 = vpack.c.b16 %v556, %v555
      %v589 = vpack.c.b16 %v558, %v557
      %v590 = vpack.c.b16 %v560, %v559
      %v591 = vpack.c.b16 %v562, %v561
      %v592 = vpack.c.b16 %v564, %v563
      %v593 = vpack.c.b16 %v566, %v565
      %vm621 = vcmask 392192
      %v623 = vsel %vm621, %v455, 0
      %625 = vmatprep.subr.bf16.mxu0 0
      %626 = vmatpush1.bf16.msra.mxu0 %v567
      %627 = vmatprep.subr.bf16.mxu0 0
      %628 = vmatpush1.bf16.msra.mxu0 %v568
      %629 = vmatprep.subr.bf16.mxu0 0
      %630 = vmatpush1.bf16.msra.mxu0 %v569
      %631 = vmatprep.subr.bf16.mxu0 0
      %632 = vmatpush1.bf16.msra.mxu0 %v570
      %633 = vmatprep.subr.bf16.mxu0 0
      %634 = vmatpush1.bf16.msra.mxu0 %v571
      %635 = vmatprep.subr.bf16.mxu0 0
      %636 = vmatpush1.bf16.msra.mxu0 %v572
      %637 = vmatprep.subr.bf16.mxu0 0
      %638 = vmatpush1.bf16.msra.mxu0 %v573
      %639 = vmatprep.subr.bf16.mxu0 0
      %640 = vmatpush1.bf16.msra.mxu0 %v574
      %641 = vmatprep.subr.bf16.mxu0 0
      %642 = vmatpush1.bf16.msra.mxu0 %v575
      %643 = vmatprep.subr.bf16.mxu0 0
      %644 = vmatpush1.bf16.msra.mxu0 %v576
      %645 = vmatprep.subr.bf16.mxu0 0
      %646 = vmatpush1.bf16.msra.mxu0 %v577
      %647 = vmatprep.subr.bf16.mxu0 0
      %648 = vmatpush1.bf16.msra.mxu0 %v578
      %649 = vmatprep.subr.bf16.mxu0 0
      %650 = vmatpush1.bf16.msra.mxu0 %v579
      %651 = vmatprep.subr.bf16.mxu0 0
      %652 = vmatpush1.bf16.msra.mxu0 %v580
      %653 = vmatprep.subr.bf16.mxu0 0
      %654 = vmatpush1.bf16.msra.mxu0 %v581
      %655 = vmatprep.subr.bf16.mxu0 0
      %656 = vmatpush1.bf16.msra.mxu0 %v582
      %657 = vmatprep.mubr.bf16.mxu0 %v453
      %658 = vmatmul.mubr.bf16.gmra.mrb[0].mxu0 %v452
      %v659 = vpop.f32.mrb[0].mxu0
      %v660 = vadd.f32 0.0, %v659
      %v661 = vpop.f32.mrb[0].mxu0
      %v662 = vpop.f32.mrb[0].mxu0
      %v663 = vpop.f32.mrb[0].mxu0
      %664 = vdwg.mxu0
      %665 = vmatprep.subr.bf16.mxu0 0
      %666 = vmatpush1.bf16.msra.mxu0 %v583
      %667 = vmatprep.subr.bf16.mxu0 0
      %668 = vmatpush1.bf16.msra.mxu0 %v584
      %669 = vmatprep.subr.bf16.mxu0 0
      %670 = vmatpush1.bf16.msra.mxu0 %v585
      %671 = vmatprep.subr.bf16.mxu0 0
      %672 = vmatpush1.bf16.msra.mxu0 %v586
      %673 = vmatprep.subr.bf16.mxu0 0
      %674 = vmatpush1.bf16.msra.mxu0 %v587
      %675 = vmatprep.subr.bf16.mxu0 0
      %676 = vmatpush1.bf16.msra.mxu0 %v588
      %677 = vmatprep.subr.bf16.mxu0 0
      %678 = vmatpush1.bf16.msra.mxu0 %v589
      %679 = vmatprep.subr.bf16.mxu0 0
      %680 = vmatpush1.bf16.msra.mxu0 %v590
      %681 = vmatprep.subr.bf16.mxu0 0
      %682 = vmatpush1.bf16.msra.mxu0 %v591
      %683 = vmatprep.subr.bf16.mxu0 0
      %684 = vmatpush1.bf16.msra.mxu0 %v592
      %685 = vmatprep.subr.bf16.mxu0 0
      %686 = vmatpush1.bf16.msra.mxu0 %v593
      %687 = vmatprep.subr.bf16.mxu0 0
      %688 = vmatpush1.bf16.msra.mxu0 0
      %689 = vmatprep.subr.bf16.mxu0 0
      %690 = vmatpush1.bf16.msra.mxu0 0
      %691 = vmatprep.subr.bf16.mxu0 0
      %692 = vmatpush1.bf16.msra.mxu0 0
      %693 = vmatprep.subr.bf16.mxu0 0
      %694 = vmatpush1.bf16.msra.mxu0 0
      %695 = vmatprep.subr.bf16.mxu0 0
      %696 = vmatpush1.bf16.msra.mxu0 0
      %697 = vmatprep.mubr.bf16.mxu0 %v623
      %698 = vmatmul.mubr.bf16.gmra.mrb[0].mxu0 %v454
      %v699 = vpop.f32.mrb[0].mxu0
      %v700 = vadd.f32 %v660, %v699
      %v701 = vpop.f32.mrb[0].mxu0
      %v702 = vpop.f32.mrb[0].mxu0
      %v703 = vpop.f32.mrb[0].mxu0
      %704 = vdwg.mxu0
      %v705 = vld [vmem:[%s368] sm:$0xff]
      %v706 = vld [vmem:[%s372] sm:$0xff]
      %vm707 = vcmask 15360
      %v708 = vsel %vm707, %v700, 0.0
      %709 = vadd.xlane.f32.xlu0 %v708
      %v710 = vpop.xlane.xlu0 %709
      %v711 = vrcp.pop 2.0
      %v712 = vmul.f32 %v710, %v711
      %v713 = vsub.f32 %v700, %v712
      %v714 = vmul.f32 %v713, %v713
      %v715 = vsel %vm707, %v714, 0.0
      %716 = vadd.xlane.f32.xlu0 %v715
      %v717 = vpop.xlane.xlu0 %716
      %v718 = vmul.f32 %v717, %v711
      %v719 = vadd.f32 %v718, 1e-05
      %v720 = vrsqrt.pop %v719
      %v721 = vmul.f32 %v713, %v720
      %723 = vset.pattern.permute.xlu0 0
      %724 = vperm.xlu0 %723, %v705
      %v725 = vpop.permute.xlu0 %724
      %v727 = vmul.f32 %v721, %v725
      %729 = vset.pattern.permute.xlu0 0
      %730 = vperm.xlu0 %729, %v706
      %v731 = vpop.permute.xlu0 %730
      %v733 = vadd.f32 %v727, %v731
      %v734 = vld [vmem:[%s376] sm:$0xf]
      %v735 = vld [vmem:[%s5] sm:$0xf]
      %vm736 = vcmask 64512
      %v738 = vsel %vm736, %v734, 0
      %vm740 = vcmask 1043456
      %v742 = vsel %vm740, %v735, 0
      %744 = vmatprep.subr.bf16.mxu0 0
      %745 = vmatpush1.bf16.msra.mxu0 %v742
      %746 = vmatprep.subr.bf16.mxu0 0
      %747 = vmatpush1.bf16.msra.mxu0 0
      %748 = vmatprep.subr.bf16.mxu0 0
      %749 = vmatpush1.bf16.msra.mxu0 0
      %750 = vmatprep.subr.bf16.mxu0 0
      %751 = vmatpush1.bf16.msra.mxu0 0
      %752 = vmatprep.subr.bf16.mxu0 0
      %753 = vmatpush1.bf16.msra.mxu0 0
      %754 = vmatprep.subr.bf16.mxu0 0
      %755 = vmatpush1.bf16.msra.mxu0 0
      %756 = vmatprep.subr.bf16.mxu0 0
      %757 = vmatpush1.bf16.msra.mxu0 0
      %758 = vmatprep.subr.bf16.mxu0 0
      %759 = vmatpush1.bf16.msra.mxu0 0
      %760 = vmatprep.subr.bf16.mxu0 0
      %761 = vmatpush1.bf16.msra.mxu0 0
      %762 = vmatprep.subr.bf16.mxu0 0
      %763 = vmatpush1.bf16.msra.mxu0 0
      %764 = vmatprep.subr.bf16.mxu0 0
      %765 = vmatpush1.bf16.msra.mxu0 0
      %766 = vmatprep.subr.bf16.mxu0 0
      %767 = vmatpush1.bf16.msra.mxu0 0
      %768 = vmatprep.subr.bf16.mxu0 0
      %769 = vmatpush1.bf16.msra.mxu0 0
      %770 = vmatprep.subr.bf16.mxu0 0
      %771 = vmatpush1.bf16.msra.mxu0 0
      %772 = vmatprep.subr.bf16.mxu0 0
      %773 = vmatpush1.bf16.msra.mxu0 0
      %774 = vmatprep.subr.bf16.mxu0 0
      %775 = vmatpush1.bf16.msra.mxu0 0
      %776 = vmatprep.mubr.bf16.mxu0 0
      %777 = vmatmul.mubr.bf16.gmra.mrb[0].mxu0 %v738
      %v778 = vpop.f32.mrb[0].mxu0
      %v779 = vadd.f32 0.0, %v778
      %v780 = vpop.f32.mrb[0].mxu0
      %v781 = vpop.f32.mrb[0].mxu0
      %v782 = vpop.f32.mrb[0].mxu0
      %783 = vdwg.mxu0
      %v784 = vld [vmem:[%s380] sm:$0xff]
      %v785 = vld [vmem:[%s384] sm:$0xff]
      %v786 = vsel %vm707, %v779, 0.0
      %787 = vadd.xlane.f32.xlu0 %v786
      %v788 = vpop.xlane.xlu0 %787
      %v789 = vmul.f32 %v788, %v711
      %v790 = vsub.f32 %v779, %v789
      %v791 = vmul.f32 %v790, %v790
      %v792 = vsel %vm707, %v791, 0.0
      %793 = vadd.xlane.f32.xlu0 %v792
      %v794 = vpop.xlane.xlu0 %793
      %v795 = vmul.f32 %v794, %v711
      %v796 = vadd.f32 %v795, 1e-05
      %v797 = vrsqrt.pop %v796
      %v798 = vmul.f32 %v790, %v797
      %800 = vset.pattern.permute.xlu0 0
      %801 = vperm.xlu0 %800, %v784
      %v802 = vpop.permute.xlu0 %801
      %v804 = vmul.f32 %v798, %v802
      %806 = vset.pattern.permute.xlu0 0
      %807 = vperm.xlu0 %806, %v785
      %v808 = vpop.permute.xlu0 %807
      %v810 = vadd.f32 %v804, %v808
      %v811 = vadd.f32 %v733, %v810
      %v812 = vmax.f32 %v811, 0.0
      %v813 = vpack.c.bf16 %v812, %v812
      %vm814 = vcmask 11264
      %815 = vst.msk [vmem:[%s388] sm:$0xf] %vm814, %v813
      %p816 = scmp.lt.s32.totalorder %s19, 1
      %s817 = scalar_select %p816, %s19, 1
      %s818 = smul.addr %s817, 4
      %s819 = scalar_lea.vmem %s8, %s818
      // Predicated region
      $region53: #{_lambda_.18} parent=51 // pred_check
        %p820 = pneg %p235
      $region54: #{_lambda_.18} parent=51 // pred_check_branch
        %822 = sbr.rel (%p820) target = $region56
      $region55: #{_lambda_.18} parent=51 // pred_region
        _
      $region56: #{_lambda_.18} parent=51 // pred_fallthru
        _
    $region52: #{_lambda_.18} parent=5 // pred_fallthru
      _
    %p823 = scmp.le.s32.totalorder 2, %s14
    // Predicated region
    $region57: #{_lambda_.18} parent=5 // pred_check
      %p824 = pneg %p823
    $region58: #{_lambda_.18} parent=5 // pred_check_branch
      %826 = sbr.rel (%p824) target = $region60
    $region59: #{_lambda_.18} parent=5 // pred_region
      %s827 = ssub.s32 %s14, 2
      // Predicated region
      $region61: #{_lambda_.18} parent=59 // pred_check
        %p828 = pneg %p241
      $region62: #{_lambda_.18} parent=59 // pred_check_branch
        %830 = sbr.rel (%p828) target = $region64
      $region63: #{_lambda_.18} parent=59 // pred_region
        %p831 = scmp.lt.s32.totalorder %s20, 1
        %s832 = scalar_select %p831, %s20, 1
        %s833 = smul.addr %s832, 4
        %s834 = scalar_lea.vmem %s8, %s833
      $region64: #{_lambda_.18} parent=59 // pred_fallthru
        _
    $region60: #{_lambda_.18} parent=5 // pred_fallthru
      _
  $region6: #{_lambda_.18} parent=0 // loop_footer
    %s18 = sadd.s32 1, %s14
  $region7: #{_lambda_.18} parent=0 // loop_footer_branch
    %13 = sbr.rel target = $region3
  $region8: #{_lambda_.18} parent=0 // loop_exit
    _

// kernel: _lambda_.19
$region0: #{_lambda_.19}
  #allocation0 [shape = 'u32[]', space=smem, size = 0x4, offset = 0x4, fixed_abs, tag = 'smem constant byte address 0x4 - core index']
  #allocation1 [shape = 'u32[144,128]{1,0:T(1,128)}', space=vmem, size = 0x12000, scoped, tag = 'internal scratch']
  %s0 = inlined_call_operand.vmem [shape: bf16[32,432], index: 0, kind: input, shape index: {}]
  %s1 = inlined_call_operand.vmem [shape: bf16[432,2], index: 1, kind: input, shape index: {}]
  %s2 = inlined_call_operand.vmem [shape: f32[32,1], index: 2, kind: input, shape index: {}]
  %s3 = inlined_call_operand.vmem [shape: f32[32,1], index: 3, kind: input, shape index: {}]
  %s4 = inlined_call_operand.vmem [shape: bf16[32,2], index: 4, kind: output, shape index: {}]
  %s5 = sld [smem:[#allocation0]]
  $region49: #{_lambda_.19} parent=0
    _
  %s7 = ssub.s32 1, %s5
  %s8 = scalar_select 0, %s7, %s5
  loop: start=0, step=1, limit=4
  $region2: #{_lambda_.19} parent=0 // loop_pre_header
    _
  $region3: #{_lambda_.19} parent=0 // loop_header
    %s10 = sphi 0, %s14
    %p11 = scmp.ge.s32.totalorder %s10, 4
    %s20 = sphi 0, %s22
    %s23 = sphi 0, %s20
    %s24 = sphi 0, %s23
    %s40 = sphi 0, %s24
    %s44 = sphi 0, %s44
    %s46 = sphi 0, %s44
    %s47 = sphi 0, %s46
    %s61 = sphi 0, %s47
    %s67 = sphi 0, %s69
    %s70 = sphi 0, %s67
    %s71 = sphi 0, %s70
    %s87 = sphi 0, %s71
    %s93 = sphi 0, %s95
    %s96 = sphi 0, %s93
    %s97 = sphi 0, %s96
    %s113 = sphi 0, %s97
    %s119 = sphi 0, %s121
    %s122 = sphi 0, %s119
    %s123 = sphi 0, %s122
    %s139 = sphi 0, %s123
  $region4: #{_lambda_.19} parent=0 // loop_header_branch
    %13 = sbr.rel (%p11) target = $region8
  $region5: #{_lambda_.19} parent=0 // loop_body
    %s15 = ssub.s32 %s10, 1
    %s16 = ssub.s32 %s10, 2
    %s17 = sadd.s32 %s10, 1
    %s18 = ssub.s32 %s10, %s17
    %p19 = scmp.eq.s32.totalorder %s18, 0
    %s21 = sadd.s32 %s20, 1
    %s22 = scalar_select %p19, %s20, %s21
    %p25 = pneg %p19
    %p26 = scmp.eq.s32.totalorder %s10, 1
    %p27 = por %p25, %p26
    %p28 = scmp.ne.s32.totalorder %s20, %s23
    %p29 = scmp.eq.s32.totalorder %s10, 0
    %p30 = por %p28, %p29
    %p31 = scmp.ne.s32.totalorder %s20, %s23
    %p32 = scmp.eq.s32.totalorder %s15, 1
    %p33 = por %p31, %p32
    %p34 = scmp.ne.s32.totalorder %s23, %s24
    %p35 = scmp.eq.s32.totalorder %s15, 0
    %p36 = por %p34, %p35
    %p37 = scmp.ne.s32.totalorder %s23, %s24
    %p38 = scmp.eq.s32.totalorder %s16, 1
    %p39 = por %p37, %p38
    %p41 = scmp.ne.s32.totalorder %s24, %s40
    %p42 = scmp.eq.s32.totalorder %s16, 0
    %p43 = por %p41, %p42
    %s45 = sadd.s32 %s44, 1
    %p48 = scmp.eq.s32.totalorder %s10, 1
    %p49 = scmp.ne.s32.totalorder %s44, %s46
    %p50 = scmp.eq.s32.totalorder %s10, 0
    %p51 = por %p49, %p50
    %p52 = scmp.ne.s32.totalorder %s44, %s46
    %p53 = scmp.eq.s32.totalorder %s15, 1
    %p54 = por %p52, %p53
    %p55 = scmp.ne.s32.totalorder %s46, %s47
    %p56 = scmp.eq.s32.totalorder %s15, 0
    %p57 = por %p55, %p56
    %p58 = scmp.ne.s32.totalorder %s46, %s47
    %p59 = scmp.eq.s32.totalorder %s16, 1
    %p60 = por %p58, %p59
    %p62 = scmp.ne.s32.totalorder %s47, %s61
    %p63 = scmp.eq.s32.totalorder %s16, 0
    %p64 = por %p62, %p63
    %s65 = ssub.s32 %s10, %s17
    %p66 = scmp.eq.s32.totalorder %s65, 0
    %s68 = sadd.s32 %s67, 1
    %s69 = scalar_select %p66, %s67, %s68
    %p72 = pneg %p66
    %p73 = scmp.eq.s32.totalorder %s10, 1
    %p74 = por %p72, %p73
    %p75 = scmp.ne.s32.totalorder %s67, %s70
    %p76 = scmp.eq.s32.totalorder %s10, 0
    %p77 = por %p75, %p76
    %p78 = scmp.ne.s32.totalorder %s67, %s70
    %p79 = scmp.eq.s32.totalorder %s15, 1
    %p80 = por %p78, %p79
    %p81 = scmp.ne.s32.totalorder %s70, %s71
    %p82 = scmp.eq.s32.totalorder %s15, 0
    %p83 = por %p81, %p82
    %p84 = scmp.ne.s32.totalorder %s70, %s71
    %p85 = scmp.eq.s32.totalorder %s16, 1
    %p86 = por %p84, %p85
    %p88 = scmp.ne.s32.totalorder %s71, %s87
    %p89 = scmp.eq.s32.totalorder %s16, 0
    %p90 = por %p88, %p89
    %s91 = ssub.s32 %s10, %s17
    %p92 = scmp.eq.s32.totalorder %s91, 0
    %s94 = sadd.s32 %s93, 1
    %s95 = scalar_select %p92, %s93, %s94
    %p98 = pneg %p92
    %p99 = scmp.eq.s32.totalorder %s10, 1
    %p100 = por %p98, %p99
    %p101 = scmp.ne.s32.totalorder %s93, %s96
    %p102 = scmp.eq.s32.totalorder %s10, 0
    %p103 = por %p101, %p102
    %p104 = scmp.ne.s32.totalorder %s93, %s96
    %p105 = scmp.eq.s32.totalorder %s15, 1
    %p106 = por %p104, %p105
    %p107 = scmp.ne.s32.totalorder %s96, %s97
    %p108 = scmp.eq.s32.totalorder %s15, 0
    %p109 = por %p107, %p108
    %p110 = scmp.ne.s32.totalorder %s96, %s97
    %p111 = scmp.eq.s32.totalorder %s16, 1
    %p112 = por %p110, %p111
    %p114 = scmp.ne.s32.totalorder %s97, %s113
    %p115 = scmp.eq.s32.totalorder %s16, 0
    %p116 = por %p114, %p115
    %s117 = ssub.s32 %s10, %s17
    %p118 = scmp.eq.s32.totalorder %s117, 0
    %s120 = sadd.s32 %s119, 1
    %s121 = scalar_select %p118, %s119, %s120
    %p124 = pneg %p118
    %p125 = scmp.eq.s32.totalorder %s10, 1
    %p126 = por %p124, %p125
    %p127 = scmp.ne.s32.totalorder %s119, %s122
    %p128 = scmp.eq.s32.totalorder %s10, 0
    %p129 = por %p127, %p128
    %p130 = scmp.ne.s32.totalorder %s119, %s122
    %p131 = scmp.eq.s32.totalorder %s15, 1
    %p132 = por %p130, %p131
    %p133 = scmp.ne.s32.totalorder %s122, %s123
    %p134 = scmp.eq.s32.totalorder %s15, 0
    %p135 = por %p133, %p134
    %p136 = scmp.ne.s32.totalorder %s122, %s123
    %p137 = scmp.eq.s32.totalorder %s16, 1
    %p138 = por %p136, %p137
    %p140 = scmp.ne.s32.totalorder %s123, %s139
    %p141 = scmp.eq.s32.totalorder %s16, 0
    %p142 = por %p140, %p141
    %p143 = scmp.le.s32.totalorder 1, %s10
    %p144 = scmp.lt.s32.totalorder %s10, 3
    %p145 = pnand %p143, %p144
    %p146 = pneg %p145
    // Predicated region
    $region9: #{_lambda_.19} parent=5 // pred_check
      _
    $region10: #{_lambda_.19} parent=5 // pred_check_branch
      %148 = sbr.rel (%p145) target = $region12
    $region11: #{_lambda_.19} parent=5 // pred_region
      %s149 = ssub.s32 %s10, 1
      // Predicated region
      $region13: #{_lambda_.19} parent=11 // pred_check
        %p150 = pneg %p57
      $region14: #{_lambda_.19} parent=11 // pred_check_branch
        %152 = sbr.rel (%p150) target = $region16
      $region15: #{_lambda_.19} parent=11 // pred_region
        _
      $region16: #{_lambda_.19} parent=11 // pred_fallthru
        _
    $region12: #{_lambda_.19} parent=5 // pred_fallthru
      _
    %p153 = scmp.lt.s32.totalorder %s10, 2
    // Predicated region
    $region17: #{_lambda_.19} parent=5 // pred_check
      %p154 = pneg %p153
    $region18: #{_lambda_.19} parent=5 // pred_check_branch
      %156 = sbr.rel (%p154) target = $region20
    $region19: #{_lambda_.19} parent=5 // pred_region
      // Predicated region
      $region21: #{_lambda_.19} parent=19 // pred_check
        %p157 = pneg %p30
      $region22: #{_lambda_.19} parent=19 // pred_check_branch
        %159 = sbr.rel (%p157) target = $region24
      $region23: #{_lambda_.19} parent=19 // pred_region
        %s160 = smul.u32 2, %s10
        %p161 = scmp.lt.s32.totalorder %s160, 3
        %s162 = scalar_select %p161, %s160, 3
        %s163 = smul.addr %s162, 4
        %s164 = smul.addr %s163, 4
        %s165 = scalar_lea.vmem %s0, %s164
        %s166 = smul.u32 2, %s10
      $region24: #{_lambda_.19} parent=19 // pred_fallthru
        _
      // Predicated region
      $region25: #{_lambda_.19} parent=19 // pred_check
        %p167 = pneg %p77
      $region26: #{_lambda_.19} parent=19 // pred_check_branch
        %169 = sbr.rel (%p167) target = $region28
      $region27: #{_lambda_.19} parent=19 // pred_region
        %s170 = smul.u32 2, %s10
        %p171 = scmp.lt.s32.totalorder %s170, 3
        %s172 = scalar_select %p171, %s170, 3
        %s173 = smul.addr %s172, 8
        %s174 = scalar_lea.vmem %s2, %s173
        %s175 = smul.u32 2, %s10
      $region28: #{_lambda_.19} parent=19 // pred_fallthru
        _
      // Predicated region
      $region29: #{_lambda_.19} parent=19 // pred_check
        %p176 = pneg %p103
      $region30: #{_lambda_.19} parent=19 // pred_check_branch
        %178 = sbr.rel (%p176) target = $region32
      $region31: #{_lambda_.19} parent=19 // pred_region
        %s179 = smul.u32 2, %s10
        %p180 = scmp.lt.s32.totalorder %s179, 3
        %s181 = scalar_select %p180, %s179, 3
        %s182 = smul.addr %s181, 8
        %s183 = scalar_lea.vmem %s3, %s182
        %s184 = smul.u32 2, %s10
      $region32: #{_lambda_.19} parent=19 // pred_fallthru
        _
    $region20: #{_lambda_.19} parent=5 // pred_fallthru
      _
    %p185 = scmp.le.s32.totalorder 1, %s10
    %p186 = scmp.lt.s32.totalorder %s10, 3
    %p187 = pnand %p185, %p186
    %p188 = pneg %p187
    // Predicated region
    $region33: #{_lambda_.19} parent=5 // pred_check
      _
    $region34: #{_lambda_.19} parent=5 // pred_check_branch
      %190 = sbr.rel (%p187) target = $region36
    $region35: #{_lambda_.19} parent=5 // pred_region
      %s191 = ssub.s32 %s10, 1
      %s192 = smul.u32 2, %s15
      %p193 = scmp.lt.s32.totalorder %s192, 3
      %s194 = scalar_select %p193, %s192, 3
      %s195 = smul.addr %s194, 4
      %s196 = smul.addr %s195, 4
      %s197 = scalar_lea.vmem %s0, %s196
      %p198 = pneg %p36
      %p199 = pneg %p33
      %p200 = pneg %p57
      %p201 = pneg %p54
      %s202 = smul.u32 2, %s15
      %p203 = scmp.lt.s32.totalorder %s202, 3
      %s204 = scalar_select %p203, %s202, 3
      %s205 = smul.addr %s204, 8
      %s206 = scalar_lea.vmem %s2, %s205
      %p207 = pneg %p83
      %p208 = pneg %p80
      %s209 = smul.u32 2, %s15
      %p210 = scmp.lt.s32.totalorder %s209, 3
      %s211 = scalar_select %p210, %s209, 3
      %s212 = smul.addr %s211, 8
      %s213 = scalar_lea.vmem %s3, %s212
      %p214 = pneg %p109
      %p215 = pneg %p106
      %p216 = pneg %p135
      %p217 = pneg %p132
      %s218 = smul.u32 2, %s15
      %p219 = scmp.lt.s32.totalorder %s218, 3
      %s220 = scalar_select %p219, %s218, 3
      %s221 = smul.addr %s220, 4
      %s222 = scalar_lea.vmem %s4, %s221
      %s223 = smul.u32 2, %s15
      %p224 = scmp.lt.s32.totalorder %s223, 3
      %s225 = scalar_select %p224, %s223, 3
      %s226 = smul.addr %s225, 4
      %s227 = smul.addr %s226, 4
      %s228 = scalar_lea.vmem %s0, %s227
      %s229 = smul.u32 2, %s15
      %s230 = smul.u32 2, %s15
      %p231 = scmp.lt.s32.totalorder %s230, 3
      %s232 = scalar_select %p231, %s230, 3
      %s233 = smul.addr %s232, 8
      %s234 = scalar_lea.vmem %s2, %s233
      %s235 = smul.u32 2, %s15
      %s236 = smul.u32 2, %s15
      %p237 = scmp.lt.s32.totalorder %s236, 3
      %s238 = scalar_select %p237, %s236, 3
      %s239 = smul.addr %s238, 8
      %s240 = scalar_lea.vmem %s3, %s239
      %s241 = smul.u32 2, %s15
      %s242 = smul.u32 2, %s15
      %p243 = scmp.lt.s32.totalorder %s242, 3
      %s244 = scalar_select %p243, %s242, 3
      %s245 = smul.addr %s244, 4
      %s246 = scalar_lea.vmem %s4, %s245
      %s247 = smul.u32 2, %s15
      %v249 = vld [vmem:[%s228] sm:$0xff]
      %v250 = vld [vmem:[%s228 + $0x8] sm:$0xff]
      %v251 = vld [vmem:[%s228 + $0x10] sm:$0xff]
      %v252 = vld [vmem:[%s228 + $0x18] sm:$0xff]
      %v253 = vld [vmem:[%s1] sm:$0xf]
      %v254 = vld [vmem:[%s1 + $0x4] sm:$0xf]
      %v255 = vld [vmem:[%s1 + $0x8] sm:$0xf]
      %v256 = vld [vmem:[%s1 + $0xc] sm:$0xf]
      %v257 = vld [vmem:[%s1 + $0x10] sm:$0xf]
      %v258 = vld [vmem:[%s1 + $0x14] sm:$0xf]
      %v259 = vld [vmem:[%s1 + $0x18] sm:$0xf]
      %v260 = vld [vmem:[%s1 + $0x1c] sm:$0xf]
      %v261 = vld [vmem:[%s1 + $0x20] sm:$0xf]
      %v262 = vld [vmem:[%s1 + $0x24] sm:$0xf]
      %v263 = vld [vmem:[%s1 + $0x28] sm:$0xf]
      %v264 = vld [vmem:[%s1 + $0x2c] sm:$0xf]
      %v265 = vld [vmem:[%s1 + $0x30] sm:$0xf]
      %v266 = vld [vmem:[%s1 + $0x34] sm:$0xf]
      %v267 = vld [vmem:[%s1 + $0x38] sm:$0xf]
      %v268 = vld [vmem:[%s1 + $0x3c] sm:$0xf]
      %v269 = vld [vmem:[%s1 + $0x40] sm:$0xf]
      %v270 = vld [vmem:[%s1 + $0x44] sm:$0xf]
      %v271 = vld [vmem:[%s1 + $0x48] sm:$0xf]
      %v272 = vld [vmem:[%s1 + $0x4c] sm:$0xf]
      %v273 = vld [vmem:[%s1 + $0x50] sm:$0xf]
      %v274 = vld [vmem:[%s1 + $0x54] sm:$0xf]
      %v275 = vld [vmem:[%s1 + $0x58] sm:$0xf]
      %v276 = vld [vmem:[%s1 + $0x5c] sm:$0xf]
      %v277 = vld [vmem:[%s1 + $0x60] sm:$0xf]
      %v278 = vld [vmem:[%s1 + $0x64] sm:$0xf]
      %v279 = vld [vmem:[%s1 + $0x68] sm:$0xf]
      %v280 = vld [vmem:[%s1 + $0x6c] sm:$0xf]
      %v281 = vld [vmem:[%s1 + $0x70] sm:$0xf]
      %v282 = vld [vmem:[%s1 + $0x74] sm:$0xf]
      %v283 = vld [vmem:[%s1 + $0x78] sm:$0xf]
      %v284 = vld [vmem:[%s1 + $0x7c] sm:$0xf]
      %v285 = vld [vmem:[%s1 + $0x80] sm:$0xf]
      %v286 = vld [vmem:[%s1 + $0x84] sm:$0xf]
      %v287 = vld [vmem:[%s1 + $0x88] sm:$0xf]
      %v288 = vld [vmem:[%s1 + $0x8c] sm:$0xf]
      %v289 = vld [vmem:[%s1 + $0x90] sm:$0xf]
      %v290 = vld [vmem:[%s1 + $0x94] sm:$0xf]
      %v291 = vld [vmem:[%s1 + $0x98] sm:$0xf]
      %v292 = vld [vmem:[%s1 + $0x9c] sm:$0xf]
      %v293 = vld [vmem:[%s1 + $0xa0] sm:$0xf]
      %v294 = vld [vmem:[%s1 + $0xa4] sm:$0xf]
      %v295 = vld [vmem:[%s1 + $0xa8] sm:$0xf]
      %v296 = vld [vmem:[%s1 + $0xac] sm:$0xf]
      %v297 = vld [vmem:[%s1 + $0xb0] sm:$0xf]
      %v298 = vld [vmem:[%s1 + $0xb4] sm:$0xf]
      %v299 = vld [vmem:[%s1 + $0xb8] sm:$0xf]
      %v300 = vld [vmem:[%s1 + $0xbc] sm:$0xf]
      %v301 = vld [vmem:[%s1 + $0xc0] sm:$0xf]
      %v302 = vld [vmem:[%s1 + $0xc4] sm:$0xf]
      %v303 = vld [vmem:[%s1 + $0xc8] sm:$0xf]
      %v304 = vld [vmem:[%s1 + $0xcc] sm:$0xf]
      %v305 = vld [vmem:[%s1 + $0xd0] sm:$0xf]
      %v306 = vld [vmem:[%s1 + $0xd4] sm:$0xf]
      %v311 = vunpack.c.l.b16 %v249
      %v312 = vunpack.c.h.b16 %v249
      %v313 = vunpack.c.l.b16 %v250
      %v314 = vunpack.c.h.b16 %v250
      %v315 = vunpack.c.l.b16 %v251
      %v316 = vunpack.c.h.b16 %v251
      %v317 = vunpack.c.l.b16 %v252
      %v318 = vunpack.c.h.b16 %v252
      %v319 = vpack.c.b16 %v315, %v311
      %v320 = vpack.c.b16 %v316, %v312
      %v321 = vpack.c.b16 %v317, %v313
      %v322 = vpack.c.b16 %v318, %v314
      %v380 = vunpack.c.l.b16 %v253
      %v381 = vunpack.c.l.b16 %v254
      %v382 = vunpack.c.l.b16 %v255
      %v383 = vunpack.c.l.b16 %v256
      %v384 = vunpack.c.l.b16 %v257
      %v385 = vunpack.c.l.b16 %v258
      %v386 = vunpack.c.l.b16 %v259
      %v387 = vunpack.c.l.b16 %v260
      %v388 = vunpack.c.l.b16 %v261
      %v389 = vunpack.c.l.b16 %v262
      %v390 = vunpack.c.l.b16 %v263
      %v391 = vunpack.c.l.b16 %v264
      %v392 = vunpack.c.l.b16 %v265
      %v393 = vunpack.c.l.b16 %v266
      %v394 = vunpack.c.l.b16 %v267
      %v395 = vunpack.c.l.b16 %v268
      %v396 = vunpack.c.l.b16 %v269
      %v397 = vunpack.c.l.b16 %v270
      %v398 = vunpack.c.l.b16 %v271
      %v399 = vunpack.c.l.b16 %v272
      %v400 = vunpack.c.l.b16 %v273
      %v401 = vunpack.c.l.b16 %v274
      %v402 = vunpack.c.l.b16 %v275
      %v403 = vunpack.c.l.b16 %v276
      %v404 = vunpack.c.l.b16 %v277
      %v405 = vunpack.c.l.b16 %v278
      %v406 = vunpack.c.l.b16 %v279
      %v407 = vunpack.c.l.b16 %v280
      %v408 = vunpack.c.l.b16 %v281
      %v409 = vunpack.c.l.b16 %v282
      %v410 = vunpack.c.l.b16 %v283
      %v411 = vunpack.c.l.b16 %v284
      %v412 = vunpack.c.l.b16 %v285
      %v413 = vunpack.c.l.b16 %v286
      %v414 = vunpack.c.l.b16 %v287
      %v415 = vunpack.c.l.b16 %v288
      %v416 = vunpack.c.l.b16 %v289
      %v417 = vunpack.c.l.b16 %v290
      %v418 = vunpack.c.l.b16 %v291
      %v419 = vunpack.c.l.b16 %v292
      %v420 = vunpack.c.l.b16 %v293
      %v421 = vunpack.c.l.b16 %v294
      %v422 = vunpack.c.l.b16 %v295
      %v423 = vunpack.c.l.b16 %v296
      %v424 = vunpack.c.l.b16 %v297
      %v425 = vunpack.c.l.b16 %v298
      %v426 = vunpack.c.l.b16 %v299
      %v427 = vunpack.c.l.b16 %v300
      %v428 = vunpack.c.l.b16 %v301
      %v429 = vunpack.c.l.b16 %v302
      %v430 = vunpack.c.l.b16 %v303
      %v431 = vunpack.c.l.b16 %v304
      %v432 = vunpack.c.l.b16 %v305
      %v433 = vunpack.c.l.b16 %v306
      %v434 = vpack.c.b16 %v381, %v380
      %v435 = vpack.c.b16 %v383, %v382
      %v436 = vpack.c.b16 %v385, %v384
      %v437 = vpack.c.b16 %v387, %v386
      %v438 = vpack.c.b16 %v389, %v388
      %v439 = vpack.c.b16 %v391, %v390
      %v440 = vpack.c.b16 %v393, %v392
      %v441 = vpack.c.b16 %v395, %v394
      %v442 = vpack.c.b16 %v397, %v396
      %v443 = vpack.c.b16 %v399, %v398
      %v444 = vpack.c.b16 %v401, %v400
      %v445 = vpack.c.b16 %v403, %v402
      %v446 = vpack.c.b16 %v405, %v404
      %v447 = vpack.c.b16 %v407, %v406
      %v448 = vpack.c.b16 %v409, %v408
      %v449 = vpack.c.b16 %v411, %v410
      %v450 = vpack.c.b16 %v413, %v412
      %v451 = vpack.c.b16 %v415, %v414
      %v452 = vpack.c.b16 %v417, %v416
      %v453 = vpack.c.b16 %v419, %v418
      %v454 = vpack.c.b16 %v421, %v420
      %v455 = vpack.c.b16 %v423, %v422
      %v456 = vpack.c.b16 %v425, %v424
      %v457 = vpack.c.b16 %v427, %v426
      %v458 = vpack.c.b16 %v429, %v428
      %v459 = vpack.c.b16 %v431, %v430
      %v460 = vpack.c.b16 %v433, %v432
      %vm488 = vcmask 392192
      %v490 = vsel %vm488, %v322, 0
      %492 = vmatprep.subr.bf16.mxu0 0
      %493 = vmatpush1.bf16.msra.mxu0 %v434
      %494 = vmatprep.subr.bf16.mxu0 0
      %495 = vmatpush1.bf16.msra.mxu0 %v435
      %496 = vmatprep.subr.bf16.mxu0 0
      %497 = vmatpush1.bf16.msra.mxu0 %v436
      %498 = vmatprep.subr.bf16.mxu0 0
      %499 = vmatpush1.bf16.msra.mxu0 %v437
      %500 = vmatprep.subr.bf16.mxu0 0
      %501 = vmatpush1.bf16.msra.mxu0 %v438
      %502 = vmatprep.subr.bf16.mxu0 0
      %503 = vmatpush1.bf16.msra.mxu0 %v439
      %504 = vmatprep.subr.bf16.mxu0 0
      %505 = vmatpush1.bf16.msra.mxu0 %v440
      %506 = vmatprep.subr.bf16.mxu0 0
      %507 = vmatpush1.bf16.msra.mxu0 %v441
      %508 = vmatprep.subr.bf16.mxu0 0
      %509 = vmatpush1.bf16.msra.mxu0 %v442
      %510 = vmatprep.subr.bf16.mxu0 0
      %511 = vmatpush1.bf16.msra.mxu0 %v443
      %512 = vmatprep.subr.bf16.mxu0 0
      %513 = vmatpush1.bf16.msra.mxu0 %v444
      %514 = vmatprep.subr.bf16.mxu0 0
      %515 = vmatpush1.bf16.msra.mxu0 %v445
      %516 = vmatprep.subr.bf16.mxu0 0
      %517 = vmatpush1.bf16.msra.mxu0 %v446
      %518 = vmatprep.subr.bf16.mxu0 0
      %519 = vmatpush1.bf16.msra.mxu0 %v447
      %520 = vmatprep.subr.bf16.mxu0 0
      %521 = vmatpush1.bf16.msra.mxu0 %v448
      %522 = vmatprep.subr.bf16.mxu0 0
      %523 = vmatpush1.bf16.msra.mxu0 %v449
      %524 = vmatprep.mubr.bf16.mxu0 %v320
      %525 = vmatmul.mubr.bf16.gmra.mrb[0].mxu0 %v319
      %v526 = vpop.f32.mrb[0].mxu0
      %v527 = vadd.f32 0.0, %v526
      %v528 = vpop.f32.mrb[0].mxu0
      %v529 = vpop.f32.mrb[0].mxu0
      %v530 = vadd.f32 0.0, %v529
      %v531 = vpop.f32.mrb[0].mxu0
      %532 = vdwg.mxu0
      %533 = vmatprep.subr.bf16.mxu0 0
      %534 = vmatpush1.bf16.msra.mxu0 %v450
      %535 = vmatprep.subr.bf16.mxu0 0
      %536 = vmatpush1.bf16.msra.mxu0 %v451
      %537 = vmatprep.subr.bf16.mxu0 0
      %538 = vmatpush1.bf16.msra.mxu0 %v452
      %539 = vmatprep.subr.bf16.mxu0 0
      %540 = vmatpush1.bf16.msra.mxu0 %v453
      %541 = vmatprep.subr.bf16.mxu0 0
      %542 = vmatpush1.bf16.msra.mxu0 %v454
      %543 = vmatprep.subr.bf16.mxu0 0
      %544 = vmatpush1.bf16.msra.mxu0 %v455
      %545 = vmatprep.subr.bf16.mxu0 0
      %546 = vmatpush1.bf16.msra.mxu0 %v456
      %547 = vmatprep.subr.bf16.mxu0 0
      %548 = vmatpush1.bf16.msra.mxu0 %v457
      %549 = vmatprep.subr.bf16.mxu0 0
      %550 = vmatpush1.bf16.msra.mxu0 %v458
      %551 = vmatprep.subr.bf16.mxu0 0
      %552 = vmatpush1.bf16.msra.mxu0 %v459
      %553 = vmatprep.subr.bf16.mxu0 0
      %554 = vmatpush1.bf16.msra.mxu0 %v460
      %555 = vmatprep.subr.bf16.mxu0 0
      %556 = vmatpush1.bf16.msra.mxu0 0
      %557 = vmatprep.subr.bf16.mxu0 0
      %558 = vmatpush1.bf16.msra.mxu0 0
      %559 = vmatprep.subr.bf16.mxu0 0
      %560 = vmatpush1.bf16.msra.mxu0 0
      %561 = vmatprep.subr.bf16.mxu0 0
      %562 = vmatpush1.bf16.msra.mxu0 0
      %563 = vmatprep.subr.bf16.mxu0 0
      %564 = vmatpush1.bf16.msra.mxu0 0
      %565 = vmatprep.mubr.bf16.mxu0 %v490
      %566 = vmatmul.mubr.bf16.gmra.mrb[0].mxu0 %v321
      %v567 = vpop.f32.mrb[0].mxu0
      %v568 = vadd.f32 %v527, %v567
      %v569 = vpop.f32.mrb[0].mxu0
      %v570 = vpop.f32.mrb[0].mxu0
      %v571 = vadd.f32 %v530, %v570
      %v572 = vpop.f32.mrb[0].mxu0
      %573 = vdwg.mxu0
      %v574 = vld [vmem:[%s234] sm:$0xff]
      %v575 = vld [vmem:[%s234 + $0x8] sm:$0xff]
      %v576 = vld [vmem:[%s240] sm:$0xff]
      %v577 = vld [vmem:[%s240 + $0x8] sm:$0xff]
      %vm578 = vcmask 15360
      %v579 = vsel %vm578, %v568, 0.0
      %580 = vadd.xlane.f32.xlu0 %v579
      %v581 = vpop.xlane.xlu0 %580
      %v582 = vsel %vm578, %v571, 0.0
      %583 = vadd.xlane.f32.xlu0 %v582
      %v584 = vpop.xlane.xlu0 %583
      %v585 = vrcp.pop 2.0
      %v586 = vmul.f32 %v581, %v585
      %v587 = vmul.f32 %v584, %v585
      %v588 = vsub.f32 %v568, %v586
      %v589 = vsub.f32 %v571, %v587
      %v590 = vmul.f32 %v588, %v588
      %v591 = vmul.f32 %v589, %v589
      %v592 = vsel %vm578, %v590, 0.0
      %593 = vadd.xlane.f32.xlu0 %v592
      %v594 = vpop.xlane.xlu0 %593
      %v595 = vsel %vm578, %v591, 0.0
      %596 = vadd.xlane.f32.xlu0 %v595
      %v597 = vpop.xlane.xlu0 %596
      %v598 = vmul.f32 %v594, %v585
      %v599 = vmul.f32 %v597, %v585
      %v600 = vadd.f32 %v598, 1e-05
      %v601 = vadd.f32 %v599, 1e-05
      %v602 = vrsqrt.pop %v600
      %v603 = vrsqrt.pop %v601
      %v604 = vmul.f32 %v588, %v602
      %v605 = vmul.f32 %v589, %v603
      %607 = vset.pattern.permute.xlu0 0
      %608 = vperm.xlu0 %607, %v574
      %v609 = vpop.permute.xlu0 %608
      %612 = vset.pattern.permute.xlu0 0
      %613 = vperm.xlu0 %612, %v575
      %v614 = vpop.permute.xlu0 %613
      %v616 = vmul.f32 %v604, %v609
      %v617 = vmul.f32 %v605, %v614
      %619 = vset.pattern.permute.xlu0 0
      %620 = vperm.xlu0 %619, %v576
      %v621 = vpop.permute.xlu0 %620
      %624 = vset.pattern.permute.xlu0 0
      %625 = vperm.xlu0 %624, %v577
      %v626 = vpop.permute.xlu0 %625
      %v628 = vadd.f32 %v616, %v621
      %v629 = vadd.f32 %v617, %v626
      %v630 = vmax.f32 %v628, 0.0
      %v631 = vmax.f32 %v629, 0.0
      %v632 = vpack.c.bf16 %v631, %v630
      %v634 = vunpack.c.l.b16 %v632
      %v635 = vunpack.c.h.b16 %v632
      %v636 = vpack.c.b16 %v634, %v634
      %v637 = vpack.c.b16 %v635, %v635
      %vm640 = vcmask 11264
      %641 = vst.msk [vmem:[%s246] sm:$0xf] %vm640, %v636
      %642 = vst.msk [vmem:[%s246 + $0x4] sm:$0xf] %vm640, %v637
      %s643 = smul.u32 2, %s15
      %p644 = scmp.lt.s32.totalorder %s643, 3
      %s645 = scalar_select %p644, %s643, 3
      %s646 = smul.addr %s645, 4
      %s647 = scalar_lea.vmem %s4, %s646
      // Predicated region
      $region37: #{_lambda_.19} parent=35 // pred_check
        %p648 = pneg %p132
      $region38: #{_lambda_.19} parent=35 // pred_check_branch
        %650 = sbr.rel (%p648) target = $region40
      $region39: #{_lambda_.19} parent=35 // pred_region
        %s651 = smul.u32 2, %s15
      $region40: #{_lambda_.19} parent=35 // pred_fallthru
        _
    $region36: #{_lambda_.19} parent=5 // pred_fallthru
      _
    %p652 = scmp.le.s32.totalorder 2, %s10
    // Predicated region
    $region41: #{_lambda_.19} parent=5 // pred_check
      %p653 = pneg %p652
    $region42: #{_lambda_.19} parent=5 // pred_check_branch
      %655 = sbr.rel (%p653) target = $region44
    $region43: #{_lambda_.19} parent=5 // pred_region
      %s656 = ssub.s32 %s10, 2
      // Predicated region
      $region45: #{_lambda_.19} parent=43 // pred_check
        %p657 = pneg %p138
      $region46: #{_lambda_.19} parent=43 // pred_check_branch
        %659 = sbr.rel (%p657) target = $region48
      $region47: #{_lambda_.19} parent=43 // pred_region
        %s660 = smul.u32 2, %s16
        %p661 = scmp.lt.s32.totalorder %s660, 3
        %s662 = scalar_select %p661, %s660, 3
        %s663 = smul.addr %s662, 4
        %s664 = scalar_lea.vmem %s4, %s663
      $region48: #{_lambda_.19} parent=43 // pred_fallthru
        _
    $region44: #{_lambda_.19} parent=5 // pred_fallthru
      _
  $region6: #{_lambda_.19} parent=0 // loop_footer
    %s14 = sadd.s32 1, %s10
  $region7: #{_lambda_.19} parent=0 // loop_footer_branch
    %9 = sbr.rel target = $region3
  $region8: #{_lambda_.19} parent=0 // loop_exit
    _

// kernel: _lambda_.20
$region0: #{_lambda_.20}
  #allocation0 [shape = 'u32[]', space=smem, size = 0x4, offset = 0x4, fixed_abs, tag = 'smem constant byte address 0x4 - core index']
  #allocation1 [shape = 'u32[144,128]{1,0:T(1,128)}', space=vmem, size = 0x12000, scoped, tag = 'internal scratch']
  %s0 = inlined_call_operand.vmem [shape: bf16[32,864], index: 0, kind: input, shape index: {}]
  %s1 = inlined_call_operand.vmem [shape: bf16[864,2], index: 1, kind: input, shape index: {}]
  %s2 = inlined_call_operand.vmem [shape: f32[32,1], index: 2, kind: input, shape index: {}, may-alias: {2,6}]
  %s3 = inlined_call_operand.vmem [shape: f32[32,1], index: 3, kind: input, shape index: {}, may-alias: {3,7}]
  %s4 = inlined_call_operand.vmem [shape: bf16[32,16], index: 4, kind: input, shape index: {}]
  %s5 = inlined_call_operand.vmem [shape: bf16[16,2], index: 5, kind: input, shape index: {}]
  %s6 = inlined_call_operand.vmem [shape: f32[32,1], index: 6, kind: input, shape index: {}, may-alias: {2,6}]
  %s7 = inlined_call_operand.vmem [shape: f32[32,1], index: 7, kind: input, shape index: {}, may-alias: {3,7}]
  %s8 = inlined_call_operand.vmem [shape: bf16[32,2], index: 8, kind: output, shape index: {}]
  %s9 = sld [smem:[#allocation0]]
  $region65: #{_lambda_.20} parent=0
    _
  %s11 = ssub.s32 1, %s9
  %s12 = scalar_select 0, %s11, %s9
  loop: start=0, step=1, limit=4
  $region2: #{_lambda_.20} parent=0 // loop_pre_header
    _
  $region3: #{_lambda_.20} parent=0 // loop_header
    %s14 = sphi 0, %s18
    %p15 = scmp.ge.s32.totalorder %s14, 4
    %s24 = sphi 0, %s26
    %s27 = sphi 0, %s24
    %s28 = sphi 0, %s27
    %s44 = sphi 0, %s28
    %s48 = sphi 0, %s48
    %s50 = sphi 0, %s48
    %s51 = sphi 0, %s50
    %s65 = sphi 0, %s51
    %s71 = sphi 0, %s73
    %s74 = sphi 0, %s71
    %s75 = sphi 0, %s74
    %s91 = sphi 0, %s75
    %s97 = sphi 0, %s99
    %s100 = sphi 0, %s97
    %s101 = sphi 0, %s100
    %s117 = sphi 0, %s101
    %s123 = sphi 0, %s125
    %s126 = sphi 0, %s123
    %s127 = sphi 0, %s126
    %s143 = sphi 0, %s127
    %s147 = sphi 0, %s147
    %s149 = sphi 0, %s147
    %s150 = sphi 0, %s149
    %s164 = sphi 0, %s150
    %s170 = sphi 0, %s172
    %s173 = sphi 0, %s170
    %s174 = sphi 0, %s173
    %s190 = sphi 0, %s174
    %s196 = sphi 0, %s198
    %s199 = sphi 0, %s196
    %s200 = sphi 0, %s199
    %s216 = sphi 0, %s200
    %s222 = sphi 0, %s224
    %s225 = sphi 0, %s222
    %s226 = sphi 0, %s225
    %s242 = sphi 0, %s226
  $region4: #{_lambda_.20} parent=0 // loop_header_branch
    %17 = sbr.rel (%p15) target = $region8
  $region5: #{_lambda_.20} parent=0 // loop_body
    %s19 = ssub.s32 %s14, 1
    %s20 = ssub.s32 %s14, 2
    %s21 = sadd.s32 %s14, 1
    %s22 = ssub.s32 %s14, %s21
    %p23 = scmp.eq.s32.totalorder %s22, 0
    %s25 = sadd.s32 %s24, 1
    %s26 = scalar_select %p23, %s24, %s25
    %p29 = pneg %p23
    %p30 = scmp.eq.s32.totalorder %s14, 1
    %p31 = por %p29, %p30
    %p32 = scmp.ne.s32.totalorder %s24, %s27
    %p33 = scmp.eq.s32.totalorder %s14, 0
    %p34 = por %p32, %p33
    %p35 = scmp.ne.s32.totalorder %s24, %s27
    %p36 = scmp.eq.s32.totalorder %s19, 1
    %p37 = por %p35, %p36
    %p38 = scmp.ne.s32.totalorder %s27, %s28
    %p39 = scmp.eq.s32.totalorder %s19, 0
    %p40 = por %p38, %p39
    %p41 = scmp.ne.s32.totalorder %s27, %s28
    %p42 = scmp.eq.s32.totalorder %s20, 1
    %p43 = por %p41, %p42
    %p45 = scmp.ne.s32.totalorder %s28, %s44
    %p46 = scmp.eq.s32.totalorder %s20, 0
    %p47 = por %p45, %p46
    %s49 = sadd.s32 %s48, 1
    %p52 = scmp.eq.s32.totalorder %s14, 1
    %p53 = scmp.ne.s32.totalorder %s48, %s50
    %p54 = scmp.eq.s32.totalorder %s14, 0
    %p55 = por %p53, %p54
    %p56 = scmp.ne.s32.totalorder %s48, %s50
    %p57 = scmp.eq.s32.totalorder %s19, 1
    %p58 = por %p56, %p57
    %p59 = scmp.ne.s32.totalorder %s50, %s51
    %p60 = scmp.eq.s32.totalorder %s19, 0
    %p61 = por %p59, %p60
    %p62 = scmp.ne.s32.totalorder %s50, %s51
    %p63 = scmp.eq.s32.totalorder %s20, 1
    %p64 = por %p62, %p63
    %p66 = scmp.ne.s32.totalorder %s51, %s65
    %p67 = scmp.eq.s32.totalorder %s20, 0
    %p68 = por %p66, %p67
    %s69 = ssub.s32 %s14, %s21
    %p70 = scmp.eq.s32.totalorder %s69, 0
    %s72 = sadd.s32 %s71, 1
    %s73 = scalar_select %p70, %s71, %s72
    %p76 = pneg %p70
    %p77 = scmp.eq.s32.totalorder %s14, 1
    %p78 = por %p76, %p77
    %p79 = scmp.ne.s32.totalorder %s71, %s74
    %p80 = scmp.eq.s32.totalorder %s14, 0
    %p81 = por %p79, %p80
    %p82 = scmp.ne.s32.totalorder %s71, %s74
    %p83 = scmp.eq.s32.totalorder %s19, 1
    %p84 = por %p82, %p83
    %p85 = scmp.ne.s32.totalorder %s74, %s75
    %p86 = scmp.eq.s32.totalorder %s19, 0
    %p87 = por %p85, %p86
    %p88 = scmp.ne.s32.totalorder %s74, %s75
    %p89 = scmp.eq.s32.totalorder %s20, 1
    %p90 = por %p88, %p89
    %p92 = scmp.ne.s32.totalorder %s75, %s91
    %p93 = scmp.eq.s32.totalorder %s20, 0
    %p94 = por %p92, %p93
    %s95 = ssub.s32 %s14, %s21
    %p96 = scmp.eq.s32.totalorder %s95, 0
    %s98 = sadd.s32 %s97, 1
    %s99 = scalar_select %p96, %s97, %s98
    %p102 = pneg %p96
    %p103 = scmp.eq.s32.totalorder %s14, 1
    %p104 = por %p102, %p103
    %p105 = scmp.ne.s32.totalorder %s97, %s100
    %p106 = scmp.eq.s32.totalorder %s14, 0
    %p107 = por %p105, %p106
    %p108 = scmp.ne.s32.totalorder %s97, %s100
    %p109 = scmp.eq.s32.totalorder %s19, 1
    %p110 = por %p108, %p109
    %p111 = scmp.ne.s32.totalorder %s100, %s101
    %p112 = scmp.eq.s32.totalorder %s19, 0
    %p113 = por %p111, %p112
    %p114 = scmp.ne.s32.totalorder %s100, %s101
    %p115 = scmp.eq.s32.totalorder %s20, 1
    %p116 = por %p114, %p115
    %p118 = scmp.ne.s32.totalorder %s101, %s117
    %p119 = scmp.eq.s32.totalorder %s20, 0
    %p120 = por %p118, %p119
    %s121 = ssub.s32 %s14, %s21
    %p122 = scmp.eq.s32.totalorder %s121, 0
    %s124 = sadd.s32 %s123, 1
    %s125 = scalar_select %p122, %s123, %s124
    %p128 = pneg %p122
    %p129 = scmp.eq.s32.totalorder %s14, 1
    %p130 = por %p128, %p129
    %p131 = scmp.ne.s32.totalorder %s123, %s126
    %p132 = scmp.eq.s32.totalorder %s14, 0
    %p133 = por %p131, %p132
    %p134 = scmp.ne.s32.totalorder %s123, %s126
    %p135 = scmp.eq.s32.totalorder %s19, 1
    %p136 = por %p134, %p135
    %p137 = scmp.ne.s32.totalorder %s126, %s127
    %p138 = scmp.eq.s32.totalorder %s19, 0
    %p139 = por %p137, %p138
    %p140 = scmp.ne.s32.totalorder %s126, %s127
    %p141 = scmp.eq.s32.totalorder %s20, 1
    %p142 = por %p140, %p141
    %p144 = scmp.ne.s32.totalorder %s127, %s143
    %p145 = scmp.eq.s32.totalorder %s20, 0
    %p146 = por %p144, %p145
    %s148 = sadd.s32 %s147, 1
    %p151 = scmp.eq.s32.totalorder %s14, 1
    %p152 = scmp.ne.s32.totalorder %s147, %s149
    %p153 = scmp.eq.s32.totalorder %s14, 0
    %p154 = por %p152, %p153
    %p155 = scmp.ne.s32.totalorder %s147, %s149
    %p156 = scmp.eq.s32.totalorder %s19, 1
    %p157 = por %p155, %p156
    %p158 = scmp.ne.s32.totalorder %s149, %s150
    %p159 = scmp.eq.s32.totalorder %s19, 0
    %p160 = por %p158, %p159
    %p161 = scmp.ne.s32.totalorder %s149, %s150
    %p162 = scmp.eq.s32.totalorder %s20, 1
    %p163 = por %p161, %p162
    %p165 = scmp.ne.s32.totalorder %s150, %s164
    %p166 = scmp.eq.s32.totalorder %s20, 0
    %p167 = por %p165, %p166
    %s168 = ssub.s32 %s14, %s21
    %p169 = scmp.eq.s32.totalorder %s168, 0
    %s171 = sadd.s32 %s170, 1
    %s172 = scalar_select %p169, %s170, %s171
    %p175 = pneg %p169
    %p176 = scmp.eq.s32.totalorder %s14, 1
    %p177 = por %p175, %p176
    %p178 = scmp.ne.s32.totalorder %s170, %s173
    %p179 = scmp.eq.s32.totalorder %s14, 0
    %p180 = por %p178, %p179
    %p181 = scmp.ne.s32.totalorder %s170, %s173
    %p182 = scmp.eq.s32.totalorder %s19, 1
    %p183 = por %p181, %p182
    %p184 = scmp.ne.s32.totalorder %s173, %s174
    %p185 = scmp.eq.s32.totalorder %s19, 0
    %p186 = por %p184, %p185
    %p187 = scmp.ne.s32.totalorder %s173, %s174
    %p188 = scmp.eq.s32.totalorder %s20, 1
    %p189 = por %p187, %p188
    %p191 = scmp.ne.s32.totalorder %s174, %s190
    %p192 = scmp.eq.s32.totalorder %s20, 0
    %p193 = por %p191, %p192
    %s194 = ssub.s32 %s14, %s21
    %p195 = scmp.eq.s32.totalorder %s194, 0
    %s197 = sadd.s32 %s196, 1
    %s198 = scalar_select %p195, %s196, %s197
    %p201 = pneg %p195
    %p202 = scmp.eq.s32.totalorder %s14, 1
    %p203 = por %p201, %p202
    %p204 = scmp.ne.s32.totalorder %s196, %s199
    %p205 = scmp.eq.s32.totalorder %s14, 0
    %p206 = por %p204, %p205
    %p207 = scmp.ne.s32.totalorder %s196, %s199
    %p208 = scmp.eq.s32.totalorder %s19, 1
    %p209 = por %p207, %p208
    %p210 = scmp.ne.s32.totalorder %s199, %s200
    %p211 = scmp.eq.s32.totalorder %s19, 0
    %p212 = por %p210, %p211
    %p213 = scmp.ne.s32.totalorder %s199, %s200
    %p214 = scmp.eq.s32.totalorder %s20, 1
    %p215 = por %p213, %p214
    %p217 = scmp.ne.s32.totalorder %s200, %s216
    %p218 = scmp.eq.s32.totalorder %s20, 0
    %p219 = por %p217, %p218
    %s220 = ssub.s32 %s14, %s21
    %p221 = scmp.eq.s32.totalorder %s220, 0
    %s223 = sadd.s32 %s222, 1
    %s224 = scalar_select %p221, %s222, %s223
    %p227 = pneg %p221
    %p228 = scmp.eq.s32.totalorder %s14, 1
    %p229 = por %p227, %p228
    %p230 = scmp.ne.s32.totalorder %s222, %s225
    %p231 = scmp.eq.s32.totalorder %s14, 0
    %p232 = por %p230, %p231
    %p233 = scmp.ne.s32.totalorder %s222, %s225
    %p234 = scmp.eq.s32.totalorder %s19, 1
    %p235 = por %p233, %p234
    %p236 = scmp.ne.s32.totalorder %s225, %s226
    %p237 = scmp.eq.s32.totalorder %s19, 0
    %p238 = por %p236, %p237
    %p239 = scmp.ne.s32.totalorder %s225, %s226
    %p240 = scmp.eq.s32.totalorder %s20, 1
    %p241 = por %p239, %p240
    %p243 = scmp.ne.s32.totalorder %s226, %s242
    %p244 = scmp.eq.s32.totalorder %s20, 0
    %p245 = por %p243, %p244
    %p246 = scmp.le.s32.totalorder 1, %s14
    %p247 = scmp.lt.s32.totalorder %s14, 3
    %p248 = pnand %p246, %p247
    %p249 = pneg %p248
    // Predicated region
    $region9: #{_lambda_.20} parent=5 // pred_check
      _
    $region10: #{_lambda_.20} parent=5 // pred_check_branch
      %251 = sbr.rel (%p248) target = $region12
    $region11: #{_lambda_.20} parent=5 // pred_region
      %s252 = ssub.s32 %s14, 1
      // Predicated region
      $region13: #{_lambda_.20} parent=11 // pred_check
        %p253 = pneg %p61
      $region14: #{_lambda_.20} parent=11 // pred_check_branch
        %255 = sbr.rel (%p253) target = $region16
      $region15: #{_lambda_.20} parent=11 // pred_region
        _
      $region16: #{_lambda_.20} parent=11 // pred_fallthru
        _
      // Predicated region
      $region17: #{_lambda_.20} parent=11 // pred_check
        %p256 = pneg %p160
      $region18: #{_lambda_.20} parent=11 // pred_check_branch
        %258 = sbr.rel (%p256) target = $region20
      $region19: #{_lambda_.20} parent=11 // pred_region
        _
      $region20: #{_lambda_.20} parent=11 // pred_fallthru
        _
    $region12: #{_lambda_.20} parent=5 // pred_fallthru
      _
    %p259 = scmp.lt.s32.totalorder %s14, 2
    // Predicated region
    $region21: #{_lambda_.20} parent=5 // pred_check
      %p260 = pneg %p259
    $region22: #{_lambda_.20} parent=5 // pred_check_branch
      %262 = sbr.rel (%p260) target = $region24
    $region23: #{_lambda_.20} parent=5 // pred_region
      // Predicated region
      $region25: #{_lambda_.20} parent=23 // pred_check
        %p263 = pneg %p34
      $region26: #{_lambda_.20} parent=23 // pred_check_branch
        %265 = sbr.rel (%p263) target = $region28
      $region27: #{_lambda_.20} parent=23 // pred_region
        %s266 = smul.u32 2, %s14
        %p267 = scmp.lt.s32.totalorder %s266, 3
        %s268 = scalar_select %p267, %s266, 3
        %s269 = smul.addr %s268, 7
        %s270 = smul.addr %s269, 4
        %s271 = scalar_lea.vmem %s0, %s270
        %s272 = smul.u32 2, %s14
      $region28: #{_lambda_.20} parent=23 // pred_fallthru
        _
      // Predicated region
      $region29: #{_lambda_.20} parent=23 // pred_check
        %p273 = pneg %p81
      $region30: #{_lambda_.20} parent=23 // pred_check_branch
        %275 = sbr.rel (%p273) target = $region32
      $region31: #{_lambda_.20} parent=23 // pred_region
        %s276 = smul.u32 2, %s14
        %p277 = scmp.lt.s32.totalorder %s276, 3
        %s278 = scalar_select %p277, %s276, 3
        %s279 = smul.addr %s278, 8
        %s280 = scalar_lea.vmem %s2, %s279
        %s281 = smul.u32 2, %s14
      $region32: #{_lambda_.20} parent=23 // pred_fallthru
        _
      // Predicated region
      $region33: #{_lambda_.20} parent=23 // pred_check
        %p282 = pneg %p107
      $region34: #{_lambda_.20} parent=23 // pred_check_branch
        %284 = sbr.rel (%p282) target = $region36
      $region35: #{_lambda_.20} parent=23 // pred_region
        %s285 = smul.u32 2, %s14
        %p286 = scmp.lt.s32.totalorder %s285, 3
        %s287 = scalar_select %p286, %s285, 3
        %s288 = smul.addr %s287, 8
        %s289 = scalar_lea.vmem %s3, %s288
        %s290 = smul.u32 2, %s14
      $region36: #{_lambda_.20} parent=23 // pred_fallthru
        _
      // Predicated region
      $region37: #{_lambda_.20} parent=23 // pred_check
        %p291 = pneg %p133
      $region38: #{_lambda_.20} parent=23 // pred_check_branch
        %293 = sbr.rel (%p291) target = $region40
      $region39: #{_lambda_.20} parent=23 // pred_region
        %s294 = smul.u32 2, %s14
        %p295 = scmp.lt.s32.totalorder %s294, 3
        %s296 = scalar_select %p295, %s294, 3
        %s297 = smul.addr %s296, 4
        %s298 = scalar_lea.vmem %s4, %s297
        %s299 = smul.u32 2, %s14
      $region40: #{_lambda_.20} parent=23 // pred_fallthru
        _
      // Predicated region
      $region41: #{_lambda_.20} parent=23 // pred_check
        %p300 = pneg %p180
      $region42: #{_lambda_.20} parent=23 // pred_check_branch
        %302 = sbr.rel (%p300) target = $region44
      $region43: #{_lambda_.20} parent=23 // pred_region
        %s303 = smul.u32 2, %s14
        %p304 = scmp.lt.s32.totalorder %s303, 3
        %s305 = scalar_select %p304, %s303, 3
        %s306 = smul.addr %s305, 8
        %s307 = scalar_lea.vmem %s6, %s306
        %s308 = smul.u32 2, %s14
      $region44: #{_lambda_.20} parent=23 // pred_fallthru
        _
      // Predicated region
      $region45: #{_lambda_.20} parent=23 // pred_check
        %p309 = pneg %p206
      $region46: #{_lambda_.20} parent=23 // pred_check_branch
        %311 = sbr.rel (%p309) target = $region48
      $region47: #{_lambda_.20} parent=23 // pred_region
        %s312 = smul.u32 2, %s14
        %p313 = scmp.lt.s32.totalorder %s312, 3
        %s314 = scalar_select %p313, %s312, 3
        %s315 = smul.addr %s314, 8
        %s316 = scalar_lea.vmem %s7, %s315
        %s317 = smul.u32 2, %s14
      $region48: #{_lambda_.20} parent=23 // pred_fallthru
        _
    $region24: #{_lambda_.20} parent=5 // pred_fallthru
      _
    %p318 = scmp.le.s32.totalorder 1, %s14
    %p319 = scmp.lt.s32.totalorder %s14, 3
    %p320 = pnand %p318, %p319
    %p321 = pneg %p320
    // Predicated region
    $region49: #{_lambda_.20} parent=5 // pred_check
      _
    $region50: #{_lambda_.20} parent=5 // pred_check_branch
      %323 = sbr.rel (%p320) target = $region52
    $region51: #{_lambda_.20} parent=5 // pred_region
      %s324 = ssub.s32 %s14, 1
      %s325 = smul.u32 2, %s19
      %p326 = scmp.lt.s32.totalorder %s325, 3
      %s327 = scalar_select %p326, %s325, 3
      %s328 = smul.addr %s327, 7
      %s329 = smul.addr %s328, 4
      %s330 = scalar_lea.vmem %s0, %s329
      %p331 = pneg %p40
      %p332 = pneg %p37
      %p333 = pneg %p61
      %p334 = pneg %p58
      %s335 = smul.u32 2, %s19
      %p336 = scmp.lt.s32.totalorder %s335, 3
      %s337 = scalar_select %p336, %s335, 3
      %s338 = smul.addr %s337, 8
      %s339 = scalar_lea.vmem %s2, %s338
      %p340 = pneg %p87
      %p341 = pneg %p84
      %s342 = smul.u32 2, %s19
      %p343 = scmp.lt.s32.totalorder %s342, 3
      %s344 = scalar_select %p343, %s342, 3
      %s345 = smul.addr %s344, 8
      %s346 = scalar_lea.vmem %s3, %s345
      %p347 = pneg %p113
      %p348 = pneg %p110
      %s349 = smul.u32 2, %s19
      %p350 = scmp.lt.s32.totalorder %s349, 3
      %s351 = scalar_select %p350, %s349, 3
      %s352 = smul.addr %s351, 4
      %s353 = scalar_lea.vmem %s4, %s352
      %p354 = pneg %p139
      %p355 = pneg %p136
      %p356 = pneg %p160
      %p357 = pneg %p157
      %s358 = smul.u32 2, %s19
      %p359 = scmp.lt.s32.totalorder %s358, 3
      %s360 = scalar_select %p359, %s358, 3
      %s361 = smul.addr %s360, 8
      %s362 = scalar_lea.vmem %s6, %s361
      %p363 = pneg %p186
      %p364 = pneg %p183
      %s365 = smul.u32 2, %s19
      %p366 = scmp.lt.s32.totalorder %s365, 3
      %s367 = scalar_select %p366, %s365, 3
      %s368 = smul.addr %s367, 8
      %s369 = scalar_lea.vmem %s7, %s368
      %p370 = pneg %p212
      %p371 = pneg %p209
      %p372 = pneg %p238
      %p373 = pneg %p235
      %s374 = smul.u32 2, %s19
      %p375 = scmp.lt.s32.totalorder %s374, 3
      %s376 = scalar_select %p375, %s374, 3
      %s377 = smul.addr %s376, 4
      %s378 = scalar_lea.vmem %s8, %s377
      %s379 = smul.u32 2, %s19
      %p380 = scmp.lt.s32.totalorder %s379, 3
      %s381 = scalar_select %p380, %s379, 3
      %s382 = smul.addr %s381, 7
      %s383 = smul.addr %s382, 4
      %s384 = scalar_lea.vmem %s0, %s383
      %s385 = smul.u32 2, %s19
      %s386 = smul.u32 2, %s19
      %p387 = scmp.lt.s32.totalorder %s386, 3
      %s388 = scalar_select %p387, %s386, 3
      %s389 = smul.addr %s388, 8
      %s390 = scalar_lea.vmem %s2, %s389
      %s391 = smul.u32 2, %s19
      %s392 = smul.u32 2, %s19
      %p393 = scmp.lt.s32.totalorder %s392, 3
      %s394 = scalar_select %p393, %s392, 3
      %s395 = smul.addr %s394, 8
      %s396 = scalar_lea.vmem %s3, %s395
      %s397 = smul.u32 2, %s19
      %s398 = smul.u32 2, %s19
      %p399 = scmp.lt.s32.totalorder %s398, 3
      %s400 = scalar_select %p399, %s398, 3
      %s401 = smul.addr %s400, 4
      %s402 = scalar_lea.vmem %s4, %s401
      %s403 = smul.u32 2, %s19
      %s404 = smul.u32 2, %s19
      %p405 = scmp.lt.s32.totalorder %s404, 3
      %s406 = scalar_select %p405, %s404, 3
      %s407 = smul.addr %s406, 8
      %s408 = scalar_lea.vmem %s6, %s407
      %s409 = smul.u32 2, %s19
      %s410 = smul.u32 2, %s19
      %p411 = scmp.lt.s32.totalorder %s410, 3
      %s412 = scalar_select %p411, %s410, 3
      %s413 = smul.addr %s412, 8
      %s414 = scalar_lea.vmem %s7, %s413
      %s415 = smul.u32 2, %s19
      %s416 = smul.u32 2, %s19
      %p417 = scmp.lt.s32.totalorder %s416, 3
      %s418 = scalar_select %p417, %s416, 3
      %s419 = smul.addr %s418, 4
      %s420 = scalar_lea.vmem %s8, %s419
      %s421 = smul.u32 2, %s19
      %v423 = vld [vmem:[%s384] sm:$0xff]
      %v424 = vld [vmem:[%s384 + $0x8] sm:$0xff]
      %v425 = vld [vmem:[%s384 + $0x10] sm:$0xff]
      %v426 = vld [vmem:[%s384 + $0x18] sm:$0xf]
      %v427 = vld [vmem:[%s384 + $0x1c] sm:$0xff]
      %v428 = vld [vmem:[%s384 + $0x24] sm:$0xff]
      %v429 = vld [vmem:[%s384 + $0x2c] sm:$0xff]
      %v430 = vld [vmem:[%s384 + $0x34] sm:$0xf]
      %v431 = vld [vmem:[%s1] sm:$0xf]
      %v432 = vld [vmem:[%s1 + $0x4] sm:$0xf]
      %v433 = vld [vmem:[%s1 + $0x8] sm:$0xf]
      %v434 = vld [vmem:[%s1 + $0xc] sm:$0xf]
      %v435 = vld [vmem:[%s1 + $0x10] sm:$0xf]
      %v436 = vld [vmem:[%s1 + $0x14] sm:$0xf]
      %v437 = vld [vmem:[%s1 + $0x18] sm:$0xf]
      %v438 = vld [vmem:[%s1 + $0x1c] sm:$0xf]
      %v439 = vld [vmem:[%s1 + $0x20] sm:$0xf]
      %v440 = vld [vmem:[%s1 + $0x24] sm:$0xf]
      %v441 = vld [vmem:[%s1 + $0x28] sm:$0xf]
      %v442 = vld [vmem:[%s1 + $0x2c] sm:$0xf]
      %v443 = vld [vmem:[%s1 + $0x30] sm:$0xf]
      %v444 = vld [vmem:[%s1 + $0x34] sm:$0xf]
      %v445 = vld [vmem:[%s1 + $0x38] sm:$0xf]
      %v446 = vld [vmem:[%s1 + $0x3c] sm:$0xf]
      %v447 = vld [vmem:[%s1 + $0x40] sm:$0xf]
      %v448 = vld [vmem:[%s1 + $0x44] sm:$0xf]
      %v449 = vld [vmem:[%s1 + $0x48] sm:$0xf]
      %v450 = vld [vmem:[%s1 + $0x4c] sm:$0xf]
      %v451 = vld [vmem:[%s1 + $0x50] sm:$0xf]
      %v452 = vld [vmem:[%s1 + $0x54] sm:$0xf]
      %v453 = vld [vmem:[%s1 + $0x58] sm:$0xf]
      %v454 = vld [vmem:[%s1 + $0x5c] sm:$0xf]
      %v455 = vld [vmem:[%s1 + $0x60] sm:$0xf]
      %v456 = vld [vmem:[%s1 + $0x64] sm:$0xf]
      %v457 = vld [vmem:[%s1 + $0x68] sm:$0xf]
      %v458 = vld [vmem:[%s1 + $0x6c] sm:$0xf]
      %v459 = vld [vmem:[%s1 + $0x70] sm:$0xf]
      %v460 = vld [vmem:[%s1 + $0x74] sm:$0xf]
      %v461 = vld [vmem:[%s1 + $0x78] sm:$0xf]
      %v462 = vld [vmem:[%s1 + $0x7c] sm:$0xf]
      %v463 = vld [vmem:[%s1 + $0x80] sm:$0xf]
      %v464 = vld [vmem:[%s1 + $0x84] sm:$0xf]
      %v465 = vld [vmem:[%s1 + $0x88] sm:$0xf]
      %v466 = vld [vmem:[%s1 + $0x8c] sm:$0xf]
      %v467 = vld [vmem:[%s1 + $0x90] sm:$0xf]
      %v468 = vld [vmem:[%s1 + $0x94] sm:$0xf]
      %v469 = vld [vmem:[%s1 + $0x98] sm:$0xf]
      %v470 = vld [vmem:[%s1 + $0x9c] sm:$0xf]
      %v471 = vld [vmem:[%s1 + $0xa0] sm:$0xf]
      %v472 = vld [vmem:[%s1 + $0xa4] sm:$0xf]
      %v473 = vld [vmem:[%s1 + $0xa8] sm:$0xf]
      %v474 = vld [vmem:[%s1 + $0xac] sm:$0xf]
      %v475 = vld [vmem:[%s1 + $0xb0] sm:$0xf]
      %v476 = vld [vmem:[%s1 + $0xb4] sm:$0xf]
      %v477 = vld [vmem:[%s1 + $0xb8] sm:$0xf]
      %v478 = vld [vmem:[%s1 + $0xbc] sm:$0xf]
      %v479 = vld [vmem:[%s1 + $0xc0] sm:$0xf]
      %v480 = vld [vmem:[%s1 + $0xc4] sm:$0xf]
      %v481 = vld [vmem:[%s1 + $0xc8] sm:$0xf]
      %v482 = vld [vmem:[%s1 + $0xcc] sm:$0xf]
      %v483 = vld [vmem:[%s1 + $0xd0] sm:$0xf]
      %v484 = vld [vmem:[%s1 + $0xd4] sm:$0xf]
      %v485 = vld [vmem:[%s1 + $0xd8] sm:$0xf]
      %v486 = vld [vmem:[%s1 + $0xdc] sm:$0xf]
      %v487 = vld [vmem:[%s1 + $0xe0] sm:$0xf]
      %v488 = vld [vmem:[%s1 + $0xe4] sm:$0xf]
      %v489 = vld [vmem:[%s1 + $0xe8] sm:$0xf]
      %v490 = vld [vmem:[%s1 + $0xec] sm:$0xf]
      %v491 = vld [vmem:[%s1 + $0xf0] sm:$0xf]
      %v492 = vld [vmem:[%s1 + $0xf4] sm:$0xf]
      %v493 = vld [vmem:[%s1 + $0xf8] sm:$0xf]
      %v494 = vld [vmem:[%s1 + $0xfc] sm:$0xf]
      %v495 = vld [vmem:[%s1 + $0x100] sm:$0xf]
      %v496 = vld [vmem:[%s1 + $0x104] sm:$0xf]
      %v497 = vld [vmem:[%s1 + $0x108] sm:$0xf]
      %v498 = vld [vmem:[%s1 + $0x10c] sm:$0xf]
      %v499 = vld [vmem:[%s1 + $0x110] sm:$0xf]
      %v500 = vld [vmem:[%s1 + $0x114] sm:$0xf]
      %v501 = vld [vmem:[%s1 + $0x118] sm:$0xf]
      %v502 = vld [vmem:[%s1 + $0x11c] sm:$0xf]
      %v503 = vld [vmem:[%s1 + $0x120] sm:$0xf]
      %v504 = vld [vmem:[%s1 + $0x124] sm:$0xf]
      %v505 = vld [vmem:[%s1 + $0x128] sm:$0xf]
      %v506 = vld [vmem:[%s1 + $0x12c] sm:$0xf]
      %v507 = vld [vmem:[%s1 + $0x130] sm:$0xf]
      %v508 = vld [vmem:[%s1 + $0x134] sm:$0xf]
      %v509 = vld [vmem:[%s1 + $0x138] sm:$0xf]
      %v510 = vld [vmem:[%s1 + $0x13c] sm:$0xf]
      %v511 = vld [vmem:[%s1 + $0x140] sm:$0xf]
      %v512 = vld [vmem:[%s1 + $0x144] sm:$0xf]
      %v513 = vld [vmem:[%s1 + $0x148] sm:$0xf]
      %v514 = vld [vmem:[%s1 + $0x14c] sm:$0xf]
      %v515 = vld [vmem:[%s1 + $0x150] sm:$0xf]
      %v516 = vld [vmem:[%s1 + $0x154] sm:$0xf]
      %v517 = vld [vmem:[%s1 + $0x158] sm:$0xf]
      %v518 = vld [vmem:[%s1 + $0x15c] sm:$0xf]
      %v519 = vld [vmem:[%s1 + $0x160] sm:$0xf]
      %v520 = vld [vmem:[%s1 + $0x164] sm:$0xf]
      %v521 = vld [vmem:[%s1 + $0x168] sm:$0xf]
      %v522 = vld [vmem:[%s1 + $0x16c] sm:$0xf]
      %v523 = vld [vmem:[%s1 + $0x170] sm:$0xf]
      %v524 = vld [vmem:[%s1 + $0x174] sm:$0xf]
      %v525 = vld [vmem:[%s1 + $0x178] sm:$0xf]
      %v526 = vld [vmem:[%s1 + $0x17c] sm:$0xf]
      %v527 = vld [vmem:[%s1 + $0x180] sm:$0xf]
      %v528 = vld [vmem:[%s1 + $0x184] sm:$0xf]
      %v529 = vld [vmem:[%s1 + $0x188] sm:$0xf]
      %v530 = vld [vmem:[%s1 + $0x18c] sm:$0xf]
      %v531 = vld [vmem:[%s1 + $0x190] sm:$0xf]
      %v532 = vld [vmem:[%s1 + $0x194] sm:$0xf]
      %v533 = vld [vmem:[%s1 + $0x198] sm:$0xf]
      %v534 = vld [vmem:[%s1 + $0x19c] sm:$0xf]
      %v535 = vld [vmem:[%s1 + $0x1a0] sm:$0xf]
      %v536 = vld [vmem:[%s1 + $0x1a4] sm:$0xf]
      %v537 = vld [vmem:[%s1 + $0x1a8] sm:$0xf]
      %v538 = vld [vmem:[%s1 + $0x1ac] sm:$0xf]
      %v547 = vunpack.c.l.b16 %v423
      %v548 = vunpack.c.h.b16 %v423
      %v549 = vunpack.c.l.b16 %v424
      %v550 = vunpack.c.h.b16 %v424
      %v551 = vunpack.c.l.b16 %v425
      %v552 = vunpack.c.h.b16 %v425
      %v553 = vunpack.c.l.b16 %v426
      %v554 = vunpack.c.l.b16 %v427
      %v555 = vunpack.c.h.b16 %v427
      %v556 = vunpack.c.l.b16 %v428
      %v557 = vunpack.c.h.b16 %v428
      %v558 = vunpack.c.l.b16 %v429
      %v559 = vunpack.c.h.b16 %v429
      %v560 = vunpack.c.l.b16 %v430
      %v561 = vpack.c.b16 %v554, %v547
      %v562 = vpack.c.b16 %v555, %v548
      %v563 = vpack.c.b16 %v556, %v549
      %v564 = vpack.c.b16 %v557, %v550
      %v565 = vpack.c.b16 %v558, %v551
      %v566 = vpack.c.b16 %v559, %v552
      %v567 = vpack.c.b16 %v560, %v553
      %v682 = vunpack.c.l.b16 %v431
      %v683 = vunpack.c.l.b16 %v432
      %v684 = vunpack.c.l.b16 %v433
      %v685 = vunpack.c.l.b16 %v434
      %v686 = vunpack.c.l.b16 %v435
      %v687 = vunpack.c.l.b16 %v436
      %v688 = vunpack.c.l.b16 %v437
      %v689 = vunpack.c.l.b16 %v438
      %v690 = vunpack.c.l.b16 %v439
      %v691 = vunpack.c.l.b16 %v440
      %v692 = vunpack.c.l.b16 %v441
      %v693 = vunpack.c.l.b16 %v442
      %v694 = vunpack.c.l.b16 %v443
      %v695 = vunpack.c.l.b16 %v444
      %v696 = vunpack.c.l.b16 %v445
      %v697 = vunpack.c.l.b16 %v446
      %v698 = vunpack.c.l.b16 %v447
      %v699 = vunpack.c.l.b16 %v448
      %v700 = vunpack.c.l.b16 %v449
      %v701 = vunpack.c.l.b16 %v450
      %v702 = vunpack.c.l.b16 %v451
      %v703 = vunpack.c.l.b16 %v452
      %v704 = vunpack.c.l.b16 %v453
      %v705 = vunpack.c.l.b16 %v454
      %v706 = vunpack.c.l.b16 %v455
      %v707 = vunpack.c.l.b16 %v456
      %v708 = vunpack.c.l.b16 %v457
      %v709 = vunpack.c.l.b16 %v458
      %v710 = vunpack.c.l.b16 %v459
      %v711 = vunpack.c.l.b16 %v460
      %v712 = vunpack.c.l.b16 %v461
      %v713 = vunpack.c.l.b16 %v462
      %v714 = vunpack.c.l.b16 %v463
      %v715 = vunpack.c.l.b16 %v464
      %v716 = vunpack.c.l.b16 %v465
      %v717 = vunpack.c.l.b16 %v466
      %v718 = vunpack.c.l.b16 %v467
      %v719 = vunpack.c.l.b16 %v468
      %v720 = vunpack.c.l.b16 %v469
      %v721 = vunpack.c.l.b16 %v470
      %v722 = vunpack.c.l.b16 %v471
      %v723 = vunpack.c.l.b16 %v472
      %v724 = vunpack.c.l.b16 %v473
      %v725 = vunpack.c.l.b16 %v474
      %v726 = vunpack.c.l.b16 %v475
      %v727 = vunpack.c.l.b16 %v476
      %v728 = vunpack.c.l.b16 %v477
      %v729 = vunpack.c.l.b16 %v478
      %v730 = vunpack.c.l.b16 %v479
      %v731 = vunpack.c.l.b16 %v480
      %v732 = vunpack.c.l.b16 %v481
      %v733 = vunpack.c.l.b16 %v482
      %v734 = vunpack.c.l.b16 %v483
      %v735 = vunpack.c.l.b16 %v484
      %v736 = vunpack.c.l.b16 %v485
      %v737 = vunpack.c.l.b16 %v486
      %v738 = vunpack.c.l.b16 %v487
      %v739 = vunpack.c.l.b16 %v488
      %v740 = vunpack.c.l.b16 %v489
      %v741 = vunpack.c.l.b16 %v490
      %v742 = vunpack.c.l.b16 %v491
      %v743 = vunpack.c.l.b16 %v492
      %v744 = vunpack.c.l.b16 %v493
      %v745 = vunpack.c.l.b16 %v494
      %v746 = vunpack.c.l.b16 %v495
      %v747 = vunpack.c.l.b16 %v496
      %v748 = vunpack.c.l.b16 %v497
      %v749 = vunpack.c.l.b16 %v498
      %v750 = vunpack.c.l.b16 %v499
      %v751 = vunpack.c.l.b16 %v500
      %v752 = vunpack.c.l.b16 %v501
      %v753 = vunpack.c.l.b16 %v502
      %v754 = vunpack.c.l.b16 %v503
      %v755 = vunpack.c.l.b16 %v504
      %v756 = vunpack.c.l.b16 %v505
      %v757 = vunpack.c.l.b16 %v506
      %v758 = vunpack.c.l.b16 %v507
      %v759 = vunpack.c.l.b16 %v508
      %v760 = vunpack.c.l.b16 %v509
      %v761 = vunpack.c.l.b16 %v510
      %v762 = vunpack.c.l.b16 %v511
      %v763 = vunpack.c.l.b16 %v512
      %v764 = vunpack.c.l.b16 %v513
      %v765 = vunpack.c.l.b16 %v514
      %v766 = vunpack.c.l.b16 %v515
      %v767 = vunpack.c.l.b16 %v516
      %v768 = vunpack.c.l.b16 %v517
      %v769 = vunpack.c.l.b16 %v518
      %v770 = vunpack.c.l.b16 %v519
      %v771 = vunpack.c.l.b16 %v520
      %v772 = vunpack.c.l.b16 %v521
      %v773 = vunpack.c.l.b16 %v522
      %v774 = vunpack.c.l.b16 %v523
      %v775 = vunpack.c.l.b16 %v524
      %v776 = vunpack.c.l.b16 %v525
      %v777 = vunpack.c.l.b16 %v526
      %v778 = vunpack.c.l.b16 %v527
      %v779 = vunpack.c.l.b16 %v528
      %v780 = vunpack.c.l.b16 %v529
      %v781 = vunpack.c.l.b16 %v530
      %v782 = vunpack.c.l.b16 %v531
      %v783 = vunpack.c.l.b16 %v532
      %v784 = vunpack.c.l.b16 %v533
      %v785 = vunpack.c.l.b16 %v534
      %v786 = vunpack.c.l.b16 %v535
      %v787 = vunpack.c.l.b16 %v536
      %v788 = vunpack.c.l.b16 %v537
      %v789 = vunpack.c.l.b16 %v538
      %v790 = vpack.c.b16 %v683, %v682
      %v791 = vpack.c.b16 %v685, %v684
      %v792 = vpack.c.b16 %v687, %v686
      %v793 = vpack.c.b16 %v689, %v688
      %v794 = vpack.c.b16 %v691, %v690
      %v795 = vpack.c.b16 %v693, %v692
      %v796 = vpack.c.b16 %v695, %v694
      %v797 = vpack.c.b16 %v697, %v696
      %v798 = vpack.c.b16 %v699, %v698
      %v799 = vpack.c.b16 %v701, %v700
      %v800 = vpack.c.b16 %v703, %v702
      %v801 = vpack.c.b16 %v705, %v704
      %v802 = vpack.c.b16 %v707, %v706
      %v803 = vpack.c.b16 %v709, %v708
      %v804 = vpack.c.b16 %v711, %v710
      %v805 = vpack.c.b16 %v713, %v712
      %v806 = vpack.c.b16 %v715, %v714
      %v807 = vpack.c.b16 %v717, %v716
      %v808 = vpack.c.b16 %v719, %v718
      %v809 = vpack.c.b16 %v721, %v720
      %v810 = vpack.c.b16 %v723, %v722
      %v811 = vpack.c.b16 %v725, %v724
      %v812 = vpack.c.b16 %v727, %v726
      %v813 = vpack.c.b16 %v729, %v728
      %v814 = vpack.c.b16 %v731, %v730
      %v815 = vpack.c.b16 %v733, %v732
      %v816 = vpack.c.b16 %v735, %v734
      %v817 = vpack.c.b16 %v737, %v736
      %v818 = vpack.c.b16 %v739, %v738
      %v819 = vpack.c.b16 %v741, %v740
      %v820 = vpack.c.b16 %v743, %v742
      %v821 = vpack.c.b16 %v745, %v744
      %v822 = vpack.c.b16 %v747, %v746
      %v823 = vpack.c.b16 %v749, %v748
      %v824 = vpack.c.b16 %v751, %v750
      %v825 = vpack.c.b16 %v753, %v752
      %v826 = vpack.c.b16 %v755, %v754
      %v827 = vpack.c.b16 %v757, %v756
      %v828 = vpack.c.b16 %v759, %v758
      %v829 = vpack.c.b16 %v761, %v760
      %v830 = vpack.c.b16 %v763, %v762
      %v831 = vpack.c.b16 %v765, %v764
      %v832 = vpack.c.b16 %v767, %v766
      %v833 = vpack.c.b16 %v769, %v768
      %v834 = vpack.c.b16 %v771, %v770
      %v835 = vpack.c.b16 %v773, %v772
      %v836 = vpack.c.b16 %v775, %v774
      %v837 = vpack.c.b16 %v777, %v776
      %v838 = vpack.c.b16 %v779, %v778
      %v839 = vpack.c.b16 %v781, %v780
      %v840 = vpack.c.b16 %v783, %v782
      %v841 = vpack.c.b16 %v785, %v784
      %v842 = vpack.c.b16 %v787, %v786
      %v843 = vpack.c.b16 %v789, %v788
      %vm898 = vcmask 785408
      %v900 = vsel %vm898, %v567, 0
      %902 = vmatprep.subr.bf16.mxu0 0
      %903 = vmatpush1.bf16.msra.mxu0 %v790
      %904 = vmatprep.subr.bf16.mxu0 0
      %905 = vmatpush1.bf16.msra.mxu0 %v791
      %906 = vmatprep.subr.bf16.mxu0 0
      %907 = vmatpush1.bf16.msra.mxu0 %v792
      %908 = vmatprep.subr.bf16.mxu0 0
      %909 = vmatpush1.bf16.msra.mxu0 %v793
      %910 = vmatprep.subr.bf16.mxu0 0
      %911 = vmatpush1.bf16.msra.mxu0 %v794
      %912 = vmatprep.subr.bf16.mxu0 0
      %913 = vmatpush1.bf16.msra.mxu0 %v795
      %914 = vmatprep.subr.bf16.mxu0 0
      %915 = vmatpush1.bf16.msra.mxu0 %v796
      %916 = vmatprep.subr.bf16.mxu0 0
      %917 = vmatpush1.bf16.msra.mxu0 %v797
      %918 = vmatprep.subr.bf16.mxu0 0
      %919 = vmatpush1.bf16.msra.mxu0 %v798
      %920 = vmatprep.subr.bf16.mxu0 0
      %921 = vmatpush1.bf16.msra.mxu0 %v799
      %922 = vmatprep.subr.bf16.mxu0 0
      %923 = vmatpush1.bf16.msra.mxu0 %v800
      %924 = vmatprep.subr.bf16.mxu0 0
      %925 = vmatpush1.bf16.msra.mxu0 %v801
      %926 = vmatprep.subr.bf16.mxu0 0
      %927 = vmatpush1.bf16.msra.mxu0 %v802
      %928 = vmatprep.subr.bf16.mxu0 0
      %929 = vmatpush1.bf16.msra.mxu0 %v803
      %930 = vmatprep.subr.bf16.mxu0 0
      %931 = vmatpush1.bf16.msra.mxu0 %v804
      %932 = vmatprep.subr.bf16.mxu0 0
      %933 = vmatpush1.bf16.msra.mxu0 %v805
      %934 = vmatprep.mubr.bf16.mxu0 %v562
      %935 = vmatmul.mubr.bf16.gmra.mrb[0].mxu0 %v561
      %v936 = vpop.f32.mrb[0].mxu0
      %v937 = vadd.f32 0.0, %v936
      %v938 = vpop.f32.mrb[0].mxu0
      %v939 = vpop.f32.mrb[0].mxu0
      %v940 = vadd.f32 0.0, %v939
      %v941 = vpop.f32.mrb[0].mxu0
      %942 = vdwg.mxu0
      %943 = vmatprep.subr.bf16.mxu0 0
      %944 = vmatpush1.bf16.msra.mxu0 %v806
      %945 = vmatprep.subr.bf16.mxu0 0
      %946 = vmatpush1.bf16.msra.mxu0 %v807
      %947 = vmatprep.subr.bf16.mxu0 0
      %948 = vmatpush1.bf16.msra.mxu0 %v808
      %949 = vmatprep.subr.bf16.mxu0 0
      %950 = vmatpush1.bf16.msra.mxu0 %v809
      %951 = vmatprep.subr.bf16.mxu0 0
      %952 = vmatpush1.bf16.msra.mxu0 %v810
      %953 = vmatprep.subr.bf16.mxu0 0
      %954 = vmatpush1.bf16.msra.mxu0 %v811
      %955 = vmatprep.subr.bf16.mxu0 0
      %956 = vmatpush1.bf16.msra.mxu0 %v812
      %957 = vmatprep.subr.bf16.mxu0 0
      %958 = vmatpush1.bf16.msra.mxu0 %v813
      %959 = vmatprep.subr.bf16.mxu0 0
      %960 = vmatpush1.bf16.msra.mxu0 %v814
      %961 = vmatprep.subr.bf16.mxu0 0
      %962 = vmatpush1.bf16.msra.mxu0 %v815
      %963 = vmatprep.subr.bf16.mxu0 0
      %964 = vmatpush1.bf16.msra.mxu0 %v816
      %965 = vmatprep.subr.bf16.mxu0 0
      %966 = vmatpush1.bf16.msra.mxu0 %v817
      %967 = vmatprep.subr.bf16.mxu0 0
      %968 = vmatpush1.bf16.msra.mxu0 %v818
      %969 = vmatprep.subr.bf16.mxu0 0
      %970 = vmatpush1.bf16.msra.mxu0 %v819
      %971 = vmatprep.subr.bf16.mxu0 0
      %972 = vmatpush1.bf16.msra.mxu0 %v820
      %973 = vmatprep.subr.bf16.mxu0 0
      %974 = vmatpush1.bf16.msra.mxu0 %v821
      %975 = vmatprep.mubr.bf16.mxu0 %v564
      %976 = vmatmul.mubr.bf16.gmra.mrb[0].mxu0 %v563
      %v977 = vpop.f32.mrb[0].mxu0
      %v978 = vadd.f32 %v937, %v977
      %v979 = vpop.f32.mrb[0].mxu0
      %v980 = vpop.f32.mrb[0].mxu0
      %v981 = vadd.f32 %v940, %v980
      %v982 = vpop.f32.mrb[0].mxu0
      %983 = vdwg.mxu0
      %984 = vmatprep.subr.bf16.mxu0 0
      %985 = vmatpush1.bf16.msra.mxu0 %v822
      %986 = vmatprep.subr.bf16.mxu0 0
      %987 = vmatpush1.bf16.msra.mxu0 %v823
      %988 = vmatprep.subr.bf16.mxu0 0
      %989 = vmatpush1.bf16.msra.mxu0 %v824
      %990 = vmatprep.subr.bf16.mxu0 0
      %991 = vmatpush1.bf16.msra.mxu0 %v825
      %992 = vmatprep.subr.bf16.mxu0 0
      %993 = vmatpush1.bf16.msra.mxu0 %v826
      %994 = vmatprep.subr.bf16.mxu0 0
      %995 = vmatpush1.bf16.msra.mxu0 %v827
      %996 = vmatprep.subr.bf16.mxu0 0
      %997 = vmatpush1.bf16.msra.mxu0 %v828
      %998 = vmatprep.subr.bf16.mxu0 0
      %999 = vmatpush1.bf16.msra.mxu0 %v829
      %1000 = vmatprep.subr.bf16.mxu0 0
      %1001 = vmatpush1.bf16.msra.mxu0 %v830
      %1002 = vmatprep.subr.bf16.mxu0 0
      %1003 = vmatpush1.bf16.msra.mxu0 %v831
      %1004 = vmatprep.subr.bf16.mxu0 0
      %1005 = vmatpush1.bf16.msra.mxu0 %v832
      %1006 = vmatprep.subr.bf16.mxu0 0
      %1007 = vmatpush1.bf16.msra.mxu0 %v833
      %1008 = vmatprep.subr.bf16.mxu0 0
      %1009 = vmatpush1.bf16.msra.mxu0 %v834
      %1010 = vmatprep.subr.bf16.mxu0 0
      %1011 = vmatpush1.bf16.msra.mxu0 %v835
      %1012 = vmatprep.subr.bf16.mxu0 0
      %1013 = vmatpush1.bf16.msra.mxu0 %v836
      %1014 = vmatprep.subr.bf16.mxu0 0
      %1015 = vmatpush1.bf16.msra.mxu0 %v837
      %1016 = vmatprep.mubr.bf16.mxu0 %v566
      %1017 = vmatmul.mubr.bf16.gmra.mrb[0].mxu0 %v565
      %v1018 = vpop.f32.mrb[0].mxu0
      %v1019 = vadd.f32 %v978, %v1018
      %v1020 = vpop.f32.mrb[0].mxu0
      %v1021 = vpop.f32.mrb[0].mxu0
      %v1022 = vadd.f32 %v981, %v1021
      %v1023 = vpop.f32.mrb[0].mxu0
      %1024 = vdwg.mxu0
      %1025 = vmatprep.subr.bf16.mxu0 0
      %1026 = vmatpush1.bf16.msra.mxu0 %v838
      %1027 = vmatprep.subr.bf16.mxu0 0
      %1028 = vmatpush1.bf16.msra.mxu0 %v839
      %1029 = vmatprep.subr.bf16.mxu0 0
      %1030 = vmatpush1.bf16.msra.mxu0 %v840
      %1031 = vmatprep.subr.bf16.mxu0 0
      %1032 = vmatpush1.bf16.msra.mxu0 %v841
      %1033 = vmatprep.subr.bf16.mxu0 0
      %1034 = vmatpush1.bf16.msra.mxu0 %v842
      %1035 = vmatprep.subr.bf16.mxu0 0
      %1036 = vmatpush1.bf16.msra.mxu0 %v843
      %1037 = vmatprep.subr.bf16.mxu0 0
      %1038 = vmatpush1.bf16.msra.mxu0 0
      %1039 = vmatprep.subr.bf16.mxu0 0
      %1040 = vmatpush1.bf16.msra.mxu0 0
      %1041 = vmatprep.subr.bf16.mxu0 0
      %1042 = vmatpush1.bf16.msra.mxu0 0
      %1043 = vmatprep.subr.bf16.mxu0 0
      %1044 = vmatpush1.bf16.msra.mxu0 0
      %1045 = vmatprep.subr.bf16.mxu0 0
      %1046 = vmatpush1.bf16.msra.mxu0 0
      %1047 = vmatprep.subr.bf16.mxu0 0
      %1048 = vmatpush1.bf16.msra.mxu0 0
      %1049 = vmatprep.subr.bf16.mxu0 0
      %1050 = vmatpush1.bf16.msra.mxu0 0
      %1051 = vmatprep.subr.bf16.mxu0 0
      %1052 = vmatpush1.bf16.msra.mxu0 0
      %1053 = vmatprep.subr.bf16.mxu0 0
      %1054 = vmatpush1.bf16.msra.mxu0 0
      %1055 = vmatprep.subr.bf16.mxu0 0
      %1056 = vmatpush1.bf16.msra.mxu0 0
      %1057 = vmatprep.mubr.bf16.mxu0 0
      %1058 = vmatmul.mubr.bf16.gmra.mrb[0].mxu0 %v900
      %v1059 = vpop.f32.mrb[0].mxu0
      %v1060 = vadd.f32 %v1019, %v1059
      %v1061 = vpop.f32.mrb[0].mxu0
      %v1062 = vpop.f32.mrb[0].mxu0
      %v1063 = vadd.f32 %v1022, %v1062
      %v1064 = vpop.f32.mrb[0].mxu0
      %1065 = vdwg.mxu0
      %v1066 = vld [vmem:[%s390] sm:$0xff]
      %v1067 = vld [vmem:[%s390 + $0x8] sm:$0xff]
      %v1068 = vld [vmem:[%s396] sm:$0xff]
      %v1069 = vld [vmem:[%s396 + $0x8] sm:$0xff]
      %vm1070 = vcmask 15360
      %v1071 = vsel %vm1070, %v1060, 0.0
      %1072 = vadd.xlane.f32.xlu0 %v1071
      %v1073 = vpop.xlane.xlu0 %1072
      %v1074 = vsel %vm1070, %v1063, 0.0
      %1075 = vadd.xlane.f32.xlu0 %v1074
      %v1076 = vpop.xlane.xlu0 %1075
      %v1077 = vrcp.pop 2.0
      %v1078 = vmul.f32 %v1073, %v1077
      %v1079 = vmul.f32 %v1076, %v1077
      %v1080 = vsub.f32 %v1060, %v1078
      %v1081 = vsub.f32 %v1063, %v1079
      %v1082 = vmul.f32 %v1080, %v1080
      %v1083 = vmul.f32 %v1081, %v1081
      %v1084 = vsel %vm1070, %v1082, 0.0
      %1085 = vadd.xlane.f32.xlu0 %v1084
      %v1086 = vpop.xlane.xlu0 %1085
      %v1087 = vsel %vm1070, %v1083, 0.0
      %1088 = vadd.xlane.f32.xlu0 %v1087
      %v1089 = vpop.xlane.xlu0 %1088
      %v1090 = vmul.f32 %v1086, %v1077
      %v1091 = vmul.f32 %v1089, %v1077
      %v1092 = vadd.f32 %v1090, 1e-05
      %v1093 = vadd.f32 %v1091, 1e-05
      %v1094 = vrsqrt.pop %v1092
      %v1095 = vrsqrt.pop %v1093
      %v1096 = vmul.f32 %v1080, %v1094
      %v1097 = vmul.f32 %v1081, %v1095
      %1099 = vset.pattern.permute.xlu0 0
      %1100 = vperm.xlu0 %1099, %v1066
      %v1101 = vpop.permute.xlu0 %1100
      %1104 = vset.pattern.permute.xlu0 0
      %1105 = vperm.xlu0 %1104, %v1067
      %v1106 = vpop.permute.xlu0 %1105
      %v1108 = vmul.f32 %v1096, %v1101
      %v1109 = vmul.f32 %v1097, %v1106
      %1111 = vset.pattern.permute.xlu0 0
      %1112 = vperm.xlu0 %1111, %v1068
      %v1113 = vpop.permute.xlu0 %1112
      %1116 = vset.pattern.permute.xlu0 0
      %1117 = vperm.xlu0 %1116, %v1069
      %v1118 = vpop.permute.xlu0 %1117
      %v1120 = vadd.f32 %v1108, %v1113
      %v1121 = vadd.f32 %v1109, %v1118
      %v1122 = vld [vmem:[%s402] sm:$0xf]
      %v1123 = vld [vmem:[%s402 + $0x4] sm:$0xf]
      %v1124 = vld [vmem:[%s5] sm:$0xf]
      %v1125 = vld [vmem:[%s5 + $0x4] sm:$0xf]
      %v1128 = vunpack.c.l.b16 %v1122
      %v1129 = vunpack.c.l.b16 %v1123
      %v1130 = vpack.c.b16 %v1129, %v1128
      %v1133 = vunpack.c.l.b16 %v1124
      %v1134 = vunpack.c.l.b16 %v1125
      %v1135 = vpack.c.b16 %v1134, %v1133
      %vm1137 = vcmask 130048
      %v1139 = vsel %vm1137, %v1130, 0
      %1141 = vmatprep.subr.bf16.mxu0 0
      %1142 = vmatpush1.bf16.msra.mxu0 %v1135
      %1143 = vmatprep.subr.bf16.mxu0 0
      %1144 = vmatpush1.bf16.msra.mxu0 0
      %1145 = vmatprep.subr.bf16.mxu0 0
      %1146 = vmatpush1.bf16.msra.mxu0 0
      %1147 = vmatprep.subr.bf16.mxu0 0
      %1148 = vmatpush1.bf16.msra.mxu0 0
      %1149 = vmatprep.subr.bf16.mxu0 0
      %1150 = vmatpush1.bf16.msra.mxu0 0
      %1151 = vmatprep.subr.bf16.mxu0 0
      %1152 = vmatpush1.bf16.msra.mxu0 0
      %1153 = vmatprep.subr.bf16.mxu0 0
      %1154 = vmatpush1.bf16.msra.mxu0 0
      %1155 = vmatprep.subr.bf16.mxu0 0
      %1156 = vmatpush1.bf16.msra.mxu0 0
      %1157 = vmatprep.subr.bf16.mxu0 0
      %1158 = vmatpush1.bf16.msra.mxu0 0
      %1159 = vmatprep.subr.bf16.mxu0 0
      %1160 = vmatpush1.bf16.msra.mxu0 0
      %1161 = vmatprep.subr.bf16.mxu0 0
      %1162 = vmatpush1.bf16.msra.mxu0 0
      %1163 = vmatprep.subr.bf16.mxu0 0
      %1164 = vmatpush1.bf16.msra.mxu0 0
      %1165 = vmatprep.subr.bf16.mxu0 0
      %1166 = vmatpush1.bf16.msra.mxu0 0
      %1167 = vmatprep.subr.bf16.mxu0 0
      %1168 = vmatpush1.bf16.msra.mxu0 0
      %1169 = vmatprep.subr.bf16.mxu0 0
      %1170 = vmatpush1.bf16.msra.mxu0 0
      %1171 = vmatprep.subr.bf16.mxu0 0
      %1172 = vmatpush1.bf16.msra.mxu0 0
      %1173 = vmatprep.mubr.bf16.mxu0 0
      %1174 = vmatmul.mubr.bf16.gmra.mrb[0].mxu0 %v1139
      %v1175 = vpop.f32.mrb[0].mxu0
      %v1176 = vadd.f32 0.0, %v1175
      %v1177 = vpop.f32.mrb[0].mxu0
      %v1178 = vpop.f32.mrb[0].mxu0
      %v1179 = vadd.f32 0.0, %v1178
      %v1180 = vpop.f32.mrb[0].mxu0
      %1181 = vdwg.mxu0
      %v1182 = vld [vmem:[%s408] sm:$0xff]
      %v1183 = vld [vmem:[%s408 + $0x8] sm:$0xff]
      %v1184 = vld [vmem:[%s414] sm:$0xff]
      %v1185 = vld [vmem:[%s414 + $0x8] sm:$0xff]
      %v1186 = vsel %vm1070, %v1176, 0.0
      %1187 = vadd.xlane.f32.xlu0 %v1186
      %v1188 = vpop.xlane.xlu0 %1187
      %v1189 = vsel %vm1070, %v1179, 0.0
      %1190 = vadd.xlane.f32.xlu0 %v1189
      %v1191 = vpop.xlane.xlu0 %1190
      %v1192 = vmul.f32 %v1188, %v1077
      %v1193 = vmul.f32 %v1191, %v1077
      %v1194 = vsub.f32 %v1176, %v1192
      %v1195 = vsub.f32 %v1179, %v1193
      %v1196 = vmul.f32 %v1194, %v1194
      %v1197 = vmul.f32 %v1195, %v1195
      %v1198 = vsel %vm1070, %v1196, 0.0
      %1199 = vadd.xlane.f32.xlu0 %v1198
      %v1200 = vpop.xlane.xlu0 %1199
      %v1201 = vsel %vm1070, %v1197, 0.0
      %1202 = vadd.xlane.f32.xlu0 %v1201
      %v1203 = vpop.xlane.xlu0 %1202
      %v1204 = vmul.f32 %v1200, %v1077
      %v1205 = vmul.f32 %v1203, %v1077
      %v1206 = vadd.f32 %v1204, 1e-05
      %v1207 = vadd.f32 %v1205, 1e-05
      %v1208 = vrsqrt.pop %v1206
      %v1209 = vrsqrt.pop %v1207
      %v1210 = vmul.f32 %v1194, %v1208
      %v1211 = vmul.f32 %v1195, %v1209
      %1213 = vset.pattern.permute.xlu0 0
      %1214 = vperm.xlu0 %1213, %v1182
      %v1215 = vpop.permute.xlu0 %1214
      %1218 = vset.pattern.permute.xlu0 0
      %1219 = vperm.xlu0 %1218, %v1183
      %v1220 = vpop.permute.xlu0 %1219
      %v1222 = vmul.f32 %v1210, %v1215
      %v1223 = vmul.f32 %v1211, %v1220
      %1225 = vset.pattern.permute.xlu0 0
      %1226 = vperm.xlu0 %1225, %v1184
      %v1227 = vpop.permute.xlu0 %1226
      %1230 = vset.pattern.permute.xlu0 0
      %1231 = vperm.xlu0 %1230, %v1185
      %v1232 = vpop.permute.xlu0 %1231
      %v1234 = vadd.f32 %v1222, %v1227
      %v1235 = vadd.f32 %v1223, %v1232
      %v1236 = vadd.f32 %v1120, %v1234
      %v1237 = vadd.f32 %v1121, %v1235
      %v1238 = vmax.f32 %v1236, 0.0
      %v1239 = vmax.f32 %v1237, 0.0
      %v1240 = vpack.c.bf16 %v1239, %v1238
      %v1242 = vunpack.c.l.b16 %v1240
      %v1243 = vunpack.c.h.b16 %v1240
      %v1244 = vpack.c.b16 %v1242, %v1242
      %v1245 = vpack.c.b16 %v1243, %v1243
      %vm1248 = vcmask 11264
      %1249 = vst.msk [vmem:[%s420] sm:$0xf] %vm1248, %v1244
      %1250 = vst.msk [vmem:[%s420 + $0x4] sm:$0xf] %vm1248, %v1245
      %s1251 = smul.u32 2, %s19
      %p1252 = scmp.lt.s32.totalorder %s1251, 3
      %s1253 = scalar_select %p1252, %s1251, 3
      %s1254 = smul.addr %s1253, 4
      %s1255 = scalar_lea.vmem %s8, %s1254
      // Predicated region
      $region53: #{_lambda_.20} parent=51 // pred_check
        %p1256 = pneg %p235
      $region54: #{_lambda_.20} parent=51 // pred_check_branch
        %1258 = sbr.rel (%p1256) target = $region56
      $region55: #{_lambda_.20} parent=51 // pred_region
        %s1259 = smul.u32 2, %s19
      $region56: #{_lambda_.20} parent=51 // pred_fallthru
        _
    $region52: #{_lambda_.20} parent=5 // pred_fallthru
      _
    %p1260 = scmp.le.s32.totalorder 2, %s14
    // Predicated region
    $region57: #{_lambda_.20} parent=5 // pred_check
      %p1261 = pneg %p1260
    $region58: #{_lambda_.20} parent=5 // pred_check_branch
      %1263 = sbr.rel (%p1261) target = $region60
    $region59: #{_lambda_.20} parent=5 // pred_region
      %s1264 = ssub.s32 %s14, 2
      // Predicated region
      $region61: #{_lambda_.20} parent=59 // pred_check
        %p1265 = pneg %p241
      $region62: #{_lambda_.20} parent=59 // pred_check_branch
        %1267 = sbr.rel (%p1265) target = $region64
      $region63: #{_lambda_.20} parent=59 // pred_region
        %s1268 = smul.u32 2, %s20
        %p1269 = scmp.lt.s32.totalorder %s1268, 3
        %s1270 = scalar_select %p1269, %s1268, 3
        %s1271 = smul.addr %s1270, 4
        %s1272 = scalar_lea.vmem %s8, %s1271
      $region64: #{_lambda_.20} parent=59 // pred_fallthru
        _
    $region60: #{_lambda_.20} parent=5 // pred_fallthru
      _
  $region6: #{_lambda_.20} parent=0 // loop_footer
    %s18 = sadd.s32 1, %s14
  $region7: #{_lambda_.20} parent=0 // loop_footer_branch
    %13 = sbr.rel target = $region3
  $region8: #{_lambda_.20} parent=0 // loop_exit
    _

// kernel: _lambda_.21
$region0: #{_lambda_.21}
  #allocation0 [shape = 'u32[]', space=smem, size = 0x4, offset = 0x4, fixed_abs, tag = 'smem constant byte address 0x4 - core index']
  #allocation1 [shape = 'u32[144,128]{1,0:T(1,128)}', space=vmem, size = 0x12000, scoped, tag = 'internal scratch']
  %s0 = inlined_call_operand.vmem [shape: bf16[32,2,1], index: 0, kind: input, shape index: {}]
  %s1 = inlined_call_operand.vmem [shape: bf16[16,32], index: 1, kind: input, shape index: {}]
  %s2 = inlined_call_operand.vmem [shape: f32[16,1], index: 2, kind: input, shape index: {}]
  %s3 = inlined_call_operand.vmem [shape: bf16[2,16], index: 3, kind: input, shape index: {}]
  %s4 = inlined_call_operand.vmem [shape: f32[2,1], index: 4, kind: input, shape index: {}]
  %s5 = inlined_call_operand.vmem [shape: bf16[32,32], index: 5, kind: input, shape index: {}]
  %s6 = inlined_call_operand.vmem [shape: f32[32,1], index: 6, kind: input, shape index: {}]
  %s7 = inlined_call_operand.vmem [shape: f32[32,1], index: 7, kind: input, shape index: {}]
  %s8 = inlined_call_operand.vmem [shape: f32[32,1], index: 8, kind: input, shape index: {}]
  %s9 = inlined_call_operand.vmem [shape: bf16[512,32], index: 9, kind: input, shape index: {}]
  %s10 = inlined_call_operand.vmem [shape: f32[512,1], index: 10, kind: input, shape index: {}]
  %s11 = inlined_call_operand.vmem [shape: f32[512,2], index: 11, kind: output, shape index: {0}]
  %s12 = inlined_call_operand.vmem [shape: f32[2,2], index: 12, kind: output, shape index: {1}]
  %13 = xla_tuple %s11, %s12
  %s14 = sld [smem:[#allocation0]]
  $region62: #{_lambda_.21} parent=0
    _
  %s16 = ssub.s32 1, %s14
  %s17 = scalar_select 0, %s16, %s14
  // Predicated region
  $region2: #{_lambda_.21} parent=0 // pred_check
    _
  $region3: #{_lambda_.21} parent=0 // pred_check_branch
    %19 = sbr.rel (0) target = $region5
  $region4: #{_lambda_.21} parent=0 // pred_region
    _
  $region5: #{_lambda_.21} parent=0 // pred_fallthru
    _
  // Predicated region
  $region6: #{_lambda_.21} parent=0 // pred_check
    _
  $region7: #{_lambda_.21} parent=0 // pred_check_branch
    %21 = sbr.rel (0) target = $region9
  $region8: #{_lambda_.21} parent=0 // pred_region
    _
  $region9: #{_lambda_.21} parent=0 // pred_fallthru
    _
  // Predicated region
  $region10: #{_lambda_.21} parent=0 // pred_check
    _
  $region11: #{_lambda_.21} parent=0 // pred_check_branch
    %23 = sbr.rel (0) target = $region13
  $region12: #{_lambda_.21} parent=0 // pred_region
    _
  $region13: #{_lambda_.21} parent=0 // pred_fallthru
    _
  // Predicated region
  $region14: #{_lambda_.21} parent=0 // pred_check
    _
  $region15: #{_lambda_.21} parent=0 // pred_check_branch
    %25 = sbr.rel (0) target = $region17
  $region16: #{_lambda_.21} parent=0 // pred_region
    _
  $region17: #{_lambda_.21} parent=0 // pred_fallthru
    _
  // Predicated region
  $region18: #{_lambda_.21} parent=0 // pred_check
    _
  $region19: #{_lambda_.21} parent=0 // pred_check_branch
    %27 = sbr.rel (0) target = $region21
  $region20: #{_lambda_.21} parent=0 // pred_region
    _
  $region21: #{_lambda_.21} parent=0 // pred_fallthru
    _
  // Predicated region
  $region22: #{_lambda_.21} parent=0 // pred_check
    _
  $region23: #{_lambda_.21} parent=0 // pred_check_branch
    %29 = sbr.rel (0) target = $region25
  $region24: #{_lambda_.21} parent=0 // pred_region
    _
  $region25: #{_lambda_.21} parent=0 // pred_fallthru
    _
  // Predicated region
  $region26: #{_lambda_.21} parent=0 // pred_check
    _
  $region27: #{_lambda_.21} parent=0 // pred_check_branch
    %31 = sbr.rel (0) target = $region29
  $region28: #{_lambda_.21} parent=0 // pred_region
    _
  $region29: #{_lambda_.21} parent=0 // pred_fallthru
    _
  // Predicated region
  $region30: #{_lambda_.21} parent=0 // pred_check
    _
  $region31: #{_lambda_.21} parent=0 // pred_check_branch
    %33 = sbr.rel (0) target = $region33
  $region32: #{_lambda_.21} parent=0 // pred_region
    _
  $region33: #{_lambda_.21} parent=0 // pred_fallthru
    _
  // Predicated region
  $region34: #{_lambda_.21} parent=0 // pred_check
    _
  $region35: #{_lambda_.21} parent=0 // pred_check_branch
    %35 = sbr.rel (0) target = $region37
  $region36: #{_lambda_.21} parent=0 // pred_region
    _
  $region37: #{_lambda_.21} parent=0 // pred_fallthru
    _
  // Predicated region
  $region38: #{_lambda_.21} parent=0 // pred_check
    _
  $region39: #{_lambda_.21} parent=0 // pred_check_branch
    %37 = sbr.rel (0) target = $region41
  $region40: #{_lambda_.21} parent=0 // pred_region
    _
  $region41: #{_lambda_.21} parent=0 // pred_fallthru
    _
  // Predicated region
  $region42: #{_lambda_.21} parent=0 // pred_check
    _
  $region43: #{_lambda_.21} parent=0 // pred_check_branch
    %39 = sbr.rel (0) target = $region45
  $region44: #{_lambda_.21} parent=0 // pred_region
    _
  $region45: #{_lambda_.21} parent=0 // pred_fallthru
    _
  %v41 = vld [vmem:[%s0] sm:$0x1]
  %v42 = vld [vmem:[%s0 + $0x1] sm:$0x1]
  %v43 = vld [vmem:[%s0 + $0x2] sm:$0x1]
  %v44 = vld [vmem:[%s0 + $0x3] sm:$0x1]
  %v45 = vld [vmem:[%s0 + $0x4] sm:$0x1]
  %v46 = vld [vmem:[%s0 + $0x5] sm:$0x1]
  %v47 = vld [vmem:[%s0 + $0x6] sm:$0x1]
  %v48 = vld [vmem:[%s0 + $0x7] sm:$0x1]
  %v49 = vld [vmem:[%s0 + $0x8] sm:$0x1]
  %v50 = vld [vmem:[%s0 + $0x9] sm:$0x1]
  %v51 = vld [vmem:[%s0 + $0xa] sm:$0x1]
  %v52 = vld [vmem:[%s0 + $0xb] sm:$0x1]
  %v53 = vld [vmem:[%s0 + $0xc] sm:$0x1]
  %v54 = vld [vmem:[%s0 + $0xd] sm:$0x1]
  %v55 = vld [vmem:[%s0 + $0xe] sm:$0x1]
  %v56 = vld [vmem:[%s0 + $0xf] sm:$0x1]
  %v57 = vld [vmem:[%s0 + $0x10] sm:$0x1]
  %v58 = vld [vmem:[%s0 + $0x11] sm:$0x1]
  %v59 = vld [vmem:[%s0 + $0x12] sm:$0x1]
  %v60 = vld [vmem:[%s0 + $0x13] sm:$0x1]
  %v61 = vld [vmem:[%s0 + $0x14] sm:$0x1]
  %v62 = vld [vmem:[%s0 + $0x15] sm:$0x1]
  %v63 = vld [vmem:[%s0 + $0x16] sm:$0x1]
  %v64 = vld [vmem:[%s0 + $0x17] sm:$0x1]
  %v65 = vld [vmem:[%s0 + $0x18] sm:$0x1]
  %v66 = vld [vmem:[%s0 + $0x19] sm:$0x1]
  %v67 = vld [vmem:[%s0 + $0x1a] sm:$0x1]
  %v68 = vld [vmem:[%s0 + $0x1b] sm:$0x1]
  %v69 = vld [vmem:[%s0 + $0x1c] sm:$0x1]
  %v70 = vld [vmem:[%s0 + $0x1d] sm:$0x1]
  %v71 = vld [vmem:[%s0 + $0x1e] sm:$0x1]
  %v72 = vld [vmem:[%s0 + $0x1f] sm:$0x1]
  %v73 = vunpack.c.l.bf16 %v41
  %v74 = vunpack.c.l.bf16 %v42
  %v75 = vunpack.c.l.bf16 %v43
  %v76 = vunpack.c.l.bf16 %v44
  %v77 = vunpack.c.l.bf16 %v45
  %v78 = vunpack.c.l.bf16 %v46
  %v79 = vunpack.c.l.bf16 %v47
  %v80 = vunpack.c.l.bf16 %v48
  %v81 = vunpack.c.l.bf16 %v49
  %v82 = vunpack.c.l.bf16 %v50
  %v83 = vunpack.c.l.bf16 %v51
  %v84 = vunpack.c.l.bf16 %v52
  %v85 = vunpack.c.l.bf16 %v53
  %v86 = vunpack.c.l.bf16 %v54
  %v87 = vunpack.c.l.bf16 %v55
  %v88 = vunpack.c.l.bf16 %v56
  %v89 = vunpack.c.l.bf16 %v57
  %v90 = vunpack.c.l.bf16 %v58
  %v91 = vunpack.c.l.bf16 %v59
  %v92 = vunpack.c.l.bf16 %v60
  %v93 = vunpack.c.l.bf16 %v61
  %v94 = vunpack.c.l.bf16 %v62
  %v95 = vunpack.c.l.bf16 %v63
  %v96 = vunpack.c.l.bf16 %v64
  %v97 = vunpack.c.l.bf16 %v65
  %v98 = vunpack.c.l.bf16 %v66
  %v99 = vunpack.c.l.bf16 %v67
  %v100 = vunpack.c.l.bf16 %v68
  %v101 = vunpack.c.l.bf16 %v69
  %v102 = vunpack.c.l.bf16 %v70
  %v103 = vunpack.c.l.bf16 %v71
  %v104 = vunpack.c.l.bf16 %v72
  %v105 = vadd.f32 %v73, 0.0
  %v106 = vadd.f32 %v74, 0.0
  %v107 = vadd.f32 %v75, 0.0
  %v108 = vadd.f32 %v76, 0.0
  %v109 = vadd.f32 %v77, 0.0
  %v110 = vadd.f32 %v78, 0.0
  %v111 = vadd.f32 %v79, 0.0
  %v112 = vadd.f32 %v80, 0.0
  %v113 = vadd.f32 %v81, 0.0
  %v114 = vadd.f32 %v82, 0.0
  %v115 = vadd.f32 %v83, 0.0
  %v116 = vadd.f32 %v84, 0.0
  %v117 = vadd.f32 %v85, 0.0
  %v118 = vadd.f32 %v86, 0.0
  %v119 = vadd.f32 %v87, 0.0
  %v120 = vadd.f32 %v88, 0.0
  %v121 = vadd.f32 %v89, 0.0
  %v122 = vadd.f32 %v90, 0.0
  %v123 = vadd.f32 %v91, 0.0
  %v124 = vadd.f32 %v92, 0.0
  %v125 = vadd.f32 %v93, 0.0
  %v126 = vadd.f32 %v94, 0.0
  %v127 = vadd.f32 %v95, 0.0
  %v128 = vadd.f32 %v96, 0.0
  %v129 = vadd.f32 %v97, 0.0
  %v130 = vadd.f32 %v98, 0.0
  %v131 = vadd.f32 %v99, 0.0
  %v132 = vadd.f32 %v100, 0.0
  %v133 = vadd.f32 %v101, 0.0
  %v134 = vadd.f32 %v102, 0.0
  %v135 = vadd.f32 %v103, 0.0
  %v136 = vadd.f32 %v104, 0.0
  %v137 = vpack.c.bf16 %v105, %v105
  %v138 = vpack.c.bf16 %v106, %v106
  %v139 = vpack.c.bf16 %v107, %v107
  %v140 = vpack.c.bf16 %v108, %v108
  %v141 = vpack.c.bf16 %v109, %v109
  %v142 = vpack.c.bf16 %v110, %v110
  %v143 = vpack.c.bf16 %v111, %v111
  %v144 = vpack.c.bf16 %v112, %v112
  %v145 = vpack.c.bf16 %v113, %v113
  %v146 = vpack.c.bf16 %v114, %v114
  %v147 = vpack.c.bf16 %v115, %v115
  %v148 = vpack.c.bf16 %v116, %v116
  %v149 = vpack.c.bf16 %v117, %v117
  %v150 = vpack.c.bf16 %v118, %v118
  %v151 = vpack.c.bf16 %v119, %v119
  %v152 = vpack.c.bf16 %v120, %v120
  %v153 = vpack.c.bf16 %v121, %v121
  %v154 = vpack.c.bf16 %v122, %v122
  %v155 = vpack.c.bf16 %v123, %v123
  %v156 = vpack.c.bf16 %v124, %v124
  %v157 = vpack.c.bf16 %v125, %v125
  %v158 = vpack.c.bf16 %v126, %v126
  %v159 = vpack.c.bf16 %v127, %v127
  %v160 = vpack.c.bf16 %v128, %v128
  %v161 = vpack.c.bf16 %v129, %v129
  %v162 = vpack.c.bf16 %v130, %v130
  %v163 = vpack.c.bf16 %v131, %v131
  %v164 = vpack.c.bf16 %v132, %v132
  %v165 = vpack.c.bf16 %v133, %v133
  %v166 = vpack.c.bf16 %v134, %v134
  %v167 = vpack.c.bf16 %v135, %v135
  %v168 = vpack.c.bf16 %v136, %v136
  %v169 = vld [vmem:[%s1] sm:$0xf]
  %v170 = vld [vmem:[%s1 + $0x4] sm:$0xf]
  %v171 = vld [vmem:[%s2] sm:$0xff]
  %v172 = vld [vmem:[%s2 + $0x8] sm:$0xff]
  %174 = vset.pattern.permute.xlu0 0
  %175 = vperm.xlu0 %174, %v171
  %v176 = vpop.permute.xlu0 %175
  %179 = vset.pattern.permute.xlu0 0
  %180 = vperm.xlu0 %179, %v172
  %v181 = vpop.permute.xlu0 %180
  %v185 = vunpack.c.l.b16 %v169
  %v186 = vunpack.c.l.b16 %v170
  %v187 = vpack.c.b16 %v186, %v185
  %v220 = vunpack.c.l.b16 %v137
  %v221 = vunpack.c.l.b16 %v138
  %v222 = vunpack.c.l.b16 %v139
  %v223 = vunpack.c.l.b16 %v140
  %v224 = vunpack.c.l.b16 %v141
  %v225 = vunpack.c.l.b16 %v142
  %v226 = vunpack.c.l.b16 %v143
  %v227 = vunpack.c.l.b16 %v144
  %v228 = vunpack.c.l.b16 %v145
  %v229 = vunpack.c.l.b16 %v146
  %v230 = vunpack.c.l.b16 %v147
  %v231 = vunpack.c.l.b16 %v148
  %v232 = vunpack.c.l.b16 %v149
  %v233 = vunpack.c.l.b16 %v150
  %v234 = vunpack.c.l.b16 %v151
  %v235 = vunpack.c.l.b16 %v152
  %v236 = vunpack.c.l.b16 %v153
  %v237 = vunpack.c.l.b16 %v154
  %v238 = vunpack.c.l.b16 %v155
  %v239 = vunpack.c.l.b16 %v156
  %v240 = vunpack.c.l.b16 %v157
  %v241 = vunpack.c.l.b16 %v158
  %v242 = vunpack.c.l.b16 %v159
  %v243 = vunpack.c.l.b16 %v160
  %v244 = vunpack.c.l.b16 %v161
  %v245 = vunpack.c.l.b16 %v162
  %v246 = vunpack.c.l.b16 %v163
  %v247 = vunpack.c.l.b16 %v164
  %v248 = vunpack.c.l.b16 %v165
  %v249 = vunpack.c.l.b16 %v166
  %v250 = vunpack.c.l.b16 %v167
  %v251 = vunpack.c.l.b16 %v168
  %252 = vset.pattern.permute.xlu0 0
  %253 = vperm.xlu0 %252, %v220
  %v254 = vpop.permute.xlu0 %253
  %255 = vset.pattern.permute.xlu0 0
  %256 = vperm.xlu0 %255, %v221
  %v257 = vpop.permute.xlu0 %256
  %258 = vset.pattern.permute.xlu0 0
  %259 = vperm.xlu0 %258, %v222
  %v260 = vpop.permute.xlu0 %259
  %261 = vset.pattern.permute.xlu0 0
  %262 = vperm.xlu0 %261, %v223
  %v263 = vpop.permute.xlu0 %262
  %264 = vset.pattern.permute.xlu0 0
  %265 = vperm.xlu0 %264, %v224
  %v266 = vpop.permute.xlu0 %265
  %267 = vset.pattern.permute.xlu0 0
  %268 = vperm.xlu0 %267, %v225
  %v269 = vpop.permute.xlu0 %268
  %270 = vset.pattern.permute.xlu0 0
  %271 = vperm.xlu0 %270, %v226
  %v272 = vpop.permute.xlu0 %271
  %273 = vset.pattern.permute.xlu0 0
  %274 = vperm.xlu0 %273, %v227
  %v275 = vpop.permute.xlu0 %274
  %276 = vset.pattern.permute.xlu0 0
  %277 = vperm.xlu0 %276, %v228
  %v278 = vpop.permute.xlu0 %277
  %279 = vset.pattern.permute.xlu0 0
  %280 = vperm.xlu0 %279, %v229
  %v281 = vpop.permute.xlu0 %280
  %282 = vset.pattern.permute.xlu0 0
  %283 = vperm.xlu0 %282, %v230
  %v284 = vpop.permute.xlu0 %283
  %285 = vset.pattern.permute.xlu0 0
  %286 = vperm.xlu0 %285, %v231
  %v287 = vpop.permute.xlu0 %286
  %288 = vset.pattern.permute.xlu0 0
  %289 = vperm.xlu0 %288, %v232
  %v290 = vpop.permute.xlu0 %289
  %291 = vset.pattern.permute.xlu0 0
  %292 = vperm.xlu0 %291, %v233
  %v293 = vpop.permute.xlu0 %292
  %294 = vset.pattern.permute.xlu0 0
  %295 = vperm.xlu0 %294, %v234
  %v296 = vpop.permute.xlu0 %295
  %297 = vset.pattern.permute.xlu0 0
  %298 = vperm.xlu0 %297, %v235
  %v299 = vpop.permute.xlu0 %298
  %300 = vset.pattern.permute.xlu0 0
  %301 = vperm.xlu0 %300, %v236
  %v302 = vpop.permute.xlu0 %301
  %303 = vset.pattern.permute.xlu0 0
  %304 = vperm.xlu0 %303, %v237
  %v305 = vpop.permute.xlu0 %304
  %306 = vset.pattern.permute.xlu0 0
  %307 = vperm.xlu0 %306, %v238
  %v308 = vpop.permute.xlu0 %307
  %309 = vset.pattern.permute.xlu0 0
  %310 = vperm.xlu0 %309, %v239
  %v311 = vpop.permute.xlu0 %310
  %312 = vset.pattern.permute.xlu0 0
  %313 = vperm.xlu0 %312, %v240
  %v314 = vpop.permute.xlu0 %313
  %315 = vset.pattern.permute.xlu0 0
  %316 = vperm.xlu0 %315, %v241
  %v317 = vpop.permute.xlu0 %316
  %318 = vset.pattern.permute.xlu0 0
  %319 = vperm.xlu0 %318, %v242
  %v320 = vpop.permute.xlu0 %319
  %321 = vset.pattern.permute.xlu0 0
  %322 = vperm.xlu0 %321, %v243
  %v323 = vpop.permute.xlu0 %322
  %324 = vset.pattern.permute.xlu0 0
  %325 = vperm.xlu0 %324, %v244
  %v326 = vpop.permute.xlu0 %325
  %327 = vset.pattern.permute.xlu0 0
  %328 = vperm.xlu0 %327, %v245
  %v329 = vpop.permute.xlu0 %328
  %330 = vset.pattern.permute.xlu0 0
  %331 = vperm.xlu0 %330, %v246
  %v332 = vpop.permute.xlu0 %331
  %333 = vset.pattern.permute.xlu0 0
  %334 = vperm.xlu0 %333, %v247
  %v335 = vpop.permute.xlu0 %334
  %336 = vset.pattern.permute.xlu0 0
  %337 = vperm.xlu0 %336, %v248
  %v338 = vpop.permute.xlu0 %337
  %339 = vset.pattern.permute.xlu0 0
  %340 = vperm.xlu0 %339, %v249
  %v341 = vpop.permute.xlu0 %340
  %342 = vset.pattern.permute.xlu0 0
  %343 = vperm.xlu0 %342, %v250
  %v344 = vpop.permute.xlu0 %343
  %345 = vset.pattern.permute.xlu0 0
  %346 = vperm.xlu0 %345, %v251
  %v347 = vpop.permute.xlu0 %346
  %v348 = vlaneseq
  %v349 = vand.u32 %v348, 127
  %v350 = vlaneseq
  %v351 = vshrl.u32 %v350, 7
  %v352 = vsub.s32 %v349, %v351
  %v353 = vrot.slane %v254, %v352
  %v354 = vlaneseq
  %v355 = vshrl.u32 %v354, 7
  %v356 = vsub.s32 %v349, %v355
  %v357 = vrot.slane %v257, %v356
  %v358 = vlaneseq
  %v359 = vshrl.u32 %v358, 7
  %v360 = vsub.s32 %v349, %v359
  %v361 = vrot.slane %v260, %v360
  %v362 = vlaneseq
  %v363 = vshrl.u32 %v362, 7
  %v364 = vsub.s32 %v349, %v363
  %v365 = vrot.slane %v263, %v364
  %v366 = vlaneseq
  %v367 = vshrl.u32 %v366, 7
  %v368 = vsub.s32 %v349, %v367
  %v369 = vrot.slane %v266, %v368
  %v370 = vlaneseq
  %v371 = vshrl.u32 %v370, 7
  %v372 = vsub.s32 %v349, %v371
  %v373 = vrot.slane %v269, %v372
  %v374 = vlaneseq
  %v375 = vshrl.u32 %v374, 7
  %v376 = vsub.s32 %v349, %v375
  %v377 = vrot.slane %v272, %v376
  %v378 = vlaneseq
  %v379 = vshrl.u32 %v378, 7
  %v380 = vsub.s32 %v349, %v379
  %v381 = vrot.slane %v275, %v380
  %v382 = vlaneseq
  %v383 = vshrl.u32 %v382, 7
  %v384 = vsub.s32 %v349, %v383
  %v385 = vrot.slane %v278, %v384
  %v386 = vlaneseq
  %v387 = vshrl.u32 %v386, 7
  %v388 = vsub.s32 %v349, %v387
  %v389 = vrot.slane %v281, %v388
  %v390 = vlaneseq
  %v391 = vshrl.u32 %v390, 7
  %v392 = vsub.s32 %v349, %v391
  %v393 = vrot.slane %v284, %v392
  %v394 = vlaneseq
  %v395 = vshrl.u32 %v394, 7
  %v396 = vsub.s32 %v349, %v395
  %v397 = vrot.slane %v287, %v396
  %v398 = vlaneseq
  %v399 = vshrl.u32 %v398, 7
  %v400 = vsub.s32 %v349, %v399
  %v401 = vrot.slane %v290, %v400
  %v402 = vlaneseq
  %v403 = vshrl.u32 %v402, 7
  %v404 = vsub.s32 %v349, %v403
  %v405 = vrot.slane %v293, %v404
  %v406 = vlaneseq
  %v407 = vshrl.u32 %v406, 7
  %v408 = vsub.s32 %v349, %v407
  %v409 = vrot.slane %v296, %v408
  %v410 = vlaneseq
  %v411 = vshrl.u32 %v410, 7
  %v412 = vsub.s32 %v349, %v411
  %v413 = vrot.slane %v299, %v412
  %v414 = vlaneseq
  %v415 = vshrl.u32 %v414, 7
  %v416 = vsub.s32 %v349, %v415
  %v417 = vrot.slane %v302, %v416
  %v418 = vlaneseq
  %v419 = vshrl.u32 %v418, 7
  %v420 = vsub.s32 %v349, %v419
  %v421 = vrot.slane %v305, %v420
  %v422 = vlaneseq
  %v423 = vshrl.u32 %v422, 7
  %v424 = vsub.s32 %v349, %v423
  %v425 = vrot.slane %v308, %v424
  %v426 = vlaneseq
  %v427 = vshrl.u32 %v426, 7
  %v428 = vsub.s32 %v349, %v427
  %v429 = vrot.slane %v311, %v428
  %v430 = vlaneseq
  %v431 = vshrl.u32 %v430, 7
  %v432 = vsub.s32 %v349, %v431
  %v433 = vrot.slane %v314, %v432
  %v434 = vlaneseq
  %v435 = vshrl.u32 %v434, 7
  %v436 = vsub.s32 %v349, %v435
  %v437 = vrot.slane %v317, %v436
  %v438 = vlaneseq
  %v439 = vshrl.u32 %v438, 7
  %v440 = vsub.s32 %v349, %v439
  %v441 = vrot.slane %v320, %v440
  %v442 = vlaneseq
  %v443 = vshrl.u32 %v442, 7
  %v444 = vsub.s32 %v349, %v443
  %v445 = vrot.slane %v323, %v444
  %v446 = vlaneseq
  %v447 = vshrl.u32 %v446, 7
  %v448 = vsub.s32 %v349, %v447
  %v449 = vrot.slane %v326, %v448
  %v450 = vlaneseq
  %v451 = vshrl.u32 %v450, 7
  %v452 = vsub.s32 %v349, %v451
  %v453 = vrot.slane %v329, %v452
  %v454 = vlaneseq
  %v455 = vshrl.u32 %v454, 7
  %v456 = vsub.s32 %v349, %v455
  %v457 = vrot.slane %v332, %v456
  %v458 = vlaneseq
  %v459 = vshrl.u32 %v458, 7
  %v460 = vsub.s32 %v349, %v459
  %v461 = vrot.slane %v335, %v460
  %v462 = vlaneseq
  %v463 = vshrl.u32 %v462, 7
  %v464 = vsub.s32 %v349, %v463
  %v465 = vrot.slane %v338, %v464
  %v466 = vlaneseq
  %v467 = vshrl.u32 %v466, 7
  %v468 = vsub.s32 %v349, %v467
  %v469 = vrot.slane %v341, %v468
  %v470 = vlaneseq
  %v471 = vshrl.u32 %v470, 7
  %v472 = vsub.s32 %v349, %v471
  %v473 = vrot.slane %v344, %v472
  %v474 = vlaneseq
  %v475 = vshrl.u32 %v474, 7
  %v476 = vsub.s32 %v349, %v475
  %v477 = vrot.slane %v347, %v476
  %vm478 = vcmask 1041409
  %v479 = vsel %vm478, %v357, %v353
  %vm480 = vcmask 1042434
  %v481 = vsel %vm480, %v361, %v479
  %vm482 = vcmask 1043459
  %v483 = vsel %vm482, %v365, %v481
  %vm484 = vcmask 1044484
  %v485 = vsel %vm484, %v369, %v483
  %vm486 = vcmask 1045509
  %v487 = vsel %vm486, %v373, %v485
  %vm488 = vcmask 1046534
  %v489 = vsel %vm488, %v377, %v487
  %vm490 = vcmask 1047559
  %v491 = vsel %vm490, %v381, %v489
  %v492 = vsel %vm478, %v389, %v385
  %v493 = vsel %vm480, %v393, %v492
  %v494 = vsel %vm482, %v397, %v493
  %v495 = vsel %vm484, %v401, %v494
  %v496 = vsel %vm486, %v405, %v495
  %v497 = vsel %vm488, %v409, %v496
  %v498 = vsel %vm490, %v413, %v497
  %v499 = vsel %vm478, %v421, %v417
  %v500 = vsel %vm480, %v425, %v499
  %v501 = vsel %vm482, %v429, %v500
  %v502 = vsel %vm484, %v433, %v501
  %v503 = vsel %vm486, %v437, %v502
  %v504 = vsel %vm488, %v441, %v503
  %v505 = vsel %vm490, %v445, %v504
  %v506 = vsel %vm478, %v453, %v449
  %v507 = vsel %vm480, %v457, %v506
  %v508 = vsel %vm482, %v461, %v507
  %v509 = vsel %vm484, %v465, %v508
  %v510 = vsel %vm486, %v469, %v509
  %v511 = vsel %vm488, %v473, %v510
  %v512 = vsel %vm490, %v477, %v511
  %v513 = vpack.c.b16 %v498, %v491
  %v514 = vpack.c.b16 %v512, %v505
  %vm517 = vcmask 261120
  %v519 = vsel %vm517, %v187, 0
  %521 = vmatprep.subr.bf16.mxu0 0
  %522 = vmatpush1.bf16.msra.mxu0 %v513
  %523 = vmatprep.subr.bf16.mxu0 0
  %524 = vmatpush1.bf16.msra.mxu0 %v514
  %525 = vmatprep.subr.bf16.mxu0 0
  %526 = vmatpush1.bf16.msra.mxu0 0
  %527 = vmatprep.subr.bf16.mxu0 0
  %528 = vmatpush1.bf16.msra.mxu0 0
  %529 = vmatprep.subr.bf16.mxu0 0
  %530 = vmatpush1.bf16.msra.mxu0 0
  %531 = vmatprep.subr.bf16.mxu0 0
  %532 = vmatpush1.bf16.msra.mxu0 0
  %533 = vmatprep.subr.bf16.mxu0 0
  %534 = vmatpush1.bf16.msra.mxu0 0
  %535 = vmatprep.subr.bf16.mxu0 0
  %536 = vmatpush1.bf16.msra.mxu0 0
  %537 = vmatprep.subr.bf16.mxu0 0
  %538 = vmatpush1.bf16.msra.mxu0 0
  %539 = vmatprep.subr.bf16.mxu0 0
  %540 = vmatpush1.bf16.msra.mxu0 0
  %541 = vmatprep.subr.bf16.mxu0 0
  %542 = vmatpush1.bf16.msra.mxu0 0
  %543 = vmatprep.subr.bf16.mxu0 0
  %544 = vmatpush1.bf16.msra.mxu0 0
  %545 = vmatprep.subr.bf16.mxu0 0
  %546 = vmatpush1.bf16.msra.mxu0 0
  %547 = vmatprep.subr.bf16.mxu0 0
  %548 = vmatpush1.bf16.msra.mxu0 0
  %549 = vmatprep.subr.bf16.mxu0 0
  %550 = vmatpush1.bf16.msra.mxu0 0
  %551 = vmatprep.subr.bf16.mxu0 0
  %552 = vmatpush1.bf16.msra.mxu0 0
  %553 = vmatprep.mubr.bf16.mxu0 0
  %554 = vmatmul.mubr.bf16.gmra.mrb[0].mxu0 %v519
  %v555 = vpop.f32.mrb[0].mxu0
  %v556 = vadd.f32 %v176, %v555
  %v557 = vpop.f32.mrb[0].mxu0
  %v558 = vpop.f32.mrb[0].mxu0
  %v559 = vadd.f32 %v181, %v558
  %v560 = vpop.f32.mrb[0].mxu0
  %561 = vdwg.mxu0
  %v562 = vmax.f32 %v556, 0.0
  %v563 = vmax.f32 %v559, 0.0
  %v564 = vld [vmem:[%s3] sm:$0x1]
  %v565 = vpack.c.bf16 %v563, %v562
  %v566 = vld [vmem:[%s4] sm:$0x3]
  %568 = vset.pattern.permute.xlu0 0
  %569 = vperm.xlu0 %568, %v566
  %v570 = vpop.permute.xlu0 %569
  %vm572 = vcmask 130048
  %v574 = vsel %vm572, %v564, 0
  %576 = vmatprep.subr.bf16.mxu0 0
  %577 = vmatpush1.bf16.msra.mxu0 %v565
  %578 = vmatprep.subr.bf16.mxu0 0
  %579 = vmatpush1.bf16.msra.mxu0 0
  %580 = vmatprep.subr.bf16.mxu0 0
  %581 = vmatpush1.bf16.msra.mxu0 0
  %582 = vmatprep.subr.bf16.mxu0 0
  %583 = vmatpush1.bf16.msra.mxu0 0
  %584 = vmatprep.subr.bf16.mxu0 0
  %585 = vmatpush1.bf16.msra.mxu0 0
  %586 = vmatprep.subr.bf16.mxu0 0
  %587 = vmatpush1.bf16.msra.mxu0 0
  %588 = vmatprep.subr.bf16.mxu0 0
  %589 = vmatpush1.bf16.msra.mxu0 0
  %590 = vmatprep.subr.bf16.mxu0 0
  %591 = vmatpush1.bf16.msra.mxu0 0
  %592 = vmatprep.subr.bf16.mxu0 0
  %593 = vmatpush1.bf16.msra.mxu0 0
  %594 = vmatprep.subr.bf16.mxu0 0
  %595 = vmatpush1.bf16.msra.mxu0 0
  %596 = vmatprep.subr.bf16.mxu0 0
  %597 = vmatpush1.bf16.msra.mxu0 0
  %598 = vmatprep.subr.bf16.mxu0 0
  %599 = vmatpush1.bf16.msra.mxu0 0
  %600 = vmatprep.subr.bf16.mxu0 0
  %601 = vmatpush1.bf16.msra.mxu0 0
  %602 = vmatprep.subr.bf16.mxu0 0
  %603 = vmatpush1.bf16.msra.mxu0 0
  %604 = vmatprep.subr.bf16.mxu0 0
  %605 = vmatpush1.bf16.msra.mxu0 0
  %606 = vmatprep.subr.bf16.mxu0 0
  %607 = vmatpush1.bf16.msra.mxu0 0
  %608 = vmatprep.mubr.bf16.mxu0 0
  %609 = vmatmul.mubr.bf16.gmra.mrb[0].mxu0 %v574
  %v610 = vpop.f32.mrb[0].mxu0
  %v611 = vadd.f32 %v570, %v610
  %v612 = vpop.f32.mrb[0].mxu0
  %v613 = vpop.f32.mrb[0].mxu0
  %v614 = vpop.f32.mrb[0].mxu0
  %615 = vdwg.mxu0
  %vm616 = vcmask 9216
  %617 = vst.msk [vmem:[%s12] sm:$0x3] %vm616, %v611
  %v618 = vld [vmem:[%s5] sm:$0xf]
  %v619 = vld [vmem:[%s5 + $0x4] sm:$0xf]
  %v620 = vld [vmem:[%s5 + $0x8] sm:$0xf]
  %v621 = vld [vmem:[%s5 + $0xc] sm:$0xf]
  %v622 = vld [vmem:[%s6] sm:$0xff]
  %v623 = vld [vmem:[%s6 + $0x8] sm:$0xff]
  %v624 = vld [vmem:[%s6 + $0x10] sm:$0xff]
  %v625 = vld [vmem:[%s6 + $0x18] sm:$0xff]
  %627 = vset.pattern.permute.xlu0 0
  %628 = vperm.xlu0 %627, %v622
  %v629 = vpop.permute.xlu0 %628
  %632 = vset.pattern.permute.xlu0 0
  %633 = vperm.xlu0 %632, %v623
  %v634 = vpop.permute.xlu0 %633
  %637 = vset.pattern.permute.xlu0 0
  %638 = vperm.xlu0 %637, %v624
  %v639 = vpop.permute.xlu0 %638
  %642 = vset.pattern.permute.xlu0 0
  %643 = vperm.xlu0 %642, %v625
  %v644 = vpop.permute.xlu0 %643
  %v650 = vunpack.c.l.b16 %v618
  %v651 = vunpack.c.l.b16 %v619
  %v652 = vunpack.c.l.b16 %v620
  %v653 = vunpack.c.l.b16 %v621
  %v654 = vpack.c.b16 %v651, %v650
  %v655 = vpack.c.b16 %v653, %v652
  %v657 = vsel %vm517, %v654, 0
  %v660 = vsel %vm517, %v655, 0
  %662 = vmatprep.subr.bf16.mxu0 0
  %663 = vmatpush1.bf16.msra.mxu0 %v513
  %664 = vmatprep.subr.bf16.mxu0 0
  %665 = vmatpush1.bf16.msra.mxu0 %v514
  %666 = vmatprep.subr.bf16.mxu0 0
  %667 = vmatpush1.bf16.msra.mxu0 0
  %668 = vmatprep.subr.bf16.mxu0 0
  %669 = vmatpush1.bf16.msra.mxu0 0
  %670 = vmatprep.subr.bf16.mxu0 0
  %671 = vmatpush1.bf16.msra.mxu0 0
  %672 = vmatprep.subr.bf16.mxu0 0
  %673 = vmatpush1.bf16.msra.mxu0 0
  %674 = vmatprep.subr.bf16.mxu0 0
  %675 = vmatpush1.bf16.msra.mxu0 0
  %676 = vmatprep.subr.bf16.mxu0 0
  %677 = vmatpush1.bf16.msra.mxu0 0
  %678 = vmatprep.subr.bf16.mxu0 0
  %679 = vmatpush1.bf16.msra.mxu0 0
  %680 = vmatprep.subr.bf16.mxu0 0
  %681 = vmatpush1.bf16.msra.mxu0 0
  %682 = vmatprep.subr.bf16.mxu0 0
  %683 = vmatpush1.bf16.msra.mxu0 0
  %684 = vmatprep.subr.bf16.mxu0 0
  %685 = vmatpush1.bf16.msra.mxu0 0
  %686 = vmatprep.subr.bf16.mxu0 0
  %687 = vmatpush1.bf16.msra.mxu0 0
  %688 = vmatprep.subr.bf16.mxu0 0
  %689 = vmatpush1.bf16.msra.mxu0 0
  %690 = vmatprep.subr.bf16.mxu0 0
  %691 = vmatpush1.bf16.msra.mxu0 0
  %692 = vmatprep.subr.bf16.mxu0 0
  %693 = vmatpush1.bf16.msra.mxu0 0
  %694 = vmatprep.mubr.bf16.mxu0 0
  %695 = vmatmul.mubr.bf16.gmra.mrb[0].mxu0 %v657
  %v696 = vpop.f32.mrb[0].mxu0
  %v697 = vadd.f32 %v629, %v696
  %v698 = vpop.f32.mrb[0].mxu0
  %v699 = vpop.f32.mrb[0].mxu0
  %v700 = vadd.f32 %v634, %v699
  %v701 = vpop.f32.mrb[0].mxu0
  %702 = vmatprep.mubr.bf16.mxu0 0
  %703 = vmatmul.mubr.bf16.gmra.mrb[0].mxu0 %v660
  %v704 = vpop.f32.mrb[0].mxu0
  %v705 = vadd.f32 %v639, %v704
  %v706 = vpop.f32.mrb[0].mxu0
  %v707 = vpop.f32.mrb[0].mxu0
  %v708 = vadd.f32 %v644, %v707
  %v709 = vpop.f32.mrb[0].mxu0
  %710 = vdwg.mxu0
  %v711 = vld [vmem:[%s7] sm:$0xff]
  %v712 = vld [vmem:[%s7 + $0x8] sm:$0xff]
  %v713 = vld [vmem:[%s7 + $0x10] sm:$0xff]
  %v714 = vld [vmem:[%s7 + $0x18] sm:$0xff]
  %v715 = vld [vmem:[%s8] sm:$0xff]
  %v716 = vld [vmem:[%s8 + $0x8] sm:$0xff]
  %v717 = vld [vmem:[%s8 + $0x10] sm:$0xff]
  %v718 = vld [vmem:[%s8 + $0x18] sm:$0xff]
  %vm719 = vcmask 15360
  %v720 = vsel %vm719, %v697, 0.0
  %721 = vadd.xlane.f32.xlu0 %v720
  %v722 = vpop.xlane.xlu0 %721
  %v723 = vsel %vm719, %v700, 0.0
  %724 = vadd.xlane.f32.xlu0 %v723
  %v725 = vpop.xlane.xlu0 %724
  %v726 = vsel %vm719, %v705, 0.0
  %727 = vadd.xlane.f32.xlu0 %v726
  %v728 = vpop.xlane.xlu0 %727
  %v729 = vsel %vm719, %v708, 0.0
  %730 = vadd.xlane.f32.xlu0 %v729
  %v731 = vpop.xlane.xlu0 %730
  %v732 = vrcp.pop 2.0
  %v733 = vmul.f32 %v722, %v732
  %v734 = vmul.f32 %v725, %v732
  %v735 = vmul.f32 %v728, %v732
  %v736 = vmul.f32 %v731, %v732
  %v737 = vsub.f32 %v697, %v733
  %v738 = vsub.f32 %v700, %v734
  %v739 = vsub.f32 %v705, %v735
  %v740 = vsub.f32 %v708, %v736
  %v741 = vmul.f32 %v737, %v737
  %v742 = vmul.f32 %v738, %v738
  %v743 = vmul.f32 %v739, %v739
  %v744 = vmul.f32 %v740, %v740
  %v745 = vsel %vm719, %v741, 0.0
  %746 = vadd.xlane.f32.xlu0 %v745
  %v747 = vpop.xlane.xlu0 %746
  %v748 = vsel %vm719, %v742, 0.0
  %749 = vadd.xlane.f32.xlu0 %v748
  %v750 = vpop.xlane.xlu0 %749
  %v751 = vsel %vm719, %v743, 0.0
  %752 = vadd.xlane.f32.xlu0 %v751
  %v753 = vpop.xlane.xlu0 %752
  %v754 = vsel %vm719, %v744, 0.0
  %755 = vadd.xlane.f32.xlu0 %v754
  %v756 = vpop.xlane.xlu0 %755
  %v757 = vmul.f32 %v747, %v732
  %v758 = vmul.f32 %v750, %v732
  %v759 = vmul.f32 %v753, %v732
  %v760 = vmul.f32 %v756, %v732
  %v761 = vadd.f32 %v757, 1e-05
  %v762 = vadd.f32 %v758, 1e-05
  %v763 = vadd.f32 %v759, 1e-05
  %v764 = vadd.f32 %v760, 1e-05
  %v765 = vrsqrt.pop %v761
  %v766 = vrsqrt.pop %v762
  %v767 = vrsqrt.pop %v763
  %v768 = vrsqrt.pop %v764
  %v769 = vmul.f32 %v737, %v765
  %v770 = vmul.f32 %v738, %v766
  %v771 = vmul.f32 %v739, %v767
  %v772 = vmul.f32 %v740, %v768
  %774 = vset.pattern.permute.xlu0 0
  %775 = vperm.xlu0 %774, %v711
  %v776 = vpop.permute.xlu0 %775
  %779 = vset.pattern.permute.xlu0 0
  %780 = vperm.xlu0 %779, %v712
  %v781 = vpop.permute.xlu0 %780
  %784 = vset.pattern.permute.xlu0 0
  %785 = vperm.xlu0 %784, %v713
  %v786 = vpop.permute.xlu0 %785
  %789 = vset.pattern.permute.xlu0 0
  %790 = vperm.xlu0 %789, %v714
  %v791 = vpop.permute.xlu0 %790
  %v793 = vmul.f32 %v769, %v776
  %v794 = vmul.f32 %v770, %v781
  %v795 = vmul.f32 %v771, %v786
  %v796 = vmul.f32 %v772, %v791
  %798 = vset.pattern.permute.xlu0 0
  %799 = vperm.xlu0 %798, %v715
  %v800 = vpop.permute.xlu0 %799
  %803 = vset.pattern.permute.xlu0 0
  %804 = vperm.xlu0 %803, %v716
  %v805 = vpop.permute.xlu0 %804
  %808 = vset.pattern.permute.xlu0 0
  %809 = vperm.xlu0 %808, %v717
  %v810 = vpop.permute.xlu0 %809
  %813 = vset.pattern.permute.xlu0 0
  %814 = vperm.xlu0 %813, %v718
  %v815 = vpop.permute.xlu0 %814
  %v817 = vadd.f32 %v793, %v800
  %v818 = vadd.f32 %v794, %v805
  %v819 = vadd.f32 %v795, %v810
  %v820 = vadd.f32 %v796, %v815
  %v821 = vmax.f32 %v817, 0.0
  %v822 = vmax.f32 %v818, 0.0
  %v823 = vmax.f32 %v819, 0.0
  %v824 = vmax.f32 %v820, 0.0
  %v825 = vld [vmem:[%s9] sm:$0xf]
  %v826 = vld [vmem:[%s9 + $0x4] sm:$0xf]
  %v827 = vld [vmem:[%s9 + $0x8] sm:$0xf]
  %v828 = vld [vmem:[%s9 + $0xc] sm:$0xf]
  %v829 = vld [vmem:[%s9 + $0x10] sm:$0xf]
  %v830 = vld [vmem:[%s9 + $0x14] sm:$0xf]
  %v831 = vld [vmem:[%s9 + $0x18] sm:$0xf]
  %v832 = vld [vmem:[%s9 + $0x1c] sm:$0xf]
  %v833 = vld [vmem:[%s9 + $0x20] sm:$0xf]
  %v834 = vld [vmem:[%s9 + $0x24] sm:$0xf]
  %v835 = vld [vmem:[%s9 + $0x28] sm:$0xf]
  %v836 = vld [vmem:[%s9 + $0x2c] sm:$0xf]
  %v837 = vld [vmem:[%s9 + $0x30] sm:$0xf]
  %v838 = vld [vmem:[%s9 + $0x34] sm:$0xf]
  %v839 = vld [vmem:[%s9 + $0x38] sm:$0xf]
  %v840 = vld [vmem:[%s9 + $0x3c] sm:$0xf]
  %v841 = vld [vmem:[%s9 + $0x40] sm:$0xf]
  %v842 = vld [vmem:[%s9 + $0x44] sm:$0xf]
  %v843 = vld [vmem:[%s9 + $0x48] sm:$0xf]
  %v844 = vld [vmem:[%s9 + $0x4c] sm:$0xf]
  %v845 = vld [vmem:[%s9 + $0x50] sm:$0xf]
  %v846 = vld [vmem:[%s9 + $0x54] sm:$0xf]
  %v847 = vld [vmem:[%s9 + $0x58] sm:$0xf]
  %v848 = vld [vmem:[%s9 + $0x5c] sm:$0xf]
  %v849 = vld [vmem:[%s9 + $0x60] sm:$0xf]
  %v850 = vld [vmem:[%s9 + $0x64] sm:$0xf]
  %v851 = vld [vmem:[%s9 + $0x68] sm:$0xf]
  %v852 = vld [vmem:[%s9 + $0x6c] sm:$0xf]
  %v853 = vld [vmem:[%s9 + $0x70] sm:$0xf]
  %v854 = vld [vmem:[%s9 + $0x74] sm:$0xf]
  %v855 = vld [vmem:[%s9 + $0x78] sm:$0xf]
  %v856 = vld [vmem:[%s9 + $0x7c] sm:$0xf]
  %v857 = vld [vmem:[%s9 + $0x80] sm:$0xf]
  %v858 = vld [vmem:[%s9 + $0x84] sm:$0xf]
  %v859 = vld [vmem:[%s9 + $0x88] sm:$0xf]
  %v860 = vld [vmem:[%s9 + $0x8c] sm:$0xf]
  %v861 = vld [vmem:[%s9 + $0x90] sm:$0xf]
  %v862 = vld [vmem:[%s9 + $0x94] sm:$0xf]
  %v863 = vld [vmem:[%s9 + $0x98] sm:$0xf]
  %v864 = vld [vmem:[%s9 + $0x9c] sm:$0xf]
  %v865 = vld [vmem:[%s9 + $0xa0] sm:$0xf]
  %v866 = vld [vmem:[%s9 + $0xa4] sm:$0xf]
  %v867 = vld [vmem:[%s9 + $0xa8] sm:$0xf]
  %v868 = vld [vmem:[%s9 + $0xac] sm:$0xf]
  %v869 = vld [vmem:[%s9 + $0xb0] sm:$0xf]
  %v870 = vld [vmem:[%s9 + $0xb4] sm:$0xf]
  %v871 = vld [vmem:[%s9 + $0xb8] sm:$0xf]
  %v872 = vld [vmem:[%s9 + $0xbc] sm:$0xf]
  %v873 = vld [vmem:[%s9 + $0xc0] sm:$0xf]
  %v874 = vld [vmem:[%s9 + $0xc4] sm:$0xf]
  %v875 = vld [vmem:[%s9 + $0xc8] sm:$0xf]
  %v876 = vld [vmem:[%s9 + $0xcc] sm:$0xf]
  %v877 = vld [vmem:[%s9 + $0xd0] sm:$0xf]
  %v878 = vld [vmem:[%s9 + $0xd4] sm:$0xf]
  %v879 = vld [vmem:[%s9 + $0xd8] sm:$0xf]
  %v880 = vld [vmem:[%s9 + $0xdc] sm:$0xf]
  %v881 = vld [vmem:[%s9 + $0xe0] sm:$0xf]
  %v882 = vld [vmem:[%s9 + $0xe4] sm:$0xf]
  %v883 = vld [vmem:[%s9 + $0xe8] sm:$0xf]
  %v884 = vld [vmem:[%s9 + $0xec] sm:$0xf]
  %v885 = vld [vmem:[%s9 + $0xf0] sm:$0xf]
  %v886 = vld [vmem:[%s9 + $0xf4] sm:$0xf]
  %v887 = vld [vmem:[%s9 + $0xf8] sm:$0xf]
  %v888 = vld [vmem:[%s9 + $0xfc] sm:$0xf]
  %v889 = vpack.c.bf16 %v822, %v821
  %v890 = vpack.c.bf16 %v824, %v823
  %v891 = vld [vmem:[%s10] sm:$0xff]
  %v892 = vld [vmem:[%s10 + $0x8] sm:$0xff]
  %v893 = vld [vmem:[%s10 + $0x10] sm:$0xff]
  %v894 = vld [vmem:[%s10 + $0x18] sm:$0xff]
  %v895 = vld [vmem:[%s10 + $0x20] sm:$0xff]
  %v896 = vld [vmem:[%s10 + $0x28] sm:$0xff]
  %v897 = vld [vmem:[%s10 + $0x30] sm:$0xff]
  %v898 = vld [vmem:[%s10 + $0x38] sm:$0xff]
  %v899 = vld [vmem:[%s10 + $0x40] sm:$0xff]
  %v900 = vld [vmem:[%s10 + $0x48] sm:$0xff]
  %v901 = vld [vmem:[%s10 + $0x50] sm:$0xff]
  %v902 = vld [vmem:[%s10 + $0x58] sm:$0xff]
  %v903 = vld [vmem:[%s10 + $0x60] sm:$0xff]
  %v904 = vld [vmem:[%s10 + $0x68] sm:$0xff]
  %v905 = vld [vmem:[%s10 + $0x70] sm:$0xff]
  %v906 = vld [vmem:[%s10 + $0x78] sm:$0xff]
  %v907 = vld [vmem:[%s10 + $0x80] sm:$0xff]
  %v908 = vld [vmem:[%s10 + $0x88] sm:$0xff]
  %v909 = vld [vmem:[%s10 + $0x90] sm:$0xff]
  %v910 = vld [vmem:[%s10 + $0x98] sm:$0xff]
  %v911 = vld [vmem:[%s10 + $0xa0] sm:$0xff]
  %v912 = vld [vmem:[%s10 + $0xa8] sm:$0xff]
  %v913 = vld [vmem:[%s10 + $0xb0] sm:$0xff]
  %v914 = vld [vmem:[%s10 + $0xb8] sm:$0xff]
  %v915 = vld [vmem:[%s10 + $0xc0] sm:$0xff]
  %v916 = vld [vmem:[%s10 + $0xc8] sm:$0xff]
  %v917 = vld [vmem:[%s10 + $0xd0] sm:$0xff]
  %v918 = vld [vmem:[%s10 + $0xd8] sm:$0xff]
  %v919 = vld [vmem:[%s10 + $0xe0] sm:$0xff]
  %v920 = vld [vmem:[%s10 + $0xe8] sm:$0xff]
  %v921 = vld [vmem:[%s10 + $0xf0] sm:$0xff]
  %v922 = vld [vmem:[%s10 + $0xf8] sm:$0xff]
  %v923 = vld [vmem:[%s10 + $0x100] sm:$0xff]
  %v924 = vld [vmem:[%s10 + $0x108] sm:$0xff]
  %v925 = vld [vmem:[%s10 + $0x110] sm:$0xff]
  %v926 = vld [vmem:[%s10 + $0x118] sm:$0xff]
  %v927 = vld [vmem:[%s10 + $0x120] sm:$0xff]
  %v928 = vld [vmem:[%s10 + $0x128] sm:$0xff]
  %v929 = vld [vmem:[%s10 + $0x130] sm:$0xff]
  %v930 = vld [vmem:[%s10 + $0x138] sm:$0xff]
  %v931 = vld [vmem:[%s10 + $0x140] sm:$0xff]
  %v932 = vld [vmem:[%s10 + $0x148] sm:$0xff]
  %v933 = vld [vmem:[%s10 + $0x150] sm:$0xff]
  %v934 = vld [vmem:[%s10 + $0x158] sm:$0xff]
  %v935 = vld [vmem:[%s10 + $0x160] sm:$0xff]
  %v936 = vld [vmem:[%s10 + $0x168] sm:$0xff]
  %v937 = vld [vmem:[%s10 + $0x170] sm:$0xff]
  %v938 = vld [vmem:[%s10 + $0x178] sm:$0xff]
  %v939 = vld [vmem:[%s10 + $0x180] sm:$0xff]
  %v940 = vld [vmem:[%s10 + $0x188] sm:$0xff]
  %v941 = vld [vmem:[%s10 + $0x190] sm:$0xff]
  %v942 = vld [vmem:[%s10 + $0x198] sm:$0xff]
  %v943 = vld [vmem:[%s10 + $0x1a0] sm:$0xff]
  %v944 = vld [vmem:[%s10 + $0x1a8] sm:$0xff]
  %v945 = vld [vmem:[%s10 + $0x1b0] sm:$0xff]
  %v946 = vld [vmem:[%s10 + $0x1b8] sm:$0xff]
  %v947 = vld [vmem:[%s10 + $0x1c0] sm:$0xff]
  %v948 = vld [vmem:[%s10 + $0x1c8] sm:$0xff]
  %v949 = vld [vmem:[%s10 + $0x1d0] sm:$0xff]
  %v950 = vld [vmem:[%s10 + $0x1d8] sm:$0xff]
  %v951 = vld [vmem:[%s10 + $0x1e0] sm:$0xff]
  %v952 = vld [vmem:[%s10 + $0x1e8] sm:$0xff]
  %v953 = vld [vmem:[%s10 + $0x1f0] sm:$0xff]
  %v954 = vld [vmem:[%s10 + $0x1f8] sm:$0xff]
  %956 = vset.pattern.permute.xlu0 0
  %957 = vperm.xlu0 %956, %v891
  %v958 = vpop.permute.xlu0 %957
  %961 = vset.pattern.permute.xlu0 0
  %962 = vperm.xlu0 %961, %v892
  %v963 = vpop.permute.xlu0 %962
  %966 = vset.pattern.permute.xlu0 0
  %967 = vperm.xlu0 %966, %v893
  %v968 = vpop.permute.xlu0 %967
  %971 = vset.pattern.permute.xlu0 0
  %972 = vperm.xlu0 %971, %v894
  %v973 = vpop.permute.xlu0 %972
  %976 = vset.pattern.permute.xlu0 0
  %977 = vperm.xlu0 %976, %v895
  %v978 = vpop.permute.xlu0 %977
  %981 = vset.pattern.permute.xlu0 0
  %982 = vperm.xlu0 %981, %v896
  %v983 = vpop.permute.xlu0 %982
  %986 = vset.pattern.permute.xlu0 0
  %987 = vperm.xlu0 %986, %v897
  %v988 = vpop.permute.xlu0 %987
  %991 = vset.pattern.permute.xlu0 0
  %992 = vperm.xlu0 %991, %v898
  %v993 = vpop.permute.xlu0 %992
  %996 = vset.pattern.permute.xlu0 0
  %997 = vperm.xlu0 %996, %v899
  %v998 = vpop.permute.xlu0 %997
  %1001 = vset.pattern.permute.xlu0 0
  %1002 = vperm.xlu0 %1001, %v900
  %v1003 = vpop.permute.xlu0 %1002
  %1006 = vset.pattern.permute.xlu0 0
  %1007 = vperm.xlu0 %1006, %v901
  %v1008 = vpop.permute.xlu0 %1007
  %1011 = vset.pattern.permute.xlu0 0
  %1012 = vperm.xlu0 %1011, %v902
  %v1013 = vpop.permute.xlu0 %1012
  %1016 = vset.pattern.permute.xlu0 0
  %1017 = vperm.xlu0 %1016, %v903
  %v1018 = vpop.permute.xlu0 %1017
  %1021 = vset.pattern.permute.xlu0 0
  %1022 = vperm.xlu0 %1021, %v904
  %v1023 = vpop.permute.xlu0 %1022
  %1026 = vset.pattern.permute.xlu0 0
  %1027 = vperm.xlu0 %1026, %v905
  %v1028 = vpop.permute.xlu0 %1027
  %1031 = vset.pattern.permute.xlu0 0
  %1032 = vperm.xlu0 %1031, %v906
  %v1033 = vpop.permute.xlu0 %1032
  %1036 = vset.pattern.permute.xlu0 0
  %1037 = vperm.xlu0 %1036, %v907
  %v1038 = vpop.permute.xlu0 %1037
  %1041 = vset.pattern.permute.xlu0 0
  %1042 = vperm.xlu0 %1041, %v908
  %v1043 = vpop.permute.xlu0 %1042
  %1046 = vset.pattern.permute.xlu0 0
  %1047 = vperm.xlu0 %1046, %v909
  %v1048 = vpop.permute.xlu0 %1047
  %1051 = vset.pattern.permute.xlu0 0
  %1052 = vperm.xlu0 %1051, %v910
  %v1053 = vpop.permute.xlu0 %1052
  %1056 = vset.pattern.permute.xlu0 0
  %1057 = vperm.xlu0 %1056, %v911
  %v1058 = vpop.permute.xlu0 %1057
  %1061 = vset.pattern.permute.xlu0 0
  %1062 = vperm.xlu0 %1061, %v912
  %v1063 = vpop.permute.xlu0 %1062
  %1066 = vset.pattern.permute.xlu0 0
  %1067 = vperm.xlu0 %1066, %v913
  %v1068 = vpop.permute.xlu0 %1067
  %1071 = vset.pattern.permute.xlu0 0
  %1072 = vperm.xlu0 %1071, %v914
  %v1073 = vpop.permute.xlu0 %1072
  %1076 = vset.pattern.permute.xlu0 0
  %1077 = vperm.xlu0 %1076, %v915
  %v1078 = vpop.permute.xlu0 %1077
  %1081 = vset.pattern.permute.xlu0 0
  %1082 = vperm.xlu0 %1081, %v916
  %v1083 = vpop.permute.xlu0 %1082
  %1086 = vset.pattern.permute.xlu0 0
  %1087 = vperm.xlu0 %1086, %v917
  %v1088 = vpop.permute.xlu0 %1087
  %1091 = vset.pattern.permute.xlu0 0
  %1092 = vperm.xlu0 %1091, %v918
  %v1093 = vpop.permute.xlu0 %1092
  %1096 = vset.pattern.permute.xlu0 0
  %1097 = vperm.xlu0 %1096, %v919
  %v1098 = vpop.permute.xlu0 %1097
  %1101 = vset.pattern.permute.xlu0 0
  %1102 = vperm.xlu0 %1101, %v920
  %v1103 = vpop.permute.xlu0 %1102
  %1106 = vset.pattern.permute.xlu0 0
  %1107 = vperm.xlu0 %1106, %v921
  %v1108 = vpop.permute.xlu0 %1107
  %1111 = vset.pattern.permute.xlu0 0
  %1112 = vperm.xlu0 %1111, %v922
  %v1113 = vpop.permute.xlu0 %1112
  %1116 = vset.pattern.permute.xlu0 0
  %1117 = vperm.xlu0 %1116, %v923
  %v1118 = vpop.permute.xlu0 %1117
  %1121 = vset.pattern.permute.xlu0 0
  %1122 = vperm.xlu0 %1121, %v924
  %v1123 = vpop.permute.xlu0 %1122
  %1126 = vset.pattern.permute.xlu0 0
  %1127 = vperm.xlu0 %1126, %v925
  %v1128 = vpop.permute.xlu0 %1127
  %1131 = vset.pattern.permute.xlu0 0
  %1132 = vperm.xlu0 %1131, %v926
  %v1133 = vpop.permute.xlu0 %1132
  %1136 = vset.pattern.permute.xlu0 0
  %1137 = vperm.xlu0 %1136, %v927
  %v1138 = vpop.permute.xlu0 %1137
  %1141 = vset.pattern.permute.xlu0 0
  %1142 = vperm.xlu0 %1141, %v928
  %v1143 = vpop.permute.xlu0 %1142
  %1146 = vset.pattern.permute.xlu0 0
  %1147 = vperm.xlu0 %1146, %v929
  %v1148 = vpop.permute.xlu0 %1147
  %1151 = vset.pattern.permute.xlu0 0
  %1152 = vperm.xlu0 %1151, %v930
  %v1153 = vpop.permute.xlu0 %1152
  %1156 = vset.pattern.permute.xlu0 0
  %1157 = vperm.xlu0 %1156, %v931
  %v1158 = vpop.permute.xlu0 %1157
  %1161 = vset.pattern.permute.xlu0 0
  %1162 = vperm.xlu0 %1161, %v932
  %v1163 = vpop.permute.xlu0 %1162
  %1166 = vset.pattern.permute.xlu0 0
  %1167 = vperm.xlu0 %1166, %v933
  %v1168 = vpop.permute.xlu0 %1167
  %1171 = vset.pattern.permute.xlu0 0
  %1172 = vperm.xlu0 %1171, %v934
  %v1173 = vpop.permute.xlu0 %1172
  %1176 = vset.pattern.permute.xlu0 0
  %1177 = vperm.xlu0 %1176, %v935
  %v1178 = vpop.permute.xlu0 %1177
  %1181 = vset.pattern.permute.xlu0 0
  %1182 = vperm.xlu0 %1181, %v936
  %v1183 = vpop.permute.xlu0 %1182
  %1186 = vset.pattern.permute.xlu0 0
  %1187 = vperm.xlu0 %1186, %v937
  %v1188 = vpop.permute.xlu0 %1187
  %1191 = vset.pattern.permute.xlu0 0
  %1192 = vperm.xlu0 %1191, %v938
  %v1193 = vpop.permute.xlu0 %1192
  %1196 = vset.pattern.permute.xlu0 0
  %1197 = vperm.xlu0 %1196, %v939
  %v1198 = vpop.permute.xlu0 %1197
  %1201 = vset.pattern.permute.xlu0 0
  %1202 = vperm.xlu0 %1201, %v940
  %v1203 = vpop.permute.xlu0 %1202
  %1206 = vset.pattern.permute.xlu0 0
  %1207 = vperm.xlu0 %1206, %v941
  %v1208 = vpop.permute.xlu0 %1207
  %1211 = vset.pattern.permute.xlu0 0
  %1212 = vperm.xlu0 %1211, %v942
  %v1213 = vpop.permute.xlu0 %1212
  %1216 = vset.pattern.permute.xlu0 0
  %1217 = vperm.xlu0 %1216, %v943
  %v1218 = vpop.permute.xlu0 %1217
  %1221 = vset.pattern.permute.xlu0 0
  %1222 = vperm.xlu0 %1221, %v944
  %v1223 = vpop.permute.xlu0 %1222
  %1226 = vset.pattern.permute.xlu0 0
  %1227 = vperm.xlu0 %1226, %v945
  %v1228 = vpop.permute.xlu0 %1227
  %1231 = vset.pattern.permute.xlu0 0
  %1232 = vperm.xlu0 %1231, %v946
  %v1233 = vpop.permute.xlu0 %1232
  %1236 = vset.pattern.permute.xlu0 0
  %1237 = vperm.xlu0 %1236, %v947
  %v1238 = vpop.permute.xlu0 %1237
  %1241 = vset.pattern.permute.xlu0 0
  %1242 = vperm.xlu0 %1241, %v948
  %v1243 = vpop.permute.xlu0 %1242
  %1246 = vset.pattern.permute.xlu0 0
  %1247 = vperm.xlu0 %1246, %v949
  %v1248 = vpop.permute.xlu0 %1247
  %1251 = vset.pattern.permute.xlu0 0
  %1252 = vperm.xlu0 %1251, %v950
  %v1253 = vpop.permute.xlu0 %1252
  %1256 = vset.pattern.permute.xlu0 0
  %1257 = vperm.xlu0 %1256, %v951
  %v1258 = vpop.permute.xlu0 %1257
  %1261 = vset.pattern.permute.xlu0 0
  %1262 = vperm.xlu0 %1261, %v952
  %v1263 = vpop.permute.xlu0 %1262
  %1266 = vset.pattern.permute.xlu0 0
  %1267 = vperm.xlu0 %1266, %v953
  %v1268 = vpop.permute.xlu0 %1267
  %1271 = vset.pattern.permute.xlu0 0
  %1272 = vperm.xlu0 %1271, %v954
  %v1273 = vpop.permute.xlu0 %1272
  %v1339 = vunpack.c.l.b16 %v825
  %v1340 = vunpack.c.l.b16 %v826
  %v1341 = vunpack.c.l.b16 %v827
  %v1342 = vunpack.c.l.b16 %v828
  %v1343 = vunpack.c.l.b16 %v829
  %v1344 = vunpack.c.l.b16 %v830
  %v1345 = vunpack.c.l.b16 %v831
  %v1346 = vunpack.c.l.b16 %v832
  %v1347 = vunpack.c.l.b16 %v833
  %v1348 = vunpack.c.l.b16 %v834
  %v1349 = vunpack.c.l.b16 %v835
  %v1350 = vunpack.c.l.b16 %v836
  %v1351 = vunpack.c.l.b16 %v837
  %v1352 = vunpack.c.l.b16 %v838
  %v1353 = vunpack.c.l.b16 %v839
  %v1354 = vunpack.c.l.b16 %v840
  %v1355 = vunpack.c.l.b16 %v841
  %v1356 = vunpack.c.l.b16 %v842
  %v1357 = vunpack.c.l.b16 %v843
  %v1358 = vunpack.c.l.b16 %v844
  %v1359 = vunpack.c.l.b16 %v845
  %v1360 = vunpack.c.l.b16 %v846
  %v1361 = vunpack.c.l.b16 %v847
  %v1362 = vunpack.c.l.b16 %v848
  %v1363 = vunpack.c.l.b16 %v849
  %v1364 = vunpack.c.l.b16 %v850
  %v1365 = vunpack.c.l.b16 %v851
  %v1366 = vunpack.c.l.b16 %v852
  %v1367 = vunpack.c.l.b16 %v853
  %v1368 = vunpack.c.l.b16 %v854
  %v1369 = vunpack.c.l.b16 %v855
  %v1370 = vunpack.c.l.b16 %v856
  %v1371 = vunpack.c.l.b16 %v857
  %v1372 = vunpack.c.l.b16 %v858
  %v1373 = vunpack.c.l.b16 %v859
  %v1374 = vunpack.c.l.b16 %v860
  %v1375 = vunpack.c.l.b16 %v861
  %v1376 = vunpack.c.l.b16 %v862
  %v1377 = vunpack.c.l.b16 %v863
  %v1378 = vunpack.c.l.b16 %v864
  %v1379 = vunpack.c.l.b16 %v865
  %v1380 = vunpack.c.l.b16 %v866
  %v1381 = vunpack.c.l.b16 %v867
  %v1382 = vunpack.c.l.b16 %v868
  %v1383 = vunpack.c.l.b16 %v869
  %v1384 = vunpack.c.l.b16 %v870
  %v1385 = vunpack.c.l.b16 %v871
  %v1386 = vunpack.c.l.b16 %v872
  %v1387 = vunpack.c.l.b16 %v873
  %v1388 = vunpack.c.l.b16 %v874
  %v1389 = vunpack.c.l.b16 %v875
  %v1390 = vunpack.c.l.b16 %v876
  %v1391 = vunpack.c.l.b16 %v877
  %v1392 = vunpack.c.l.b16 %v878
  %v1393 = vunpack.c.l.b16 %v879
  %v1394 = vunpack.c.l.b16 %v880
  %v1395 = vunpack.c.l.b16 %v881
  %v1396 = vunpack.c.l.b16 %v882
  %v1397 = vunpack.c.l.b16 %v883
  %v1398 = vunpack.c.l.b16 %v884
  %v1399 = vunpack.c.l.b16 %v885
  %v1400 = vunpack.c.l.b16 %v886
  %v1401 = vunpack.c.l.b16 %v887
  %v1402 = vunpack.c.l.b16 %v888
  %v1403 = vpack.c.b16 %v1340, %v1339
  %v1404 = vpack.c.b16 %v1342, %v1341
  %v1405 = vpack.c.b16 %v1344, %v1343
  %v1406 = vpack.c.b16 %v1346, %v1345
  %v1407 = vpack.c.b16 %v1348, %v1347
  %v1408 = vpack.c.b16 %v1350, %v1349
  %v1409 = vpack.c.b16 %v1352, %v1351
  %v1410 = vpack.c.b16 %v1354, %v1353
  %v1411 = vpack.c.b16 %v1356, %v1355
  %v1412 = vpack.c.b16 %v1358, %v1357
  %v1413 = vpack.c.b16 %v1360, %v1359
  %v1414 = vpack.c.b16 %v1362, %v1361
  %v1415 = vpack.c.b16 %v1364, %v1363
  %v1416 = vpack.c.b16 %v1366, %v1365
  %v1417 = vpack.c.b16 %v1368, %v1367
  %v1418 = vpack.c.b16 %v1370, %v1369
  %v1419 = vpack.c.b16 %v1372, %v1371
  %v1420 = vpack.c.b16 %v1374, %v1373
  %v1421 = vpack.c.b16 %v1376, %v1375
  %v1422 = vpack.c.b16 %v1378, %v1377
  %v1423 = vpack.c.b16 %v1380, %v1379
  %v1424 = vpack.c.b16 %v1382, %v1381
  %v1425 = vpack.c.b16 %v1384, %v1383
  %v1426 = vpack.c.b16 %v1386, %v1385
  %v1427 = vpack.c.b16 %v1388, %v1387
  %v1428 = vpack.c.b16 %v1390, %v1389
  %v1429 = vpack.c.b16 %v1392, %v1391
  %v1430 = vpack.c.b16 %v1394, %v1393
  %v1431 = vpack.c.b16 %v1396, %v1395
  %v1432 = vpack.c.b16 %v1398, %v1397
  %v1433 = vpack.c.b16 %v1400, %v1399
  %v1434 = vpack.c.b16 %v1402, %v1401
  %v1436 = vsel %vm517, %v1403, 0
  %v1439 = vsel %vm517, %v1404, 0
  %v1442 = vsel %vm517, %v1405, 0
  %v1445 = vsel %vm517, %v1406, 0
  %v1448 = vsel %vm517, %v1407, 0
  %v1451 = vsel %vm517, %v1408, 0
  %v1454 = vsel %vm517, %v1409, 0
  %v1457 = vsel %vm517, %v1410, 0
  %v1460 = vsel %vm517, %v1411, 0
  %v1463 = vsel %vm517, %v1412, 0
  %v1466 = vsel %vm517, %v1413, 0
  %v1469 = vsel %vm517, %v1414, 0
  %v1472 = vsel %vm517, %v1415, 0
  %v1475 = vsel %vm517, %v1416, 0
  %v1478 = vsel %vm517, %v1417, 0
  %v1481 = vsel %vm517, %v1418, 0
  %v1484 = vsel %vm517, %v1419, 0
  %v1487 = vsel %vm517, %v1420, 0
  %v1490 = vsel %vm517, %v1421, 0
  %v1493 = vsel %vm517, %v1422, 0
  %v1496 = vsel %vm517, %v1423, 0
  %v1499 = vsel %vm517, %v1424, 0
  %v1502 = vsel %vm517, %v1425, 0
  %v1505 = vsel %vm517, %v1426, 0
  %v1508 = vsel %vm517, %v1427, 0
  %v1511 = vsel %vm517, %v1428, 0
  %v1514 = vsel %vm517, %v1429, 0
  %v1517 = vsel %vm517, %v1430, 0
  %v1520 = vsel %vm517, %v1431, 0
  %v1523 = vsel %vm517, %v1432, 0
  %v1526 = vsel %vm517, %v1433, 0
  %v1529 = vsel %vm517, %v1434, 0
  %1531 = vmatprep.subr.bf16.mxu0 0
  %1532 = vmatpush1.bf16.msra.mxu0 %v889
  %1533 = vmatprep.subr.bf16.mxu0 0
  %1534 = vmatpush1.bf16.msra.mxu0 %v890
  %1535 = vmatprep.subr.bf16.mxu0 0
  %1536 = vmatpush1.bf16.msra.mxu0 0
  %1537 = vmatprep.subr.bf16.mxu0 0
  %1538 = vmatpush1.bf16.msra.mxu0 0
  %1539 = vmatprep.subr.bf16.mxu0 0
  %1540 = vmatpush1.bf16.msra.mxu0 0
  %1541 = vmatprep.subr.bf16.mxu0 0
  %1542 = vmatpush1.bf16.msra.mxu0 0
  %1543 = vmatprep.subr.bf16.mxu0 0
  %1544 = vmatpush1.bf16.msra.mxu0 0
  %1545 = vmatprep.subr.bf16.mxu0 0
  %1546 = vmatpush1.bf16.msra.mxu0 0
  %1547 = vmatprep.subr.bf16.mxu0 0
  %1548 = vmatpush1.bf16.msra.mxu0 0
  %1549 = vmatprep.subr.bf16.mxu0 0
  %1550 = vmatpush1.bf16.msra.mxu0 0
  %1551 = vmatprep.subr.bf16.mxu0 0
  %1552 = vmatpush1.bf16.msra.mxu0 0
  %1553 = vmatprep.subr.bf16.mxu0 0
  %1554 = vmatpush1.bf16.msra.mxu0 0
  %1555 = vmatprep.subr.bf16.mxu0 0
  %1556 = vmatpush1.bf16.msra.mxu0 0
  %1557 = vmatprep.subr.bf16.mxu0 0
  %1558 = vmatpush1.bf16.msra.mxu0 0
  %1559 = vmatprep.subr.bf16.mxu0 0
  %1560 = vmatpush1.bf16.msra.mxu0 0
  %1561 = vmatprep.subr.bf16.mxu0 0
  %1562 = vmatpush1.bf16.msra.mxu0 0
  %1563 = vmatprep.mubr.bf16.mxu0 0
  %1564 = vmatmul.mubr.bf16.gmra.mrb[0].mxu0 %v1436
  %v1565 = vpop.f32.mrb[0].mxu0
  %v1566 = vadd.f32 %v958, %v1565
  %v1567 = vpop.f32.mrb[0].mxu0
  %v1568 = vpop.f32.mrb[0].mxu0
  %v1569 = vadd.f32 %v963, %v1568
  %v1570 = vpop.f32.mrb[0].mxu0
  %1571 = vmatprep.mubr.bf16.mxu0 0
  %1572 = vmatmul.mubr.bf16.gmra.mrb[0].mxu0 %v1439
  %v1573 = vpop.f32.mrb[0].mxu0
  %v1574 = vadd.f32 %v968, %v1573
  %v1575 = vpop.f32.mrb[0].mxu0
  %v1576 = vpop.f32.mrb[0].mxu0
  %v1577 = vadd.f32 %v973, %v1576
  %v1578 = vpop.f32.mrb[0].mxu0
  %1579 = vmatprep.mubr.bf16.mxu0 0
  %1580 = vmatmul.mubr.bf16.gmra.mrb[0].mxu0 %v1442
  %v1581 = vpop.f32.mrb[0].mxu0
  %v1582 = vadd.f32 %v978, %v1581
  %v1583 = vpop.f32.mrb[0].mxu0
  %v1584 = vpop.f32.mrb[0].mxu0
  %v1585 = vadd.f32 %v983, %v1584
  %v1586 = vpop.f32.mrb[0].mxu0
  %1587 = vmatprep.mubr.bf16.mxu0 0
  %1588 = vmatmul.mubr.bf16.gmra.mrb[0].mxu0 %v1445
  %v1589 = vpop.f32.mrb[0].mxu0
  %v1590 = vadd.f32 %v988, %v1589
  %v1591 = vpop.f32.mrb[0].mxu0
  %v1592 = vpop.f32.mrb[0].mxu0
  %v1593 = vadd.f32 %v993, %v1592
  %v1594 = vpop.f32.mrb[0].mxu0
  %1595 = vmatprep.mubr.bf16.mxu0 0
  %1596 = vmatmul.mubr.bf16.gmra.mrb[0].mxu0 %v1448
  %v1597 = vpop.f32.mrb[0].mxu0
  %v1598 = vadd.f32 %v998, %v1597
  %v1599 = vpop.f32.mrb[0].mxu0
  %v1600 = vpop.f32.mrb[0].mxu0
  %v1601 = vadd.f32 %v1003, %v1600
  %v1602 = vpop.f32.mrb[0].mxu0
  %1603 = vmatprep.mubr.bf16.mxu0 0
  %1604 = vmatmul.mubr.bf16.gmra.mrb[0].mxu0 %v1451
  %v1605 = vpop.f32.mrb[0].mxu0
  %v1606 = vadd.f32 %v1008, %v1605
  %v1607 = vpop.f32.mrb[0].mxu0
  %v1608 = vpop.f32.mrb[0].mxu0
  %v1609 = vadd.f32 %v1013, %v1608
  %v1610 = vpop.f32.mrb[0].mxu0
  %1611 = vmatprep.mubr.bf16.mxu0 0
  %1612 = vmatmul.mubr.bf16.gmra.mrb[0].mxu0 %v1454
  %v1613 = vpop.f32.mrb[0].mxu0
  %v1614 = vadd.f32 %v1018, %v1613
  %v1615 = vpop.f32.mrb[0].mxu0
  %v1616 = vpop.f32.mrb[0].mxu0
  %v1617 = vadd.f32 %v1023, %v1616
  %v1618 = vpop.f32.mrb[0].mxu0
  %1619 = vmatprep.mubr.bf16.mxu0 0
  %1620 = vmatmul.mubr.bf16.gmra.mrb[0].mxu0 %v1457
  %v1621 = vpop.f32.mrb[0].mxu0
  %v1622 = vadd.f32 %v1028, %v1621
  %v1623 = vpop.f32.mrb[0].mxu0
  %v1624 = vpop.f32.mrb[0].mxu0
  %v1625 = vadd.f32 %v1033, %v1624
  %v1626 = vpop.f32.mrb[0].mxu0
  %1627 = vmatprep.mubr.bf16.mxu0 0
  %1628 = vmatmul.mubr.bf16.gmra.mrb[0].mxu0 %v1460
  %v1629 = vpop.f32.mrb[0].mxu0
  %v1630 = vadd.f32 %v1038, %v1629
  %v1631 = vpop.f32.mrb[0].mxu0
  %v1632 = vpop.f32.mrb[0].mxu0
  %v1633 = vadd.f32 %v1043, %v1632
  %v1634 = vpop.f32.mrb[0].mxu0
  %1635 = vmatprep.mubr.bf16.mxu0 0
  %1636 = vmatmul.mubr.bf16.gmra.mrb[0].mxu0 %v1463
  %v1637 = vpop.f32.mrb[0].mxu0
  %v1638 = vadd.f32 %v1048, %v1637
  %v1639 = vpop.f32.mrb[0].mxu0
  %v1640 = vpop.f32.mrb[0].mxu0
  %v1641 = vadd.f32 %v1053, %v1640
  %v1642 = vpop.f32.mrb[0].mxu0
  %1643 = vmatprep.mubr.bf16.mxu0 0
  %1644 = vmatmul.mubr.bf16.gmra.mrb[0].mxu0 %v1466
  %v1645 = vpop.f32.mrb[0].mxu0
  %v1646 = vadd.f32 %v1058, %v1645
  %v1647 = vpop.f32.mrb[0].mxu0
  %v1648 = vpop.f32.mrb[0].mxu0
  %v1649 = vadd.f32 %v1063, %v1648
  %v1650 = vpop.f32.mrb[0].mxu0
  %1651 = vmatprep.mubr.bf16.mxu0 0
  %1652 = vmatmul.mubr.bf16.gmra.mrb[0].mxu0 %v1469
  %v1653 = vpop.f32.mrb[0].mxu0
  %v1654 = vadd.f32 %v1068, %v1653
  %v1655 = vpop.f32.mrb[0].mxu0
  %v1656 = vpop.f32.mrb[0].mxu0
  %v1657 = vadd.f32 %v1073, %v1656
  %v1658 = vpop.f32.mrb[0].mxu0
  %1659 = vmatprep.mubr.bf16.mxu0 0
  %1660 = vmatmul.mubr.bf16.gmra.mrb[0].mxu0 %v1472
  %v1661 = vpop.f32.mrb[0].mxu0
  %v1662 = vadd.f32 %v1078, %v1661
  %v1663 = vpop.f32.mrb[0].mxu0
  %v1664 = vpop.f32.mrb[0].mxu0
  %v1665 = vadd.f32 %v1083, %v1664
  %v1666 = vpop.f32.mrb[0].mxu0
  %1667 = vmatprep.mubr.bf16.mxu0 0
  %1668 = vmatmul.mubr.bf16.gmra.mrb[0].mxu0 %v1475
  %v1669 = vpop.f32.mrb[0].mxu0
  %v1670 = vadd.f32 %v1088, %v1669
  %v1671 = vpop.f32.mrb[0].mxu0
  %v1672 = vpop.f32.mrb[0].mxu0
  %v1673 = vadd.f32 %v1093, %v1672
  %v1674 = vpop.f32.mrb[0].mxu0
  %1675 = vmatprep.mubr.bf16.mxu0 0
  %1676 = vmatmul.mubr.bf16.gmra.mrb[0].mxu0 %v1478
  %v1677 = vpop.f32.mrb[0].mxu0
  %v1678 = vadd.f32 %v1098, %v1677
  %v1679 = vpop.f32.mrb[0].mxu0
  %v1680 = vpop.f32.mrb[0].mxu0
  %v1681 = vadd.f32 %v1103, %v1680
  %v1682 = vpop.f32.mrb[0].mxu0
  %1683 = vmatprep.mubr.bf16.mxu0 0
  %1684 = vmatmul.mubr.bf16.gmra.mrb[0].mxu0 %v1481
  %v1685 = vpop.f32.mrb[0].mxu0
  %v1686 = vadd.f32 %v1108, %v1685
  %v1687 = vpop.f32.mrb[0].mxu0
  %v1688 = vpop.f32.mrb[0].mxu0
  %v1689 = vadd.f32 %v1113, %v1688
  %v1690 = vpop.f32.mrb[0].mxu0
  %1691 = vmatprep.mubr.bf16.mxu0 0
  %1692 = vmatmul.mubr.bf16.gmra.mrb[0].mxu0 %v1484
  %v1693 = vpop.f32.mrb[0].mxu0
  %v1694 = vadd.f32 %v1118, %v1693
  %v1695 = vpop.f32.mrb[0].mxu0
  %v1696 = vpop.f32.mrb[0].mxu0
  %v1697 = vadd.f32 %v1123, %v1696
  %v1698 = vpop.f32.mrb[0].mxu0
  %1699 = vmatprep.mubr.bf16.mxu0 0
  %1700 = vmatmul.mubr.bf16.gmra.mrb[0].mxu0 %v1487
  %v1701 = vpop.f32.mrb[0].mxu0
  %v1702 = vadd.f32 %v1128, %v1701
  %v1703 = vpop.f32.mrb[0].mxu0
  %v1704 = vpop.f32.mrb[0].mxu0
  %v1705 = vadd.f32 %v1133, %v1704
  %v1706 = vpop.f32.mrb[0].mxu0
  %1707 = vmatprep.mubr.bf16.mxu0 0
  %1708 = vmatmul.mubr.bf16.gmra.mrb[0].mxu0 %v1490
  %v1709 = vpop.f32.mrb[0].mxu0
  %v1710 = vadd.f32 %v1138, %v1709
  %v1711 = vpop.f32.mrb[0].mxu0
  %v1712 = vpop.f32.mrb[0].mxu0
  %v1713 = vadd.f32 %v1143, %v1712
  %v1714 = vpop.f32.mrb[0].mxu0
  %1715 = vmatprep.mubr.bf16.mxu0 0
  %1716 = vmatmul.mubr.bf16.gmra.mrb[0].mxu0 %v1493
  %v1717 = vpop.f32.mrb[0].mxu0
  %v1718 = vadd.f32 %v1148, %v1717
  %v1719 = vpop.f32.mrb[0].mxu0
  %v1720 = vpop.f32.mrb[0].mxu0
  %v1721 = vadd.f32 %v1153, %v1720
  %v1722 = vpop.f32.mrb[0].mxu0
  %1723 = vmatprep.mubr.bf16.mxu0 0
  %1724 = vmatmul.mubr.bf16.gmra.mrb[0].mxu0 %v1496
  %v1725 = vpop.f32.mrb[0].mxu0
  %v1726 = vadd.f32 %v1158, %v1725
  %v1727 = vpop.f32.mrb[0].mxu0
  %v1728 = vpop.f32.mrb[0].mxu0
  %v1729 = vadd.f32 %v1163, %v1728
  %v1730 = vpop.f32.mrb[0].mxu0
  %1731 = vmatprep.mubr.bf16.mxu0 0
  %1732 = vmatmul.mubr.bf16.gmra.mrb[0].mxu0 %v1499
  %v1733 = vpop.f32.mrb[0].mxu0
  %v1734 = vadd.f32 %v1168, %v1733
  %v1735 = vpop.f32.mrb[0].mxu0
  %v1736 = vpop.f32.mrb[0].mxu0
  %v1737 = vadd.f32 %v1173, %v1736
  %v1738 = vpop.f32.mrb[0].mxu0
  %1739 = vmatprep.mubr.bf16.mxu0 0
  %1740 = vmatmul.mubr.bf16.gmra.mrb[0].mxu0 %v1502
  %v1741 = vpop.f32.mrb[0].mxu0
  %v1742 = vadd.f32 %v1178, %v1741
  %v1743 = vpop.f32.mrb[0].mxu0
  %v1744 = vpop.f32.mrb[0].mxu0
  %v1745 = vadd.f32 %v1183, %v1744
  %v1746 = vpop.f32.mrb[0].mxu0
  %1747 = vmatprep.mubr.bf16.mxu0 0
  %1748 = vmatmul.mubr.bf16.gmra.mrb[0].mxu0 %v1505
  %v1749 = vpop.f32.mrb[0].mxu0
  %v1750 = vadd.f32 %v1188, %v1749
  %v1751 = vpop.f32.mrb[0].mxu0
  %v1752 = vpop.f32.mrb[0].mxu0
  %v1753 = vadd.f32 %v1193, %v1752
  %v1754 = vpop.f32.mrb[0].mxu0
  %1755 = vmatprep.mubr.bf16.mxu0 0
  %1756 = vmatmul.mubr.bf16.gmra.mrb[0].mxu0 %v1508
  %v1757 = vpop.f32.mrb[0].mxu0
  %v1758 = vadd.f32 %v1198, %v1757
  %v1759 = vpop.f32.mrb[0].mxu0
  %v1760 = vpop.f32.mrb[0].mxu0
  %v1761 = vadd.f32 %v1203, %v1760
  %v1762 = vpop.f32.mrb[0].mxu0
  %1763 = vmatprep.mubr.bf16.mxu0 0
  %1764 = vmatmul.mubr.bf16.gmra.mrb[0].mxu0 %v1511
  %v1765 = vpop.f32.mrb[0].mxu0
  %v1766 = vadd.f32 %v1208, %v1765
  %v1767 = vpop.f32.mrb[0].mxu0
  %v1768 = vpop.f32.mrb[0].mxu0
  %v1769 = vadd.f32 %v1213, %v1768
  %v1770 = vpop.f32.mrb[0].mxu0
  %1771 = vmatprep.mubr.bf16.mxu0 0
  %1772 = vmatmul.mubr.bf16.gmra.mrb[0].mxu0 %v1514
  %v1773 = vpop.f32.mrb[0].mxu0
  %v1774 = vadd.f32 %v1218, %v1773
  %v1775 = vpop.f32.mrb[0].mxu0
  %v1776 = vpop.f32.mrb[0].mxu0
  %v1777 = vadd.f32 %v1223, %v1776
  %v1778 = vpop.f32.mrb[0].mxu0
  %1779 = vmatprep.mubr.bf16.mxu0 0
  %1780 = vmatmul.mubr.bf16.gmra.mrb[0].mxu0 %v1517
  %v1781 = vpop.f32.mrb[0].mxu0
  %v1782 = vadd.f32 %v1228, %v1781
  %v1783 = vpop.f32.mrb[0].mxu0
  %v1784 = vpop.f32.mrb[0].mxu0
  %v1785 = vadd.f32 %v1233, %v1784
  %v1786 = vpop.f32.mrb[0].mxu0
  %1787 = vmatprep.mubr.bf16.mxu0 0
  %1788 = vmatmul.mubr.bf16.gmra.mrb[0].mxu0 %v1520
  %v1789 = vpop.f32.mrb[0].mxu0
  %v1790 = vadd.f32 %v1238, %v1789
  %v1791 = vpop.f32.mrb[0].mxu0
  %v1792 = vpop.f32.mrb[0].mxu0
  %v1793 = vadd.f32 %v1243, %v1792
  %v1794 = vpop.f32.mrb[0].mxu0
  %1795 = vmatprep.mubr.bf16.mxu0 0
  %1796 = vmatmul.mubr.bf16.gmra.mrb[0].mxu0 %v1523
  %v1797 = vpop.f32.mrb[0].mxu0
  %v1798 = vadd.f32 %v1248, %v1797
  %v1799 = vpop.f32.mrb[0].mxu0
  %v1800 = vpop.f32.mrb[0].mxu0
  %v1801 = vadd.f32 %v1253, %v1800
  %v1802 = vpop.f32.mrb[0].mxu0
  %1803 = vmatprep.mubr.bf16.mxu0 0
  %1804 = vmatmul.mubr.bf16.gmra.mrb[0].mxu0 %v1526
  %v1805 = vpop.f32.mrb[0].mxu0
  %v1806 = vadd.f32 %v1258, %v1805
  %v1807 = vpop.f32.mrb[0].mxu0
  %v1808 = vpop.f32.mrb[0].mxu0
  %v1809 = vadd.f32 %v1263, %v1808
  %v1810 = vpop.f32.mrb[0].mxu0
  %1811 = vmatprep.mubr.bf16.mxu0 0
  %1812 = vmatmul.mubr.bf16.gmra.mrb[0].mxu0 %v1529
  %v1813 = vpop.f32.mrb[0].mxu0
  %v1814 = vadd.f32 %v1268, %v1813
  %v1815 = vpop.f32.mrb[0].mxu0
  %v1816 = vpop.f32.mrb[0].mxu0
  %v1817 = vadd.f32 %v1273, %v1816
  %v1818 = vpop.f32.mrb[0].mxu0
  %1819 = vdwg.mxu0
  %1820 = vst.msk [vmem:[%s11] sm:$0xff] %vm719, %v1566
  %1821 = vst.msk [vmem:[%s11 + $0x8] sm:$0xff] %vm719, %v1569
  %1822 = vst.msk [vmem:[%s11 + $0x10] sm:$0xff] %vm719, %v1574
  %1823 = vst.msk [vmem:[%s11 + $0x18] sm:$0xff] %vm719, %v1577
  %1824 = vst.msk [vmem:[%s11 + $0x20] sm:$0xff] %vm719, %v1582
  %1825 = vst.msk [vmem:[%s11 + $0x28] sm:$0xff] %vm719, %v1585
  %1826 = vst.msk [vmem:[%s11 + $0x30] sm:$0xff] %vm719, %v1590
  %1827 = vst.msk [vmem:[%s11 + $0x38] sm:$0xff] %vm719, %v1593
  %1828 = vst.msk [vmem:[%s11 + $0x40] sm:$0xff] %vm719, %v1598
  %1829 = vst.msk [vmem:[%s11 + $0x48] sm:$0xff] %vm719, %v1601
  %1830 = vst.msk [vmem:[%s11 + $0x50] sm:$0xff] %vm719, %v1606
  %1831 = vst.msk [vmem:[%s11 + $0x58] sm:$0xff] %vm719, %v1609
  %1832 = vst.msk [vmem:[%s11 + $0x60] sm:$0xff] %vm719, %v1614
  %1833 = vst.msk [vmem:[%s11 + $0x68] sm:$0xff] %vm719, %v1617
  %1834 = vst.msk [vmem:[%s11 + $0x70] sm:$0xff] %vm719, %v1622
  %1835 = vst.msk [vmem:[%s11 + $0x78] sm:$0xff] %vm719, %v1625
  %1836 = vst.msk [vmem:[%s11 + $0x80] sm:$0xff] %vm719, %v1630
  %1837 = vst.msk [vmem:[%s11 + $0x88] sm:$0xff] %vm719, %v1633
  %1838 = vst.msk [vmem:[%s11 + $0x90] sm:$0xff] %vm719, %v1638
  %1839 = vst.msk [vmem:[%s11 + $0x98] sm:$0xff] %vm719, %v1641
  %1840 = vst.msk [vmem:[%s11 + $0xa0] sm:$0xff] %vm719, %v1646
  %1841 = vst.msk [vmem:[%s11 + $0xa8] sm:$0xff] %vm719, %v1649
  %1842 = vst.msk [vmem:[%s11 + $0xb0] sm:$0xff] %vm719, %v1654
  %1843 = vst.msk [vmem:[%s11 + $0xb8] sm:$0xff] %vm719, %v1657
  %1844 = vst.msk [vmem:[%s11 + $0xc0] sm:$0xff] %vm719, %v1662
  %1845 = vst.msk [vmem:[%s11 + $0xc8] sm:$0xff] %vm719, %v1665
  %1846 = vst.msk [vmem:[%s11 + $0xd0] sm:$0xff] %vm719, %v1670
  %1847 = vst.msk [vmem:[%s11 + $0xd8] sm:$0xff] %vm719, %v1673
  %1848 = vst.msk [vmem:[%s11 + $0xe0] sm:$0xff] %vm719, %v1678
  %1849 = vst.msk [vmem:[%s11 + $0xe8] sm:$0xff] %vm719, %v1681
  %1850 = vst.msk [vmem:[%s11 + $0xf0] sm:$0xff] %vm719, %v1686
  %1851 = vst.msk [vmem:[%s11 + $0xf8] sm:$0xff] %vm719, %v1689
  %1852 = vst.msk [vmem:[%s11 + $0x100] sm:$0xff] %vm719, %v1694
  %1853 = vst.msk [vmem:[%s11 + $0x108] sm:$0xff] %vm719, %v1697
  %1854 = vst.msk [vmem:[%s11 + $0x110] sm:$0xff] %vm719, %v1702
  %1855 = vst.msk [vmem:[%s11 + $0x118] sm:$0xff] %vm719, %v1705
  %1856 = vst.msk [vmem:[%s11 + $0x120] sm:$0xff] %vm719, %v1710
  %1857 = vst.msk [vmem:[%s11 + $0x128] sm:$0xff] %vm719, %v1713
  %1858 = vst.msk [vmem:[%s11 + $0x130] sm:$0xff] %vm719, %v1718
  %1859 = vst.msk [vmem:[%s11 + $0x138] sm:$0xff] %vm719, %v1721
  %1860 = vst.msk [vmem:[%s11 + $0x140] sm:$0xff] %vm719, %v1726
  %1861 = vst.msk [vmem:[%s11 + $0x148] sm:$0xff] %vm719, %v1729
  %1862 = vst.msk [vmem:[%s11 + $0x150] sm:$0xff] %vm719, %v1734
  %1863 = vst.msk [vmem:[%s11 + $0x158] sm:$0xff] %vm719, %v1737
  %1864 = vst.msk [vmem:[%s11 + $0x160] sm:$0xff] %vm719, %v1742
  %1865 = vst.msk [vmem:[%s11 + $0x168] sm:$0xff] %vm719, %v1745
  %1866 = vst.msk [vmem:[%s11 + $0x170] sm:$0xff] %vm719, %v1750
  %1867 = vst.msk [vmem:[%s11 + $0x178] sm:$0xff] %vm719, %v1753
  %1868 = vst.msk [vmem:[%s11 + $0x180] sm:$0xff] %vm719, %v1758
  %1869 = vst.msk [vmem:[%s11 + $0x188] sm:$0xff] %vm719, %v1761
  %1870 = vst.msk [vmem:[%s11 + $0x190] sm:$0xff] %vm719, %v1766
  %1871 = vst.msk [vmem:[%s11 + $0x198] sm:$0xff] %vm719, %v1769
  %1872 = vst.msk [vmem:[%s11 + $0x1a0] sm:$0xff] %vm719, %v1774
  %1873 = vst.msk [vmem:[%s11 + $0x1a8] sm:$0xff] %vm719, %v1777
  %1874 = vst.msk [vmem:[%s11 + $0x1b0] sm:$0xff] %vm719, %v1782
  %1875 = vst.msk [vmem:[%s11 + $0x1b8] sm:$0xff] %vm719, %v1785
  %1876 = vst.msk [vmem:[%s11 + $0x1c0] sm:$0xff] %vm719, %v1790
  %1877 = vst.msk [vmem:[%s11 + $0x1c8] sm:$0xff] %vm719, %v1793
  %1878 = vst.msk [vmem:[%s11 + $0x1d0] sm:$0xff] %vm719, %v1798
  %1879 = vst.msk [vmem:[%s11 + $0x1d8] sm:$0xff] %vm719, %v1801
  %1880 = vst.msk [vmem:[%s11 + $0x1e0] sm:$0xff] %vm719, %v1806
  %1881 = vst.msk [vmem:[%s11 + $0x1e8] sm:$0xff] %vm719, %v1809
  %1882 = vst.msk [vmem:[%s11 + $0x1f0] sm:$0xff] %vm719, %v1814
  %1883 = vst.msk [vmem:[%s11 + $0x1f8] sm:$0xff] %vm719, %v1817
  // Predicated region
  $region46: #{_lambda_.21} parent=0 // pred_check
    _
  $region47: #{_lambda_.21} parent=0 // pred_check_branch
    %1885 = sbr.rel (0) target = $region49
  $region48: #{_lambda_.21} parent=0 // pred_region
    _
  $region49: #{_lambda_.21} parent=0 // pred_fallthru
    _
  // Predicated region
  $region50: #{_lambda_.21} parent=0 // pred_check
    _
  $region51: #{_lambda_.21} parent=0 // pred_check_branch
    %1887 = sbr.rel (0) target = $region53
  $region52: #{_lambda_.21} parent=0 // pred_region
    _
  $region53: #{_lambda_.21} parent=0 // pred_fallthru
    _
  // Predicated region
  $region54: #{_lambda_.21} parent=0 // pred_check
    _
  $region55: #{_lambda_.21} parent=0 // pred_check_branch
    %1889 = sbr.rel (0) target = $region57
  $region56: #{_lambda_.21} parent=0 // pred_region
    _
  $region57: #{_lambda_.21} parent=0 // pred_fallthru
    _
  // Predicated region
  $region58: #{_lambda_.21} parent=0 // pred_check
    _
  $region59: #{_lambda_.21} parent=0 // pred_check_branch
    %1891 = sbr.rel (0) target = $region61
  $region60: #{_lambda_.21} parent=0 // pred_region
    _
  $region61: #{_lambda_.21} parent=0 // pred_fallthru
    _

</llo_original>
